<compile_context>
chip_gen: v7x
topology: tpu7x:2x2x1
jax: 0.10.0
libtpu: 0.0.40
codegen_flags: <defaults>
</compile_context>

<pallas_src>
import functools

import jax
import jax.numpy as jnp
from jax import lax
from jax.experimental import pallas as pl
from jax.experimental.pallas import tpu as pltpu


def _spp_kernel(x_ref, bh_ref, bw_ref, o_ref, *, pool_sizes):
  # x_ref : (1, C, H, W)        one image of the batch
  # bh_ref: (nb, H, H)          0/1 row-band operators, one per pool size
  # bw_ref: (nb, W, W)          0/1 col-band operators, one per pool size
  # o_ref : (1, nb+1, C, H, W)  output in final concat order [pools..., x]
  x = x_ref[0]                                   # (C, H, W)
  c, h, w = x.shape
  nb = len(pool_sizes)

  # Raw-x pass-through branch: exact copy, no MXU round trip.
  o_ref[0, nb] = x

  # Fold H into the matmul M dimension for the W-direction stage.
  x2 = x.reshape(c * h, w)                       # leading-dim merge (layout-trivial)

  for i, k in enumerate(pool_sizes):             # static unrolled loop (3 branches)
    bw = bw_ref[i]                               # (W, W) exact 0/1
    bh = bh_ref[i]                               # (H, H) exact 0/1
    # W-direction box sum: one 2D MXU matmul, M = C*H rows, K = W.
    t = jnp.dot(x2, bw,
                preferred_element_type=jnp.float32,
                precision=lax.Precision.HIGHEST).reshape(c, h, w)
    # H-direction box sum: batched matmul over channels, K = H.
    bh_b = jnp.broadcast_to(bh, (c, h, h))
    y = jnp.einsum('cih,chv->civ', bh_b, t,
                   preferred_element_type=jnp.float32,
                   precision=lax.Precision.HIGHEST)
    # count_include_pad=True: divide the k*k-tap sum after accumulation (f32 VPU).
    o_ref[0, i] = (y * (1.0 / float(k * k))).astype(o_ref.dtype)


def _band_matrix(n, half):
  idx = jnp.arange(n)
  return (jnp.abs(idx[:, None] - idx[None, :]) <= half).astype(jnp.float32)


def spp_pallas(x_nchw, pool_sizes=(5, 9, 13)):
  """SPP forward. x_nchw: (N, C, H, W) f32 -> (N, (len(pool_sizes)+1)*C, H, W)."""
  N, C, H, W = x_nchw.shape
  nb = len(pool_sizes)
  nout = nb + 1

  # Exact 0/1 banded operators (a few KiB total), stacked per pool size.
  bh = jnp.stack([_band_matrix(H, k // 2) for k in pool_sizes])   # (nb, H, H)
  bw = jnp.stack([_band_matrix(W, k // 2) for k in pool_sizes])   # (nb, W, W)

  kernel = functools.partial(_spp_kernel, pool_sizes=tuple(pool_sizes))

  # TODO(synk): at real yolov4-tiny SPP sizes (C~512, H=W=13), add a parallel
  # grid axis over channel tiles (multiple-of-8 rows), pad H*W to 256 so the
  # output stores are lane-dense, and size tiles against v7x's 64 MiB VMEM.
  out5 = pl.pallas_call(
      kernel,
      out_shape=jax.ShapeDtypeStruct((N, nout, C, H, W), x_nchw.dtype),
      grid=(N,),
      in_specs=[
          pl.BlockSpec((1, C, H, W), lambda n: (n, 0, 0, 0)),
          pl.BlockSpec((nb, H, H), lambda n: (0, 0, 0)),   # resident after 1st fetch
          pl.BlockSpec((nb, W, W), lambda n: (0, 0, 0)),   # resident after 1st fetch
      ],
      out_specs=pl.BlockSpec((1, nout, C, H, W), lambda n: (n, 0, 0, 0, 0)),
      compiler_params=pltpu.CompilerParams(
          dimension_semantics=("parallel",)),
  )(x_nchw, bh, bw)

  # Free row-major reshape: (N, nout, C, H, W) -> (N, nout*C, H, W) is already
  # the concat order [pool5 | pool9 | pool13 | x] along channels (no transpose).
  return out5.reshape(N, nout * C, H, W)


def spp_reference(x_nchw, pool_sizes=(5, 9, 13)):
  """Pure-JAX NCHW reference mirroring the PyTorch SPP forward exactly."""
  feats = []
  for k in pool_sizes:
    p = k // 2
    s = lax.reduce_window(
        x_nchw, 0.0, lax.add,
        window_dimensions=(1, 1, k, k),
        window_strides=(1, 1, 1, 1),
        padding=((0, 0), (0, 0), (p, p), (p, p)))
    feats.append(s / float(k * k))        # count_include_pad=True -> divide by k^2
  feats.append(x_nchw)
  return jnp.concatenate(feats, axis=1)


if __name__ == "__main__":
  N, C, H, W = 2, 4, 16, 16

  key = jax.random.PRNGKey(0)
  x = jax.random.normal(key, (N, C, H, W), jnp.float32)

  out = jax.block_until_ready(spp_pallas(x))
  ref = jax.block_until_ready(spp_reference(x))

  assert out.shape == (N, 4 * C, H, W), out.shape
  max_err = float(jnp.max(jnp.abs(out - ref)))
  assert jnp.allclose(out, ref, atol=1e-4, rtol=1e-4), max_err
  print("KERNEL_OK")
</pallas_src>

<mosaic_0001>
module attributes {stable_mosaic.version = 11 : i64} {
  func.func @_spp_kernel(%arg0: i32, %arg1: memref<1x4x16x16xf32, #tpu.memory_space<vmem>>, %arg2: memref<3x16x16xf32, #tpu.memory_space<vmem>>, %arg3: memref<3x16x16xf32, #tpu.memory_space<vmem>>, %arg4: memref<1x4x4x16x16xf32, #tpu.memory_space<vmem>>) attributes {dimension_semantics = [#tpu.dimension_semantics<parallel>], iteration_bounds = array<i64: 2>, scalar_prefetch = 0 : i64, scratch_operands = 0 : i64, tpu.core_type = #tpu.core_type<tc>, window_params = [{transform_indices = @transform_0, window_bounds = array<i64: 1, 4, 16, 16>}, {pipeline_mode = #tpu.pipeline_mode<synchronous>, transform_indices = @transform_1, window_bounds = array<i64: 3, 16, 16>}, {pipeline_mode = #tpu.pipeline_mode<synchronous>, transform_indices = @transform_2, window_bounds = array<i64: 3, 16, 16>}, {transform_indices = @transform_3, window_bounds = array<i64: 1, 4, 4, 16, 16>}]} {
    %c0 = arith.constant 0 : index
    %c0_0 = arith.constant 0 : index
    %c0_1 = arith.constant 0 : index
    %c0_2 = arith.constant 0 : index
    %0 = vector.load %arg1[%c0, %c0_0, %c0_1, %c0_2] : memref<1x4x16x16xf32, #tpu.memory_space<vmem>>, vector<1x4x16x16xf32>
    %1 = vector.shape_cast %0 : vector<1x4x16x16xf32> to vector<4x16x16xf32>
    %c0_3 = arith.constant 0 : index
    %c3 = arith.constant 3 : index
    %c0_4 = arith.constant 0 : index
    %c0_5 = arith.constant 0 : index
    %c0_6 = arith.constant 0 : index
    %2 = vector.load %arg4[%c0_3, %c3, %c0_4, %c0_5, %c0_6] : memref<1x4x4x16x16xf32, #tpu.memory_space<vmem>>, vector<1x1x4x16x16xf32>
    %3 = vector.shape_cast %2 : vector<1x1x4x16x16xf32> to vector<4x16x16xf32>
    %4 = vector.shape_cast %1 : vector<4x16x16xf32> to vector<1x1x4x16x16xf32>
    tpu.vector_store %arg4[%c0_3, %c3, %c0_4, %c0_5, %c0_6], %4 {strides = array<i32>} : memref<1x4x4x16x16xf32, #tpu.memory_space<vmem>>, vector<1x1x4x16x16xf32>,
    %5 = vector.shape_cast %1 : vector<4x16x16xf32> to vector<64x16xf32>
    %c0_7 = arith.constant 0 : index
    %c0_8 = arith.constant 0 : index
    %c0_9 = arith.constant 0 : index
    %6 = vector.load %arg3[%c0_7, %c0_8, %c0_9] : memref<3x16x16xf32, #tpu.memory_space<vmem>>, vector<1x16x16xf32>
    %7 = vector.shape_cast %6 : vector<1x16x16xf32> to vector<16x16xf32>
    %c0_10 = arith.constant 0 : index
    %c0_11 = arith.constant 0 : index
    %c0_12 = arith.constant 0 : index
    %8 = vector.load %arg2[%c0_10, %c0_11, %c0_12] : memref<3x16x16xf32, #tpu.memory_space<vmem>>, vector<1x16x16xf32>
    %9 = vector.shape_cast %8 : vector<1x16x16xf32> to vector<16x16xf32>
    %cst = arith.constant dense<0.000000e+00> : vector<64x16xf32>
    %10 = tpu.matmul %5, %7, %cst {dimension_numbers = #tpu.dot_dimension_numbers<[1], [0], [0], [1], [0, 0, 1, 1], [], []>, precision = #tpu.contract_precision<fp32>} : vector<64x16xf32>, vector<16x16xf32>, vector<64x16xf32> -> vector<64x16xf32>
    %11 = vector.shape_cast %10 : vector<64x16xf32> to vector<4x16x16xf32>
    %12 = vector.shape_cast %9 : vector<16x16xf32> to vector<1x16x16xf32>
    %13 = vector.broadcast %12 : vector<1x16x16xf32> to vector<4x16x16xf32>
    "tpu.trace_start"() <{level = 10 : i32, message = "cih,chv->civ"}> : () -> ()
    %cst_13 = arith.constant dense<0.000000e+00> : vector<4x16x16xf32>
    %14 = tpu.matmul %13, %11, %cst_13 {dimension_numbers = #tpu.dot_dimension_numbers<[2], [1], [1], [2], [0, 0, 0, 1, 1, 2], [0], [0]>, precision = #tpu.contract_precision<fp32>} : vector<4x16x16xf32>, vector<4x16x16xf32>, vector<4x16x16xf32> -> vector<4x16x16xf32>
    "tpu.trace_stop"() : () -> ()
    %cst_14 = arith.constant 4.000000e-02 : f32
    %15 = vector.broadcast %cst_14 : f32 to vector<4x16x16xf32>
    %16 = arith.mulf %14, %15 : vector<4x16x16xf32>
    %c0_15 = arith.constant 0 : index
    %c0_16 = arith.constant 0 : index
    %c0_17 = arith.constant 0 : index
    %c0_18 = arith.constant 0 : index
    %c0_19 = arith.constant 0 : index
    %17 = vector.load %arg4[%c0_15, %c0_16, %c0_17, %c0_18, %c0_19] : memref<1x4x4x16x16xf32, #tpu.memory_space<vmem>>, vector<1x1x4x16x16xf32>
    %18 = vector.shape_cast %17 : vector<1x1x4x16x16xf32> to vector<4x16x16xf32>
    %19 = vector.shape_cast %16 : vector<4x16x16xf32> to vector<1x1x4x16x16xf32>
    tpu.vector_store %arg4[%c0_15, %c0_16, %c0_17, %c0_18, %c0_19], %19 {strides = array<i32>} : memref<1x4x4x16x16xf32, #tpu.memory_space<vmem>>, vector<1x1x4x16x16xf32>,
    %c1 = arith.constant 1 : index
    %c0_20 = arith.constant 0 : index
    %c0_21 = arith.constant 0 : index
    %20 = vector.load %arg3[%c1, %c0_20, %c0_21] : memref<3x16x16xf32, #tpu.memory_space<vmem>>, vector<1x16x16xf32>
    %21 = vector.shape_cast %20 : vector<1x16x16xf32> to vector<16x16xf32>
    %c1_22 = arith.constant 1 : index
    %c0_23 = arith.constant 0 : index
    %c0_24 = arith.constant 0 : index
    %22 = vector.load %arg2[%c1_22, %c0_23, %c0_24] : memref<3x16x16xf32, #tpu.memory_space<vmem>>, vector<1x16x16xf32>
    %23 = vector.shape_cast %22 : vector<1x16x16xf32> to vector<16x16xf32>
    %cst_25 = arith.constant dense<0.000000e+00> : vector<64x16xf32>
    %24 = tpu.matmul %5, %21, %cst_25 {dimension_numbers = #tpu.dot_dimension_numbers<[1], [0], [0], [1], [0, 0, 1, 1], [], []>, precision = #tpu.contract_precision<fp32>} : vector<64x16xf32>, vector<16x16xf32>, vector<64x16xf32> -> vector<64x16xf32>
    %25 = vector.shape_cast %24 : vector<64x16xf32> to vector<4x16x16xf32>
    %26 = vector.shape_cast %23 : vector<16x16xf32> to vector<1x16x16xf32>
    %27 = vector.broadcast %26 : vector<1x16x16xf32> to vector<4x16x16xf32>
    "tpu.trace_start"() <{level = 10 : i32, message = "cih,chv->civ"}> : () -> ()
    %cst_26 = arith.constant dense<0.000000e+00> : vector<4x16x16xf32>
    %28 = tpu.matmul %27, %25, %cst_26 {dimension_numbers = #tpu.dot_dimension_numbers<[2], [1], [1], [2], [0, 0, 0, 1, 1, 2], [0], [0]>, precision = #tpu.contract_precision<fp32>} : vector<4x16x16xf32>, vector<4x16x16xf32>, vector<4x16x16xf32> -> vector<4x16x16xf32>
    "tpu.trace_stop"() : () -> ()
    %cst_27 = arith.constant 0.0123456791 : f32
    %29 = vector.broadcast %cst_27 : f32 to vector<4x16x16xf32>
    %30 = arith.mulf %28, %29 : vector<4x16x16xf32>
    %c0_28 = arith.constant 0 : index
    %c1_29 = arith.constant 1 : index
    %c0_30 = arith.constant 0 : index
    %c0_31 = arith.constant 0 : index
    %c0_32 = arith.constant 0 : index
    %31 = vector.load %arg4[%c0_28, %c1_29, %c0_30, %c0_31, %c0_32] : memref<1x4x4x16x16xf32, #tpu.memory_space<vmem>>, vector<1x1x4x16x16xf32>
    %32 = vector.shape_cast %31 : vector<1x1x4x16x16xf32> to vector<4x16x16xf32>
    %33 = vector.shape_cast %30 : vector<4x16x16xf32> to vector<1x1x4x16x16xf32>
    tpu.vector_store %arg4[%c0_28, %c1_29, %c0_30, %c0_31, %c0_32], %33 {strides = array<i32>} : memref<1x4x4x16x16xf32, #tpu.memory_space<vmem>>, vector<1x1x4x16x16xf32>,
    %c2 = arith.constant 2 : index
    %c0_33 = arith.constant 0 : index
    %c0_34 = arith.constant 0 : index
    %34 = vector.load %arg3[%c2, %c0_33, %c0_34] : memref<3x16x16xf32, #tpu.memory_space<vmem>>, vector<1x16x16xf32>
    %35 = vector.shape_cast %34 : vector<1x16x16xf32> to vector<16x16xf32>
    %c2_35 = arith.constant 2 : index
    %c0_36 = arith.constant 0 : index
    %c0_37 = arith.constant 0 : index
    %36 = vector.load %arg2[%c2_35, %c0_36, %c0_37] : memref<3x16x16xf32, #tpu.memory_space<vmem>>, vector<1x16x16xf32>
    %37 = vector.shape_cast %36 : vector<1x16x16xf32> to vector<16x16xf32>
    %cst_38 = arith.constant dense<0.000000e+00> : vector<64x16xf32>
    %38 = tpu.matmul %5, %35, %cst_38 {dimension_numbers = #tpu.dot_dimension_numbers<[1], [0], [0], [1], [0, 0, 1, 1], [], []>, precision = #tpu.contract_precision<fp32>} : vector<64x16xf32>, vector<16x16xf32>, vector<64x16xf32> -> vector<64x16xf32>
    %39 = vector.shape_cast %38 : vector<64x16xf32> to vector<4x16x16xf32>
    %40 = vector.shape_cast %37 : vector<16x16xf32> to vector<1x16x16xf32>
    %41 = vector.broadcast %40 : vector<1x16x16xf32> to vector<4x16x16xf32>
    "tpu.trace_start"() <{level = 10 : i32, message = "cih,chv->civ"}> : () -> ()
    %cst_39 = arith.constant dense<0.000000e+00> : vector<4x16x16xf32>
    %42 = tpu.matmul %41, %39, %cst_39 {dimension_numbers = #tpu.dot_dimension_numbers<[2], [1], [1], [2], [0, 0, 0, 1, 1, 2], [0], [0]>, precision = #tpu.contract_precision<fp32>} : vector<4x16x16xf32>, vector<4x16x16xf32>, vector<4x16x16xf32> -> vector<4x16x16xf32>
    "tpu.trace_stop"() : () -> ()
    %cst_40 = arith.constant 5.917160e-03 : f32
    %43 = vector.broadcast %cst_40 : f32 to vector<4x16x16xf32>
    %44 = arith.mulf %42, %43 : vector<4x16x16xf32>
    %c0_41 = arith.constant 0 : index
    %c2_42 = arith.constant 2 : index
    %c0_43 = arith.constant 0 : index
    %c0_44 = arith.constant 0 : index
    %c0_45 = arith.constant 0 : index
    %45 = vector.load %arg4[%c0_41, %c2_42, %c0_43, %c0_44, %c0_45] : memref<1x4x4x16x16xf32, #tpu.memory_space<vmem>>, vector<1x1x4x16x16xf32>
    %46 = vector.shape_cast %45 : vector<1x1x4x16x16xf32> to vector<4x16x16xf32>
    %47 = vector.shape_cast %44 : vector<4x16x16xf32> to vector<1x1x4x16x16xf32>
    tpu.vector_store %arg4[%c0_41, %c2_42, %c0_43, %c0_44, %c0_45], %47 {strides = array<i32>} : memref<1x4x4x16x16xf32, #tpu.memory_space<vmem>>, vector<1x1x4x16x16xf32>,
    return
  }
  func.func @transform_0(%arg0: i32) -> (i32, i32, i32, i32) {
    %c0_i32 = arith.constant 0 : i32
    %c0_i32_0 = arith.constant 0 : i32
    %c0_i32_1 = arith.constant 0 : i32
    %c0_i32_2 = arith.constant 0 : i32
    return %arg0, %c0_i32, %c0_i32_0, %c0_i32_1 : i32, i32, i32, i32
  }
  func.func @transform_1(%arg0: i32) -> (i32, i32, i32) {
    %c0_i32 = arith.constant 0 : i32
    %c0_i32_0 = arith.constant 0 : i32
    %c0_i32_1 = arith.constant 0 : i32
    %c0_i32_2 = arith.constant 0 : i32
    return %c0_i32, %c0_i32_0, %c0_i32_1 : i32, i32, i32
  }
  func.func @transform_2(%arg0: i32) -> (i32, i32, i32) {
    %c0_i32 = arith.constant 0 : i32
    %c0_i32_0 = arith.constant 0 : i32
    %c0_i32_1 = arith.constant 0 : i32
    %c0_i32_2 = arith.constant 0 : i32
    return %c0_i32, %c0_i32_0, %c0_i32_1 : i32, i32, i32
  }
  func.func @transform_3(%arg0: i32) -> (i32, i32, i32, i32, i32) {
    %c0_i32 = arith.constant 0 : i32
    %c0_i32_0 = arith.constant 0 : i32
    %c0_i32_1 = arith.constant 0 : i32
    %c0_i32_2 = arith.constant 0 : i32
    %c0_i32_3 = arith.constant 0 : i32
    return %arg0, %c0_i32, %c0_i32_0, %c0_i32_1, %c0_i32_2 : i32, i32, i32, i32, i32
  }
}

</mosaic_0001>

<llo_original>
// kernel: tpu_custom_call.1
$region0: #{tpu_custom_call.1}
  #allocation0 [shape = 'u32[]', space=smem, size = 0x4, offset = 0x4, fixed_abs, tag = 'smem constant byte address 0x4 - core index']
  #allocation1 [shape = 'u32[144,128]{1,0:T(1,128)}', space=vmem, size = 0x12000, scoped, tag = 'internal scratch']
  %s0 = inlined_call_operand.hbm [shape: f32[2,4,16,16], index: 0, kind: input, shape index: {}]
  %s1 = inlined_call_operand.hbm [shape: f32[3,16,16], index: 1, kind: input, shape index: {}]
  %s2 = inlined_call_operand.hbm [shape: f32[3,16,16], index: 2, kind: input, shape index: {}]
  %s3 = inlined_call_operand.hbm [shape: f32[2,4,4,16,16], index: 3, kind: output, shape index: {}]
  %s4 = sld [smem:[#allocation0]]
  $region57: #{tpu_custom_call.1} parent=0
    _
  %s6 = ssub.s32 1, %s4
  %s7 = scalar_select 0, %s6, %s4
  $region1: #{tpu_custom_call.1} parent=0
    #allocation2 [shape = 'u8[65536]{0}', space=vmem, size = 0x10000, scoped, tag = 'input window, operand 0']
    #allocation3 [shape = 's32[2]{0}', space=sflag, size = 0x8, scoped, tag = 'scoped memory for tpu_custom_call.1']
    #allocation4 [shape = 's32[2]{0}', space=sflag, size = 0x8, scoped, tag = 'scoped memory for tpu_custom_call.1']
    #allocation5 [shape = 'u8[24576]{0}', space=vmem, size = 0x6000, scoped, tag = 'input window, operand 1, single buffered']
    #allocation6 [shape = 's32[1]{0}', space=sflag, size = 0x4, scoped, tag = 'scoped memory for tpu_custom_call.1']
    #allocation7 [shape = 'u8[24576]{0}', space=vmem, size = 0x6000, scoped, tag = 'input window, operand 2, single buffered']
    #allocation8 [shape = 'u8[262144]{0}', space=vmem, size = 0x40000, scoped, tag = 'output window, operand 0']
    %8 = vsyncpa [#allocation3], 0
    %s9 = scalar_lea.sflag [#allocation3], 1
    %10 = vsyncpa %s9, 0
    %11 = vsyncpa [#allocation6], 0
    %12 = vsyncpa [#allocation4], 0
    %s13 = scalar_lea.sflag [#allocation4], 1
    %14 = vsyncpa %s13, 0
    loop: start=0, step=1, limit=4
    $region2: #{tpu_custom_call.1} parent=1 // loop_pre_header
      _
    $region3: #{tpu_custom_call.1} parent=1 // loop_header
      %s16 = sphi 0, %s20
      %p17 = scmp.ge.s32.totalorder %s16, 4
      %s26 = sphi 0, %s28
      %s29 = sphi 0, %s26
      %s30 = sphi 0, %s29
      %s46 = sphi 0, %s30
      %s50 = sphi 0, %s50
      %s52 = sphi 0, %s50
      %s53 = sphi 0, %s52
      %s67 = sphi 0, %s53
      %s71 = sphi 0, %s71
      %s73 = sphi 0, %s71
      %s74 = sphi 0, %s73
      %s88 = sphi 0, %s74
      %s94 = sphi 0, %s96
      %s97 = sphi 0, %s94
      %s98 = sphi 0, %s97
      %s114 = sphi 0, %s98
    $region4: #{tpu_custom_call.1} parent=1 // loop_header_branch
      %19 = sbr.rel (%p17) target = $region8
    $region5: #{tpu_custom_call.1} parent=1 // loop_body
      %s21 = ssub.s32 %s16, 1
      %s22 = ssub.s32 %s16, 2
      %s23 = sadd.s32 %s16, 1
      %s24 = ssub.s32 %s16, %s23
      %p25 = scmp.eq.s32.totalorder %s24, 0
      %s27 = sadd.s32 %s26, 1
      %s28 = scalar_select %p25, %s26, %s27
      %p31 = pneg %p25
      %p32 = scmp.eq.s32.totalorder %s16, 1
      %p33 = por %p31, %p32
      %p34 = scmp.ne.s32.totalorder %s26, %s29
      %p35 = scmp.eq.s32.totalorder %s16, 0
      %p36 = por %p34, %p35
      %p37 = scmp.ne.s32.totalorder %s26, %s29
      %p38 = scmp.eq.s32.totalorder %s21, 1
      %p39 = por %p37, %p38
      %p40 = scmp.ne.s32.totalorder %s29, %s30
      %p41 = scmp.eq.s32.totalorder %s21, 0
      %p42 = por %p40, %p41
      %p43 = scmp.ne.s32.totalorder %s29, %s30
      %p44 = scmp.eq.s32.totalorder %s22, 1
      %p45 = por %p43, %p44
      %p47 = scmp.ne.s32.totalorder %s30, %s46
      %p48 = scmp.eq.s32.totalorder %s22, 0
      %p49 = por %p47, %p48
      %s51 = sadd.s32 %s50, 1
      %p54 = scmp.eq.s32.totalorder %s16, 1
      %p55 = scmp.ne.s32.totalorder %s50, %s52
      %p56 = scmp.eq.s32.totalorder %s16, 0
      %p57 = por %p55, %p56
      %p58 = scmp.ne.s32.totalorder %s50, %s52
      %p59 = scmp.eq.s32.totalorder %s21, 1
      %p60 = por %p58, %p59
      %p61 = scmp.ne.s32.totalorder %s52, %s53
      %p62 = scmp.eq.s32.totalorder %s21, 0
      %p63 = por %p61, %p62
      %p64 = scmp.ne.s32.totalorder %s52, %s53
      %p65 = scmp.eq.s32.totalorder %s22, 1
      %p66 = por %p64, %p65
      %p68 = scmp.ne.s32.totalorder %s53, %s67
      %p69 = scmp.eq.s32.totalorder %s22, 0
      %p70 = por %p68, %p69
      %s72 = sadd.s32 %s71, 1
      %p75 = scmp.eq.s32.totalorder %s16, 1
      %p76 = scmp.ne.s32.totalorder %s71, %s73
      %p77 = scmp.eq.s32.totalorder %s16, 0
      %p78 = por %p76, %p77
      %p79 = scmp.ne.s32.totalorder %s71, %s73
      %p80 = scmp.eq.s32.totalorder %s21, 1
      %p81 = por %p79, %p80
      %p82 = scmp.ne.s32.totalorder %s73, %s74
      %p83 = scmp.eq.s32.totalorder %s21, 0
      %p84 = por %p82, %p83
      %p85 = scmp.ne.s32.totalorder %s73, %s74
      %p86 = scmp.eq.s32.totalorder %s22, 1
      %p87 = por %p85, %p86
      %p89 = scmp.ne.s32.totalorder %s74, %s88
      %p90 = scmp.eq.s32.totalorder %s22, 0
      %p91 = por %p89, %p90
      %s92 = ssub.s32 %s16, %s23
      %p93 = scmp.eq.s32.totalorder %s92, 0
      %s95 = sadd.s32 %s94, 1
      %s96 = scalar_select %p93, %s94, %s95
      %p99 = pneg %p93
      %p100 = scmp.eq.s32.totalorder %s16, 1
      %p101 = por %p99, %p100
      %p102 = scmp.ne.s32.totalorder %s94, %s97
      %p103 = scmp.eq.s32.totalorder %s16, 0
      %p104 = por %p102, %p103
      %p105 = scmp.ne.s32.totalorder %s94, %s97
      %p106 = scmp.eq.s32.totalorder %s21, 1
      %p107 = por %p105, %p106
      %p108 = scmp.ne.s32.totalorder %s97, %s98
      %p109 = scmp.eq.s32.totalorder %s21, 0
      %p110 = por %p108, %p109
      %p111 = scmp.ne.s32.totalorder %s97, %s98
      %p112 = scmp.eq.s32.totalorder %s22, 1
      %p113 = por %p111, %p112
      %p115 = scmp.ne.s32.totalorder %s98, %s114
      %p116 = scmp.eq.s32.totalorder %s22, 0
      %p117 = por %p115, %p116
      %p118 = scmp.le.s32.totalorder 1, %s16
      %p119 = scmp.lt.s32.totalorder %s16, 3
      %p120 = pnand %p118, %p119
      %p121 = pneg %p120
      // Predicated region
      $region9: #{tpu_custom_call.1} parent=5 // pred_check
        _
      $region10: #{tpu_custom_call.1} parent=5 // pred_check_branch
        %123 = sbr.rel (%p120) target = $region12
      $region11: #{tpu_custom_call.1} parent=5 // pred_region
        %s124 = ssub.s32 %s16, 1
        // Predicated region
        $region13: #{tpu_custom_call.1} parent=11 // pred_check
          %p125 = pneg %p63
        $region14: #{tpu_custom_call.1} parent=11 // pred_check_branch
          %127 = sbr.rel (%p125) target = $region16
        $region15: #{tpu_custom_call.1} parent=11 // pred_region
          %s129 = ssub.s32 768, 768
          %130 = vsyncadd [#allocation6], %s129
          %s131 = sshll.u32 [#allocation5], 4
          %s132 = int_to_ptr.vmem [resolvable:$true] %s131
          %137 = dma.hbm_to_vmem [thread:$0]  %s1, 768, %s132, [#allocation6], 128, 128, 8
        $region16: #{tpu_custom_call.1} parent=11 // pred_fallthru
          _
        // Predicated region
        $region17: #{tpu_custom_call.1} parent=11 // pred_check
          %p138 = pneg %p84
        $region18: #{tpu_custom_call.1} parent=11 // pred_check_branch
          %140 = sbr.rel (%p138) target = $region20
        $region19: #{tpu_custom_call.1} parent=11 // pred_region
          %s142 = ssub.s32 768, 768
          %143 = vsyncadd [#allocation6], %s142
          %s144 = sshll.u32 [#allocation7], 4
          %s145 = int_to_ptr.vmem [resolvable:$true] %s144
          %150 = dma.hbm_to_vmem [thread:$0]  %s2, 768, %s145, [#allocation6], 128, 128, 8
        $region20: #{tpu_custom_call.1} parent=11 // pred_fallthru
          _
      $region12: #{tpu_custom_call.1} parent=5 // pred_fallthru
        _
      %p151 = scmp.lt.s32.totalorder %s16, 2
      // Predicated region
      $region21: #{tpu_custom_call.1} parent=5 // pred_check
        %p152 = pneg %p151
      $region22: #{tpu_custom_call.1} parent=5 // pred_check_branch
        %154 = sbr.rel (%p152) target = $region24
      $region23: #{tpu_custom_call.1} parent=5 // pred_region
        // Predicated region
        $region25: #{tpu_custom_call.1} parent=23 // pred_check
          %p155 = pneg %p36
        $region26: #{tpu_custom_call.1} parent=23 // pred_check_branch
          %157 = sbr.rel (%p155) target = $region28
        $region27: #{tpu_custom_call.1} parent=23 // pred_region
          %s158 = sand.u32 %s26, 1
          %s159 = scalar_lea.sflag [#allocation3], %s158
          %s160 = sand.u32 %s26, 1
          %s161 = smul.addr %s160, 64
          %s162 = scalar_lea.vmem [#allocation2], %s161
          %s164 = ssub.s32 1024, 1024
          %165 = vsyncadd %s159, %s164
          %s166 = smul.addr %s16, 8
          %s167 = smul.addr %s166, 128
          %s168 = scalar_lea.hbm %s0, %s167
          %s169 = sshll.u32 %s162, 4
          %s170 = int_to_ptr.vmem [resolvable:$true] %s169
          %175 = dma.hbm_to_vmem [thread:$0]  %s168, 1024, %s170, %s159, 128, 128, 8
        $region28: #{tpu_custom_call.1} parent=23 // pred_fallthru
          _
      $region24: #{tpu_custom_call.1} parent=5 // pred_fallthru
        _
      %p176 = scmp.le.s32.totalorder 1, %s16
      %p177 = scmp.lt.s32.totalorder %s16, 3
      %p178 = pnand %p176, %p177
      %p179 = pneg %p178
      // Predicated region
      $region29: #{tpu_custom_call.1} parent=5 // pred_check
        _
      $region30: #{tpu_custom_call.1} parent=5 // pred_check_branch
        %181 = sbr.rel (%p178) target = $region32
      $region31: #{tpu_custom_call.1} parent=5 // pred_region
        %s182 = ssub.s32 %s16, 1
        %s183 = sand.u32 %s29, 1
        %s184 = scalar_lea.sflag [#allocation3], %s183
        %s185 = sand.u32 %s29, 1
        %s186 = smul.addr %s185, 64
        %s187 = scalar_lea.vmem [#allocation2], %s186
        // Predicated region
        $region33: #{tpu_custom_call.1} parent=31 // pred_check
          %p188 = pneg %p42
        $region34: #{tpu_custom_call.1} parent=31 // pred_check_branch
          %190 = sbr.rel (%p188) target = $region36
        $region35: #{tpu_custom_call.1} parent=31 // pred_region
          %191 = dma.done %s184, 1024
        $region36: #{tpu_custom_call.1} parent=31 // pred_fallthru
          _
        // Predicated region
        $region37: #{tpu_custom_call.1} parent=31 // pred_check
          %p192 = pneg %p63
        $region38: #{tpu_custom_call.1} parent=31 // pred_check_branch
          %194 = sbr.rel (%p192) target = $region40
        $region39: #{tpu_custom_call.1} parent=31 // pred_region
          %195 = dma.done [#allocation6], 768
        $region40: #{tpu_custom_call.1} parent=31 // pred_fallthru
          _
        // Predicated region
        $region41: #{tpu_custom_call.1} parent=31 // pred_check
          %p196 = pneg %p84
        $region42: #{tpu_custom_call.1} parent=31 // pred_check_branch
          %198 = sbr.rel (%p196) target = $region44
        $region43: #{tpu_custom_call.1} parent=31 // pred_region
          %199 = dma.done [#allocation6], 768
        $region44: #{tpu_custom_call.1} parent=31 // pred_fallthru
          _
        %s200 = sand.u32 %s29, 1
        %s201 = scalar_lea.sflag [#allocation3], %s200
        %s202 = sand.u32 %s29, 1
        %s203 = smul.addr %s202, 64
        %s204 = scalar_lea.vmem [#allocation2], %s203
        %p205 = pneg %p42
        %p206 = pneg %p39
        %p207 = pneg %p63
        %p208 = pneg %p60
        %p209 = pneg %p84
        %p210 = pneg %p81
        %p211 = pneg %p110
        %p212 = pneg %p107
        %s213 = sand.u32 %s97, 1
        %s214 = scalar_lea.sflag [#allocation4], %s213
        %s215 = sand.u32 %s97, 1
        %s216 = smul.addr %s215, 256
        %s217 = scalar_lea.vmem [#allocation8], %s216
        %v218 = vld [vmem:[%s187] sm:$0xff]
        %v219 = vld [vmem:[%s187 + $0x8] sm:$0xff]
        %v220 = vld [vmem:[%s187 + $0x10] sm:$0xff]
        %v221 = vld [vmem:[%s187 + $0x18] sm:$0xff]
        %v222 = vld [vmem:[%s187 + $0x20] sm:$0xff]
        %v223 = vld [vmem:[%s187 + $0x28] sm:$0xff]
        %v224 = vld [vmem:[%s187 + $0x30] sm:$0xff]
        %v225 = vld [vmem:[%s187 + $0x38] sm:$0xff]
        %s226 = scalar_lea.vmem %s217, 192 [#allocation8]
        %vm227 = vcmask 130048
        %228 = vst.msk [vmem:[%s226] sm:$0xff] %vm227, %v218
        %229 = vst.msk [vmem:[%s226 + $0x8] sm:$0xff] %vm227, %v219
        %230 = vst.msk [vmem:[%s226 + $0x10] sm:$0xff] %vm227, %v220
        %231 = vst.msk [vmem:[%s226 + $0x18] sm:$0xff] %vm227, %v221
        %232 = vst.msk [vmem:[%s226 + $0x20] sm:$0xff] %vm227, %v222
        %233 = vst.msk [vmem:[%s226 + $0x28] sm:$0xff] %vm227, %v223
        %234 = vst.msk [vmem:[%s226 + $0x30] sm:$0xff] %vm227, %v224
        %235 = vst.msk [vmem:[%s226 + $0x38] sm:$0xff] %vm227, %v225
        %v236 = vld [vmem:[#allocation7] sm:$0xff]
        %v237 = vld [vmem:[#allocation7 + $0x8] sm:$0xff]
        %v238 = vld [vmem:[#allocation5] sm:$0xff]
        %v239 = vld [vmem:[#allocation5 + $0x8] sm:$0xff]
        %v241 = vsel %vm227, %v218, 0
        %v244 = vsel %vm227, %v219, 0
        %v247 = vsel %vm227, %v220, 0
        %v250 = vsel %vm227, %v221, 0
        %v253 = vsel %vm227, %v222, 0
        %v256 = vsel %vm227, %v223, 0
        %v259 = vsel %vm227, %v224, 0
        %v262 = vsel %vm227, %v225, 0
        %264 = vmatprep.subr.mxu0 0.0
        %v265 = vand.u32 %v236, 4294901760
        %266 = vmatpush1.msra.mxu0 %v265
        %267 = vmatprep.subr.mxu0 0.0
        %v268 = vand.u32 %v237, 4294901760
        %269 = vmatpush1.msra.mxu0 %v268
        %270 = vmatprep.subr.mxu0 0.0
        %271 = vmatpush1.msra.mxu0 0.0
        %272 = vmatprep.subr.mxu0 0.0
        %273 = vmatpush1.msra.mxu0 0.0
        %274 = vmatprep.subr.mxu0 0.0
        %275 = vmatpush1.msra.mxu0 0.0
        %276 = vmatprep.subr.mxu0 0.0
        %277 = vmatpush1.msra.mxu0 0.0
        %278 = vmatprep.subr.mxu0 0.0
        %279 = vmatpush1.msra.mxu0 0.0
        %280 = vmatprep.subr.mxu0 0.0
        %281 = vmatpush1.msra.mxu0 0.0
        %282 = vmatprep.subr.mxu0 0.0
        %283 = vmatpush1.msra.mxu0 0.0
        %284 = vmatprep.subr.mxu0 0.0
        %285 = vmatpush1.msra.mxu0 0.0
        %286 = vmatprep.subr.mxu0 0.0
        %287 = vmatpush1.msra.mxu0 0.0
        %288 = vmatprep.subr.mxu0 0.0
        %289 = vmatpush1.msra.mxu0 0.0
        %290 = vmatprep.subr.mxu0 0.0
        %291 = vmatpush1.msra.mxu0 0.0
        %292 = vmatprep.subr.mxu0 0.0
        %293 = vmatpush1.msra.mxu0 0.0
        %294 = vmatprep.subr.mxu0 0.0
        %295 = vmatpush1.msra.mxu0 0.0
        %296 = vmatprep.subr.mxu0 0.0
        %297 = vmatpush1.msra.mxu0 0.0
        %298 = vmatprep.subr.mxu0 0.0
        %299 = vmatpush1.msra.mxu0 0.0
        %300 = vmatprep.subr.mxu0 0.0
        %301 = vmatpush1.msra.mxu0 0.0
        %302 = vmatprep.subr.mxu0 0.0
        %303 = vmatpush1.msra.mxu0 0.0
        %304 = vmatprep.subr.mxu0 0.0
        %305 = vmatpush1.msra.mxu0 0.0
        %306 = vmatprep.subr.mxu0 0.0
        %307 = vmatpush1.msra.mxu0 0.0
        %308 = vmatprep.subr.mxu0 0.0
        %309 = vmatpush1.msra.mxu0 0.0
        %310 = vmatprep.subr.mxu0 0.0
        %311 = vmatpush1.msra.mxu0 0.0
        %312 = vmatprep.subr.mxu0 0.0
        %313 = vmatpush1.msra.mxu0 0.0
        %314 = vmatprep.subr.mxu0 0.0
        %315 = vmatpush1.msra.mxu0 0.0
        %316 = vmatprep.subr.mxu0 0.0
        %317 = vmatpush1.msra.mxu0 0.0
        %318 = vmatprep.subr.mxu0 0.0
        %319 = vmatpush1.msra.mxu0 0.0
        %320 = vmatprep.subr.mxu0 0.0
        %321 = vmatpush1.msra.mxu0 0.0
        %322 = vmatprep.subr.mxu0 0.0
        %323 = vmatpush1.msra.mxu0 0.0
        %324 = vmatprep.subr.mxu0 0.0
        %325 = vmatpush1.msra.mxu0 0.0
        %326 = vmatprep.subr.mxu0 0.0
        %327 = vmatpush1.msra.mxu0 0.0
        %328 = vmatprep.subr.mxu0 0.0
        %329 = vmatpush1.msra.mxu0 0.0
        %330 = vmatprep.mubr.f32.mxu0 0.0
        %v331 = vand.u32 %v241, 4294901760
        %v332 = vsub.f32 %v241, %v331
        %v333 = vand.u32 %v332, 4294901760
        %v334 = vsub.f32 %v332, %v333
        %v335 = vand.u32 %v334, 4294901760
        %336 = vmatmul.mubr.f32.gmra.mrb[0].mxu0 %v335
        %v337 = vpop.f32.mrb[0].mxu0
        %v338 = vadd.f32 0.0, %v337
        %v339 = vpop.f32.mrb[0].mxu0
        %340 = vmatprep.mubr.f32.mxu0 0.0
        %v341 = vand.u32 %v244, 4294901760
        %v342 = vsub.f32 %v244, %v341
        %v343 = vand.u32 %v342, 4294901760
        %v344 = vsub.f32 %v342, %v343
        %v345 = vand.u32 %v344, 4294901760
        %346 = vmatmul.mubr.f32.gmra.mrb[0].mxu0 %v345
        %v347 = vpop.f32.mrb[0].mxu0
        %v348 = vadd.f32 0.0, %v347
        %v349 = vpop.f32.mrb[0].mxu0
        %350 = vmatprep.mubr.f32.mxu0 0.0
        %v351 = vand.u32 %v247, 4294901760
        %v352 = vsub.f32 %v247, %v351
        %v353 = vand.u32 %v352, 4294901760
        %v354 = vsub.f32 %v352, %v353
        %v355 = vand.u32 %v354, 4294901760
        %356 = vmatmul.mubr.f32.gmra.mrb[0].mxu0 %v355
        %v357 = vpop.f32.mrb[0].mxu0
        %v358 = vadd.f32 0.0, %v357
        %v359 = vpop.f32.mrb[0].mxu0
        %360 = vmatprep.mubr.f32.mxu0 0.0
        %v361 = vand.u32 %v250, 4294901760
        %v362 = vsub.f32 %v250, %v361
        %v363 = vand.u32 %v362, 4294901760
        %v364 = vsub.f32 %v362, %v363
        %v365 = vand.u32 %v364, 4294901760
        %366 = vmatmul.mubr.f32.gmra.mrb[0].mxu0 %v365
        %v367 = vpop.f32.mrb[0].mxu0
        %v368 = vadd.f32 0.0, %v367
        %v369 = vpop.f32.mrb[0].mxu0
        %370 = vmatprep.mubr.f32.mxu0 0.0
        %v371 = vand.u32 %v253, 4294901760
        %v372 = vsub.f32 %v253, %v371
        %v373 = vand.u32 %v372, 4294901760
        %v374 = vsub.f32 %v372, %v373
        %v375 = vand.u32 %v374, 4294901760
        %376 = vmatmul.mubr.f32.gmra.mrb[0].mxu0 %v375
        %v377 = vpop.f32.mrb[0].mxu0
        %v378 = vadd.f32 0.0, %v377
        %v379 = vpop.f32.mrb[0].mxu0
        %380 = vmatprep.mubr.f32.mxu0 0.0
        %v381 = vand.u32 %v256, 4294901760
        %v382 = vsub.f32 %v256, %v381
        %v383 = vand.u32 %v382, 4294901760
        %v384 = vsub.f32 %v382, %v383
        %v385 = vand.u32 %v384, 4294901760
        %386 = vmatmul.mubr.f32.gmra.mrb[0].mxu0 %v385
        %v387 = vpop.f32.mrb[0].mxu0
        %v388 = vadd.f32 0.0, %v387
        %v389 = vpop.f32.mrb[0].mxu0
        %390 = vmatprep.mubr.f32.mxu0 0.0
        %v391 = vand.u32 %v259, 4294901760
        %v392 = vsub.f32 %v259, %v391
        %v393 = vand.u32 %v392, 4294901760
        %v394 = vsub.f32 %v392, %v393
        %v395 = vand.u32 %v394, 4294901760
        %396 = vmatmul.mubr.f32.gmra.mrb[0].mxu0 %v395
        %v397 = vpop.f32.mrb[0].mxu0
        %v398 = vadd.f32 0.0, %v397
        %v399 = vpop.f32.mrb[0].mxu0
        %400 = vmatprep.mubr.f32.mxu0 0.0
        %v401 = vand.u32 %v262, 4294901760
        %v402 = vsub.f32 %v262, %v401
        %v403 = vand.u32 %v402, 4294901760
        %v404 = vsub.f32 %v402, %v403
        %v405 = vand.u32 %v404, 4294901760
        %406 = vmatmul.mubr.f32.gmra.mrb[0].mxu0 %v405
        %v407 = vpop.f32.mrb[0].mxu0
        %v408 = vadd.f32 0.0, %v407
        %v409 = vpop.f32.mrb[0].mxu0
        %410 = vdwg.mxu0
        %411 = vmatprep.subr.mxu0 0.0
        %v412 = vand.u32 %v236, 4294901760
        %v413 = vsub.f32 %v236, %v412
        %v414 = vand.u32 %v413, 4294901760
        %v415 = vsub.f32 %v413, %v414
        %v416 = vand.u32 %v415, 4294901760
        %417 = vmatpush1.msra.mxu0 %v416
        %418 = vmatprep.subr.mxu0 0.0
        %v419 = vand.u32 %v237, 4294901760
        %v420 = vsub.f32 %v237, %v419
        %v421 = vand.u32 %v420, 4294901760
        %v422 = vsub.f32 %v420, %v421
        %v423 = vand.u32 %v422, 4294901760
        %424 = vmatpush1.msra.mxu0 %v423
        %425 = vmatprep.subr.mxu0 0.0
        %426 = vmatpush1.msra.mxu0 0.0
        %427 = vmatprep.subr.mxu0 0.0
        %428 = vmatpush1.msra.mxu0 0.0
        %429 = vmatprep.subr.mxu0 0.0
        %430 = vmatpush1.msra.mxu0 0.0
        %431 = vmatprep.subr.mxu0 0.0
        %432 = vmatpush1.msra.mxu0 0.0
        %433 = vmatprep.subr.mxu0 0.0
        %434 = vmatpush1.msra.mxu0 0.0
        %435 = vmatprep.subr.mxu0 0.0
        %436 = vmatpush1.msra.mxu0 0.0
        %437 = vmatprep.subr.mxu0 0.0
        %438 = vmatpush1.msra.mxu0 0.0
        %439 = vmatprep.subr.mxu0 0.0
        %440 = vmatpush1.msra.mxu0 0.0
        %441 = vmatprep.subr.mxu0 0.0
        %442 = vmatpush1.msra.mxu0 0.0
        %443 = vmatprep.subr.mxu0 0.0
        %444 = vmatpush1.msra.mxu0 0.0
        %445 = vmatprep.subr.mxu0 0.0
        %446 = vmatpush1.msra.mxu0 0.0
        %447 = vmatprep.subr.mxu0 0.0
        %448 = vmatpush1.msra.mxu0 0.0
        %449 = vmatprep.subr.mxu0 0.0
        %450 = vmatpush1.msra.mxu0 0.0
        %451 = vmatprep.subr.mxu0 0.0
        %452 = vmatpush1.msra.mxu0 0.0
        %453 = vmatprep.subr.mxu0 0.0
        %454 = vmatpush1.msra.mxu0 0.0
        %455 = vmatprep.subr.mxu0 0.0
        %456 = vmatpush1.msra.mxu0 0.0
        %457 = vmatprep.subr.mxu0 0.0
        %458 = vmatpush1.msra.mxu0 0.0
        %459 = vmatprep.subr.mxu0 0.0
        %460 = vmatpush1.msra.mxu0 0.0
        %461 = vmatprep.subr.mxu0 0.0
        %462 = vmatpush1.msra.mxu0 0.0
        %463 = vmatprep.subr.mxu0 0.0
        %464 = vmatpush1.msra.mxu0 0.0
        %465 = vmatprep.subr.mxu0 0.0
        %466 = vmatpush1.msra.mxu0 0.0
        %467 = vmatprep.subr.mxu0 0.0
        %468 = vmatpush1.msra.mxu0 0.0
        %469 = vmatprep.subr.mxu0 0.0
        %470 = vmatpush1.msra.mxu0 0.0
        %471 = vmatprep.subr.mxu0 0.0
        %472 = vmatpush1.msra.mxu0 0.0
        %473 = vmatprep.subr.mxu0 0.0
        %474 = vmatpush1.msra.mxu0 0.0
        %475 = vmatprep.subr.mxu0 0.0
        %476 = vmatpush1.msra.mxu0 0.0
        %477 = vmatprep.subr.mxu0 0.0
        %478 = vmatpush1.msra.mxu0 0.0
        %479 = vmatprep.subr.mxu0 0.0
        %480 = vmatpush1.msra.mxu0 0.0
        %481 = vmatprep.subr.mxu0 0.0
        %482 = vmatpush1.msra.mxu0 0.0
        %483 = vmatprep.subr.mxu0 0.0
        %484 = vmatpush1.msra.mxu0 0.0
        %485 = vmatprep.mubr.f32.mxu0 0.0
        %v486 = vand.u32 %v241, 4294901760
        %487 = vmatmul.mubr.f32.gmra.mrb[0].mxu0 %v486
        %v488 = vpop.f32.mrb[0].mxu0
        %v489 = vadd.f32 %v338, %v488
        %v490 = vpop.f32.mrb[0].mxu0
        %491 = vmatprep.mubr.f32.mxu0 0.0
        %v492 = vand.u32 %v244, 4294901760
        %493 = vmatmul.mubr.f32.gmra.mrb[0].mxu0 %v492
        %v494 = vpop.f32.mrb[0].mxu0
        %v495 = vadd.f32 %v348, %v494
        %v496 = vpop.f32.mrb[0].mxu0
        %497 = vmatprep.mubr.f32.mxu0 0.0
        %v498 = vand.u32 %v247, 4294901760
        %499 = vmatmul.mubr.f32.gmra.mrb[0].mxu0 %v498
        %v500 = vpop.f32.mrb[0].mxu0
        %v501 = vadd.f32 %v358, %v500
        %v502 = vpop.f32.mrb[0].mxu0
        %503 = vmatprep.mubr.f32.mxu0 0.0
        %v504 = vand.u32 %v250, 4294901760
        %505 = vmatmul.mubr.f32.gmra.mrb[0].mxu0 %v504
        %v506 = vpop.f32.mrb[0].mxu0
        %v507 = vadd.f32 %v368, %v506
        %v508 = vpop.f32.mrb[0].mxu0
        %509 = vmatprep.mubr.f32.mxu0 0.0
        %v510 = vand.u32 %v253, 4294901760
        %511 = vmatmul.mubr.f32.gmra.mrb[0].mxu0 %v510
        %v512 = vpop.f32.mrb[0].mxu0
        %v513 = vadd.f32 %v378, %v512
        %v514 = vpop.f32.mrb[0].mxu0
        %515 = vmatprep.mubr.f32.mxu0 0.0
        %v516 = vand.u32 %v256, 4294901760
        %517 = vmatmul.mubr.f32.gmra.mrb[0].mxu0 %v516
        %v518 = vpop.f32.mrb[0].mxu0
        %v519 = vadd.f32 %v388, %v518
        %v520 = vpop.f32.mrb[0].mxu0
        %521 = vmatprep.mubr.f32.mxu0 0.0
        %v522 = vand.u32 %v259, 4294901760
        %523 = vmatmul.mubr.f32.gmra.mrb[0].mxu0 %v522
        %v524 = vpop.f32.mrb[0].mxu0
        %v525 = vadd.f32 %v398, %v524
        %v526 = vpop.f32.mrb[0].mxu0
        %527 = vmatprep.mubr.f32.mxu0 0.0
        %v528 = vand.u32 %v262, 4294901760
        %529 = vmatmul.mubr.f32.gmra.mrb[0].mxu0 %v528
        %v530 = vpop.f32.mrb[0].mxu0
        %v531 = vadd.f32 %v408, %v530
        %v532 = vpop.f32.mrb[0].mxu0
        %533 = vdwg.mxu0
        %534 = vmatprep.subr.mxu0 0.0
        %v535 = vand.u32 %v236, 4294901760
        %v536 = vsub.f32 %v236, %v535
        %537 = vmatpush1.msra.mxu0 %v536
        %538 = vmatprep.subr.mxu0 0.0
        %v539 = vand.u32 %v237, 4294901760
        %v540 = vsub.f32 %v237, %v539
        %541 = vmatpush1.msra.mxu0 %v540
        %542 = vmatprep.subr.mxu0 0.0
        %543 = vmatpush1.msra.mxu0 0.0
        %544 = vmatprep.subr.mxu0 0.0
        %545 = vmatpush1.msra.mxu0 0.0
        %546 = vmatprep.subr.mxu0 0.0
        %547 = vmatpush1.msra.mxu0 0.0
        %548 = vmatprep.subr.mxu0 0.0
        %549 = vmatpush1.msra.mxu0 0.0
        %550 = vmatprep.subr.mxu0 0.0
        %551 = vmatpush1.msra.mxu0 0.0
        %552 = vmatprep.subr.mxu0 0.0
        %553 = vmatpush1.msra.mxu0 0.0
        %554 = vmatprep.subr.mxu0 0.0
        %555 = vmatpush1.msra.mxu0 0.0
        %556 = vmatprep.subr.mxu0 0.0
        %557 = vmatpush1.msra.mxu0 0.0
        %558 = vmatprep.subr.mxu0 0.0
        %559 = vmatpush1.msra.mxu0 0.0
        %560 = vmatprep.subr.mxu0 0.0
        %561 = vmatpush1.msra.mxu0 0.0
        %562 = vmatprep.subr.mxu0 0.0
        %563 = vmatpush1.msra.mxu0 0.0
        %564 = vmatprep.subr.mxu0 0.0
        %565 = vmatpush1.msra.mxu0 0.0
        %566 = vmatprep.subr.mxu0 0.0
        %567 = vmatpush1.msra.mxu0 0.0
        %568 = vmatprep.subr.mxu0 0.0
        %569 = vmatpush1.msra.mxu0 0.0
        %570 = vmatprep.subr.mxu0 0.0
        %571 = vmatpush1.msra.mxu0 0.0
        %572 = vmatprep.subr.mxu0 0.0
        %573 = vmatpush1.msra.mxu0 0.0
        %574 = vmatprep.subr.mxu0 0.0
        %575 = vmatpush1.msra.mxu0 0.0
        %576 = vmatprep.subr.mxu0 0.0
        %577 = vmatpush1.msra.mxu0 0.0
        %578 = vmatprep.subr.mxu0 0.0
        %579 = vmatpush1.msra.mxu0 0.0
        %580 = vmatprep.subr.mxu0 0.0
        %581 = vmatpush1.msra.mxu0 0.0
        %582 = vmatprep.subr.mxu0 0.0
        %583 = vmatpush1.msra.mxu0 0.0
        %584 = vmatprep.subr.mxu0 0.0
        %585 = vmatpush1.msra.mxu0 0.0
        %586 = vmatprep.subr.mxu0 0.0
        %587 = vmatpush1.msra.mxu0 0.0
        %588 = vmatprep.subr.mxu0 0.0
        %589 = vmatpush1.msra.mxu0 0.0
        %590 = vmatprep.subr.mxu0 0.0
        %591 = vmatpush1.msra.mxu0 0.0
        %592 = vmatprep.subr.mxu0 0.0
        %593 = vmatpush1.msra.mxu0 0.0
        %594 = vmatprep.subr.mxu0 0.0
        %595 = vmatpush1.msra.mxu0 0.0
        %596 = vmatprep.subr.mxu0 0.0
        %597 = vmatpush1.msra.mxu0 0.0
        %598 = vmatprep.subr.mxu0 0.0
        %599 = vmatpush1.msra.mxu0 0.0
        %600 = vmatprep.subr.mxu0 0.0
        %601 = vmatpush1.msra.mxu0 0.0
        %602 = vmatprep.mubr.f32.mxu0 0.0
        %v603 = vand.u32 %v241, 4294901760
        %v604 = vsub.f32 %v241, %v603
        %605 = vmatmul.mubr.f32.gmra.mrb[0].mxu0 %v604
        %v606 = vpop.f32.mrb[0].mxu0
        %v607 = vadd.f32 %v489, %v606
        %v608 = vpop.f32.mrb[0].mxu0
        %609 = vmatprep.mubr.f32.mxu0 0.0
        %v610 = vand.u32 %v244, 4294901760
        %v611 = vsub.f32 %v244, %v610
        %612 = vmatmul.mubr.f32.gmra.mrb[0].mxu0 %v611
        %v613 = vpop.f32.mrb[0].mxu0
        %v614 = vadd.f32 %v495, %v613
        %v615 = vpop.f32.mrb[0].mxu0
        %616 = vmatprep.mubr.f32.mxu0 0.0
        %v617 = vand.u32 %v247, 4294901760
        %v618 = vsub.f32 %v247, %v617
        %619 = vmatmul.mubr.f32.gmra.mrb[0].mxu0 %v618
        %v620 = vpop.f32.mrb[0].mxu0
        %v621 = vadd.f32 %v501, %v620
        %v622 = vpop.f32.mrb[0].mxu0
        %623 = vmatprep.mubr.f32.mxu0 0.0
        %v624 = vand.u32 %v250, 4294901760
        %v625 = vsub.f32 %v250, %v624
        %626 = vmatmul.mubr.f32.gmra.mrb[0].mxu0 %v625
        %v627 = vpop.f32.mrb[0].mxu0
        %v628 = vadd.f32 %v507, %v627
        %v629 = vpop.f32.mrb[0].mxu0
        %630 = vmatprep.mubr.f32.mxu0 0.0
        %v631 = vand.u32 %v253, 4294901760
        %v632 = vsub.f32 %v253, %v631
        %633 = vmatmul.mubr.f32.gmra.mrb[0].mxu0 %v632
        %v634 = vpop.f32.mrb[0].mxu0
        %v635 = vadd.f32 %v513, %v634
        %v636 = vpop.f32.mrb[0].mxu0
        %637 = vmatprep.mubr.f32.mxu0 0.0
        %v638 = vand.u32 %v256, 4294901760
        %v639 = vsub.f32 %v256, %v638
        %640 = vmatmul.mubr.f32.gmra.mrb[0].mxu0 %v639
        %v641 = vpop.f32.mrb[0].mxu0
        %v642 = vadd.f32 %v519, %v641
        %v643 = vpop.f32.mrb[0].mxu0
        %644 = vmatprep.mubr.f32.mxu0 0.0
        %v645 = vand.u32 %v259, 4294901760
        %v646 = vsub.f32 %v259, %v645
        %647 = vmatmul.mubr.f32.gmra.mrb[0].mxu0 %v646
        %v648 = vpop.f32.mrb[0].mxu0
        %v649 = vadd.f32 %v525, %v648
        %v650 = vpop.f32.mrb[0].mxu0
        %651 = vmatprep.mubr.f32.mxu0 0.0
        %v652 = vand.u32 %v262, 4294901760
        %v653 = vsub.f32 %v262, %v652
        %654 = vmatmul.mubr.f32.gmra.mrb[0].mxu0 %v653
        %v655 = vpop.f32.mrb[0].mxu0
        %v656 = vadd.f32 %v531, %v655
        %v657 = vpop.f32.mrb[0].mxu0
        %658 = vdwg.mxu0
        %659 = vmatprep.subr.mxu0 0.0
        %v660 = vand.u32 %v236, 4294901760
        %661 = vmatpush1.msra.mxu0 %v660
        %662 = vmatprep.subr.mxu0 0.0
        %v663 = vand.u32 %v237, 4294901760
        %664 = vmatpush1.msra.mxu0 %v663
        %665 = vmatprep.subr.mxu0 0.0
        %666 = vmatpush1.msra.mxu0 0.0
        %667 = vmatprep.subr.mxu0 0.0
        %668 = vmatpush1.msra.mxu0 0.0
        %669 = vmatprep.subr.mxu0 0.0
        %670 = vmatpush1.msra.mxu0 0.0
        %671 = vmatprep.subr.mxu0 0.0
        %672 = vmatpush1.msra.mxu0 0.0
        %673 = vmatprep.subr.mxu0 0.0
        %674 = vmatpush1.msra.mxu0 0.0
        %675 = vmatprep.subr.mxu0 0.0
        %676 = vmatpush1.msra.mxu0 0.0
        %677 = vmatprep.subr.mxu0 0.0
        %678 = vmatpush1.msra.mxu0 0.0
        %679 = vmatprep.subr.mxu0 0.0
        %680 = vmatpush1.msra.mxu0 0.0
        %681 = vmatprep.subr.mxu0 0.0
        %682 = vmatpush1.msra.mxu0 0.0
        %683 = vmatprep.subr.mxu0 0.0
        %684 = vmatpush1.msra.mxu0 0.0
        %685 = vmatprep.subr.mxu0 0.0
        %686 = vmatpush1.msra.mxu0 0.0
        %687 = vmatprep.subr.mxu0 0.0
        %688 = vmatpush1.msra.mxu0 0.0
        %689 = vmatprep.subr.mxu0 0.0
        %690 = vmatpush1.msra.mxu0 0.0
        %691 = vmatprep.subr.mxu0 0.0
        %692 = vmatpush1.msra.mxu0 0.0
        %693 = vmatprep.subr.mxu0 0.0
        %694 = vmatpush1.msra.mxu0 0.0
        %695 = vmatprep.subr.mxu0 0.0
        %696 = vmatpush1.msra.mxu0 0.0
        %697 = vmatprep.subr.mxu0 0.0
        %698 = vmatpush1.msra.mxu0 0.0
        %699 = vmatprep.subr.mxu0 0.0
        %700 = vmatpush1.msra.mxu0 0.0
        %701 = vmatprep.subr.mxu0 0.0
        %702 = vmatpush1.msra.mxu0 0.0
        %703 = vmatprep.subr.mxu0 0.0
        %704 = vmatpush1.msra.mxu0 0.0
        %705 = vmatprep.subr.mxu0 0.0
        %706 = vmatpush1.msra.mxu0 0.0
        %707 = vmatprep.subr.mxu0 0.0
        %708 = vmatpush1.msra.mxu0 0.0
        %709 = vmatprep.subr.mxu0 0.0
        %710 = vmatpush1.msra.mxu0 0.0
        %711 = vmatprep.subr.mxu0 0.0
        %712 = vmatpush1.msra.mxu0 0.0
        %713 = vmatprep.subr.mxu0 0.0
        %714 = vmatpush1.msra.mxu0 0.0
        %715 = vmatprep.subr.mxu0 0.0
        %716 = vmatpush1.msra.mxu0 0.0
        %717 = vmatprep.subr.mxu0 0.0
        %718 = vmatpush1.msra.mxu0 0.0
        %719 = vmatprep.subr.mxu0 0.0
        %720 = vmatpush1.msra.mxu0 0.0
        %721 = vmatprep.subr.mxu0 0.0
        %722 = vmatpush1.msra.mxu0 0.0
        %723 = vmatprep.subr.mxu0 0.0
        %724 = vmatpush1.msra.mxu0 0.0
        %725 = vmatprep.mubr.f32.mxu0 0.0
        %v726 = vand.u32 %v241, 4294901760
        %v727 = vsub.f32 %v241, %v726
        %v728 = vand.u32 %v727, 4294901760
        %729 = vmatmul.mubr.f32.gmra.mrb[0].mxu0 %v728
        %v730 = vpop.f32.mrb[0].mxu0
        %v731 = vadd.f32 %v607, %v730
        %v732 = vpop.f32.mrb[0].mxu0
        %733 = vmatprep.mubr.f32.mxu0 0.0
        %v734 = vand.u32 %v244, 4294901760
        %v735 = vsub.f32 %v244, %v734
        %v736 = vand.u32 %v735, 4294901760
        %737 = vmatmul.mubr.f32.gmra.mrb[0].mxu0 %v736
        %v738 = vpop.f32.mrb[0].mxu0
        %v739 = vadd.f32 %v614, %v738
        %v740 = vpop.f32.mrb[0].mxu0
        %741 = vmatprep.mubr.f32.mxu0 0.0
        %v742 = vand.u32 %v247, 4294901760
        %v743 = vsub.f32 %v247, %v742
        %v744 = vand.u32 %v743, 4294901760
        %745 = vmatmul.mubr.f32.gmra.mrb[0].mxu0 %v744
        %v746 = vpop.f32.mrb[0].mxu0
        %v747 = vadd.f32 %v621, %v746
        %v748 = vpop.f32.mrb[0].mxu0
        %749 = vmatprep.mubr.f32.mxu0 0.0
        %v750 = vand.u32 %v250, 4294901760
        %v751 = vsub.f32 %v250, %v750
        %v752 = vand.u32 %v751, 4294901760
        %753 = vmatmul.mubr.f32.gmra.mrb[0].mxu0 %v752
        %v754 = vpop.f32.mrb[0].mxu0
        %v755 = vadd.f32 %v628, %v754
        %v756 = vpop.f32.mrb[0].mxu0
        %757 = vmatprep.mubr.f32.mxu0 0.0
        %v758 = vand.u32 %v253, 4294901760
        %v759 = vsub.f32 %v253, %v758
        %v760 = vand.u32 %v759, 4294901760
        %761 = vmatmul.mubr.f32.gmra.mrb[0].mxu0 %v760
        %v762 = vpop.f32.mrb[0].mxu0
        %v763 = vadd.f32 %v635, %v762
        %v764 = vpop.f32.mrb[0].mxu0
        %765 = vmatprep.mubr.f32.mxu0 0.0
        %v766 = vand.u32 %v256, 4294901760
        %v767 = vsub.f32 %v256, %v766
        %v768 = vand.u32 %v767, 4294901760
        %769 = vmatmul.mubr.f32.gmra.mrb[0].mxu0 %v768
        %v770 = vpop.f32.mrb[0].mxu0
        %v771 = vadd.f32 %v642, %v770
        %v772 = vpop.f32.mrb[0].mxu0
        %773 = vmatprep.mubr.f32.mxu0 0.0
        %v774 = vand.u32 %v259, 4294901760
        %v775 = vsub.f32 %v259, %v774
        %v776 = vand.u32 %v775, 4294901760
        %777 = vmatmul.mubr.f32.gmra.mrb[0].mxu0 %v776
        %v778 = vpop.f32.mrb[0].mxu0
        %v779 = vadd.f32 %v649, %v778
        %v780 = vpop.f32.mrb[0].mxu0
        %781 = vmatprep.mubr.f32.mxu0 0.0
        %v782 = vand.u32 %v262, 4294901760
        %v783 = vsub.f32 %v262, %v782
        %v784 = vand.u32 %v783, 4294901760
        %785 = vmatmul.mubr.f32.gmra.mrb[0].mxu0 %v784
        %v786 = vpop.f32.mrb[0].mxu0
        %v787 = vadd.f32 %v656, %v786
        %v788 = vpop.f32.mrb[0].mxu0
        %789 = vdwg.mxu0
        %790 = vmatprep.subr.mxu0 0.0
        %v791 = vand.u32 %v236, 4294901760
        %v792 = vsub.f32 %v236, %v791
        %v793 = vand.u32 %v792, 4294901760
        %794 = vmatpush1.msra.mxu0 %v793
        %795 = vmatprep.subr.mxu0 0.0
        %v796 = vand.u32 %v237, 4294901760
        %v797 = vsub.f32 %v237, %v796
        %v798 = vand.u32 %v797, 4294901760
        %799 = vmatpush1.msra.mxu0 %v798
        %800 = vmatprep.subr.mxu0 0.0
        %801 = vmatpush1.msra.mxu0 0.0
        %802 = vmatprep.subr.mxu0 0.0
        %803 = vmatpush1.msra.mxu0 0.0
        %804 = vmatprep.subr.mxu0 0.0
        %805 = vmatpush1.msra.mxu0 0.0
        %806 = vmatprep.subr.mxu0 0.0
        %807 = vmatpush1.msra.mxu0 0.0
        %808 = vmatprep.subr.mxu0 0.0
        %809 = vmatpush1.msra.mxu0 0.0
        %810 = vmatprep.subr.mxu0 0.0
        %811 = vmatpush1.msra.mxu0 0.0
        %812 = vmatprep.subr.mxu0 0.0
        %813 = vmatpush1.msra.mxu0 0.0
        %814 = vmatprep.subr.mxu0 0.0
        %815 = vmatpush1.msra.mxu0 0.0
        %816 = vmatprep.subr.mxu0 0.0
        %817 = vmatpush1.msra.mxu0 0.0
        %818 = vmatprep.subr.mxu0 0.0
        %819 = vmatpush1.msra.mxu0 0.0
        %820 = vmatprep.subr.mxu0 0.0
        %821 = vmatpush1.msra.mxu0 0.0
        %822 = vmatprep.subr.mxu0 0.0
        %823 = vmatpush1.msra.mxu0 0.0
        %824 = vmatprep.subr.mxu0 0.0
        %825 = vmatpush1.msra.mxu0 0.0
        %826 = vmatprep.subr.mxu0 0.0
        %827 = vmatpush1.msra.mxu0 0.0
        %828 = vmatprep.subr.mxu0 0.0
        %829 = vmatpush1.msra.mxu0 0.0
        %830 = vmatprep.subr.mxu0 0.0
        %831 = vmatpush1.msra.mxu0 0.0
        %832 = vmatprep.subr.mxu0 0.0
        %833 = vmatpush1.msra.mxu0 0.0
        %834 = vmatprep.subr.mxu0 0.0
        %835 = vmatpush1.msra.mxu0 0.0
        %836 = vmatprep.subr.mxu0 0.0
        %837 = vmatpush1.msra.mxu0 0.0
        %838 = vmatprep.subr.mxu0 0.0
        %839 = vmatpush1.msra.mxu0 0.0
        %840 = vmatprep.subr.mxu0 0.0
        %841 = vmatpush1.msra.mxu0 0.0
        %842 = vmatprep.subr.mxu0 0.0
        %843 = vmatpush1.msra.mxu0 0.0
        %844 = vmatprep.subr.mxu0 0.0
        %845 = vmatpush1.msra.mxu0 0.0
        %846 = vmatprep.subr.mxu0 0.0
        %847 = vmatpush1.msra.mxu0 0.0
        %848 = vmatprep.subr.mxu0 0.0
        %849 = vmatpush1.msra.mxu0 0.0
        %850 = vmatprep.subr.mxu0 0.0
        %851 = vmatpush1.msra.mxu0 0.0
        %852 = vmatprep.subr.mxu0 0.0
        %853 = vmatpush1.msra.mxu0 0.0
        %854 = vmatprep.subr.mxu0 0.0
        %855 = vmatpush1.msra.mxu0 0.0
        %856 = vmatprep.subr.mxu0 0.0
        %857 = vmatpush1.msra.mxu0 0.0
        %858 = vmatprep.subr.mxu0 0.0
        %859 = vmatpush1.msra.mxu0 0.0
        %860 = vmatprep.mubr.f32.mxu0 0.0
        %v861 = vand.u32 %v241, 4294901760
        %862 = vmatmul.mubr.f32.gmra.mrb[0].mxu0 %v861
        %v863 = vpop.f32.mrb[0].mxu0
        %v864 = vadd.f32 %v731, %v863
        %v865 = vpop.f32.mrb[0].mxu0
        %866 = vmatprep.mubr.f32.mxu0 0.0
        %v867 = vand.u32 %v244, 4294901760
        %868 = vmatmul.mubr.f32.gmra.mrb[0].mxu0 %v867
        %v869 = vpop.f32.mrb[0].mxu0
        %v870 = vadd.f32 %v739, %v869
        %v871 = vpop.f32.mrb[0].mxu0
        %872 = vmatprep.mubr.f32.mxu0 0.0
        %v873 = vand.u32 %v247, 4294901760
        %874 = vmatmul.mubr.f32.gmra.mrb[0].mxu0 %v873
        %v875 = vpop.f32.mrb[0].mxu0
        %v876 = vadd.f32 %v747, %v875
        %v877 = vpop.f32.mrb[0].mxu0
        %878 = vmatprep.mubr.f32.mxu0 0.0
        %v879 = vand.u32 %v250, 4294901760
        %880 = vmatmul.mubr.f32.gmra.mrb[0].mxu0 %v879
        %v881 = vpop.f32.mrb[0].mxu0
        %v882 = vadd.f32 %v755, %v881
        %v883 = vpop.f32.mrb[0].mxu0
        %884 = vmatprep.mubr.f32.mxu0 0.0
        %v885 = vand.u32 %v253, 4294901760
        %886 = vmatmul.mubr.f32.gmra.mrb[0].mxu0 %v885
        %v887 = vpop.f32.mrb[0].mxu0
        %v888 = vadd.f32 %v763, %v887
        %v889 = vpop.f32.mrb[0].mxu0
        %890 = vmatprep.mubr.f32.mxu0 0.0
        %v891 = vand.u32 %v256, 4294901760
        %892 = vmatmul.mubr.f32.gmra.mrb[0].mxu0 %v891
        %v893 = vpop.f32.mrb[0].mxu0
        %v894 = vadd.f32 %v771, %v893
        %v895 = vpop.f32.mrb[0].mxu0
        %896 = vmatprep.mubr.f32.mxu0 0.0
        %v897 = vand.u32 %v259, 4294901760
        %898 = vmatmul.mubr.f32.gmra.mrb[0].mxu0 %v897
        %v899 = vpop.f32.mrb[0].mxu0
        %v900 = vadd.f32 %v779, %v899
        %v901 = vpop.f32.mrb[0].mxu0
        %902 = vmatprep.mubr.f32.mxu0 0.0
        %v903 = vand.u32 %v262, 4294901760
        %904 = vmatmul.mubr.f32.gmra.mrb[0].mxu0 %v903
        %v905 = vpop.f32.mrb[0].mxu0
        %v906 = vadd.f32 %v787, %v905
        %v907 = vpop.f32.mrb[0].mxu0
        %908 = vdwg.mxu0
        %909 = vmatprep.subr.mxu0 0.0
        %v910 = vand.u32 %v236, 4294901760
        %911 = vmatpush1.msra.mxu0 %v910
        %912 = vmatprep.subr.mxu0 0.0
        %v913 = vand.u32 %v237, 4294901760
        %914 = vmatpush1.msra.mxu0 %v913
        %915 = vmatprep.subr.mxu0 0.0
        %916 = vmatpush1.msra.mxu0 0.0
        %917 = vmatprep.subr.mxu0 0.0
        %918 = vmatpush1.msra.mxu0 0.0
        %919 = vmatprep.subr.mxu0 0.0
        %920 = vmatpush1.msra.mxu0 0.0
        %921 = vmatprep.subr.mxu0 0.0
        %922 = vmatpush1.msra.mxu0 0.0
        %923 = vmatprep.subr.mxu0 0.0
        %924 = vmatpush1.msra.mxu0 0.0
        %925 = vmatprep.subr.mxu0 0.0
        %926 = vmatpush1.msra.mxu0 0.0
        %927 = vmatprep.subr.mxu0 0.0
        %928 = vmatpush1.msra.mxu0 0.0
        %929 = vmatprep.subr.mxu0 0.0
        %930 = vmatpush1.msra.mxu0 0.0
        %931 = vmatprep.subr.mxu0 0.0
        %932 = vmatpush1.msra.mxu0 0.0
        %933 = vmatprep.subr.mxu0 0.0
        %934 = vmatpush1.msra.mxu0 0.0
        %935 = vmatprep.subr.mxu0 0.0
        %936 = vmatpush1.msra.mxu0 0.0
        %937 = vmatprep.subr.mxu0 0.0
        %938 = vmatpush1.msra.mxu0 0.0
        %939 = vmatprep.subr.mxu0 0.0
        %940 = vmatpush1.msra.mxu0 0.0
        %941 = vmatprep.subr.mxu0 0.0
        %942 = vmatpush1.msra.mxu0 0.0
        %943 = vmatprep.subr.mxu0 0.0
        %944 = vmatpush1.msra.mxu0 0.0
        %945 = vmatprep.subr.mxu0 0.0
        %946 = vmatpush1.msra.mxu0 0.0
        %947 = vmatprep.subr.mxu0 0.0
        %948 = vmatpush1.msra.mxu0 0.0
        %949 = vmatprep.subr.mxu0 0.0
        %950 = vmatpush1.msra.mxu0 0.0
        %951 = vmatprep.subr.mxu0 0.0
        %952 = vmatpush1.msra.mxu0 0.0
        %953 = vmatprep.subr.mxu0 0.0
        %954 = vmatpush1.msra.mxu0 0.0
        %955 = vmatprep.subr.mxu0 0.0
        %956 = vmatpush1.msra.mxu0 0.0
        %957 = vmatprep.subr.mxu0 0.0
        %958 = vmatpush1.msra.mxu0 0.0
        %959 = vmatprep.subr.mxu0 0.0
        %960 = vmatpush1.msra.mxu0 0.0
        %961 = vmatprep.subr.mxu0 0.0
        %962 = vmatpush1.msra.mxu0 0.0
        %963 = vmatprep.subr.mxu0 0.0
        %964 = vmatpush1.msra.mxu0 0.0
        %965 = vmatprep.subr.mxu0 0.0
        %966 = vmatpush1.msra.mxu0 0.0
        %967 = vmatprep.subr.mxu0 0.0
        %968 = vmatpush1.msra.mxu0 0.0
        %969 = vmatprep.subr.mxu0 0.0
        %970 = vmatpush1.msra.mxu0 0.0
        %971 = vmatprep.subr.mxu0 0.0
        %972 = vmatpush1.msra.mxu0 0.0
        %973 = vmatprep.subr.mxu0 0.0
        %974 = vmatpush1.msra.mxu0 0.0
        %975 = vmatprep.mubr.f32.mxu0 0.0
        %v976 = vand.u32 %v241, 4294901760
        %977 = vmatmul.mubr.f32.gmra.mrb[0].mxu0 %v976
        %v978 = vpop.f32.mrb[0].mxu0
        %v979 = vadd.f32 %v864, %v978
        %v980 = vpop.f32.mrb[0].mxu0
        %981 = vmatprep.mubr.f32.mxu0 0.0
        %v982 = vand.u32 %v244, 4294901760
        %983 = vmatmul.mubr.f32.gmra.mrb[0].mxu0 %v982
        %v984 = vpop.f32.mrb[0].mxu0
        %v985 = vadd.f32 %v870, %v984
        %v986 = vpop.f32.mrb[0].mxu0
        %987 = vmatprep.mubr.f32.mxu0 0.0
        %v988 = vand.u32 %v247, 4294901760
        %989 = vmatmul.mubr.f32.gmra.mrb[0].mxu0 %v988
        %v990 = vpop.f32.mrb[0].mxu0
        %v991 = vadd.f32 %v876, %v990
        %v992 = vpop.f32.mrb[0].mxu0
        %993 = vmatprep.mubr.f32.mxu0 0.0
        %v994 = vand.u32 %v250, 4294901760
        %995 = vmatmul.mubr.f32.gmra.mrb[0].mxu0 %v994
        %v996 = vpop.f32.mrb[0].mxu0
        %v997 = vadd.f32 %v882, %v996
        %v998 = vpop.f32.mrb[0].mxu0
        %999 = vmatprep.mubr.f32.mxu0 0.0
        %v1000 = vand.u32 %v253, 4294901760
        %1001 = vmatmul.mubr.f32.gmra.mrb[0].mxu0 %v1000
        %v1002 = vpop.f32.mrb[0].mxu0
        %v1003 = vadd.f32 %v888, %v1002
        %v1004 = vpop.f32.mrb[0].mxu0
        %1005 = vmatprep.mubr.f32.mxu0 0.0
        %v1006 = vand.u32 %v256, 4294901760
        %1007 = vmatmul.mubr.f32.gmra.mrb[0].mxu0 %v1006
        %v1008 = vpop.f32.mrb[0].mxu0
        %v1009 = vadd.f32 %v894, %v1008
        %v1010 = vpop.f32.mrb[0].mxu0
        %1011 = vmatprep.mubr.f32.mxu0 0.0
        %v1012 = vand.u32 %v259, 4294901760
        %1013 = vmatmul.mubr.f32.gmra.mrb[0].mxu0 %v1012
        %v1014 = vpop.f32.mrb[0].mxu0
        %v1015 = vadd.f32 %v900, %v1014
        %v1016 = vpop.f32.mrb[0].mxu0
        %1017 = vmatprep.mubr.f32.mxu0 0.0
        %v1018 = vand.u32 %v262, 4294901760
        %1019 = vmatmul.mubr.f32.gmra.mrb[0].mxu0 %v1018
        %v1020 = vpop.f32.mrb[0].mxu0
        %v1021 = vadd.f32 %v906, %v1020
        %v1022 = vpop.f32.mrb[0].mxu0
        %1023 = vdwg.mxu0
        %v1025 = vsel %vm227, %v238, 0
        %v1028 = vsel %vm227, %v239, 0
        %1030 = vmatprep.subr.mxu0 0.0
        %v1031 = vand.u32 %v979, 4294901760
        %1032 = vmatpush1.msra.mxu0 %v1031
        %1033 = vmatprep.subr.mxu0 0.0
        %v1034 = vand.u32 %v985, 4294901760
        %1035 = vmatpush1.msra.mxu0 %v1034
        %1036 = vmatprep.subr.mxu0 0.0
        %1037 = vmatpush1.msra.mxu0 0.0
        %1038 = vmatprep.subr.mxu0 0.0
        %1039 = vmatpush1.msra.mxu0 0.0
        %1040 = vmatprep.subr.mxu0 0.0
        %1041 = vmatpush1.msra.mxu0 0.0
        %1042 = vmatprep.subr.mxu0 0.0
        %1043 = vmatpush1.msra.mxu0 0.0
        %1044 = vmatprep.subr.mxu0 0.0
        %1045 = vmatpush1.msra.mxu0 0.0
        %1046 = vmatprep.subr.mxu0 0.0
        %1047 = vmatpush1.msra.mxu0 0.0
        %1048 = vmatprep.subr.mxu0 0.0
        %1049 = vmatpush1.msra.mxu0 0.0
        %1050 = vmatprep.subr.mxu0 0.0
        %1051 = vmatpush1.msra.mxu0 0.0
        %1052 = vmatprep.subr.mxu0 0.0
        %1053 = vmatpush1.msra.mxu0 0.0
        %1054 = vmatprep.subr.mxu0 0.0
        %1055 = vmatpush1.msra.mxu0 0.0
        %1056 = vmatprep.subr.mxu0 0.0
        %1057 = vmatpush1.msra.mxu0 0.0
        %1058 = vmatprep.subr.mxu0 0.0
        %1059 = vmatpush1.msra.mxu0 0.0
        %1060 = vmatprep.subr.mxu0 0.0
        %1061 = vmatpush1.msra.mxu0 0.0
        %1062 = vmatprep.subr.mxu0 0.0
        %1063 = vmatpush1.msra.mxu0 0.0
        %1064 = vmatprep.subr.mxu0 0.0
        %1065 = vmatpush1.msra.mxu0 0.0
        %1066 = vmatprep.subr.mxu0 0.0
        %1067 = vmatpush1.msra.mxu0 0.0
        %1068 = vmatprep.subr.mxu0 0.0
        %1069 = vmatpush1.msra.mxu0 0.0
        %1070 = vmatprep.subr.mxu0 0.0
        %1071 = vmatpush1.msra.mxu0 0.0
        %1072 = vmatprep.subr.mxu0 0.0
        %1073 = vmatpush1.msra.mxu0 0.0
        %1074 = vmatprep.subr.mxu0 0.0
        %1075 = vmatpush1.msra.mxu0 0.0
        %1076 = vmatprep.subr.mxu0 0.0
        %1077 = vmatpush1.msra.mxu0 0.0
        %1078 = vmatprep.subr.mxu0 0.0
        %1079 = vmatpush1.msra.mxu0 0.0
        %1080 = vmatprep.subr.mxu0 0.0
        %1081 = vmatpush1.msra.mxu0 0.0
        %1082 = vmatprep.subr.mxu0 0.0
        %1083 = vmatpush1.msra.mxu0 0.0
        %1084 = vmatprep.subr.mxu0 0.0
        %1085 = vmatpush1.msra.mxu0 0.0
        %1086 = vmatprep.subr.mxu0 0.0
        %1087 = vmatpush1.msra.mxu0 0.0
        %1088 = vmatprep.subr.mxu0 0.0
        %1089 = vmatpush1.msra.mxu0 0.0
        %1090 = vmatprep.subr.mxu0 0.0
        %1091 = vmatpush1.msra.mxu0 0.0
        %1092 = vmatprep.subr.mxu0 0.0
        %1093 = vmatpush1.msra.mxu0 0.0
        %1094 = vmatprep.subr.mxu0 0.0
        %1095 = vmatpush1.msra.mxu0 0.0
        %1096 = vmatprep.mubr.f32.mxu0 0.0
        %v1097 = vand.u32 %v1025, 4294901760
        %v1098 = vsub.f32 %v1025, %v1097
        %v1099 = vand.u32 %v1098, 4294901760
        %v1100 = vsub.f32 %v1098, %v1099
        %v1101 = vand.u32 %v1100, 4294901760
        %1102 = vmatmul.mubr.f32.gmra.mrb[0].mxu0 %v1101
        %v1103 = vpop.f32.mrb[0].mxu0
        %v1104 = vadd.f32 0.0, %v1103
        %v1105 = vpop.f32.mrb[0].mxu0
        %1106 = vmatprep.mubr.f32.mxu0 0.0
        %v1107 = vand.u32 %v1028, 4294901760
        %v1108 = vsub.f32 %v1028, %v1107
        %v1109 = vand.u32 %v1108, 4294901760
        %v1110 = vsub.f32 %v1108, %v1109
        %v1111 = vand.u32 %v1110, 4294901760
        %1112 = vmatmul.mubr.f32.gmra.mrb[0].mxu0 %v1111
        %v1113 = vpop.f32.mrb[0].mxu0
        %v1114 = vadd.f32 0.0, %v1113
        %v1115 = vpop.f32.mrb[0].mxu0
        %1116 = vdwg.mxu0
        %1117 = vmatprep.subr.mxu0 0.0
        %v1118 = vand.u32 %v979, 4294901760
        %v1119 = vsub.f32 %v979, %v1118
        %v1120 = vand.u32 %v1119, 4294901760
        %v1121 = vsub.f32 %v1119, %v1120
        %v1122 = vand.u32 %v1121, 4294901760
        %1123 = vmatpush1.msra.mxu0 %v1122
        %1124 = vmatprep.subr.mxu0 0.0
        %v1125 = vand.u32 %v985, 4294901760
        %v1126 = vsub.f32 %v985, %v1125
        %v1127 = vand.u32 %v1126, 4294901760
        %v1128 = vsub.f32 %v1126, %v1127
        %v1129 = vand.u32 %v1128, 4294901760
        %1130 = vmatpush1.msra.mxu0 %v1129
        %1131 = vmatprep.subr.mxu0 0.0
        %1132 = vmatpush1.msra.mxu0 0.0
        %1133 = vmatprep.subr.mxu0 0.0
        %1134 = vmatpush1.msra.mxu0 0.0
        %1135 = vmatprep.subr.mxu0 0.0
        %1136 = vmatpush1.msra.mxu0 0.0
        %1137 = vmatprep.subr.mxu0 0.0
        %1138 = vmatpush1.msra.mxu0 0.0
        %1139 = vmatprep.subr.mxu0 0.0
        %1140 = vmatpush1.msra.mxu0 0.0
        %1141 = vmatprep.subr.mxu0 0.0
        %1142 = vmatpush1.msra.mxu0 0.0
        %1143 = vmatprep.subr.mxu0 0.0
        %1144 = vmatpush1.msra.mxu0 0.0
        %1145 = vmatprep.subr.mxu0 0.0
        %1146 = vmatpush1.msra.mxu0 0.0
        %1147 = vmatprep.subr.mxu0 0.0
        %1148 = vmatpush1.msra.mxu0 0.0
        %1149 = vmatprep.subr.mxu0 0.0
        %1150 = vmatpush1.msra.mxu0 0.0
        %1151 = vmatprep.subr.mxu0 0.0
        %1152 = vmatpush1.msra.mxu0 0.0
        %1153 = vmatprep.subr.mxu0 0.0
        %1154 = vmatpush1.msra.mxu0 0.0
        %1155 = vmatprep.subr.mxu0 0.0
        %1156 = vmatpush1.msra.mxu0 0.0
        %1157 = vmatprep.subr.mxu0 0.0
        %1158 = vmatpush1.msra.mxu0 0.0
        %1159 = vmatprep.subr.mxu0 0.0
        %1160 = vmatpush1.msra.mxu0 0.0
        %1161 = vmatprep.subr.mxu0 0.0
        %1162 = vmatpush1.msra.mxu0 0.0
        %1163 = vmatprep.subr.mxu0 0.0
        %1164 = vmatpush1.msra.mxu0 0.0
        %1165 = vmatprep.subr.mxu0 0.0
        %1166 = vmatpush1.msra.mxu0 0.0
        %1167 = vmatprep.subr.mxu0 0.0
        %1168 = vmatpush1.msra.mxu0 0.0
        %1169 = vmatprep.subr.mxu0 0.0
        %1170 = vmatpush1.msra.mxu0 0.0
        %1171 = vmatprep.subr.mxu0 0.0
        %1172 = vmatpush1.msra.mxu0 0.0
        %1173 = vmatprep.subr.mxu0 0.0
        %1174 = vmatpush1.msra.mxu0 0.0
        %1175 = vmatprep.subr.mxu0 0.0
        %1176 = vmatpush1.msra.mxu0 0.0
        %1177 = vmatprep.subr.mxu0 0.0
        %1178 = vmatpush1.msra.mxu0 0.0
        %1179 = vmatprep.subr.mxu0 0.0
        %1180 = vmatpush1.msra.mxu0 0.0
        %1181 = vmatprep.subr.mxu0 0.0
        %1182 = vmatpush1.msra.mxu0 0.0
        %1183 = vmatprep.subr.mxu0 0.0
        %1184 = vmatpush1.msra.mxu0 0.0
        %1185 = vmatprep.subr.mxu0 0.0
        %1186 = vmatpush1.msra.mxu0 0.0
        %1187 = vmatprep.subr.mxu0 0.0
        %1188 = vmatpush1.msra.mxu0 0.0
        %1189 = vmatprep.subr.mxu0 0.0
        %1190 = vmatpush1.msra.mxu0 0.0
        %1191 = vmatprep.mubr.f32.mxu0 0.0
        %v1192 = vand.u32 %v1025, 4294901760
        %1193 = vmatmul.mubr.f32.gmra.mrb[0].mxu0 %v1192
        %v1194 = vpop.f32.mrb[0].mxu0
        %v1195 = vadd.f32 %v1104, %v1194
        %v1196 = vpop.f32.mrb[0].mxu0
        %1197 = vmatprep.mubr.f32.mxu0 0.0
        %v1198 = vand.u32 %v1028, 4294901760
        %1199 = vmatmul.mubr.f32.gmra.mrb[0].mxu0 %v1198
        %v1200 = vpop.f32.mrb[0].mxu0
        %v1201 = vadd.f32 %v1114, %v1200
        %v1202 = vpop.f32.mrb[0].mxu0
        %1203 = vdwg.mxu0
        %1204 = vmatprep.subr.mxu0 0.0
        %v1205 = vand.u32 %v979, 4294901760
        %v1206 = vsub.f32 %v979, %v1205
        %1207 = vmatpush1.msra.mxu0 %v1206
        %1208 = vmatprep.subr.mxu0 0.0
        %v1209 = vand.u32 %v985, 4294901760
        %v1210 = vsub.f32 %v985, %v1209
        %1211 = vmatpush1.msra.mxu0 %v1210
        %1212 = vmatprep.subr.mxu0 0.0
        %1213 = vmatpush1.msra.mxu0 0.0
        %1214 = vmatprep.subr.mxu0 0.0
        %1215 = vmatpush1.msra.mxu0 0.0
        %1216 = vmatprep.subr.mxu0 0.0
        %1217 = vmatpush1.msra.mxu0 0.0
        %1218 = vmatprep.subr.mxu0 0.0
        %1219 = vmatpush1.msra.mxu0 0.0
        %1220 = vmatprep.subr.mxu0 0.0
        %1221 = vmatpush1.msra.mxu0 0.0
        %1222 = vmatprep.subr.mxu0 0.0
        %1223 = vmatpush1.msra.mxu0 0.0
        %1224 = vmatprep.subr.mxu0 0.0
        %1225 = vmatpush1.msra.mxu0 0.0
        %1226 = vmatprep.subr.mxu0 0.0
        %1227 = vmatpush1.msra.mxu0 0.0
        %1228 = vmatprep.subr.mxu0 0.0
        %1229 = vmatpush1.msra.mxu0 0.0
        %1230 = vmatprep.subr.mxu0 0.0
        %1231 = vmatpush1.msra.mxu0 0.0
        %1232 = vmatprep.subr.mxu0 0.0
        %1233 = vmatpush1.msra.mxu0 0.0
        %1234 = vmatprep.subr.mxu0 0.0
        %1235 = vmatpush1.msra.mxu0 0.0
        %1236 = vmatprep.subr.mxu0 0.0
        %1237 = vmatpush1.msra.mxu0 0.0
        %1238 = vmatprep.subr.mxu0 0.0
        %1239 = vmatpush1.msra.mxu0 0.0
        %1240 = vmatprep.subr.mxu0 0.0
        %1241 = vmatpush1.msra.mxu0 0.0
        %1242 = vmatprep.subr.mxu0 0.0
        %1243 = vmatpush1.msra.mxu0 0.0
        %1244 = vmatprep.subr.mxu0 0.0
        %1245 = vmatpush1.msra.mxu0 0.0
        %1246 = vmatprep.subr.mxu0 0.0
        %1247 = vmatpush1.msra.mxu0 0.0
        %1248 = vmatprep.subr.mxu0 0.0
        %1249 = vmatpush1.msra.mxu0 0.0
        %1250 = vmatprep.subr.mxu0 0.0
        %1251 = vmatpush1.msra.mxu0 0.0
        %1252 = vmatprep.subr.mxu0 0.0
        %1253 = vmatpush1.msra.mxu0 0.0
        %1254 = vmatprep.subr.mxu0 0.0
        %1255 = vmatpush1.msra.mxu0 0.0
        %1256 = vmatprep.subr.mxu0 0.0
        %1257 = vmatpush1.msra.mxu0 0.0
        %1258 = vmatprep.subr.mxu0 0.0
        %1259 = vmatpush1.msra.mxu0 0.0
        %1260 = vmatprep.subr.mxu0 0.0
        %1261 = vmatpush1.msra.mxu0 0.0
        %1262 = vmatprep.subr.mxu0 0.0
        %1263 = vmatpush1.msra.mxu0 0.0
        %1264 = vmatprep.subr.mxu0 0.0
        %1265 = vmatpush1.msra.mxu0 0.0
        %1266 = vmatprep.subr.mxu0 0.0
        %1267 = vmatpush1.msra.mxu0 0.0
        %1268 = vmatprep.subr.mxu0 0.0
        %1269 = vmatpush1.msra.mxu0 0.0
        %1270 = vmatprep.subr.mxu0 0.0
        %1271 = vmatpush1.msra.mxu0 0.0
        %1272 = vmatprep.mubr.f32.mxu0 0.0
        %v1273 = vand.u32 %v1025, 4294901760
        %v1274 = vsub.f32 %v1025, %v1273
        %1275 = vmatmul.mubr.f32.gmra.mrb[0].mxu0 %v1274
        %v1276 = vpop.f32.mrb[0].mxu0
        %v1277 = vadd.f32 %v1195, %v1276
        %v1278 = vpop.f32.mrb[0].mxu0
        %1279 = vmatprep.mubr.f32.mxu0 0.0
        %v1280 = vand.u32 %v1028, 4294901760
        %v1281 = vsub.f32 %v1028, %v1280
        %1282 = vmatmul.mubr.f32.gmra.mrb[0].mxu0 %v1281
        %v1283 = vpop.f32.mrb[0].mxu0
        %v1284 = vadd.f32 %v1201, %v1283
        %v1285 = vpop.f32.mrb[0].mxu0
        %1286 = vdwg.mxu0
        %1287 = vmatprep.subr.mxu0 0.0
        %v1288 = vand.u32 %v979, 4294901760
        %1289 = vmatpush1.msra.mxu0 %v1288
        %1290 = vmatprep.subr.mxu0 0.0
        %v1291 = vand.u32 %v985, 4294901760
        %1292 = vmatpush1.msra.mxu0 %v1291
        %1293 = vmatprep.subr.mxu0 0.0
        %1294 = vmatpush1.msra.mxu0 0.0
        %1295 = vmatprep.subr.mxu0 0.0
        %1296 = vmatpush1.msra.mxu0 0.0
        %1297 = vmatprep.subr.mxu0 0.0
        %1298 = vmatpush1.msra.mxu0 0.0
        %1299 = vmatprep.subr.mxu0 0.0
        %1300 = vmatpush1.msra.mxu0 0.0
        %1301 = vmatprep.subr.mxu0 0.0
        %1302 = vmatpush1.msra.mxu0 0.0
        %1303 = vmatprep.subr.mxu0 0.0
        %1304 = vmatpush1.msra.mxu0 0.0
        %1305 = vmatprep.subr.mxu0 0.0
        %1306 = vmatpush1.msra.mxu0 0.0
        %1307 = vmatprep.subr.mxu0 0.0
        %1308 = vmatpush1.msra.mxu0 0.0
        %1309 = vmatprep.subr.mxu0 0.0
        %1310 = vmatpush1.msra.mxu0 0.0
        %1311 = vmatprep.subr.mxu0 0.0
        %1312 = vmatpush1.msra.mxu0 0.0
        %1313 = vmatprep.subr.mxu0 0.0
        %1314 = vmatpush1.msra.mxu0 0.0
        %1315 = vmatprep.subr.mxu0 0.0
        %1316 = vmatpush1.msra.mxu0 0.0
        %1317 = vmatprep.subr.mxu0 0.0
        %1318 = vmatpush1.msra.mxu0 0.0
        %1319 = vmatprep.subr.mxu0 0.0
        %1320 = vmatpush1.msra.mxu0 0.0
        %1321 = vmatprep.subr.mxu0 0.0
        %1322 = vmatpush1.msra.mxu0 0.0
        %1323 = vmatprep.subr.mxu0 0.0
        %1324 = vmatpush1.msra.mxu0 0.0
        %1325 = vmatprep.subr.mxu0 0.0
        %1326 = vmatpush1.msra.mxu0 0.0
        %1327 = vmatprep.subr.mxu0 0.0
        %1328 = vmatpush1.msra.mxu0 0.0
        %1329 = vmatprep.subr.mxu0 0.0
        %1330 = vmatpush1.msra.mxu0 0.0
        %1331 = vmatprep.subr.mxu0 0.0
        %1332 = vmatpush1.msra.mxu0 0.0
        %1333 = vmatprep.subr.mxu0 0.0
        %1334 = vmatpush1.msra.mxu0 0.0
        %1335 = vmatprep.subr.mxu0 0.0
        %1336 = vmatpush1.msra.mxu0 0.0
        %1337 = vmatprep.subr.mxu0 0.0
        %1338 = vmatpush1.msra.mxu0 0.0
        %1339 = vmatprep.subr.mxu0 0.0
        %1340 = vmatpush1.msra.mxu0 0.0
        %1341 = vmatprep.subr.mxu0 0.0
        %1342 = vmatpush1.msra.mxu0 0.0
        %1343 = vmatprep.subr.mxu0 0.0
        %1344 = vmatpush1.msra.mxu0 0.0
        %1345 = vmatprep.subr.mxu0 0.0
        %1346 = vmatpush1.msra.mxu0 0.0
        %1347 = vmatprep.subr.mxu0 0.0
        %1348 = vmatpush1.msra.mxu0 0.0
        %1349 = vmatprep.subr.mxu0 0.0
        %1350 = vmatpush1.msra.mxu0 0.0
        %1351 = vmatprep.subr.mxu0 0.0
        %1352 = vmatpush1.msra.mxu0 0.0
        %1353 = vmatprep.mubr.f32.mxu0 0.0
        %v1354 = vand.u32 %v1025, 4294901760
        %v1355 = vsub.f32 %v1025, %v1354
        %v1356 = vand.u32 %v1355, 4294901760
        %1357 = vmatmul.mubr.f32.gmra.mrb[0].mxu0 %v1356
        %v1358 = vpop.f32.mrb[0].mxu0
        %v1359 = vadd.f32 %v1277, %v1358
        %v1360 = vpop.f32.mrb[0].mxu0
        %1361 = vmatprep.mubr.f32.mxu0 0.0
        %v1362 = vand.u32 %v1028, 4294901760
        %v1363 = vsub.f32 %v1028, %v1362
        %v1364 = vand.u32 %v1363, 4294901760
        %1365 = vmatmul.mubr.f32.gmra.mrb[0].mxu0 %v1364
        %v1366 = vpop.f32.mrb[0].mxu0
        %v1367 = vadd.f32 %v1284, %v1366
        %v1368 = vpop.f32.mrb[0].mxu0
        %1369 = vdwg.mxu0
        %1370 = vmatprep.subr.mxu0 0.0
        %v1371 = vand.u32 %v979, 4294901760
        %v1372 = vsub.f32 %v979, %v1371
        %v1373 = vand.u32 %v1372, 4294901760
        %1374 = vmatpush1.msra.mxu0 %v1373
        %1375 = vmatprep.subr.mxu0 0.0
        %v1376 = vand.u32 %v985, 4294901760
        %v1377 = vsub.f32 %v985, %v1376
        %v1378 = vand.u32 %v1377, 4294901760
        %1379 = vmatpush1.msra.mxu0 %v1378
        %1380 = vmatprep.subr.mxu0 0.0
        %1381 = vmatpush1.msra.mxu0 0.0
        %1382 = vmatprep.subr.mxu0 0.0
        %1383 = vmatpush1.msra.mxu0 0.0
        %1384 = vmatprep.subr.mxu0 0.0
        %1385 = vmatpush1.msra.mxu0 0.0
        %1386 = vmatprep.subr.mxu0 0.0
        %1387 = vmatpush1.msra.mxu0 0.0
        %1388 = vmatprep.subr.mxu0 0.0
        %1389 = vmatpush1.msra.mxu0 0.0
        %1390 = vmatprep.subr.mxu0 0.0
        %1391 = vmatpush1.msra.mxu0 0.0
        %1392 = vmatprep.subr.mxu0 0.0
        %1393 = vmatpush1.msra.mxu0 0.0
        %1394 = vmatprep.subr.mxu0 0.0
        %1395 = vmatpush1.msra.mxu0 0.0
        %1396 = vmatprep.subr.mxu0 0.0
        %1397 = vmatpush1.msra.mxu0 0.0
        %1398 = vmatprep.subr.mxu0 0.0
        %1399 = vmatpush1.msra.mxu0 0.0
        %1400 = vmatprep.subr.mxu0 0.0
        %1401 = vmatpush1.msra.mxu0 0.0
        %1402 = vmatprep.subr.mxu0 0.0
        %1403 = vmatpush1.msra.mxu0 0.0
        %1404 = vmatprep.subr.mxu0 0.0
        %1405 = vmatpush1.msra.mxu0 0.0
        %1406 = vmatprep.subr.mxu0 0.0
        %1407 = vmatpush1.msra.mxu0 0.0
        %1408 = vmatprep.subr.mxu0 0.0
        %1409 = vmatpush1.msra.mxu0 0.0
        %1410 = vmatprep.subr.mxu0 0.0
        %1411 = vmatpush1.msra.mxu0 0.0
        %1412 = vmatprep.subr.mxu0 0.0
        %1413 = vmatpush1.msra.mxu0 0.0
        %1414 = vmatprep.subr.mxu0 0.0
        %1415 = vmatpush1.msra.mxu0 0.0
        %1416 = vmatprep.subr.mxu0 0.0
        %1417 = vmatpush1.msra.mxu0 0.0
        %1418 = vmatprep.subr.mxu0 0.0
        %1419 = vmatpush1.msra.mxu0 0.0
        %1420 = vmatprep.subr.mxu0 0.0
        %1421 = vmatpush1.msra.mxu0 0.0
        %1422 = vmatprep.subr.mxu0 0.0
        %1423 = vmatpush1.msra.mxu0 0.0
        %1424 = vmatprep.subr.mxu0 0.0
        %1425 = vmatpush1.msra.mxu0 0.0
        %1426 = vmatprep.subr.mxu0 0.0
        %1427 = vmatpush1.msra.mxu0 0.0
        %1428 = vmatprep.subr.mxu0 0.0
        %1429 = vmatpush1.msra.mxu0 0.0
        %1430 = vmatprep.subr.mxu0 0.0
        %1431 = vmatpush1.msra.mxu0 0.0
        %1432 = vmatprep.subr.mxu0 0.0
        %1433 = vmatpush1.msra.mxu0 0.0
        %1434 = vmatprep.subr.mxu0 0.0
        %1435 = vmatpush1.msra.mxu0 0.0
        %1436 = vmatprep.subr.mxu0 0.0
        %1437 = vmatpush1.msra.mxu0 0.0
        %1438 = vmatprep.subr.mxu0 0.0
        %1439 = vmatpush1.msra.mxu0 0.0
        %1440 = vmatprep.mubr.f32.mxu0 0.0
        %v1441 = vand.u32 %v1025, 4294901760
        %1442 = vmatmul.mubr.f32.gmra.mrb[0].mxu0 %v1441
        %v1443 = vpop.f32.mrb[0].mxu0
        %v1444 = vadd.f32 %v1359, %v1443
        %v1445 = vpop.f32.mrb[0].mxu0
        %1446 = vmatprep.mubr.f32.mxu0 0.0
        %v1447 = vand.u32 %v1028, 4294901760
        %1448 = vmatmul.mubr.f32.gmra.mrb[0].mxu0 %v1447
        %v1449 = vpop.f32.mrb[0].mxu0
        %v1450 = vadd.f32 %v1367, %v1449
        %v1451 = vpop.f32.mrb[0].mxu0
        %1452 = vdwg.mxu0
        %1453 = vmatprep.subr.mxu0 0.0
        %v1454 = vand.u32 %v979, 4294901760
        %1455 = vmatpush1.msra.mxu0 %v1454
        %1456 = vmatprep.subr.mxu0 0.0
        %v1457 = vand.u32 %v985, 4294901760
        %1458 = vmatpush1.msra.mxu0 %v1457
        %1459 = vmatprep.subr.mxu0 0.0
        %1460 = vmatpush1.msra.mxu0 0.0
        %1461 = vmatprep.subr.mxu0 0.0
        %1462 = vmatpush1.msra.mxu0 0.0
        %1463 = vmatprep.subr.mxu0 0.0
        %1464 = vmatpush1.msra.mxu0 0.0
        %1465 = vmatprep.subr.mxu0 0.0
        %1466 = vmatpush1.msra.mxu0 0.0
        %1467 = vmatprep.subr.mxu0 0.0
        %1468 = vmatpush1.msra.mxu0 0.0
        %1469 = vmatprep.subr.mxu0 0.0
        %1470 = vmatpush1.msra.mxu0 0.0
        %1471 = vmatprep.subr.mxu0 0.0
        %1472 = vmatpush1.msra.mxu0 0.0
        %1473 = vmatprep.subr.mxu0 0.0
        %1474 = vmatpush1.msra.mxu0 0.0
        %1475 = vmatprep.subr.mxu0 0.0
        %1476 = vmatpush1.msra.mxu0 0.0
        %1477 = vmatprep.subr.mxu0 0.0
        %1478 = vmatpush1.msra.mxu0 0.0
        %1479 = vmatprep.subr.mxu0 0.0
        %1480 = vmatpush1.msra.mxu0 0.0
        %1481 = vmatprep.subr.mxu0 0.0
        %1482 = vmatpush1.msra.mxu0 0.0
        %1483 = vmatprep.subr.mxu0 0.0
        %1484 = vmatpush1.msra.mxu0 0.0
        %1485 = vmatprep.subr.mxu0 0.0
        %1486 = vmatpush1.msra.mxu0 0.0
        %1487 = vmatprep.subr.mxu0 0.0
        %1488 = vmatpush1.msra.mxu0 0.0
        %1489 = vmatprep.subr.mxu0 0.0
        %1490 = vmatpush1.msra.mxu0 0.0
        %1491 = vmatprep.subr.mxu0 0.0
        %1492 = vmatpush1.msra.mxu0 0.0
        %1493 = vmatprep.subr.mxu0 0.0
        %1494 = vmatpush1.msra.mxu0 0.0
        %1495 = vmatprep.subr.mxu0 0.0
        %1496 = vmatpush1.msra.mxu0 0.0
        %1497 = vmatprep.subr.mxu0 0.0
        %1498 = vmatpush1.msra.mxu0 0.0
        %1499 = vmatprep.subr.mxu0 0.0
        %1500 = vmatpush1.msra.mxu0 0.0
        %1501 = vmatprep.subr.mxu0 0.0
        %1502 = vmatpush1.msra.mxu0 0.0
        %1503 = vmatprep.subr.mxu0 0.0
        %1504 = vmatpush1.msra.mxu0 0.0
        %1505 = vmatprep.subr.mxu0 0.0
        %1506 = vmatpush1.msra.mxu0 0.0
        %1507 = vmatprep.subr.mxu0 0.0
        %1508 = vmatpush1.msra.mxu0 0.0
        %1509 = vmatprep.subr.mxu0 0.0
        %1510 = vmatpush1.msra.mxu0 0.0
        %1511 = vmatprep.subr.mxu0 0.0
        %1512 = vmatpush1.msra.mxu0 0.0
        %1513 = vmatprep.subr.mxu0 0.0
        %1514 = vmatpush1.msra.mxu0 0.0
        %1515 = vmatprep.subr.mxu0 0.0
        %1516 = vmatpush1.msra.mxu0 0.0
        %1517 = vmatprep.subr.mxu0 0.0
        %1518 = vmatpush1.msra.mxu0 0.0
        %1519 = vmatprep.mubr.f32.mxu0 0.0
        %v1520 = vand.u32 %v1025, 4294901760
        %1521 = vmatmul.mubr.f32.gmra.mrb[0].mxu0 %v1520
        %v1522 = vpop.f32.mrb[0].mxu0
        %v1523 = vadd.f32 %v1444, %v1522
        %v1524 = vpop.f32.mrb[0].mxu0
        %1525 = vmatprep.mubr.f32.mxu0 0.0
        %v1526 = vand.u32 %v1028, 4294901760
        %1527 = vmatmul.mubr.f32.gmra.mrb[0].mxu0 %v1526
        %v1528 = vpop.f32.mrb[0].mxu0
        %v1529 = vadd.f32 %v1450, %v1528
        %v1530 = vpop.f32.mrb[0].mxu0
        %1531 = vdwg.mxu0
        %1532 = vmatprep.subr.mxu0 0.0
        %v1533 = vand.u32 %v991, 4294901760
        %1534 = vmatpush1.msra.mxu0 %v1533
        %1535 = vmatprep.subr.mxu0 0.0
        %v1536 = vand.u32 %v997, 4294901760
        %1537 = vmatpush1.msra.mxu0 %v1536
        %1538 = vmatprep.subr.mxu0 0.0
        %1539 = vmatpush1.msra.mxu0 0.0
        %1540 = vmatprep.subr.mxu0 0.0
        %1541 = vmatpush1.msra.mxu0 0.0
        %1542 = vmatprep.subr.mxu0 0.0
        %1543 = vmatpush1.msra.mxu0 0.0
        %1544 = vmatprep.subr.mxu0 0.0
        %1545 = vmatpush1.msra.mxu0 0.0
        %1546 = vmatprep.subr.mxu0 0.0
        %1547 = vmatpush1.msra.mxu0 0.0
        %1548 = vmatprep.subr.mxu0 0.0
        %1549 = vmatpush1.msra.mxu0 0.0
        %1550 = vmatprep.subr.mxu0 0.0
        %1551 = vmatpush1.msra.mxu0 0.0
        %1552 = vmatprep.subr.mxu0 0.0
        %1553 = vmatpush1.msra.mxu0 0.0
        %1554 = vmatprep.subr.mxu0 0.0
        %1555 = vmatpush1.msra.mxu0 0.0
        %1556 = vmatprep.subr.mxu0 0.0
        %1557 = vmatpush1.msra.mxu0 0.0
        %1558 = vmatprep.subr.mxu0 0.0
        %1559 = vmatpush1.msra.mxu0 0.0
        %1560 = vmatprep.subr.mxu0 0.0
        %1561 = vmatpush1.msra.mxu0 0.0
        %1562 = vmatprep.subr.mxu0 0.0
        %1563 = vmatpush1.msra.mxu0 0.0
        %1564 = vmatprep.subr.mxu0 0.0
        %1565 = vmatpush1.msra.mxu0 0.0
        %1566 = vmatprep.subr.mxu0 0.0
        %1567 = vmatpush1.msra.mxu0 0.0
        %1568 = vmatprep.subr.mxu0 0.0
        %1569 = vmatpush1.msra.mxu0 0.0
        %1570 = vmatprep.subr.mxu0 0.0
        %1571 = vmatpush1.msra.mxu0 0.0
        %1572 = vmatprep.subr.mxu0 0.0
        %1573 = vmatpush1.msra.mxu0 0.0
        %1574 = vmatprep.subr.mxu0 0.0
        %1575 = vmatpush1.msra.mxu0 0.0
        %1576 = vmatprep.subr.mxu0 0.0
        %1577 = vmatpush1.msra.mxu0 0.0
        %1578 = vmatprep.subr.mxu0 0.0
        %1579 = vmatpush1.msra.mxu0 0.0
        %1580 = vmatprep.subr.mxu0 0.0
        %1581 = vmatpush1.msra.mxu0 0.0
        %1582 = vmatprep.subr.mxu0 0.0
        %1583 = vmatpush1.msra.mxu0 0.0
        %1584 = vmatprep.subr.mxu0 0.0
        %1585 = vmatpush1.msra.mxu0 0.0
        %1586 = vmatprep.subr.mxu0 0.0
        %1587 = vmatpush1.msra.mxu0 0.0
        %1588 = vmatprep.subr.mxu0 0.0
        %1589 = vmatpush1.msra.mxu0 0.0
        %1590 = vmatprep.subr.mxu0 0.0
        %1591 = vmatpush1.msra.mxu0 0.0
        %1592 = vmatprep.subr.mxu0 0.0
        %1593 = vmatpush1.msra.mxu0 0.0
        %1594 = vmatprep.subr.mxu0 0.0
        %1595 = vmatpush1.msra.mxu0 0.0
        %1596 = vmatprep.subr.mxu0 0.0
        %1597 = vmatpush1.msra.mxu0 0.0
        %1598 = vmatprep.mubr.f32.mxu0 0.0
        %v1599 = vand.u32 %v1025, 4294901760
        %v1600 = vsub.f32 %v1025, %v1599
        %v1601 = vand.u32 %v1600, 4294901760
        %v1602 = vsub.f32 %v1600, %v1601
        %v1603 = vand.u32 %v1602, 4294901760
        %1604 = vmatmul.mubr.f32.gmra.mrb[0].mxu0 %v1603
        %v1605 = vpop.f32.mrb[0].mxu0
        %v1606 = vadd.f32 0.0, %v1605
        %v1607 = vpop.f32.mrb[0].mxu0
        %1608 = vmatprep.mubr.f32.mxu0 0.0
        %v1609 = vand.u32 %v1028, 4294901760
        %v1610 = vsub.f32 %v1028, %v1609
        %v1611 = vand.u32 %v1610, 4294901760
        %v1612 = vsub.f32 %v1610, %v1611
        %v1613 = vand.u32 %v1612, 4294901760
        %1614 = vmatmul.mubr.f32.gmra.mrb[0].mxu0 %v1613
        %v1615 = vpop.f32.mrb[0].mxu0
        %v1616 = vadd.f32 0.0, %v1615
        %v1617 = vpop.f32.mrb[0].mxu0
        %1618 = vdwg.mxu0
        %1619 = vmatprep.subr.mxu0 0.0
        %v1620 = vand.u32 %v991, 4294901760
        %v1621 = vsub.f32 %v991, %v1620
        %v1622 = vand.u32 %v1621, 4294901760
        %v1623 = vsub.f32 %v1621, %v1622
        %v1624 = vand.u32 %v1623, 4294901760
        %1625 = vmatpush1.msra.mxu0 %v1624
        %1626 = vmatprep.subr.mxu0 0.0
        %v1627 = vand.u32 %v997, 4294901760
        %v1628 = vsub.f32 %v997, %v1627
        %v1629 = vand.u32 %v1628, 4294901760
        %v1630 = vsub.f32 %v1628, %v1629
        %v1631 = vand.u32 %v1630, 4294901760
        %1632 = vmatpush1.msra.mxu0 %v1631
        %1633 = vmatprep.subr.mxu0 0.0
        %1634 = vmatpush1.msra.mxu0 0.0
        %1635 = vmatprep.subr.mxu0 0.0
        %1636 = vmatpush1.msra.mxu0 0.0
        %1637 = vmatprep.subr.mxu0 0.0
        %1638 = vmatpush1.msra.mxu0 0.0
        %1639 = vmatprep.subr.mxu0 0.0
        %1640 = vmatpush1.msra.mxu0 0.0
        %1641 = vmatprep.subr.mxu0 0.0
        %1642 = vmatpush1.msra.mxu0 0.0
        %1643 = vmatprep.subr.mxu0 0.0
        %1644 = vmatpush1.msra.mxu0 0.0
        %1645 = vmatprep.subr.mxu0 0.0
        %1646 = vmatpush1.msra.mxu0 0.0
        %1647 = vmatprep.subr.mxu0 0.0
        %1648 = vmatpush1.msra.mxu0 0.0
        %1649 = vmatprep.subr.mxu0 0.0
        %1650 = vmatpush1.msra.mxu0 0.0
        %1651 = vmatprep.subr.mxu0 0.0
        %1652 = vmatpush1.msra.mxu0 0.0
        %1653 = vmatprep.subr.mxu0 0.0
        %1654 = vmatpush1.msra.mxu0 0.0
        %1655 = vmatprep.subr.mxu0 0.0
        %1656 = vmatpush1.msra.mxu0 0.0
        %1657 = vmatprep.subr.mxu0 0.0
        %1658 = vmatpush1.msra.mxu0 0.0
        %1659 = vmatprep.subr.mxu0 0.0
        %1660 = vmatpush1.msra.mxu0 0.0
        %1661 = vmatprep.subr.mxu0 0.0
        %1662 = vmatpush1.msra.mxu0 0.0
        %1663 = vmatprep.subr.mxu0 0.0
        %1664 = vmatpush1.msra.mxu0 0.0
        %1665 = vmatprep.subr.mxu0 0.0
        %1666 = vmatpush1.msra.mxu0 0.0
        %1667 = vmatprep.subr.mxu0 0.0
        %1668 = vmatpush1.msra.mxu0 0.0
        %1669 = vmatprep.subr.mxu0 0.0
        %1670 = vmatpush1.msra.mxu0 0.0
        %1671 = vmatprep.subr.mxu0 0.0
        %1672 = vmatpush1.msra.mxu0 0.0
        %1673 = vmatprep.subr.mxu0 0.0
        %1674 = vmatpush1.msra.mxu0 0.0
        %1675 = vmatprep.subr.mxu0 0.0
        %1676 = vmatpush1.msra.mxu0 0.0
        %1677 = vmatprep.subr.mxu0 0.0
        %1678 = vmatpush1.msra.mxu0 0.0
        %1679 = vmatprep.subr.mxu0 0.0
        %1680 = vmatpush1.msra.mxu0 0.0
        %1681 = vmatprep.subr.mxu0 0.0
        %1682 = vmatpush1.msra.mxu0 0.0
        %1683 = vmatprep.subr.mxu0 0.0
        %1684 = vmatpush1.msra.mxu0 0.0
        %1685 = vmatprep.subr.mxu0 0.0
        %1686 = vmatpush1.msra.mxu0 0.0
        %1687 = vmatprep.subr.mxu0 0.0
        %1688 = vmatpush1.msra.mxu0 0.0
        %1689 = vmatprep.subr.mxu0 0.0
        %1690 = vmatpush1.msra.mxu0 0.0
        %1691 = vmatprep.subr.mxu0 0.0
        %1692 = vmatpush1.msra.mxu0 0.0
        %1693 = vmatprep.mubr.f32.mxu0 0.0
        %v1694 = vand.u32 %v1025, 4294901760
        %1695 = vmatmul.mubr.f32.gmra.mrb[0].mxu0 %v1694
        %v1696 = vpop.f32.mrb[0].mxu0
        %v1697 = vadd.f32 %v1606, %v1696
        %v1698 = vpop.f32.mrb[0].mxu0
        %1699 = vmatprep.mubr.f32.mxu0 0.0
        %v1700 = vand.u32 %v1028, 4294901760
        %1701 = vmatmul.mubr.f32.gmra.mrb[0].mxu0 %v1700
        %v1702 = vpop.f32.mrb[0].mxu0
        %v1703 = vadd.f32 %v1616, %v1702
        %v1704 = vpop.f32.mrb[0].mxu0
        %1705 = vdwg.mxu0
        %1706 = vmatprep.subr.mxu0 0.0
        %v1707 = vand.u32 %v991, 4294901760
        %v1708 = vsub.f32 %v991, %v1707
        %1709 = vmatpush1.msra.mxu0 %v1708
        %1710 = vmatprep.subr.mxu0 0.0
        %v1711 = vand.u32 %v997, 4294901760
        %v1712 = vsub.f32 %v997, %v1711
        %1713 = vmatpush1.msra.mxu0 %v1712
        %1714 = vmatprep.subr.mxu0 0.0
        %1715 = vmatpush1.msra.mxu0 0.0
        %1716 = vmatprep.subr.mxu0 0.0
        %1717 = vmatpush1.msra.mxu0 0.0
        %1718 = vmatprep.subr.mxu0 0.0
        %1719 = vmatpush1.msra.mxu0 0.0
        %1720 = vmatprep.subr.mxu0 0.0
        %1721 = vmatpush1.msra.mxu0 0.0
        %1722 = vmatprep.subr.mxu0 0.0
        %1723 = vmatpush1.msra.mxu0 0.0
        %1724 = vmatprep.subr.mxu0 0.0
        %1725 = vmatpush1.msra.mxu0 0.0
        %1726 = vmatprep.subr.mxu0 0.0
        %1727 = vmatpush1.msra.mxu0 0.0
        %1728 = vmatprep.subr.mxu0 0.0
        %1729 = vmatpush1.msra.mxu0 0.0
        %1730 = vmatprep.subr.mxu0 0.0
        %1731 = vmatpush1.msra.mxu0 0.0
        %1732 = vmatprep.subr.mxu0 0.0
        %1733 = vmatpush1.msra.mxu0 0.0
        %1734 = vmatprep.subr.mxu0 0.0
        %1735 = vmatpush1.msra.mxu0 0.0
        %1736 = vmatprep.subr.mxu0 0.0
        %1737 = vmatpush1.msra.mxu0 0.0
        %1738 = vmatprep.subr.mxu0 0.0
        %1739 = vmatpush1.msra.mxu0 0.0
        %1740 = vmatprep.subr.mxu0 0.0
        %1741 = vmatpush1.msra.mxu0 0.0
        %1742 = vmatprep.subr.mxu0 0.0
        %1743 = vmatpush1.msra.mxu0 0.0
        %1744 = vmatprep.subr.mxu0 0.0
        %1745 = vmatpush1.msra.mxu0 0.0
        %1746 = vmatprep.subr.mxu0 0.0
        %1747 = vmatpush1.msra.mxu0 0.0
        %1748 = vmatprep.subr.mxu0 0.0
        %1749 = vmatpush1.msra.mxu0 0.0
        %1750 = vmatprep.subr.mxu0 0.0
        %1751 = vmatpush1.msra.mxu0 0.0
        %1752 = vmatprep.subr.mxu0 0.0
        %1753 = vmatpush1.msra.mxu0 0.0
        %1754 = vmatprep.subr.mxu0 0.0
        %1755 = vmatpush1.msra.mxu0 0.0
        %1756 = vmatprep.subr.mxu0 0.0
        %1757 = vmatpush1.msra.mxu0 0.0
        %1758 = vmatprep.subr.mxu0 0.0
        %1759 = vmatpush1.msra.mxu0 0.0
        %1760 = vmatprep.subr.mxu0 0.0
        %1761 = vmatpush1.msra.mxu0 0.0
        %1762 = vmatprep.subr.mxu0 0.0
        %1763 = vmatpush1.msra.mxu0 0.0
        %1764 = vmatprep.subr.mxu0 0.0
        %1765 = vmatpush1.msra.mxu0 0.0
        %1766 = vmatprep.subr.mxu0 0.0
        %1767 = vmatpush1.msra.mxu0 0.0
        %1768 = vmatprep.subr.mxu0 0.0
        %1769 = vmatpush1.msra.mxu0 0.0
        %1770 = vmatprep.subr.mxu0 0.0
        %1771 = vmatpush1.msra.mxu0 0.0
        %1772 = vmatprep.subr.mxu0 0.0
        %1773 = vmatpush1.msra.mxu0 0.0
        %1774 = vmatprep.mubr.f32.mxu0 0.0
        %v1775 = vand.u32 %v1025, 4294901760
        %v1776 = vsub.f32 %v1025, %v1775
        %1777 = vmatmul.mubr.f32.gmra.mrb[0].mxu0 %v1776
        %v1778 = vpop.f32.mrb[0].mxu0
        %v1779 = vadd.f32 %v1697, %v1778
        %v1780 = vpop.f32.mrb[0].mxu0
        %1781 = vmatprep.mubr.f32.mxu0 0.0
        %v1782 = vand.u32 %v1028, 4294901760
        %v1783 = vsub.f32 %v1028, %v1782
        %1784 = vmatmul.mubr.f32.gmra.mrb[0].mxu0 %v1783
        %v1785 = vpop.f32.mrb[0].mxu0
        %v1786 = vadd.f32 %v1703, %v1785
        %v1787 = vpop.f32.mrb[0].mxu0
        %1788 = vdwg.mxu0
        %1789 = vmatprep.subr.mxu0 0.0
        %v1790 = vand.u32 %v991, 4294901760
        %1791 = vmatpush1.msra.mxu0 %v1790
        %1792 = vmatprep.subr.mxu0 0.0
        %v1793 = vand.u32 %v997, 4294901760
        %1794 = vmatpush1.msra.mxu0 %v1793
        %1795 = vmatprep.subr.mxu0 0.0
        %1796 = vmatpush1.msra.mxu0 0.0
        %1797 = vmatprep.subr.mxu0 0.0
        %1798 = vmatpush1.msra.mxu0 0.0
        %1799 = vmatprep.subr.mxu0 0.0
        %1800 = vmatpush1.msra.mxu0 0.0
        %1801 = vmatprep.subr.mxu0 0.0
        %1802 = vmatpush1.msra.mxu0 0.0
        %1803 = vmatprep.subr.mxu0 0.0
        %1804 = vmatpush1.msra.mxu0 0.0
        %1805 = vmatprep.subr.mxu0 0.0
        %1806 = vmatpush1.msra.mxu0 0.0
        %1807 = vmatprep.subr.mxu0 0.0
        %1808 = vmatpush1.msra.mxu0 0.0
        %1809 = vmatprep.subr.mxu0 0.0
        %1810 = vmatpush1.msra.mxu0 0.0
        %1811 = vmatprep.subr.mxu0 0.0
        %1812 = vmatpush1.msra.mxu0 0.0
        %1813 = vmatprep.subr.mxu0 0.0
        %1814 = vmatpush1.msra.mxu0 0.0
        %1815 = vmatprep.subr.mxu0 0.0
        %1816 = vmatpush1.msra.mxu0 0.0
        %1817 = vmatprep.subr.mxu0 0.0
        %1818 = vmatpush1.msra.mxu0 0.0
        %1819 = vmatprep.subr.mxu0 0.0
        %1820 = vmatpush1.msra.mxu0 0.0
        %1821 = vmatprep.subr.mxu0 0.0
        %1822 = vmatpush1.msra.mxu0 0.0
        %1823 = vmatprep.subr.mxu0 0.0
        %1824 = vmatpush1.msra.mxu0 0.0
        %1825 = vmatprep.subr.mxu0 0.0
        %1826 = vmatpush1.msra.mxu0 0.0
        %1827 = vmatprep.subr.mxu0 0.0
        %1828 = vmatpush1.msra.mxu0 0.0
        %1829 = vmatprep.subr.mxu0 0.0
        %1830 = vmatpush1.msra.mxu0 0.0
        %1831 = vmatprep.subr.mxu0 0.0
        %1832 = vmatpush1.msra.mxu0 0.0
        %1833 = vmatprep.subr.mxu0 0.0
        %1834 = vmatpush1.msra.mxu0 0.0
        %1835 = vmatprep.subr.mxu0 0.0
        %1836 = vmatpush1.msra.mxu0 0.0
        %1837 = vmatprep.subr.mxu0 0.0
        %1838 = vmatpush1.msra.mxu0 0.0
        %1839 = vmatprep.subr.mxu0 0.0
        %1840 = vmatpush1.msra.mxu0 0.0
        %1841 = vmatprep.subr.mxu0 0.0
        %1842 = vmatpush1.msra.mxu0 0.0
        %1843 = vmatprep.subr.mxu0 0.0
        %1844 = vmatpush1.msra.mxu0 0.0
        %1845 = vmatprep.subr.mxu0 0.0
        %1846 = vmatpush1.msra.mxu0 0.0
        %1847 = vmatprep.subr.mxu0 0.0
        %1848 = vmatpush1.msra.mxu0 0.0
        %1849 = vmatprep.subr.mxu0 0.0
        %1850 = vmatpush1.msra.mxu0 0.0
        %1851 = vmatprep.subr.mxu0 0.0
        %1852 = vmatpush1.msra.mxu0 0.0
        %1853 = vmatprep.subr.mxu0 0.0
        %1854 = vmatpush1.msra.mxu0 0.0
        %1855 = vmatprep.mubr.f32.mxu0 0.0
        %v1856 = vand.u32 %v1025, 4294901760
        %v1857 = vsub.f32 %v1025, %v1856
        %v1858 = vand.u32 %v1857, 4294901760
        %1859 = vmatmul.mubr.f32.gmra.mrb[0].mxu0 %v1858
        %v1860 = vpop.f32.mrb[0].mxu0
        %v1861 = vadd.f32 %v1779, %v1860
        %v1862 = vpop.f32.mrb[0].mxu0
        %1863 = vmatprep.mubr.f32.mxu0 0.0
        %v1864 = vand.u32 %v1028, 4294901760
        %v1865 = vsub.f32 %v1028, %v1864
        %v1866 = vand.u32 %v1865, 4294901760
        %1867 = vmatmul.mubr.f32.gmra.mrb[0].mxu0 %v1866
        %v1868 = vpop.f32.mrb[0].mxu0
        %v1869 = vadd.f32 %v1786, %v1868
        %v1870 = vpop.f32.mrb[0].mxu0
        %1871 = vdwg.mxu0
        %1872 = vmatprep.subr.mxu0 0.0
        %v1873 = vand.u32 %v991, 4294901760
        %v1874 = vsub.f32 %v991, %v1873
        %v1875 = vand.u32 %v1874, 4294901760
        %1876 = vmatpush1.msra.mxu0 %v1875
        %1877 = vmatprep.subr.mxu0 0.0
        %v1878 = vand.u32 %v997, 4294901760
        %v1879 = vsub.f32 %v997, %v1878
        %v1880 = vand.u32 %v1879, 4294901760
        %1881 = vmatpush1.msra.mxu0 %v1880
        %1882 = vmatprep.subr.mxu0 0.0
        %1883 = vmatpush1.msra.mxu0 0.0
        %1884 = vmatprep.subr.mxu0 0.0
        %1885 = vmatpush1.msra.mxu0 0.0
        %1886 = vmatprep.subr.mxu0 0.0
        %1887 = vmatpush1.msra.mxu0 0.0
        %1888 = vmatprep.subr.mxu0 0.0
        %1889 = vmatpush1.msra.mxu0 0.0
        %1890 = vmatprep.subr.mxu0 0.0
        %1891 = vmatpush1.msra.mxu0 0.0
        %1892 = vmatprep.subr.mxu0 0.0
        %1893 = vmatpush1.msra.mxu0 0.0
        %1894 = vmatprep.subr.mxu0 0.0
        %1895 = vmatpush1.msra.mxu0 0.0
        %1896 = vmatprep.subr.mxu0 0.0
        %1897 = vmatpush1.msra.mxu0 0.0
        %1898 = vmatprep.subr.mxu0 0.0
        %1899 = vmatpush1.msra.mxu0 0.0
        %1900 = vmatprep.subr.mxu0 0.0
        %1901 = vmatpush1.msra.mxu0 0.0
        %1902 = vmatprep.subr.mxu0 0.0
        %1903 = vmatpush1.msra.mxu0 0.0
        %1904 = vmatprep.subr.mxu0 0.0
        %1905 = vmatpush1.msra.mxu0 0.0
        %1906 = vmatprep.subr.mxu0 0.0
        %1907 = vmatpush1.msra.mxu0 0.0
        %1908 = vmatprep.subr.mxu0 0.0
        %1909 = vmatpush1.msra.mxu0 0.0
        %1910 = vmatprep.subr.mxu0 0.0
        %1911 = vmatpush1.msra.mxu0 0.0
        %1912 = vmatprep.subr.mxu0 0.0
        %1913 = vmatpush1.msra.mxu0 0.0
        %1914 = vmatprep.subr.mxu0 0.0
        %1915 = vmatpush1.msra.mxu0 0.0
        %1916 = vmatprep.subr.mxu0 0.0
        %1917 = vmatpush1.msra.mxu0 0.0
        %1918 = vmatprep.subr.mxu0 0.0
        %1919 = vmatpush1.msra.mxu0 0.0
        %1920 = vmatprep.subr.mxu0 0.0
        %1921 = vmatpush1.msra.mxu0 0.0
        %1922 = vmatprep.subr.mxu0 0.0
        %1923 = vmatpush1.msra.mxu0 0.0
        %1924 = vmatprep.subr.mxu0 0.0
        %1925 = vmatpush1.msra.mxu0 0.0
        %1926 = vmatprep.subr.mxu0 0.0
        %1927 = vmatpush1.msra.mxu0 0.0
        %1928 = vmatprep.subr.mxu0 0.0
        %1929 = vmatpush1.msra.mxu0 0.0
        %1930 = vmatprep.subr.mxu0 0.0
        %1931 = vmatpush1.msra.mxu0 0.0
        %1932 = vmatprep.subr.mxu0 0.0
        %1933 = vmatpush1.msra.mxu0 0.0
        %1934 = vmatprep.subr.mxu0 0.0
        %1935 = vmatpush1.msra.mxu0 0.0
        %1936 = vmatprep.subr.mxu0 0.0
        %1937 = vmatpush1.msra.mxu0 0.0
        %1938 = vmatprep.subr.mxu0 0.0
        %1939 = vmatpush1.msra.mxu0 0.0
        %1940 = vmatprep.subr.mxu0 0.0
        %1941 = vmatpush1.msra.mxu0 0.0
        %1942 = vmatprep.mubr.f32.mxu0 0.0
        %v1943 = vand.u32 %v1025, 4294901760
        %1944 = vmatmul.mubr.f32.gmra.mrb[0].mxu0 %v1943
        %v1945 = vpop.f32.mrb[0].mxu0
        %v1946 = vadd.f32 %v1861, %v1945
        %v1947 = vpop.f32.mrb[0].mxu0
        %1948 = vmatprep.mubr.f32.mxu0 0.0
        %v1949 = vand.u32 %v1028, 4294901760
        %1950 = vmatmul.mubr.f32.gmra.mrb[0].mxu0 %v1949
        %v1951 = vpop.f32.mrb[0].mxu0
        %v1952 = vadd.f32 %v1869, %v1951
        %v1953 = vpop.f32.mrb[0].mxu0
        %1954 = vdwg.mxu0
        %1955 = vmatprep.subr.mxu0 0.0
        %v1956 = vand.u32 %v991, 4294901760
        %1957 = vmatpush1.msra.mxu0 %v1956
        %1958 = vmatprep.subr.mxu0 0.0
        %v1959 = vand.u32 %v997, 4294901760
        %1960 = vmatpush1.msra.mxu0 %v1959
        %1961 = vmatprep.subr.mxu0 0.0
        %1962 = vmatpush1.msra.mxu0 0.0
        %1963 = vmatprep.subr.mxu0 0.0
        %1964 = vmatpush1.msra.mxu0 0.0
        %1965 = vmatprep.subr.mxu0 0.0
        %1966 = vmatpush1.msra.mxu0 0.0
        %1967 = vmatprep.subr.mxu0 0.0
        %1968 = vmatpush1.msra.mxu0 0.0
        %1969 = vmatprep.subr.mxu0 0.0
        %1970 = vmatpush1.msra.mxu0 0.0
        %1971 = vmatprep.subr.mxu0 0.0
        %1972 = vmatpush1.msra.mxu0 0.0
        %1973 = vmatprep.subr.mxu0 0.0
        %1974 = vmatpush1.msra.mxu0 0.0
        %1975 = vmatprep.subr.mxu0 0.0
        %1976 = vmatpush1.msra.mxu0 0.0
        %1977 = vmatprep.subr.mxu0 0.0
        %1978 = vmatpush1.msra.mxu0 0.0
        %1979 = vmatprep.subr.mxu0 0.0
        %1980 = vmatpush1.msra.mxu0 0.0
        %1981 = vmatprep.subr.mxu0 0.0
        %1982 = vmatpush1.msra.mxu0 0.0
        %1983 = vmatprep.subr.mxu0 0.0
        %1984 = vmatpush1.msra.mxu0 0.0
        %1985 = vmatprep.subr.mxu0 0.0
        %1986 = vmatpush1.msra.mxu0 0.0
        %1987 = vmatprep.subr.mxu0 0.0
        %1988 = vmatpush1.msra.mxu0 0.0
        %1989 = vmatprep.subr.mxu0 0.0
        %1990 = vmatpush1.msra.mxu0 0.0
        %1991 = vmatprep.subr.mxu0 0.0
        %1992 = vmatpush1.msra.mxu0 0.0
        %1993 = vmatprep.subr.mxu0 0.0
        %1994 = vmatpush1.msra.mxu0 0.0
        %1995 = vmatprep.subr.mxu0 0.0
        %1996 = vmatpush1.msra.mxu0 0.0
        %1997 = vmatprep.subr.mxu0 0.0
        %1998 = vmatpush1.msra.mxu0 0.0
        %1999 = vmatprep.subr.mxu0 0.0
        %2000 = vmatpush1.msra.mxu0 0.0
        %2001 = vmatprep.subr.mxu0 0.0
        %2002 = vmatpush1.msra.mxu0 0.0
        %2003 = vmatprep.subr.mxu0 0.0
        %2004 = vmatpush1.msra.mxu0 0.0
        %2005 = vmatprep.subr.mxu0 0.0
        %2006 = vmatpush1.msra.mxu0 0.0
        %2007 = vmatprep.subr.mxu0 0.0
        %2008 = vmatpush1.msra.mxu0 0.0
        %2009 = vmatprep.subr.mxu0 0.0
        %2010 = vmatpush1.msra.mxu0 0.0
        %2011 = vmatprep.subr.mxu0 0.0
        %2012 = vmatpush1.msra.mxu0 0.0
        %2013 = vmatprep.subr.mxu0 0.0
        %2014 = vmatpush1.msra.mxu0 0.0
        %2015 = vmatprep.subr.mxu0 0.0
        %2016 = vmatpush1.msra.mxu0 0.0
        %2017 = vmatprep.subr.mxu0 0.0
        %2018 = vmatpush1.msra.mxu0 0.0
        %2019 = vmatprep.subr.mxu0 0.0
        %2020 = vmatpush1.msra.mxu0 0.0
        %2021 = vmatprep.mubr.f32.mxu0 0.0
        %v2022 = vand.u32 %v1025, 4294901760
        %2023 = vmatmul.mubr.f32.gmra.mrb[0].mxu0 %v2022
        %v2024 = vpop.f32.mrb[0].mxu0
        %v2025 = vadd.f32 %v1946, %v2024
        %v2026 = vpop.f32.mrb[0].mxu0
        %2027 = vmatprep.mubr.f32.mxu0 0.0
        %v2028 = vand.u32 %v1028, 4294901760
        %2029 = vmatmul.mubr.f32.gmra.mrb[0].mxu0 %v2028
        %v2030 = vpop.f32.mrb[0].mxu0
        %v2031 = vadd.f32 %v1952, %v2030
        %v2032 = vpop.f32.mrb[0].mxu0
        %2033 = vdwg.mxu0
        %2034 = vmatprep.subr.mxu0 0.0
        %v2035 = vand.u32 %v1003, 4294901760
        %2036 = vmatpush1.msra.mxu0 %v2035
        %2037 = vmatprep.subr.mxu0 0.0
        %v2038 = vand.u32 %v1009, 4294901760
        %2039 = vmatpush1.msra.mxu0 %v2038
        %2040 = vmatprep.subr.mxu0 0.0
        %2041 = vmatpush1.msra.mxu0 0.0
        %2042 = vmatprep.subr.mxu0 0.0
        %2043 = vmatpush1.msra.mxu0 0.0
        %2044 = vmatprep.subr.mxu0 0.0
        %2045 = vmatpush1.msra.mxu0 0.0
        %2046 = vmatprep.subr.mxu0 0.0
        %2047 = vmatpush1.msra.mxu0 0.0
        %2048 = vmatprep.subr.mxu0 0.0
        %2049 = vmatpush1.msra.mxu0 0.0
        %2050 = vmatprep.subr.mxu0 0.0
        %2051 = vmatpush1.msra.mxu0 0.0
        %2052 = vmatprep.subr.mxu0 0.0
        %2053 = vmatpush1.msra.mxu0 0.0
        %2054 = vmatprep.subr.mxu0 0.0
        %2055 = vmatpush1.msra.mxu0 0.0
        %2056 = vmatprep.subr.mxu0 0.0
        %2057 = vmatpush1.msra.mxu0 0.0
        %2058 = vmatprep.subr.mxu0 0.0
        %2059 = vmatpush1.msra.mxu0 0.0
        %2060 = vmatprep.subr.mxu0 0.0
        %2061 = vmatpush1.msra.mxu0 0.0
        %2062 = vmatprep.subr.mxu0 0.0
        %2063 = vmatpush1.msra.mxu0 0.0
        %2064 = vmatprep.subr.mxu0 0.0
        %2065 = vmatpush1.msra.mxu0 0.0
        %2066 = vmatprep.subr.mxu0 0.0
        %2067 = vmatpush1.msra.mxu0 0.0
        %2068 = vmatprep.subr.mxu0 0.0
        %2069 = vmatpush1.msra.mxu0 0.0
        %2070 = vmatprep.subr.mxu0 0.0
        %2071 = vmatpush1.msra.mxu0 0.0
        %2072 = vmatprep.subr.mxu0 0.0
        %2073 = vmatpush1.msra.mxu0 0.0
        %2074 = vmatprep.subr.mxu0 0.0
        %2075 = vmatpush1.msra.mxu0 0.0
        %2076 = vmatprep.subr.mxu0 0.0
        %2077 = vmatpush1.msra.mxu0 0.0
        %2078 = vmatprep.subr.mxu0 0.0
        %2079 = vmatpush1.msra.mxu0 0.0
        %2080 = vmatprep.subr.mxu0 0.0
        %2081 = vmatpush1.msra.mxu0 0.0
        %2082 = vmatprep.subr.mxu0 0.0
        %2083 = vmatpush1.msra.mxu0 0.0
        %2084 = vmatprep.subr.mxu0 0.0
        %2085 = vmatpush1.msra.mxu0 0.0
        %2086 = vmatprep.subr.mxu0 0.0
        %2087 = vmatpush1.msra.mxu0 0.0
        %2088 = vmatprep.subr.mxu0 0.0
        %2089 = vmatpush1.msra.mxu0 0.0
        %2090 = vmatprep.subr.mxu0 0.0
        %2091 = vmatpush1.msra.mxu0 0.0
        %2092 = vmatprep.subr.mxu0 0.0
        %2093 = vmatpush1.msra.mxu0 0.0
        %2094 = vmatprep.subr.mxu0 0.0
        %2095 = vmatpush1.msra.mxu0 0.0
        %2096 = vmatprep.subr.mxu0 0.0
        %2097 = vmatpush1.msra.mxu0 0.0
        %2098 = vmatprep.subr.mxu0 0.0
        %2099 = vmatpush1.msra.mxu0 0.0
        %2100 = vmatprep.mubr.f32.mxu0 0.0
        %v2101 = vand.u32 %v1025, 4294901760
        %v2102 = vsub.f32 %v1025, %v2101
        %v2103 = vand.u32 %v2102, 4294901760
        %v2104 = vsub.f32 %v2102, %v2103
        %v2105 = vand.u32 %v2104, 4294901760
        %2106 = vmatmul.mubr.f32.gmra.mrb[0].mxu0 %v2105
        %v2107 = vpop.f32.mrb[0].mxu0
        %v2108 = vadd.f32 0.0, %v2107
        %v2109 = vpop.f32.mrb[0].mxu0
        %2110 = vmatprep.mubr.f32.mxu0 0.0
        %v2111 = vand.u32 %v1028, 4294901760
        %v2112 = vsub.f32 %v1028, %v2111
        %v2113 = vand.u32 %v2112, 4294901760
        %v2114 = vsub.f32 %v2112, %v2113
        %v2115 = vand.u32 %v2114, 4294901760
        %2116 = vmatmul.mubr.f32.gmra.mrb[0].mxu0 %v2115
        %v2117 = vpop.f32.mrb[0].mxu0
        %v2118 = vadd.f32 0.0, %v2117
        %v2119 = vpop.f32.mrb[0].mxu0
        %2120 = vdwg.mxu0
        %2121 = vmatprep.subr.mxu0 0.0
        %v2122 = vand.u32 %v1003, 4294901760
        %v2123 = vsub.f32 %v1003, %v2122
        %v2124 = vand.u32 %v2123, 4294901760
        %v2125 = vsub.f32 %v2123, %v2124
        %v2126 = vand.u32 %v2125, 4294901760
        %2127 = vmatpush1.msra.mxu0 %v2126
        %2128 = vmatprep.subr.mxu0 0.0
        %v2129 = vand.u32 %v1009, 4294901760
        %v2130 = vsub.f32 %v1009, %v2129
        %v2131 = vand.u32 %v2130, 4294901760
        %v2132 = vsub.f32 %v2130, %v2131
        %v2133 = vand.u32 %v2132, 4294901760
        %2134 = vmatpush1.msra.mxu0 %v2133
        %2135 = vmatprep.subr.mxu0 0.0
        %2136 = vmatpush1.msra.mxu0 0.0
        %2137 = vmatprep.subr.mxu0 0.0
        %2138 = vmatpush1.msra.mxu0 0.0
        %2139 = vmatprep.subr.mxu0 0.0
        %2140 = vmatpush1.msra.mxu0 0.0
        %2141 = vmatprep.subr.mxu0 0.0
        %2142 = vmatpush1.msra.mxu0 0.0
        %2143 = vmatprep.subr.mxu0 0.0
        %2144 = vmatpush1.msra.mxu0 0.0
        %2145 = vmatprep.subr.mxu0 0.0
        %2146 = vmatpush1.msra.mxu0 0.0
        %2147 = vmatprep.subr.mxu0 0.0
        %2148 = vmatpush1.msra.mxu0 0.0
        %2149 = vmatprep.subr.mxu0 0.0
        %2150 = vmatpush1.msra.mxu0 0.0
        %2151 = vmatprep.subr.mxu0 0.0
        %2152 = vmatpush1.msra.mxu0 0.0
        %2153 = vmatprep.subr.mxu0 0.0
        %2154 = vmatpush1.msra.mxu0 0.0
        %2155 = vmatprep.subr.mxu0 0.0
        %2156 = vmatpush1.msra.mxu0 0.0
        %2157 = vmatprep.subr.mxu0 0.0
        %2158 = vmatpush1.msra.mxu0 0.0
        %2159 = vmatprep.subr.mxu0 0.0
        %2160 = vmatpush1.msra.mxu0 0.0
        %2161 = vmatprep.subr.mxu0 0.0
        %2162 = vmatpush1.msra.mxu0 0.0
        %2163 = vmatprep.subr.mxu0 0.0
        %2164 = vmatpush1.msra.mxu0 0.0
        %2165 = vmatprep.subr.mxu0 0.0
        %2166 = vmatpush1.msra.mxu0 0.0
        %2167 = vmatprep.subr.mxu0 0.0
        %2168 = vmatpush1.msra.mxu0 0.0
        %2169 = vmatprep.subr.mxu0 0.0
        %2170 = vmatpush1.msra.mxu0 0.0
        %2171 = vmatprep.subr.mxu0 0.0
        %2172 = vmatpush1.msra.mxu0 0.0
        %2173 = vmatprep.subr.mxu0 0.0
        %2174 = vmatpush1.msra.mxu0 0.0
        %2175 = vmatprep.subr.mxu0 0.0
        %2176 = vmatpush1.msra.mxu0 0.0
        %2177 = vmatprep.subr.mxu0 0.0
        %2178 = vmatpush1.msra.mxu0 0.0
        %2179 = vmatprep.subr.mxu0 0.0
        %2180 = vmatpush1.msra.mxu0 0.0
        %2181 = vmatprep.subr.mxu0 0.0
        %2182 = vmatpush1.msra.mxu0 0.0
        %2183 = vmatprep.subr.mxu0 0.0
        %2184 = vmatpush1.msra.mxu0 0.0
        %2185 = vmatprep.subr.mxu0 0.0
        %2186 = vmatpush1.msra.mxu0 0.0
        %2187 = vmatprep.subr.mxu0 0.0
        %2188 = vmatpush1.msra.mxu0 0.0
        %2189 = vmatprep.subr.mxu0 0.0
        %2190 = vmatpush1.msra.mxu0 0.0
        %2191 = vmatprep.subr.mxu0 0.0
        %2192 = vmatpush1.msra.mxu0 0.0
        %2193 = vmatprep.subr.mxu0 0.0
        %2194 = vmatpush1.msra.mxu0 0.0
        %2195 = vmatprep.mubr.f32.mxu0 0.0
        %v2196 = vand.u32 %v1025, 4294901760
        %2197 = vmatmul.mubr.f32.gmra.mrb[0].mxu0 %v2196
        %v2198 = vpop.f32.mrb[0].mxu0
        %v2199 = vadd.f32 %v2108, %v2198
        %v2200 = vpop.f32.mrb[0].mxu0
        %2201 = vmatprep.mubr.f32.mxu0 0.0
        %v2202 = vand.u32 %v1028, 4294901760
        %2203 = vmatmul.mubr.f32.gmra.mrb[0].mxu0 %v2202
        %v2204 = vpop.f32.mrb[0].mxu0
        %v2205 = vadd.f32 %v2118, %v2204
        %v2206 = vpop.f32.mrb[0].mxu0
        %2207 = vdwg.mxu0
        %2208 = vmatprep.subr.mxu0 0.0
        %v2209 = vand.u32 %v1003, 4294901760
        %v2210 = vsub.f32 %v1003, %v2209
        %2211 = vmatpush1.msra.mxu0 %v2210
        %2212 = vmatprep.subr.mxu0 0.0
        %v2213 = vand.u32 %v1009, 4294901760
        %v2214 = vsub.f32 %v1009, %v2213
        %2215 = vmatpush1.msra.mxu0 %v2214
        %2216 = vmatprep.subr.mxu0 0.0
        %2217 = vmatpush1.msra.mxu0 0.0
        %2218 = vmatprep.subr.mxu0 0.0
        %2219 = vmatpush1.msra.mxu0 0.0
        %2220 = vmatprep.subr.mxu0 0.0
        %2221 = vmatpush1.msra.mxu0 0.0
        %2222 = vmatprep.subr.mxu0 0.0
        %2223 = vmatpush1.msra.mxu0 0.0
        %2224 = vmatprep.subr.mxu0 0.0
        %2225 = vmatpush1.msra.mxu0 0.0
        %2226 = vmatprep.subr.mxu0 0.0
        %2227 = vmatpush1.msra.mxu0 0.0
        %2228 = vmatprep.subr.mxu0 0.0
        %2229 = vmatpush1.msra.mxu0 0.0
        %2230 = vmatprep.subr.mxu0 0.0
        %2231 = vmatpush1.msra.mxu0 0.0
        %2232 = vmatprep.subr.mxu0 0.0
        %2233 = vmatpush1.msra.mxu0 0.0
        %2234 = vmatprep.subr.mxu0 0.0
        %2235 = vmatpush1.msra.mxu0 0.0
        %2236 = vmatprep.subr.mxu0 0.0
        %2237 = vmatpush1.msra.mxu0 0.0
        %2238 = vmatprep.subr.mxu0 0.0
        %2239 = vmatpush1.msra.mxu0 0.0
        %2240 = vmatprep.subr.mxu0 0.0
        %2241 = vmatpush1.msra.mxu0 0.0
        %2242 = vmatprep.subr.mxu0 0.0
        %2243 = vmatpush1.msra.mxu0 0.0
        %2244 = vmatprep.subr.mxu0 0.0
        %2245 = vmatpush1.msra.mxu0 0.0
        %2246 = vmatprep.subr.mxu0 0.0
        %2247 = vmatpush1.msra.mxu0 0.0
        %2248 = vmatprep.subr.mxu0 0.0
        %2249 = vmatpush1.msra.mxu0 0.0
        %2250 = vmatprep.subr.mxu0 0.0
        %2251 = vmatpush1.msra.mxu0 0.0
        %2252 = vmatprep.subr.mxu0 0.0
        %2253 = vmatpush1.msra.mxu0 0.0
        %2254 = vmatprep.subr.mxu0 0.0
        %2255 = vmatpush1.msra.mxu0 0.0
        %2256 = vmatprep.subr.mxu0 0.0
        %2257 = vmatpush1.msra.mxu0 0.0
        %2258 = vmatprep.subr.mxu0 0.0
        %2259 = vmatpush1.msra.mxu0 0.0
        %2260 = vmatprep.subr.mxu0 0.0
        %2261 = vmatpush1.msra.mxu0 0.0
        %2262 = vmatprep.subr.mxu0 0.0
        %2263 = vmatpush1.msra.mxu0 0.0
        %2264 = vmatprep.subr.mxu0 0.0
        %2265 = vmatpush1.msra.mxu0 0.0
        %2266 = vmatprep.subr.mxu0 0.0
        %2267 = vmatpush1.msra.mxu0 0.0
        %2268 = vmatprep.subr.mxu0 0.0
        %2269 = vmatpush1.msra.mxu0 0.0
        %2270 = vmatprep.subr.mxu0 0.0
        %2271 = vmatpush1.msra.mxu0 0.0
        %2272 = vmatprep.subr.mxu0 0.0
        %2273 = vmatpush1.msra.mxu0 0.0
        %2274 = vmatprep.subr.mxu0 0.0
        %2275 = vmatpush1.msra.mxu0 0.0
        %2276 = vmatprep.mubr.f32.mxu0 0.0
        %v2277 = vand.u32 %v1025, 4294901760
        %v2278 = vsub.f32 %v1025, %v2277
        %2279 = vmatmul.mubr.f32.gmra.mrb[0].mxu0 %v2278
        %v2280 = vpop.f32.mrb[0].mxu0
        %v2281 = vadd.f32 %v2199, %v2280
        %v2282 = vpop.f32.mrb[0].mxu0
        %2283 = vmatprep.mubr.f32.mxu0 0.0
        %v2284 = vand.u32 %v1028, 4294901760
        %v2285 = vsub.f32 %v1028, %v2284
        %2286 = vmatmul.mubr.f32.gmra.mrb[0].mxu0 %v2285
        %v2287 = vpop.f32.mrb[0].mxu0
        %v2288 = vadd.f32 %v2205, %v2287
        %v2289 = vpop.f32.mrb[0].mxu0
        %2290 = vdwg.mxu0
        %2291 = vmatprep.subr.mxu0 0.0
        %v2292 = vand.u32 %v1003, 4294901760
        %2293 = vmatpush1.msra.mxu0 %v2292
        %2294 = vmatprep.subr.mxu0 0.0
        %v2295 = vand.u32 %v1009, 4294901760
        %2296 = vmatpush1.msra.mxu0 %v2295
        %2297 = vmatprep.subr.mxu0 0.0
        %2298 = vmatpush1.msra.mxu0 0.0
        %2299 = vmatprep.subr.mxu0 0.0
        %2300 = vmatpush1.msra.mxu0 0.0
        %2301 = vmatprep.subr.mxu0 0.0
        %2302 = vmatpush1.msra.mxu0 0.0
        %2303 = vmatprep.subr.mxu0 0.0
        %2304 = vmatpush1.msra.mxu0 0.0
        %2305 = vmatprep.subr.mxu0 0.0
        %2306 = vmatpush1.msra.mxu0 0.0
        %2307 = vmatprep.subr.mxu0 0.0
        %2308 = vmatpush1.msra.mxu0 0.0
        %2309 = vmatprep.subr.mxu0 0.0
        %2310 = vmatpush1.msra.mxu0 0.0
        %2311 = vmatprep.subr.mxu0 0.0
        %2312 = vmatpush1.msra.mxu0 0.0
        %2313 = vmatprep.subr.mxu0 0.0
        %2314 = vmatpush1.msra.mxu0 0.0
        %2315 = vmatprep.subr.mxu0 0.0
        %2316 = vmatpush1.msra.mxu0 0.0
        %2317 = vmatprep.subr.mxu0 0.0
        %2318 = vmatpush1.msra.mxu0 0.0
        %2319 = vmatprep.subr.mxu0 0.0
        %2320 = vmatpush1.msra.mxu0 0.0
        %2321 = vmatprep.subr.mxu0 0.0
        %2322 = vmatpush1.msra.mxu0 0.0
        %2323 = vmatprep.subr.mxu0 0.0
        %2324 = vmatpush1.msra.mxu0 0.0
        %2325 = vmatprep.subr.mxu0 0.0
        %2326 = vmatpush1.msra.mxu0 0.0
        %2327 = vmatprep.subr.mxu0 0.0
        %2328 = vmatpush1.msra.mxu0 0.0
        %2329 = vmatprep.subr.mxu0 0.0
        %2330 = vmatpush1.msra.mxu0 0.0
        %2331 = vmatprep.subr.mxu0 0.0
        %2332 = vmatpush1.msra.mxu0 0.0
        %2333 = vmatprep.subr.mxu0 0.0
        %2334 = vmatpush1.msra.mxu0 0.0
        %2335 = vmatprep.subr.mxu0 0.0
        %2336 = vmatpush1.msra.mxu0 0.0
        %2337 = vmatprep.subr.mxu0 0.0
        %2338 = vmatpush1.msra.mxu0 0.0
        %2339 = vmatprep.subr.mxu0 0.0
        %2340 = vmatpush1.msra.mxu0 0.0
        %2341 = vmatprep.subr.mxu0 0.0
        %2342 = vmatpush1.msra.mxu0 0.0
        %2343 = vmatprep.subr.mxu0 0.0
        %2344 = vmatpush1.msra.mxu0 0.0
        %2345 = vmatprep.subr.mxu0 0.0
        %2346 = vmatpush1.msra.mxu0 0.0
        %2347 = vmatprep.subr.mxu0 0.0
        %2348 = vmatpush1.msra.mxu0 0.0
        %2349 = vmatprep.subr.mxu0 0.0
        %2350 = vmatpush1.msra.mxu0 0.0
        %2351 = vmatprep.subr.mxu0 0.0
        %2352 = vmatpush1.msra.mxu0 0.0
        %2353 = vmatprep.subr.mxu0 0.0
        %2354 = vmatpush1.msra.mxu0 0.0
        %2355 = vmatprep.subr.mxu0 0.0
        %2356 = vmatpush1.msra.mxu0 0.0
        %2357 = vmatprep.mubr.f32.mxu0 0.0
        %v2358 = vand.u32 %v1025, 4294901760
        %v2359 = vsub.f32 %v1025, %v2358
        %v2360 = vand.u32 %v2359, 4294901760
        %2361 = vmatmul.mubr.f32.gmra.mrb[0].mxu0 %v2360
        %v2362 = vpop.f32.mrb[0].mxu0
        %v2363 = vadd.f32 %v2281, %v2362
        %v2364 = vpop.f32.mrb[0].mxu0
        %2365 = vmatprep.mubr.f32.mxu0 0.0
        %v2366 = vand.u32 %v1028, 4294901760
        %v2367 = vsub.f32 %v1028, %v2366
        %v2368 = vand.u32 %v2367, 4294901760
        %2369 = vmatmul.mubr.f32.gmra.mrb[0].mxu0 %v2368
        %v2370 = vpop.f32.mrb[0].mxu0
        %v2371 = vadd.f32 %v2288, %v2370
        %v2372 = vpop.f32.mrb[0].mxu0
        %2373 = vdwg.mxu0
        %2374 = vmatprep.subr.mxu0 0.0
        %v2375 = vand.u32 %v1003, 4294901760
        %v2376 = vsub.f32 %v1003, %v2375
        %v2377 = vand.u32 %v2376, 4294901760
        %2378 = vmatpush1.msra.mxu0 %v2377
        %2379 = vmatprep.subr.mxu0 0.0
        %v2380 = vand.u32 %v1009, 4294901760
        %v2381 = vsub.f32 %v1009, %v2380
        %v2382 = vand.u32 %v2381, 4294901760
        %2383 = vmatpush1.msra.mxu0 %v2382
        %2384 = vmatprep.subr.mxu0 0.0
        %2385 = vmatpush1.msra.mxu0 0.0
        %2386 = vmatprep.subr.mxu0 0.0
        %2387 = vmatpush1.msra.mxu0 0.0
        %2388 = vmatprep.subr.mxu0 0.0
        %2389 = vmatpush1.msra.mxu0 0.0
        %2390 = vmatprep.subr.mxu0 0.0
        %2391 = vmatpush1.msra.mxu0 0.0
        %2392 = vmatprep.subr.mxu0 0.0
        %2393 = vmatpush1.msra.mxu0 0.0
        %2394 = vmatprep.subr.mxu0 0.0
        %2395 = vmatpush1.msra.mxu0 0.0
        %2396 = vmatprep.subr.mxu0 0.0
        %2397 = vmatpush1.msra.mxu0 0.0
        %2398 = vmatprep.subr.mxu0 0.0
        %2399 = vmatpush1.msra.mxu0 0.0
        %2400 = vmatprep.subr.mxu0 0.0
        %2401 = vmatpush1.msra.mxu0 0.0
        %2402 = vmatprep.subr.mxu0 0.0
        %2403 = vmatpush1.msra.mxu0 0.0
        %2404 = vmatprep.subr.mxu0 0.0
        %2405 = vmatpush1.msra.mxu0 0.0
        %2406 = vmatprep.subr.mxu0 0.0
        %2407 = vmatpush1.msra.mxu0 0.0
        %2408 = vmatprep.subr.mxu0 0.0
        %2409 = vmatpush1.msra.mxu0 0.0
        %2410 = vmatprep.subr.mxu0 0.0
        %2411 = vmatpush1.msra.mxu0 0.0
        %2412 = vmatprep.subr.mxu0 0.0
        %2413 = vmatpush1.msra.mxu0 0.0
        %2414 = vmatprep.subr.mxu0 0.0
        %2415 = vmatpush1.msra.mxu0 0.0
        %2416 = vmatprep.subr.mxu0 0.0
        %2417 = vmatpush1.msra.mxu0 0.0
        %2418 = vmatprep.subr.mxu0 0.0
        %2419 = vmatpush1.msra.mxu0 0.0
        %2420 = vmatprep.subr.mxu0 0.0
        %2421 = vmatpush1.msra.mxu0 0.0
        %2422 = vmatprep.subr.mxu0 0.0
        %2423 = vmatpush1.msra.mxu0 0.0
        %2424 = vmatprep.subr.mxu0 0.0
        %2425 = vmatpush1.msra.mxu0 0.0
        %2426 = vmatprep.subr.mxu0 0.0
        %2427 = vmatpush1.msra.mxu0 0.0
        %2428 = vmatprep.subr.mxu0 0.0
        %2429 = vmatpush1.msra.mxu0 0.0
        %2430 = vmatprep.subr.mxu0 0.0
        %2431 = vmatpush1.msra.mxu0 0.0
        %2432 = vmatprep.subr.mxu0 0.0
        %2433 = vmatpush1.msra.mxu0 0.0
        %2434 = vmatprep.subr.mxu0 0.0
        %2435 = vmatpush1.msra.mxu0 0.0
        %2436 = vmatprep.subr.mxu0 0.0
        %2437 = vmatpush1.msra.mxu0 0.0
        %2438 = vmatprep.subr.mxu0 0.0
        %2439 = vmatpush1.msra.mxu0 0.0
        %2440 = vmatprep.subr.mxu0 0.0
        %2441 = vmatpush1.msra.mxu0 0.0
        %2442 = vmatprep.subr.mxu0 0.0
        %2443 = vmatpush1.msra.mxu0 0.0
        %2444 = vmatprep.mubr.f32.mxu0 0.0
        %v2445 = vand.u32 %v1025, 4294901760
        %2446 = vmatmul.mubr.f32.gmra.mrb[0].mxu0 %v2445
        %v2447 = vpop.f32.mrb[0].mxu0
        %v2448 = vadd.f32 %v2363, %v2447
        %v2449 = vpop.f32.mrb[0].mxu0
        %2450 = vmatprep.mubr.f32.mxu0 0.0
        %v2451 = vand.u32 %v1028, 4294901760
        %2452 = vmatmul.mubr.f32.gmra.mrb[0].mxu0 %v2451
        %v2453 = vpop.f32.mrb[0].mxu0
        %v2454 = vadd.f32 %v2371, %v2453
        %v2455 = vpop.f32.mrb[0].mxu0
        %2456 = vdwg.mxu0
        %2457 = vmatprep.subr.mxu0 0.0
        %v2458 = vand.u32 %v1003, 4294901760
        %2459 = vmatpush1.msra.mxu0 %v2458
        %2460 = vmatprep.subr.mxu0 0.0
        %v2461 = vand.u32 %v1009, 4294901760
        %2462 = vmatpush1.msra.mxu0 %v2461
        %2463 = vmatprep.subr.mxu0 0.0
        %2464 = vmatpush1.msra.mxu0 0.0
        %2465 = vmatprep.subr.mxu0 0.0
        %2466 = vmatpush1.msra.mxu0 0.0
        %2467 = vmatprep.subr.mxu0 0.0
        %2468 = vmatpush1.msra.mxu0 0.0
        %2469 = vmatprep.subr.mxu0 0.0
        %2470 = vmatpush1.msra.mxu0 0.0
        %2471 = vmatprep.subr.mxu0 0.0
        %2472 = vmatpush1.msra.mxu0 0.0
        %2473 = vmatprep.subr.mxu0 0.0
        %2474 = vmatpush1.msra.mxu0 0.0
        %2475 = vmatprep.subr.mxu0 0.0
        %2476 = vmatpush1.msra.mxu0 0.0
        %2477 = vmatprep.subr.mxu0 0.0
        %2478 = vmatpush1.msra.mxu0 0.0
        %2479 = vmatprep.subr.mxu0 0.0
        %2480 = vmatpush1.msra.mxu0 0.0
        %2481 = vmatprep.subr.mxu0 0.0
        %2482 = vmatpush1.msra.mxu0 0.0
        %2483 = vmatprep.subr.mxu0 0.0
        %2484 = vmatpush1.msra.mxu0 0.0
        %2485 = vmatprep.subr.mxu0 0.0
        %2486 = vmatpush1.msra.mxu0 0.0
        %2487 = vmatprep.subr.mxu0 0.0
        %2488 = vmatpush1.msra.mxu0 0.0
        %2489 = vmatprep.subr.mxu0 0.0
        %2490 = vmatpush1.msra.mxu0 0.0
        %2491 = vmatprep.subr.mxu0 0.0
        %2492 = vmatpush1.msra.mxu0 0.0
        %2493 = vmatprep.subr.mxu0 0.0
        %2494 = vmatpush1.msra.mxu0 0.0
        %2495 = vmatprep.subr.mxu0 0.0
        %2496 = vmatpush1.msra.mxu0 0.0
        %2497 = vmatprep.subr.mxu0 0.0
        %2498 = vmatpush1.msra.mxu0 0.0
        %2499 = vmatprep.subr.mxu0 0.0
        %2500 = vmatpush1.msra.mxu0 0.0
        %2501 = vmatprep.subr.mxu0 0.0
        %2502 = vmatpush1.msra.mxu0 0.0
        %2503 = vmatprep.subr.mxu0 0.0
        %2504 = vmatpush1.msra.mxu0 0.0
        %2505 = vmatprep.subr.mxu0 0.0
        %2506 = vmatpush1.msra.mxu0 0.0
        %2507 = vmatprep.subr.mxu0 0.0
        %2508 = vmatpush1.msra.mxu0 0.0
        %2509 = vmatprep.subr.mxu0 0.0
        %2510 = vmatpush1.msra.mxu0 0.0
        %2511 = vmatprep.subr.mxu0 0.0
        %2512 = vmatpush1.msra.mxu0 0.0
        %2513 = vmatprep.subr.mxu0 0.0
        %2514 = vmatpush1.msra.mxu0 0.0
        %2515 = vmatprep.subr.mxu0 0.0
        %2516 = vmatpush1.msra.mxu0 0.0
        %2517 = vmatprep.subr.mxu0 0.0
        %2518 = vmatpush1.msra.mxu0 0.0
        %2519 = vmatprep.subr.mxu0 0.0
        %2520 = vmatpush1.msra.mxu0 0.0
        %2521 = vmatprep.subr.mxu0 0.0
        %2522 = vmatpush1.msra.mxu0 0.0
        %2523 = vmatprep.mubr.f32.mxu0 0.0
        %v2524 = vand.u32 %v1025, 4294901760
        %2525 = vmatmul.mubr.f32.gmra.mrb[0].mxu0 %v2524
        %v2526 = vpop.f32.mrb[0].mxu0
        %v2527 = vadd.f32 %v2448, %v2526
        %v2528 = vpop.f32.mrb[0].mxu0
        %2529 = vmatprep.mubr.f32.mxu0 0.0
        %v2530 = vand.u32 %v1028, 4294901760
        %2531 = vmatmul.mubr.f32.gmra.mrb[0].mxu0 %v2530
        %v2532 = vpop.f32.mrb[0].mxu0
        %v2533 = vadd.f32 %v2454, %v2532
        %v2534 = vpop.f32.mrb[0].mxu0
        %2535 = vdwg.mxu0
        %2536 = vmatprep.subr.mxu0 0.0
        %v2537 = vand.u32 %v1015, 4294901760
        %2538 = vmatpush1.msra.mxu0 %v2537
        %2539 = vmatprep.subr.mxu0 0.0
        %v2540 = vand.u32 %v1021, 4294901760
        %2541 = vmatpush1.msra.mxu0 %v2540
        %2542 = vmatprep.subr.mxu0 0.0
        %2543 = vmatpush1.msra.mxu0 0.0
        %2544 = vmatprep.subr.mxu0 0.0
        %2545 = vmatpush1.msra.mxu0 0.0
        %2546 = vmatprep.subr.mxu0 0.0
        %2547 = vmatpush1.msra.mxu0 0.0
        %2548 = vmatprep.subr.mxu0 0.0
        %2549 = vmatpush1.msra.mxu0 0.0
        %2550 = vmatprep.subr.mxu0 0.0
        %2551 = vmatpush1.msra.mxu0 0.0
        %2552 = vmatprep.subr.mxu0 0.0
        %2553 = vmatpush1.msra.mxu0 0.0
        %2554 = vmatprep.subr.mxu0 0.0
        %2555 = vmatpush1.msra.mxu0 0.0
        %2556 = vmatprep.subr.mxu0 0.0
        %2557 = vmatpush1.msra.mxu0 0.0
        %2558 = vmatprep.subr.mxu0 0.0
        %2559 = vmatpush1.msra.mxu0 0.0
        %2560 = vmatprep.subr.mxu0 0.0
        %2561 = vmatpush1.msra.mxu0 0.0
        %2562 = vmatprep.subr.mxu0 0.0
        %2563 = vmatpush1.msra.mxu0 0.0
        %2564 = vmatprep.subr.mxu0 0.0
        %2565 = vmatpush1.msra.mxu0 0.0
        %2566 = vmatprep.subr.mxu0 0.0
        %2567 = vmatpush1.msra.mxu0 0.0
        %2568 = vmatprep.subr.mxu0 0.0
        %2569 = vmatpush1.msra.mxu0 0.0
        %2570 = vmatprep.subr.mxu0 0.0
        %2571 = vmatpush1.msra.mxu0 0.0
        %2572 = vmatprep.subr.mxu0 0.0
        %2573 = vmatpush1.msra.mxu0 0.0
        %2574 = vmatprep.subr.mxu0 0.0
        %2575 = vmatpush1.msra.mxu0 0.0
        %2576 = vmatprep.subr.mxu0 0.0
        %2577 = vmatpush1.msra.mxu0 0.0
        %2578 = vmatprep.subr.mxu0 0.0
        %2579 = vmatpush1.msra.mxu0 0.0
        %2580 = vmatprep.subr.mxu0 0.0
        %2581 = vmatpush1.msra.mxu0 0.0
        %2582 = vmatprep.subr.mxu0 0.0
        %2583 = vmatpush1.msra.mxu0 0.0
        %2584 = vmatprep.subr.mxu0 0.0
        %2585 = vmatpush1.msra.mxu0 0.0
        %2586 = vmatprep.subr.mxu0 0.0
        %2587 = vmatpush1.msra.mxu0 0.0
        %2588 = vmatprep.subr.mxu0 0.0
        %2589 = vmatpush1.msra.mxu0 0.0
        %2590 = vmatprep.subr.mxu0 0.0
        %2591 = vmatpush1.msra.mxu0 0.0
        %2592 = vmatprep.subr.mxu0 0.0
        %2593 = vmatpush1.msra.mxu0 0.0
        %2594 = vmatprep.subr.mxu0 0.0
        %2595 = vmatpush1.msra.mxu0 0.0
        %2596 = vmatprep.subr.mxu0 0.0
        %2597 = vmatpush1.msra.mxu0 0.0
        %2598 = vmatprep.subr.mxu0 0.0
        %2599 = vmatpush1.msra.mxu0 0.0
        %2600 = vmatprep.subr.mxu0 0.0
        %2601 = vmatpush1.msra.mxu0 0.0
        %2602 = vmatprep.mubr.f32.mxu0 0.0
        %v2603 = vand.u32 %v1025, 4294901760
        %v2604 = vsub.f32 %v1025, %v2603
        %v2605 = vand.u32 %v2604, 4294901760
        %v2606 = vsub.f32 %v2604, %v2605
        %v2607 = vand.u32 %v2606, 4294901760
        %2608 = vmatmul.mubr.f32.gmra.mrb[0].mxu0 %v2607
        %v2609 = vpop.f32.mrb[0].mxu0
        %v2610 = vadd.f32 0.0, %v2609
        %v2611 = vpop.f32.mrb[0].mxu0
        %2612 = vmatprep.mubr.f32.mxu0 0.0
        %v2613 = vand.u32 %v1028, 4294901760
        %v2614 = vsub.f32 %v1028, %v2613
        %v2615 = vand.u32 %v2614, 4294901760
        %v2616 = vsub.f32 %v2614, %v2615
        %v2617 = vand.u32 %v2616, 4294901760
        %2618 = vmatmul.mubr.f32.gmra.mrb[0].mxu0 %v2617
        %v2619 = vpop.f32.mrb[0].mxu0
        %v2620 = vadd.f32 0.0, %v2619
        %v2621 = vpop.f32.mrb[0].mxu0
        %2622 = vdwg.mxu0
        %2623 = vmatprep.subr.mxu0 0.0
        %v2624 = vand.u32 %v1015, 4294901760
        %v2625 = vsub.f32 %v1015, %v2624
        %v2626 = vand.u32 %v2625, 4294901760
        %v2627 = vsub.f32 %v2625, %v2626
        %v2628 = vand.u32 %v2627, 4294901760
        %2629 = vmatpush1.msra.mxu0 %v2628
        %2630 = vmatprep.subr.mxu0 0.0
        %v2631 = vand.u32 %v1021, 4294901760
        %v2632 = vsub.f32 %v1021, %v2631
        %v2633 = vand.u32 %v2632, 4294901760
        %v2634 = vsub.f32 %v2632, %v2633
        %v2635 = vand.u32 %v2634, 4294901760
        %2636 = vmatpush1.msra.mxu0 %v2635
        %2637 = vmatprep.subr.mxu0 0.0
        %2638 = vmatpush1.msra.mxu0 0.0
        %2639 = vmatprep.subr.mxu0 0.0
        %2640 = vmatpush1.msra.mxu0 0.0
        %2641 = vmatprep.subr.mxu0 0.0
        %2642 = vmatpush1.msra.mxu0 0.0
        %2643 = vmatprep.subr.mxu0 0.0
        %2644 = vmatpush1.msra.mxu0 0.0
        %2645 = vmatprep.subr.mxu0 0.0
        %2646 = vmatpush1.msra.mxu0 0.0
        %2647 = vmatprep.subr.mxu0 0.0
        %2648 = vmatpush1.msra.mxu0 0.0
        %2649 = vmatprep.subr.mxu0 0.0
        %2650 = vmatpush1.msra.mxu0 0.0
        %2651 = vmatprep.subr.mxu0 0.0
        %2652 = vmatpush1.msra.mxu0 0.0
        %2653 = vmatprep.subr.mxu0 0.0
        %2654 = vmatpush1.msra.mxu0 0.0
        %2655 = vmatprep.subr.mxu0 0.0
        %2656 = vmatpush1.msra.mxu0 0.0
        %2657 = vmatprep.subr.mxu0 0.0
        %2658 = vmatpush1.msra.mxu0 0.0
        %2659 = vmatprep.subr.mxu0 0.0
        %2660 = vmatpush1.msra.mxu0 0.0
        %2661 = vmatprep.subr.mxu0 0.0
        %2662 = vmatpush1.msra.mxu0 0.0
        %2663 = vmatprep.subr.mxu0 0.0
        %2664 = vmatpush1.msra.mxu0 0.0
        %2665 = vmatprep.subr.mxu0 0.0
        %2666 = vmatpush1.msra.mxu0 0.0
        %2667 = vmatprep.subr.mxu0 0.0
        %2668 = vmatpush1.msra.mxu0 0.0
        %2669 = vmatprep.subr.mxu0 0.0
        %2670 = vmatpush1.msra.mxu0 0.0
        %2671 = vmatprep.subr.mxu0 0.0
        %2672 = vmatpush1.msra.mxu0 0.0
        %2673 = vmatprep.subr.mxu0 0.0
        %2674 = vmatpush1.msra.mxu0 0.0
        %2675 = vmatprep.subr.mxu0 0.0
        %2676 = vmatpush1.msra.mxu0 0.0
        %2677 = vmatprep.subr.mxu0 0.0
        %2678 = vmatpush1.msra.mxu0 0.0
        %2679 = vmatprep.subr.mxu0 0.0
        %2680 = vmatpush1.msra.mxu0 0.0
        %2681 = vmatprep.subr.mxu0 0.0
        %2682 = vmatpush1.msra.mxu0 0.0
        %2683 = vmatprep.subr.mxu0 0.0
        %2684 = vmatpush1.msra.mxu0 0.0
        %2685 = vmatprep.subr.mxu0 0.0
        %2686 = vmatpush1.msra.mxu0 0.0
        %2687 = vmatprep.subr.mxu0 0.0
        %2688 = vmatpush1.msra.mxu0 0.0
        %2689 = vmatprep.subr.mxu0 0.0
        %2690 = vmatpush1.msra.mxu0 0.0
        %2691 = vmatprep.subr.mxu0 0.0
        %2692 = vmatpush1.msra.mxu0 0.0
        %2693 = vmatprep.subr.mxu0 0.0
        %2694 = vmatpush1.msra.mxu0 0.0
        %2695 = vmatprep.subr.mxu0 0.0
        %2696 = vmatpush1.msra.mxu0 0.0
        %2697 = vmatprep.mubr.f32.mxu0 0.0
        %v2698 = vand.u32 %v1025, 4294901760
        %2699 = vmatmul.mubr.f32.gmra.mrb[0].mxu0 %v2698
        %v2700 = vpop.f32.mrb[0].mxu0
        %v2701 = vadd.f32 %v2610, %v2700
        %v2702 = vpop.f32.mrb[0].mxu0
        %2703 = vmatprep.mubr.f32.mxu0 0.0
        %v2704 = vand.u32 %v1028, 4294901760
        %2705 = vmatmul.mubr.f32.gmra.mrb[0].mxu0 %v2704
        %v2706 = vpop.f32.mrb[0].mxu0
        %v2707 = vadd.f32 %v2620, %v2706
        %v2708 = vpop.f32.mrb[0].mxu0
        %2709 = vdwg.mxu0
        %2710 = vmatprep.subr.mxu0 0.0
        %v2711 = vand.u32 %v1015, 4294901760
        %v2712 = vsub.f32 %v1015, %v2711
        %2713 = vmatpush1.msra.mxu0 %v2712
        %2714 = vmatprep.subr.mxu0 0.0
        %v2715 = vand.u32 %v1021, 4294901760
        %v2716 = vsub.f32 %v1021, %v2715
        %2717 = vmatpush1.msra.mxu0 %v2716
        %2718 = vmatprep.subr.mxu0 0.0
        %2719 = vmatpush1.msra.mxu0 0.0
        %2720 = vmatprep.subr.mxu0 0.0
        %2721 = vmatpush1.msra.mxu0 0.0
        %2722 = vmatprep.subr.mxu0 0.0
        %2723 = vmatpush1.msra.mxu0 0.0
        %2724 = vmatprep.subr.mxu0 0.0
        %2725 = vmatpush1.msra.mxu0 0.0
        %2726 = vmatprep.subr.mxu0 0.0
        %2727 = vmatpush1.msra.mxu0 0.0
        %2728 = vmatprep.subr.mxu0 0.0
        %2729 = vmatpush1.msra.mxu0 0.0
        %2730 = vmatprep.subr.mxu0 0.0
        %2731 = vmatpush1.msra.mxu0 0.0
        %2732 = vmatprep.subr.mxu0 0.0
        %2733 = vmatpush1.msra.mxu0 0.0
        %2734 = vmatprep.subr.mxu0 0.0
        %2735 = vmatpush1.msra.mxu0 0.0
        %2736 = vmatprep.subr.mxu0 0.0
        %2737 = vmatpush1.msra.mxu0 0.0
        %2738 = vmatprep.subr.mxu0 0.0
        %2739 = vmatpush1.msra.mxu0 0.0
        %2740 = vmatprep.subr.mxu0 0.0
        %2741 = vmatpush1.msra.mxu0 0.0
        %2742 = vmatprep.subr.mxu0 0.0
        %2743 = vmatpush1.msra.mxu0 0.0
        %2744 = vmatprep.subr.mxu0 0.0
        %2745 = vmatpush1.msra.mxu0 0.0
        %2746 = vmatprep.subr.mxu0 0.0
        %2747 = vmatpush1.msra.mxu0 0.0
        %2748 = vmatprep.subr.mxu0 0.0
        %2749 = vmatpush1.msra.mxu0 0.0
        %2750 = vmatprep.subr.mxu0 0.0
        %2751 = vmatpush1.msra.mxu0 0.0
        %2752 = vmatprep.subr.mxu0 0.0
        %2753 = vmatpush1.msra.mxu0 0.0
        %2754 = vmatprep.subr.mxu0 0.0
        %2755 = vmatpush1.msra.mxu0 0.0
        %2756 = vmatprep.subr.mxu0 0.0
        %2757 = vmatpush1.msra.mxu0 0.0
        %2758 = vmatprep.subr.mxu0 0.0
        %2759 = vmatpush1.msra.mxu0 0.0
        %2760 = vmatprep.subr.mxu0 0.0
        %2761 = vmatpush1.msra.mxu0 0.0
        %2762 = vmatprep.subr.mxu0 0.0
        %2763 = vmatpush1.msra.mxu0 0.0
        %2764 = vmatprep.subr.mxu0 0.0
        %2765 = vmatpush1.msra.mxu0 0.0
        %2766 = vmatprep.subr.mxu0 0.0
        %2767 = vmatpush1.msra.mxu0 0.0
        %2768 = vmatprep.subr.mxu0 0.0
        %2769 = vmatpush1.msra.mxu0 0.0
        %2770 = vmatprep.subr.mxu0 0.0
        %2771 = vmatpush1.msra.mxu0 0.0
        %2772 = vmatprep.subr.mxu0 0.0
        %2773 = vmatpush1.msra.mxu0 0.0
        %2774 = vmatprep.subr.mxu0 0.0
        %2775 = vmatpush1.msra.mxu0 0.0
        %2776 = vmatprep.subr.mxu0 0.0
        %2777 = vmatpush1.msra.mxu0 0.0
        %2778 = vmatprep.mubr.f32.mxu0 0.0
        %v2779 = vand.u32 %v1025, 4294901760
        %v2780 = vsub.f32 %v1025, %v2779
        %2781 = vmatmul.mubr.f32.gmra.mrb[0].mxu0 %v2780
        %v2782 = vpop.f32.mrb[0].mxu0
        %v2783 = vadd.f32 %v2701, %v2782
        %v2784 = vpop.f32.mrb[0].mxu0
        %2785 = vmatprep.mubr.f32.mxu0 0.0
        %v2786 = vand.u32 %v1028, 4294901760
        %v2787 = vsub.f32 %v1028, %v2786
        %2788 = vmatmul.mubr.f32.gmra.mrb[0].mxu0 %v2787
        %v2789 = vpop.f32.mrb[0].mxu0
        %v2790 = vadd.f32 %v2707, %v2789
        %v2791 = vpop.f32.mrb[0].mxu0
        %2792 = vdwg.mxu0
        %2793 = vmatprep.subr.mxu0 0.0
        %v2794 = vand.u32 %v1015, 4294901760
        %2795 = vmatpush1.msra.mxu0 %v2794
        %2796 = vmatprep.subr.mxu0 0.0
        %v2797 = vand.u32 %v1021, 4294901760
        %2798 = vmatpush1.msra.mxu0 %v2797
        %2799 = vmatprep.subr.mxu0 0.0
        %2800 = vmatpush1.msra.mxu0 0.0
        %2801 = vmatprep.subr.mxu0 0.0
        %2802 = vmatpush1.msra.mxu0 0.0
        %2803 = vmatprep.subr.mxu0 0.0
        %2804 = vmatpush1.msra.mxu0 0.0
        %2805 = vmatprep.subr.mxu0 0.0
        %2806 = vmatpush1.msra.mxu0 0.0
        %2807 = vmatprep.subr.mxu0 0.0
        %2808 = vmatpush1.msra.mxu0 0.0
        %2809 = vmatprep.subr.mxu0 0.0
        %2810 = vmatpush1.msra.mxu0 0.0
        %2811 = vmatprep.subr.mxu0 0.0
        %2812 = vmatpush1.msra.mxu0 0.0
        %2813 = vmatprep.subr.mxu0 0.0
        %2814 = vmatpush1.msra.mxu0 0.0
        %2815 = vmatprep.subr.mxu0 0.0
        %2816 = vmatpush1.msra.mxu0 0.0
        %2817 = vmatprep.subr.mxu0 0.0
        %2818 = vmatpush1.msra.mxu0 0.0
        %2819 = vmatprep.subr.mxu0 0.0
        %2820 = vmatpush1.msra.mxu0 0.0
        %2821 = vmatprep.subr.mxu0 0.0
        %2822 = vmatpush1.msra.mxu0 0.0
        %2823 = vmatprep.subr.mxu0 0.0
        %2824 = vmatpush1.msra.mxu0 0.0
        %2825 = vmatprep.subr.mxu0 0.0
        %2826 = vmatpush1.msra.mxu0 0.0
        %2827 = vmatprep.subr.mxu0 0.0
        %2828 = vmatpush1.msra.mxu0 0.0
        %2829 = vmatprep.subr.mxu0 0.0
        %2830 = vmatpush1.msra.mxu0 0.0
        %2831 = vmatprep.subr.mxu0 0.0
        %2832 = vmatpush1.msra.mxu0 0.0
        %2833 = vmatprep.subr.mxu0 0.0
        %2834 = vmatpush1.msra.mxu0 0.0
        %2835 = vmatprep.subr.mxu0 0.0
        %2836 = vmatpush1.msra.mxu0 0.0
        %2837 = vmatprep.subr.mxu0 0.0
        %2838 = vmatpush1.msra.mxu0 0.0
        %2839 = vmatprep.subr.mxu0 0.0
        %2840 = vmatpush1.msra.mxu0 0.0
        %2841 = vmatprep.subr.mxu0 0.0
        %2842 = vmatpush1.msra.mxu0 0.0
        %2843 = vmatprep.subr.mxu0 0.0
        %2844 = vmatpush1.msra.mxu0 0.0
        %2845 = vmatprep.subr.mxu0 0.0
        %2846 = vmatpush1.msra.mxu0 0.0
        %2847 = vmatprep.subr.mxu0 0.0
        %2848 = vmatpush1.msra.mxu0 0.0
        %2849 = vmatprep.subr.mxu0 0.0
        %2850 = vmatpush1.msra.mxu0 0.0
        %2851 = vmatprep.subr.mxu0 0.0
        %2852 = vmatpush1.msra.mxu0 0.0
        %2853 = vmatprep.subr.mxu0 0.0
        %2854 = vmatpush1.msra.mxu0 0.0
        %2855 = vmatprep.subr.mxu0 0.0
        %2856 = vmatpush1.msra.mxu0 0.0
        %2857 = vmatprep.subr.mxu0 0.0
        %2858 = vmatpush1.msra.mxu0 0.0
        %2859 = vmatprep.mubr.f32.mxu0 0.0
        %v2860 = vand.u32 %v1025, 4294901760
        %v2861 = vsub.f32 %v1025, %v2860
        %v2862 = vand.u32 %v2861, 4294901760
        %2863 = vmatmul.mubr.f32.gmra.mrb[0].mxu0 %v2862
        %v2864 = vpop.f32.mrb[0].mxu0
        %v2865 = vadd.f32 %v2783, %v2864
        %v2866 = vpop.f32.mrb[0].mxu0
        %2867 = vmatprep.mubr.f32.mxu0 0.0
        %v2868 = vand.u32 %v1028, 4294901760
        %v2869 = vsub.f32 %v1028, %v2868
        %v2870 = vand.u32 %v2869, 4294901760
        %2871 = vmatmul.mubr.f32.gmra.mrb[0].mxu0 %v2870
        %v2872 = vpop.f32.mrb[0].mxu0
        %v2873 = vadd.f32 %v2790, %v2872
        %v2874 = vpop.f32.mrb[0].mxu0
        %2875 = vdwg.mxu0
        %2876 = vmatprep.subr.mxu0 0.0
        %v2877 = vand.u32 %v1015, 4294901760
        %v2878 = vsub.f32 %v1015, %v2877
        %v2879 = vand.u32 %v2878, 4294901760
        %2880 = vmatpush1.msra.mxu0 %v2879
        %2881 = vmatprep.subr.mxu0 0.0
        %v2882 = vand.u32 %v1021, 4294901760
        %v2883 = vsub.f32 %v1021, %v2882
        %v2884 = vand.u32 %v2883, 4294901760
        %2885 = vmatpush1.msra.mxu0 %v2884
        %2886 = vmatprep.subr.mxu0 0.0
        %2887 = vmatpush1.msra.mxu0 0.0
        %2888 = vmatprep.subr.mxu0 0.0
        %2889 = vmatpush1.msra.mxu0 0.0
        %2890 = vmatprep.subr.mxu0 0.0
        %2891 = vmatpush1.msra.mxu0 0.0
        %2892 = vmatprep.subr.mxu0 0.0
        %2893 = vmatpush1.msra.mxu0 0.0
        %2894 = vmatprep.subr.mxu0 0.0
        %2895 = vmatpush1.msra.mxu0 0.0
        %2896 = vmatprep.subr.mxu0 0.0
        %2897 = vmatpush1.msra.mxu0 0.0
        %2898 = vmatprep.subr.mxu0 0.0
        %2899 = vmatpush1.msra.mxu0 0.0
        %2900 = vmatprep.subr.mxu0 0.0
        %2901 = vmatpush1.msra.mxu0 0.0
        %2902 = vmatprep.subr.mxu0 0.0
        %2903 = vmatpush1.msra.mxu0 0.0
        %2904 = vmatprep.subr.mxu0 0.0
        %2905 = vmatpush1.msra.mxu0 0.0
        %2906 = vmatprep.subr.mxu0 0.0
        %2907 = vmatpush1.msra.mxu0 0.0
        %2908 = vmatprep.subr.mxu0 0.0
        %2909 = vmatpush1.msra.mxu0 0.0
        %2910 = vmatprep.subr.mxu0 0.0
        %2911 = vmatpush1.msra.mxu0 0.0
        %2912 = vmatprep.subr.mxu0 0.0
        %2913 = vmatpush1.msra.mxu0 0.0
        %2914 = vmatprep.subr.mxu0 0.0
        %2915 = vmatpush1.msra.mxu0 0.0
        %2916 = vmatprep.subr.mxu0 0.0
        %2917 = vmatpush1.msra.mxu0 0.0
        %2918 = vmatprep.subr.mxu0 0.0
        %2919 = vmatpush1.msra.mxu0 0.0
        %2920 = vmatprep.subr.mxu0 0.0
        %2921 = vmatpush1.msra.mxu0 0.0
        %2922 = vmatprep.subr.mxu0 0.0
        %2923 = vmatpush1.msra.mxu0 0.0
        %2924 = vmatprep.subr.mxu0 0.0
        %2925 = vmatpush1.msra.mxu0 0.0
        %2926 = vmatprep.subr.mxu0 0.0
        %2927 = vmatpush1.msra.mxu0 0.0
        %2928 = vmatprep.subr.mxu0 0.0
        %2929 = vmatpush1.msra.mxu0 0.0
        %2930 = vmatprep.subr.mxu0 0.0
        %2931 = vmatpush1.msra.mxu0 0.0
        %2932 = vmatprep.subr.mxu0 0.0
        %2933 = vmatpush1.msra.mxu0 0.0
        %2934 = vmatprep.subr.mxu0 0.0
        %2935 = vmatpush1.msra.mxu0 0.0
        %2936 = vmatprep.subr.mxu0 0.0
        %2937 = vmatpush1.msra.mxu0 0.0
        %2938 = vmatprep.subr.mxu0 0.0
        %2939 = vmatpush1.msra.mxu0 0.0
        %2940 = vmatprep.subr.mxu0 0.0
        %2941 = vmatpush1.msra.mxu0 0.0
        %2942 = vmatprep.subr.mxu0 0.0
        %2943 = vmatpush1.msra.mxu0 0.0
        %2944 = vmatprep.subr.mxu0 0.0
        %2945 = vmatpush1.msra.mxu0 0.0
        %2946 = vmatprep.mubr.f32.mxu0 0.0
        %v2947 = vand.u32 %v1025, 4294901760
        %2948 = vmatmul.mubr.f32.gmra.mrb[0].mxu0 %v2947
        %v2949 = vpop.f32.mrb[0].mxu0
        %v2950 = vadd.f32 %v2865, %v2949
        %v2951 = vpop.f32.mrb[0].mxu0
        %2952 = vmatprep.mubr.f32.mxu0 0.0
        %v2953 = vand.u32 %v1028, 4294901760
        %2954 = vmatmul.mubr.f32.gmra.mrb[0].mxu0 %v2953
        %v2955 = vpop.f32.mrb[0].mxu0
        %v2956 = vadd.f32 %v2873, %v2955
        %v2957 = vpop.f32.mrb[0].mxu0
        %2958 = vdwg.mxu0
        %2959 = vmatprep.subr.mxu0 0.0
        %v2960 = vand.u32 %v1015, 4294901760
        %2961 = vmatpush1.msra.mxu0 %v2960
        %2962 = vmatprep.subr.mxu0 0.0
        %v2963 = vand.u32 %v1021, 4294901760
        %2964 = vmatpush1.msra.mxu0 %v2963
        %2965 = vmatprep.subr.mxu0 0.0
        %2966 = vmatpush1.msra.mxu0 0.0
        %2967 = vmatprep.subr.mxu0 0.0
        %2968 = vmatpush1.msra.mxu0 0.0
        %2969 = vmatprep.subr.mxu0 0.0
        %2970 = vmatpush1.msra.mxu0 0.0
        %2971 = vmatprep.subr.mxu0 0.0
        %2972 = vmatpush1.msra.mxu0 0.0
        %2973 = vmatprep.subr.mxu0 0.0
        %2974 = vmatpush1.msra.mxu0 0.0
        %2975 = vmatprep.subr.mxu0 0.0
        %2976 = vmatpush1.msra.mxu0 0.0
        %2977 = vmatprep.subr.mxu0 0.0
        %2978 = vmatpush1.msra.mxu0 0.0
        %2979 = vmatprep.subr.mxu0 0.0
        %2980 = vmatpush1.msra.mxu0 0.0
        %2981 = vmatprep.subr.mxu0 0.0
        %2982 = vmatpush1.msra.mxu0 0.0
        %2983 = vmatprep.subr.mxu0 0.0
        %2984 = vmatpush1.msra.mxu0 0.0
        %2985 = vmatprep.subr.mxu0 0.0
        %2986 = vmatpush1.msra.mxu0 0.0
        %2987 = vmatprep.subr.mxu0 0.0
        %2988 = vmatpush1.msra.mxu0 0.0
        %2989 = vmatprep.subr.mxu0 0.0
        %2990 = vmatpush1.msra.mxu0 0.0
        %2991 = vmatprep.subr.mxu0 0.0
        %2992 = vmatpush1.msra.mxu0 0.0
        %2993 = vmatprep.subr.mxu0 0.0
        %2994 = vmatpush1.msra.mxu0 0.0
        %2995 = vmatprep.subr.mxu0 0.0
        %2996 = vmatpush1.msra.mxu0 0.0
        %2997 = vmatprep.subr.mxu0 0.0
        %2998 = vmatpush1.msra.mxu0 0.0
        %2999 = vmatprep.subr.mxu0 0.0
        %3000 = vmatpush1.msra.mxu0 0.0
        %3001 = vmatprep.subr.mxu0 0.0
        %3002 = vmatpush1.msra.mxu0 0.0
        %3003 = vmatprep.subr.mxu0 0.0
        %3004 = vmatpush1.msra.mxu0 0.0
        %3005 = vmatprep.subr.mxu0 0.0
        %3006 = vmatpush1.msra.mxu0 0.0
        %3007 = vmatprep.subr.mxu0 0.0
        %3008 = vmatpush1.msra.mxu0 0.0
        %3009 = vmatprep.subr.mxu0 0.0
        %3010 = vmatpush1.msra.mxu0 0.0
        %3011 = vmatprep.subr.mxu0 0.0
        %3012 = vmatpush1.msra.mxu0 0.0
        %3013 = vmatprep.subr.mxu0 0.0
        %3014 = vmatpush1.msra.mxu0 0.0
        %3015 = vmatprep.subr.mxu0 0.0
        %3016 = vmatpush1.msra.mxu0 0.0
        %3017 = vmatprep.subr.mxu0 0.0
        %3018 = vmatpush1.msra.mxu0 0.0
        %3019 = vmatprep.subr.mxu0 0.0
        %3020 = vmatpush1.msra.mxu0 0.0
        %3021 = vmatprep.subr.mxu0 0.0
        %3022 = vmatpush1.msra.mxu0 0.0
        %3023 = vmatprep.subr.mxu0 0.0
        %3024 = vmatpush1.msra.mxu0 0.0
        %3025 = vmatprep.mubr.f32.mxu0 0.0
        %v3026 = vand.u32 %v1025, 4294901760
        %3027 = vmatmul.mubr.f32.gmra.mrb[0].mxu0 %v3026
        %v3028 = vpop.f32.mrb[0].mxu0
        %v3029 = vadd.f32 %v2950, %v3028
        %v3030 = vpop.f32.mrb[0].mxu0
        %3031 = vmatprep.mubr.f32.mxu0 0.0
        %v3032 = vand.u32 %v1028, 4294901760
        %3033 = vmatmul.mubr.f32.gmra.mrb[0].mxu0 %v3032
        %v3034 = vpop.f32.mrb[0].mxu0
        %v3035 = vadd.f32 %v2956, %v3034
        %v3036 = vpop.f32.mrb[0].mxu0
        %3037 = vdwg.mxu0
        %v3038 = vmul.f32 %v1523, 0.04
        %v3039 = vmul.f32 %v1529, 0.04
        %v3040 = vmul.f32 %v2025, 0.04
        %v3041 = vmul.f32 %v2031, 0.04
        %v3042 = vmul.f32 %v2527, 0.04
        %v3043 = vmul.f32 %v2533, 0.04
        %v3044 = vmul.f32 %v3029, 0.04
        %v3045 = vmul.f32 %v3035, 0.04
        %3046 = vst.msk [vmem:[%s217] sm:$0xff] %vm227, %v3038
        %3047 = vst.msk [vmem:[%s217 + $0x8] sm:$0xff] %vm227, %v3039
        %3048 = vst.msk [vmem:[%s217 + $0x10] sm:$0xff] %vm227, %v3040
        %3049 = vst.msk [vmem:[%s217 + $0x18] sm:$0xff] %vm227, %v3041
        %3050 = vst.msk [vmem:[%s217 + $0x20] sm:$0xff] %vm227, %v3042
        %3051 = vst.msk [vmem:[%s217 + $0x28] sm:$0xff] %vm227, %v3043
        %3052 = vst.msk [vmem:[%s217 + $0x30] sm:$0xff] %vm227, %v3044
        %3053 = vst.msk [vmem:[%s217 + $0x38] sm:$0xff] %vm227, %v3045
        %s3054 = scalar_lea.vmem [#allocation7], 16
        %v3055 = vld [vmem:[%s3054] sm:$0xff]
        %v3056 = vld [vmem:[%s3054 + $0x8] sm:$0xff]
        %s3057 = scalar_lea.vmem [#allocation5], 16
        %v3058 = vld [vmem:[%s3057] sm:$0xff]
        %v3059 = vld [vmem:[%s3057 + $0x8] sm:$0xff]
        %3060 = vmatprep.subr.mxu0 0.0
        %v3061 = vand.u32 %v3055, 4294901760
        %3062 = vmatpush1.msra.mxu0 %v3061
        %3063 = vmatprep.subr.mxu0 0.0
        %v3064 = vand.u32 %v3056, 4294901760
        %3065 = vmatpush1.msra.mxu0 %v3064
        %3066 = vmatprep.subr.mxu0 0.0
        %3067 = vmatpush1.msra.mxu0 0.0
        %3068 = vmatprep.subr.mxu0 0.0
        %3069 = vmatpush1.msra.mxu0 0.0
        %3070 = vmatprep.subr.mxu0 0.0
        %3071 = vmatpush1.msra.mxu0 0.0
        %3072 = vmatprep.subr.mxu0 0.0
        %3073 = vmatpush1.msra.mxu0 0.0
        %3074 = vmatprep.subr.mxu0 0.0
        %3075 = vmatpush1.msra.mxu0 0.0
        %3076 = vmatprep.subr.mxu0 0.0
        %3077 = vmatpush1.msra.mxu0 0.0
        %3078 = vmatprep.subr.mxu0 0.0
        %3079 = vmatpush1.msra.mxu0 0.0
        %3080 = vmatprep.subr.mxu0 0.0
        %3081 = vmatpush1.msra.mxu0 0.0
        %3082 = vmatprep.subr.mxu0 0.0
        %3083 = vmatpush1.msra.mxu0 0.0
        %3084 = vmatprep.subr.mxu0 0.0
        %3085 = vmatpush1.msra.mxu0 0.0
        %3086 = vmatprep.subr.mxu0 0.0
        %3087 = vmatpush1.msra.mxu0 0.0
        %3088 = vmatprep.subr.mxu0 0.0
        %3089 = vmatpush1.msra.mxu0 0.0
        %3090 = vmatprep.subr.mxu0 0.0
        %3091 = vmatpush1.msra.mxu0 0.0
        %3092 = vmatprep.subr.mxu0 0.0
        %3093 = vmatpush1.msra.mxu0 0.0
        %3094 = vmatprep.subr.mxu0 0.0
        %3095 = vmatpush1.msra.mxu0 0.0
        %3096 = vmatprep.subr.mxu0 0.0
        %3097 = vmatpush1.msra.mxu0 0.0
        %3098 = vmatprep.subr.mxu0 0.0
        %3099 = vmatpush1.msra.mxu0 0.0
        %3100 = vmatprep.subr.mxu0 0.0
        %3101 = vmatpush1.msra.mxu0 0.0
        %3102 = vmatprep.subr.mxu0 0.0
        %3103 = vmatpush1.msra.mxu0 0.0
        %3104 = vmatprep.subr.mxu0 0.0
        %3105 = vmatpush1.msra.mxu0 0.0
        %3106 = vmatprep.subr.mxu0 0.0
        %3107 = vmatpush1.msra.mxu0 0.0
        %3108 = vmatprep.subr.mxu0 0.0
        %3109 = vmatpush1.msra.mxu0 0.0
        %3110 = vmatprep.subr.mxu0 0.0
        %3111 = vmatpush1.msra.mxu0 0.0
        %3112 = vmatprep.subr.mxu0 0.0
        %3113 = vmatpush1.msra.mxu0 0.0
        %3114 = vmatprep.subr.mxu0 0.0
        %3115 = vmatpush1.msra.mxu0 0.0
        %3116 = vmatprep.subr.mxu0 0.0
        %3117 = vmatpush1.msra.mxu0 0.0
        %3118 = vmatprep.subr.mxu0 0.0
        %3119 = vmatpush1.msra.mxu0 0.0
        %3120 = vmatprep.subr.mxu0 0.0
        %3121 = vmatpush1.msra.mxu0 0.0
        %3122 = vmatprep.subr.mxu0 0.0
        %3123 = vmatpush1.msra.mxu0 0.0
        %3124 = vmatprep.subr.mxu0 0.0
        %3125 = vmatpush1.msra.mxu0 0.0
        %3126 = vmatprep.mubr.f32.mxu0 0.0
        %v3127 = vand.u32 %v241, 4294901760
        %v3128 = vsub.f32 %v241, %v3127
        %v3129 = vand.u32 %v3128, 4294901760
        %v3130 = vsub.f32 %v3128, %v3129
        %v3131 = vand.u32 %v3130, 4294901760
        %3132 = vmatmul.mubr.f32.gmra.mrb[0].mxu0 %v3131
        %v3133 = vpop.f32.mrb[0].mxu0
        %v3134 = vadd.f32 0.0, %v3133
        %v3135 = vpop.f32.mrb[0].mxu0
        %3136 = vmatprep.mubr.f32.mxu0 0.0
        %v3137 = vand.u32 %v244, 4294901760
        %v3138 = vsub.f32 %v244, %v3137
        %v3139 = vand.u32 %v3138, 4294901760
        %v3140 = vsub.f32 %v3138, %v3139
        %v3141 = vand.u32 %v3140, 4294901760
        %3142 = vmatmul.mubr.f32.gmra.mrb[0].mxu0 %v3141
        %v3143 = vpop.f32.mrb[0].mxu0
        %v3144 = vadd.f32 0.0, %v3143
        %v3145 = vpop.f32.mrb[0].mxu0
        %3146 = vmatprep.mubr.f32.mxu0 0.0
        %v3147 = vand.u32 %v247, 4294901760
        %v3148 = vsub.f32 %v247, %v3147
        %v3149 = vand.u32 %v3148, 4294901760
        %v3150 = vsub.f32 %v3148, %v3149
        %v3151 = vand.u32 %v3150, 4294901760
        %3152 = vmatmul.mubr.f32.gmra.mrb[0].mxu0 %v3151
        %v3153 = vpop.f32.mrb[0].mxu0
        %v3154 = vadd.f32 0.0, %v3153
        %v3155 = vpop.f32.mrb[0].mxu0
        %3156 = vmatprep.mubr.f32.mxu0 0.0
        %v3157 = vand.u32 %v250, 4294901760
        %v3158 = vsub.f32 %v250, %v3157
        %v3159 = vand.u32 %v3158, 4294901760
        %v3160 = vsub.f32 %v3158, %v3159
        %v3161 = vand.u32 %v3160, 4294901760
        %3162 = vmatmul.mubr.f32.gmra.mrb[0].mxu0 %v3161
        %v3163 = vpop.f32.mrb[0].mxu0
        %v3164 = vadd.f32 0.0, %v3163
        %v3165 = vpop.f32.mrb[0].mxu0
        %3166 = vmatprep.mubr.f32.mxu0 0.0
        %v3167 = vand.u32 %v253, 4294901760
        %v3168 = vsub.f32 %v253, %v3167
        %v3169 = vand.u32 %v3168, 4294901760
        %v3170 = vsub.f32 %v3168, %v3169
        %v3171 = vand.u32 %v3170, 4294901760
        %3172 = vmatmul.mubr.f32.gmra.mrb[0].mxu0 %v3171
        %v3173 = vpop.f32.mrb[0].mxu0
        %v3174 = vadd.f32 0.0, %v3173
        %v3175 = vpop.f32.mrb[0].mxu0
        %3176 = vmatprep.mubr.f32.mxu0 0.0
        %v3177 = vand.u32 %v256, 4294901760
        %v3178 = vsub.f32 %v256, %v3177
        %v3179 = vand.u32 %v3178, 4294901760
        %v3180 = vsub.f32 %v3178, %v3179
        %v3181 = vand.u32 %v3180, 4294901760
        %3182 = vmatmul.mubr.f32.gmra.mrb[0].mxu0 %v3181
        %v3183 = vpop.f32.mrb[0].mxu0
        %v3184 = vadd.f32 0.0, %v3183
        %v3185 = vpop.f32.mrb[0].mxu0
        %3186 = vmatprep.mubr.f32.mxu0 0.0
        %v3187 = vand.u32 %v259, 4294901760
        %v3188 = vsub.f32 %v259, %v3187
        %v3189 = vand.u32 %v3188, 4294901760
        %v3190 = vsub.f32 %v3188, %v3189
        %v3191 = vand.u32 %v3190, 4294901760
        %3192 = vmatmul.mubr.f32.gmra.mrb[0].mxu0 %v3191
        %v3193 = vpop.f32.mrb[0].mxu0
        %v3194 = vadd.f32 0.0, %v3193
        %v3195 = vpop.f32.mrb[0].mxu0
        %3196 = vmatprep.mubr.f32.mxu0 0.0
        %v3197 = vand.u32 %v262, 4294901760
        %v3198 = vsub.f32 %v262, %v3197
        %v3199 = vand.u32 %v3198, 4294901760
        %v3200 = vsub.f32 %v3198, %v3199
        %v3201 = vand.u32 %v3200, 4294901760
        %3202 = vmatmul.mubr.f32.gmra.mrb[0].mxu0 %v3201
        %v3203 = vpop.f32.mrb[0].mxu0
        %v3204 = vadd.f32 0.0, %v3203
        %v3205 = vpop.f32.mrb[0].mxu0
        %3206 = vdwg.mxu0
        %3207 = vmatprep.subr.mxu0 0.0
        %v3208 = vand.u32 %v3055, 4294901760
        %v3209 = vsub.f32 %v3055, %v3208
        %v3210 = vand.u32 %v3209, 4294901760
        %v3211 = vsub.f32 %v3209, %v3210
        %v3212 = vand.u32 %v3211, 4294901760
        %3213 = vmatpush1.msra.mxu0 %v3212
        %3214 = vmatprep.subr.mxu0 0.0
        %v3215 = vand.u32 %v3056, 4294901760
        %v3216 = vsub.f32 %v3056, %v3215
        %v3217 = vand.u32 %v3216, 4294901760
        %v3218 = vsub.f32 %v3216, %v3217
        %v3219 = vand.u32 %v3218, 4294901760
        %3220 = vmatpush1.msra.mxu0 %v3219
        %3221 = vmatprep.subr.mxu0 0.0
        %3222 = vmatpush1.msra.mxu0 0.0
        %3223 = vmatprep.subr.mxu0 0.0
        %3224 = vmatpush1.msra.mxu0 0.0
        %3225 = vmatprep.subr.mxu0 0.0
        %3226 = vmatpush1.msra.mxu0 0.0
        %3227 = vmatprep.subr.mxu0 0.0
        %3228 = vmatpush1.msra.mxu0 0.0
        %3229 = vmatprep.subr.mxu0 0.0
        %3230 = vmatpush1.msra.mxu0 0.0
        %3231 = vmatprep.subr.mxu0 0.0
        %3232 = vmatpush1.msra.mxu0 0.0
        %3233 = vmatprep.subr.mxu0 0.0
        %3234 = vmatpush1.msra.mxu0 0.0
        %3235 = vmatprep.subr.mxu0 0.0
        %3236 = vmatpush1.msra.mxu0 0.0
        %3237 = vmatprep.subr.mxu0 0.0
        %3238 = vmatpush1.msra.mxu0 0.0
        %3239 = vmatprep.subr.mxu0 0.0
        %3240 = vmatpush1.msra.mxu0 0.0
        %3241 = vmatprep.subr.mxu0 0.0
        %3242 = vmatpush1.msra.mxu0 0.0
        %3243 = vmatprep.subr.mxu0 0.0
        %3244 = vmatpush1.msra.mxu0 0.0
        %3245 = vmatprep.subr.mxu0 0.0
        %3246 = vmatpush1.msra.mxu0 0.0
        %3247 = vmatprep.subr.mxu0 0.0
        %3248 = vmatpush1.msra.mxu0 0.0
        %3249 = vmatprep.subr.mxu0 0.0
        %3250 = vmatpush1.msra.mxu0 0.0
        %3251 = vmatprep.subr.mxu0 0.0
        %3252 = vmatpush1.msra.mxu0 0.0
        %3253 = vmatprep.subr.mxu0 0.0
        %3254 = vmatpush1.msra.mxu0 0.0
        %3255 = vmatprep.subr.mxu0 0.0
        %3256 = vmatpush1.msra.mxu0 0.0
        %3257 = vmatprep.subr.mxu0 0.0
        %3258 = vmatpush1.msra.mxu0 0.0
        %3259 = vmatprep.subr.mxu0 0.0
        %3260 = vmatpush1.msra.mxu0 0.0
        %3261 = vmatprep.subr.mxu0 0.0
        %3262 = vmatpush1.msra.mxu0 0.0
        %3263 = vmatprep.subr.mxu0 0.0
        %3264 = vmatpush1.msra.mxu0 0.0
        %3265 = vmatprep.subr.mxu0 0.0
        %3266 = vmatpush1.msra.mxu0 0.0
        %3267 = vmatprep.subr.mxu0 0.0
        %3268 = vmatpush1.msra.mxu0 0.0
        %3269 = vmatprep.subr.mxu0 0.0
        %3270 = vmatpush1.msra.mxu0 0.0
        %3271 = vmatprep.subr.mxu0 0.0
        %3272 = vmatpush1.msra.mxu0 0.0
        %3273 = vmatprep.subr.mxu0 0.0
        %3274 = vmatpush1.msra.mxu0 0.0
        %3275 = vmatprep.subr.mxu0 0.0
        %3276 = vmatpush1.msra.mxu0 0.0
        %3277 = vmatprep.subr.mxu0 0.0
        %3278 = vmatpush1.msra.mxu0 0.0
        %3279 = vmatprep.subr.mxu0 0.0
        %3280 = vmatpush1.msra.mxu0 0.0
        %3281 = vmatprep.mubr.f32.mxu0 0.0
        %v3282 = vand.u32 %v241, 4294901760
        %3283 = vmatmul.mubr.f32.gmra.mrb[0].mxu0 %v3282
        %v3284 = vpop.f32.mrb[0].mxu0
        %v3285 = vadd.f32 %v3134, %v3284
        %v3286 = vpop.f32.mrb[0].mxu0
        %3287 = vmatprep.mubr.f32.mxu0 0.0
        %v3288 = vand.u32 %v244, 4294901760
        %3289 = vmatmul.mubr.f32.gmra.mrb[0].mxu0 %v3288
        %v3290 = vpop.f32.mrb[0].mxu0
        %v3291 = vadd.f32 %v3144, %v3290
        %v3292 = vpop.f32.mrb[0].mxu0
        %3293 = vmatprep.mubr.f32.mxu0 0.0
        %v3294 = vand.u32 %v247, 4294901760
        %3295 = vmatmul.mubr.f32.gmra.mrb[0].mxu0 %v3294
        %v3296 = vpop.f32.mrb[0].mxu0
        %v3297 = vadd.f32 %v3154, %v3296
        %v3298 = vpop.f32.mrb[0].mxu0
        %3299 = vmatprep.mubr.f32.mxu0 0.0
        %v3300 = vand.u32 %v250, 4294901760
        %3301 = vmatmul.mubr.f32.gmra.mrb[0].mxu0 %v3300
        %v3302 = vpop.f32.mrb[0].mxu0
        %v3303 = vadd.f32 %v3164, %v3302
        %v3304 = vpop.f32.mrb[0].mxu0
        %3305 = vmatprep.mubr.f32.mxu0 0.0
        %v3306 = vand.u32 %v253, 4294901760
        %3307 = vmatmul.mubr.f32.gmra.mrb[0].mxu0 %v3306
        %v3308 = vpop.f32.mrb[0].mxu0
        %v3309 = vadd.f32 %v3174, %v3308
        %v3310 = vpop.f32.mrb[0].mxu0
        %3311 = vmatprep.mubr.f32.mxu0 0.0
        %v3312 = vand.u32 %v256, 4294901760
        %3313 = vmatmul.mubr.f32.gmra.mrb[0].mxu0 %v3312
        %v3314 = vpop.f32.mrb[0].mxu0
        %v3315 = vadd.f32 %v3184, %v3314
        %v3316 = vpop.f32.mrb[0].mxu0
        %3317 = vmatprep.mubr.f32.mxu0 0.0
        %v3318 = vand.u32 %v259, 4294901760
        %3319 = vmatmul.mubr.f32.gmra.mrb[0].mxu0 %v3318
        %v3320 = vpop.f32.mrb[0].mxu0
        %v3321 = vadd.f32 %v3194, %v3320
        %v3322 = vpop.f32.mrb[0].mxu0
        %3323 = vmatprep.mubr.f32.mxu0 0.0
        %v3324 = vand.u32 %v262, 4294901760
        %3325 = vmatmul.mubr.f32.gmra.mrb[0].mxu0 %v3324
        %v3326 = vpop.f32.mrb[0].mxu0
        %v3327 = vadd.f32 %v3204, %v3326
        %v3328 = vpop.f32.mrb[0].mxu0
        %3329 = vdwg.mxu0
        %3330 = vmatprep.subr.mxu0 0.0
        %v3331 = vand.u32 %v3055, 4294901760
        %v3332 = vsub.f32 %v3055, %v3331
        %3333 = vmatpush1.msra.mxu0 %v3332
        %3334 = vmatprep.subr.mxu0 0.0
        %v3335 = vand.u32 %v3056, 4294901760
        %v3336 = vsub.f32 %v3056, %v3335
        %3337 = vmatpush1.msra.mxu0 %v3336
        %3338 = vmatprep.subr.mxu0 0.0
        %3339 = vmatpush1.msra.mxu0 0.0
        %3340 = vmatprep.subr.mxu0 0.0
        %3341 = vmatpush1.msra.mxu0 0.0
        %3342 = vmatprep.subr.mxu0 0.0
        %3343 = vmatpush1.msra.mxu0 0.0
        %3344 = vmatprep.subr.mxu0 0.0
        %3345 = vmatpush1.msra.mxu0 0.0
        %3346 = vmatprep.subr.mxu0 0.0
        %3347 = vmatpush1.msra.mxu0 0.0
        %3348 = vmatprep.subr.mxu0 0.0
        %3349 = vmatpush1.msra.mxu0 0.0
        %3350 = vmatprep.subr.mxu0 0.0
        %3351 = vmatpush1.msra.mxu0 0.0
        %3352 = vmatprep.subr.mxu0 0.0
        %3353 = vmatpush1.msra.mxu0 0.0
        %3354 = vmatprep.subr.mxu0 0.0
        %3355 = vmatpush1.msra.mxu0 0.0
        %3356 = vmatprep.subr.mxu0 0.0
        %3357 = vmatpush1.msra.mxu0 0.0
        %3358 = vmatprep.subr.mxu0 0.0
        %3359 = vmatpush1.msra.mxu0 0.0
        %3360 = vmatprep.subr.mxu0 0.0
        %3361 = vmatpush1.msra.mxu0 0.0
        %3362 = vmatprep.subr.mxu0 0.0
        %3363 = vmatpush1.msra.mxu0 0.0
        %3364 = vmatprep.subr.mxu0 0.0
        %3365 = vmatpush1.msra.mxu0 0.0
        %3366 = vmatprep.subr.mxu0 0.0
        %3367 = vmatpush1.msra.mxu0 0.0
        %3368 = vmatprep.subr.mxu0 0.0
        %3369 = vmatpush1.msra.mxu0 0.0
        %3370 = vmatprep.subr.mxu0 0.0
        %3371 = vmatpush1.msra.mxu0 0.0
        %3372 = vmatprep.subr.mxu0 0.0
        %3373 = vmatpush1.msra.mxu0 0.0
        %3374 = vmatprep.subr.mxu0 0.0
        %3375 = vmatpush1.msra.mxu0 0.0
        %3376 = vmatprep.subr.mxu0 0.0
        %3377 = vmatpush1.msra.mxu0 0.0
        %3378 = vmatprep.subr.mxu0 0.0
        %3379 = vmatpush1.msra.mxu0 0.0
        %3380 = vmatprep.subr.mxu0 0.0
        %3381 = vmatpush1.msra.mxu0 0.0
        %3382 = vmatprep.subr.mxu0 0.0
        %3383 = vmatpush1.msra.mxu0 0.0
        %3384 = vmatprep.subr.mxu0 0.0
        %3385 = vmatpush1.msra.mxu0 0.0
        %3386 = vmatprep.subr.mxu0 0.0
        %3387 = vmatpush1.msra.mxu0 0.0
        %3388 = vmatprep.subr.mxu0 0.0
        %3389 = vmatpush1.msra.mxu0 0.0
        %3390 = vmatprep.subr.mxu0 0.0
        %3391 = vmatpush1.msra.mxu0 0.0
        %3392 = vmatprep.subr.mxu0 0.0
        %3393 = vmatpush1.msra.mxu0 0.0
        %3394 = vmatprep.subr.mxu0 0.0
        %3395 = vmatpush1.msra.mxu0 0.0
        %3396 = vmatprep.subr.mxu0 0.0
        %3397 = vmatpush1.msra.mxu0 0.0
        %3398 = vmatprep.mubr.f32.mxu0 0.0
        %v3399 = vand.u32 %v241, 4294901760
        %v3400 = vsub.f32 %v241, %v3399
        %3401 = vmatmul.mubr.f32.gmra.mrb[0].mxu0 %v3400
        %v3402 = vpop.f32.mrb[0].mxu0
        %v3403 = vadd.f32 %v3285, %v3402
        %v3404 = vpop.f32.mrb[0].mxu0
        %3405 = vmatprep.mubr.f32.mxu0 0.0
        %v3406 = vand.u32 %v244, 4294901760
        %v3407 = vsub.f32 %v244, %v3406
        %3408 = vmatmul.mubr.f32.gmra.mrb[0].mxu0 %v3407
        %v3409 = vpop.f32.mrb[0].mxu0
        %v3410 = vadd.f32 %v3291, %v3409
        %v3411 = vpop.f32.mrb[0].mxu0
        %3412 = vmatprep.mubr.f32.mxu0 0.0
        %v3413 = vand.u32 %v247, 4294901760
        %v3414 = vsub.f32 %v247, %v3413
        %3415 = vmatmul.mubr.f32.gmra.mrb[0].mxu0 %v3414
        %v3416 = vpop.f32.mrb[0].mxu0
        %v3417 = vadd.f32 %v3297, %v3416
        %v3418 = vpop.f32.mrb[0].mxu0
        %3419 = vmatprep.mubr.f32.mxu0 0.0
        %v3420 = vand.u32 %v250, 4294901760
        %v3421 = vsub.f32 %v250, %v3420
        %3422 = vmatmul.mubr.f32.gmra.mrb[0].mxu0 %v3421
        %v3423 = vpop.f32.mrb[0].mxu0
        %v3424 = vadd.f32 %v3303, %v3423
        %v3425 = vpop.f32.mrb[0].mxu0
        %3426 = vmatprep.mubr.f32.mxu0 0.0
        %v3427 = vand.u32 %v253, 4294901760
        %v3428 = vsub.f32 %v253, %v3427
        %3429 = vmatmul.mubr.f32.gmra.mrb[0].mxu0 %v3428
        %v3430 = vpop.f32.mrb[0].mxu0
        %v3431 = vadd.f32 %v3309, %v3430
        %v3432 = vpop.f32.mrb[0].mxu0
        %3433 = vmatprep.mubr.f32.mxu0 0.0
        %v3434 = vand.u32 %v256, 4294901760
        %v3435 = vsub.f32 %v256, %v3434
        %3436 = vmatmul.mubr.f32.gmra.mrb[0].mxu0 %v3435
        %v3437 = vpop.f32.mrb[0].mxu0
        %v3438 = vadd.f32 %v3315, %v3437
        %v3439 = vpop.f32.mrb[0].mxu0
        %3440 = vmatprep.mubr.f32.mxu0 0.0
        %v3441 = vand.u32 %v259, 4294901760
        %v3442 = vsub.f32 %v259, %v3441
        %3443 = vmatmul.mubr.f32.gmra.mrb[0].mxu0 %v3442
        %v3444 = vpop.f32.mrb[0].mxu0
        %v3445 = vadd.f32 %v3321, %v3444
        %v3446 = vpop.f32.mrb[0].mxu0
        %3447 = vmatprep.mubr.f32.mxu0 0.0
        %v3448 = vand.u32 %v262, 4294901760
        %v3449 = vsub.f32 %v262, %v3448
        %3450 = vmatmul.mubr.f32.gmra.mrb[0].mxu0 %v3449
        %v3451 = vpop.f32.mrb[0].mxu0
        %v3452 = vadd.f32 %v3327, %v3451
        %v3453 = vpop.f32.mrb[0].mxu0
        %3454 = vdwg.mxu0
        %3455 = vmatprep.subr.mxu0 0.0
        %v3456 = vand.u32 %v3055, 4294901760
        %3457 = vmatpush1.msra.mxu0 %v3456
        %3458 = vmatprep.subr.mxu0 0.0
        %v3459 = vand.u32 %v3056, 4294901760
        %3460 = vmatpush1.msra.mxu0 %v3459
        %3461 = vmatprep.subr.mxu0 0.0
        %3462 = vmatpush1.msra.mxu0 0.0
        %3463 = vmatprep.subr.mxu0 0.0
        %3464 = vmatpush1.msra.mxu0 0.0
        %3465 = vmatprep.subr.mxu0 0.0
        %3466 = vmatpush1.msra.mxu0 0.0
        %3467 = vmatprep.subr.mxu0 0.0
        %3468 = vmatpush1.msra.mxu0 0.0
        %3469 = vmatprep.subr.mxu0 0.0
        %3470 = vmatpush1.msra.mxu0 0.0
        %3471 = vmatprep.subr.mxu0 0.0
        %3472 = vmatpush1.msra.mxu0 0.0
        %3473 = vmatprep.subr.mxu0 0.0
        %3474 = vmatpush1.msra.mxu0 0.0
        %3475 = vmatprep.subr.mxu0 0.0
        %3476 = vmatpush1.msra.mxu0 0.0
        %3477 = vmatprep.subr.mxu0 0.0
        %3478 = vmatpush1.msra.mxu0 0.0
        %3479 = vmatprep.subr.mxu0 0.0
        %3480 = vmatpush1.msra.mxu0 0.0
        %3481 = vmatprep.subr.mxu0 0.0
        %3482 = vmatpush1.msra.mxu0 0.0
        %3483 = vmatprep.subr.mxu0 0.0
        %3484 = vmatpush1.msra.mxu0 0.0
        %3485 = vmatprep.subr.mxu0 0.0
        %3486 = vmatpush1.msra.mxu0 0.0
        %3487 = vmatprep.subr.mxu0 0.0
        %3488 = vmatpush1.msra.mxu0 0.0
        %3489 = vmatprep.subr.mxu0 0.0
        %3490 = vmatpush1.msra.mxu0 0.0
        %3491 = vmatprep.subr.mxu0 0.0
        %3492 = vmatpush1.msra.mxu0 0.0
        %3493 = vmatprep.subr.mxu0 0.0
        %3494 = vmatpush1.msra.mxu0 0.0
        %3495 = vmatprep.subr.mxu0 0.0
        %3496 = vmatpush1.msra.mxu0 0.0
        %3497 = vmatprep.subr.mxu0 0.0
        %3498 = vmatpush1.msra.mxu0 0.0
        %3499 = vmatprep.subr.mxu0 0.0
        %3500 = vmatpush1.msra.mxu0 0.0
        %3501 = vmatprep.subr.mxu0 0.0
        %3502 = vmatpush1.msra.mxu0 0.0
        %3503 = vmatprep.subr.mxu0 0.0
        %3504 = vmatpush1.msra.mxu0 0.0
        %3505 = vmatprep.subr.mxu0 0.0
        %3506 = vmatpush1.msra.mxu0 0.0
        %3507 = vmatprep.subr.mxu0 0.0
        %3508 = vmatpush1.msra.mxu0 0.0
        %3509 = vmatprep.subr.mxu0 0.0
        %3510 = vmatpush1.msra.mxu0 0.0
        %3511 = vmatprep.subr.mxu0 0.0
        %3512 = vmatpush1.msra.mxu0 0.0
        %3513 = vmatprep.subr.mxu0 0.0
        %3514 = vmatpush1.msra.mxu0 0.0
        %3515 = vmatprep.subr.mxu0 0.0
        %3516 = vmatpush1.msra.mxu0 0.0
        %3517 = vmatprep.subr.mxu0 0.0
        %3518 = vmatpush1.msra.mxu0 0.0
        %3519 = vmatprep.subr.mxu0 0.0
        %3520 = vmatpush1.msra.mxu0 0.0
        %3521 = vmatprep.mubr.f32.mxu0 0.0
        %v3522 = vand.u32 %v241, 4294901760
        %v3523 = vsub.f32 %v241, %v3522
        %v3524 = vand.u32 %v3523, 4294901760
        %3525 = vmatmul.mubr.f32.gmra.mrb[0].mxu0 %v3524
        %v3526 = vpop.f32.mrb[0].mxu0
        %v3527 = vadd.f32 %v3403, %v3526
        %v3528 = vpop.f32.mrb[0].mxu0
        %3529 = vmatprep.mubr.f32.mxu0 0.0
        %v3530 = vand.u32 %v244, 4294901760
        %v3531 = vsub.f32 %v244, %v3530
        %v3532 = vand.u32 %v3531, 4294901760
        %3533 = vmatmul.mubr.f32.gmra.mrb[0].mxu0 %v3532
        %v3534 = vpop.f32.mrb[0].mxu0
        %v3535 = vadd.f32 %v3410, %v3534
        %v3536 = vpop.f32.mrb[0].mxu0
        %3537 = vmatprep.mubr.f32.mxu0 0.0
        %v3538 = vand.u32 %v247, 4294901760
        %v3539 = vsub.f32 %v247, %v3538
        %v3540 = vand.u32 %v3539, 4294901760
        %3541 = vmatmul.mubr.f32.gmra.mrb[0].mxu0 %v3540
        %v3542 = vpop.f32.mrb[0].mxu0
        %v3543 = vadd.f32 %v3417, %v3542
        %v3544 = vpop.f32.mrb[0].mxu0
        %3545 = vmatprep.mubr.f32.mxu0 0.0
        %v3546 = vand.u32 %v250, 4294901760
        %v3547 = vsub.f32 %v250, %v3546
        %v3548 = vand.u32 %v3547, 4294901760
        %3549 = vmatmul.mubr.f32.gmra.mrb[0].mxu0 %v3548
        %v3550 = vpop.f32.mrb[0].mxu0
        %v3551 = vadd.f32 %v3424, %v3550
        %v3552 = vpop.f32.mrb[0].mxu0
        %3553 = vmatprep.mubr.f32.mxu0 0.0
        %v3554 = vand.u32 %v253, 4294901760
        %v3555 = vsub.f32 %v253, %v3554
        %v3556 = vand.u32 %v3555, 4294901760
        %3557 = vmatmul.mubr.f32.gmra.mrb[0].mxu0 %v3556
        %v3558 = vpop.f32.mrb[0].mxu0
        %v3559 = vadd.f32 %v3431, %v3558
        %v3560 = vpop.f32.mrb[0].mxu0
        %3561 = vmatprep.mubr.f32.mxu0 0.0
        %v3562 = vand.u32 %v256, 4294901760
        %v3563 = vsub.f32 %v256, %v3562
        %v3564 = vand.u32 %v3563, 4294901760
        %3565 = vmatmul.mubr.f32.gmra.mrb[0].mxu0 %v3564
        %v3566 = vpop.f32.mrb[0].mxu0
        %v3567 = vadd.f32 %v3438, %v3566
        %v3568 = vpop.f32.mrb[0].mxu0
        %3569 = vmatprep.mubr.f32.mxu0 0.0
        %v3570 = vand.u32 %v259, 4294901760
        %v3571 = vsub.f32 %v259, %v3570
        %v3572 = vand.u32 %v3571, 4294901760
        %3573 = vmatmul.mubr.f32.gmra.mrb[0].mxu0 %v3572
        %v3574 = vpop.f32.mrb[0].mxu0
        %v3575 = vadd.f32 %v3445, %v3574
        %v3576 = vpop.f32.mrb[0].mxu0
        %3577 = vmatprep.mubr.f32.mxu0 0.0
        %v3578 = vand.u32 %v262, 4294901760
        %v3579 = vsub.f32 %v262, %v3578
        %v3580 = vand.u32 %v3579, 4294901760
        %3581 = vmatmul.mubr.f32.gmra.mrb[0].mxu0 %v3580
        %v3582 = vpop.f32.mrb[0].mxu0
        %v3583 = vadd.f32 %v3452, %v3582
        %v3584 = vpop.f32.mrb[0].mxu0
        %3585 = vdwg.mxu0
        %3586 = vmatprep.subr.mxu0 0.0
        %v3587 = vand.u32 %v3055, 4294901760
        %v3588 = vsub.f32 %v3055, %v3587
        %v3589 = vand.u32 %v3588, 4294901760
        %3590 = vmatpush1.msra.mxu0 %v3589
        %3591 = vmatprep.subr.mxu0 0.0
        %v3592 = vand.u32 %v3056, 4294901760
        %v3593 = vsub.f32 %v3056, %v3592
        %v3594 = vand.u32 %v3593, 4294901760
        %3595 = vmatpush1.msra.mxu0 %v3594
        %3596 = vmatprep.subr.mxu0 0.0
        %3597 = vmatpush1.msra.mxu0 0.0
        %3598 = vmatprep.subr.mxu0 0.0
        %3599 = vmatpush1.msra.mxu0 0.0
        %3600 = vmatprep.subr.mxu0 0.0
        %3601 = vmatpush1.msra.mxu0 0.0
        %3602 = vmatprep.subr.mxu0 0.0
        %3603 = vmatpush1.msra.mxu0 0.0
        %3604 = vmatprep.subr.mxu0 0.0
        %3605 = vmatpush1.msra.mxu0 0.0
        %3606 = vmatprep.subr.mxu0 0.0
        %3607 = vmatpush1.msra.mxu0 0.0
        %3608 = vmatprep.subr.mxu0 0.0
        %3609 = vmatpush1.msra.mxu0 0.0
        %3610 = vmatprep.subr.mxu0 0.0
        %3611 = vmatpush1.msra.mxu0 0.0
        %3612 = vmatprep.subr.mxu0 0.0
        %3613 = vmatpush1.msra.mxu0 0.0
        %3614 = vmatprep.subr.mxu0 0.0
        %3615 = vmatpush1.msra.mxu0 0.0
        %3616 = vmatprep.subr.mxu0 0.0
        %3617 = vmatpush1.msra.mxu0 0.0
        %3618 = vmatprep.subr.mxu0 0.0
        %3619 = vmatpush1.msra.mxu0 0.0
        %3620 = vmatprep.subr.mxu0 0.0
        %3621 = vmatpush1.msra.mxu0 0.0
        %3622 = vmatprep.subr.mxu0 0.0
        %3623 = vmatpush1.msra.mxu0 0.0
        %3624 = vmatprep.subr.mxu0 0.0
        %3625 = vmatpush1.msra.mxu0 0.0
        %3626 = vmatprep.subr.mxu0 0.0
        %3627 = vmatpush1.msra.mxu0 0.0
        %3628 = vmatprep.subr.mxu0 0.0
        %3629 = vmatpush1.msra.mxu0 0.0
        %3630 = vmatprep.subr.mxu0 0.0
        %3631 = vmatpush1.msra.mxu0 0.0
        %3632 = vmatprep.subr.mxu0 0.0
        %3633 = vmatpush1.msra.mxu0 0.0
        %3634 = vmatprep.subr.mxu0 0.0
        %3635 = vmatpush1.msra.mxu0 0.0
        %3636 = vmatprep.subr.mxu0 0.0
        %3637 = vmatpush1.msra.mxu0 0.0
        %3638 = vmatprep.subr.mxu0 0.0
        %3639 = vmatpush1.msra.mxu0 0.0
        %3640 = vmatprep.subr.mxu0 0.0
        %3641 = vmatpush1.msra.mxu0 0.0
        %3642 = vmatprep.subr.mxu0 0.0
        %3643 = vmatpush1.msra.mxu0 0.0
        %3644 = vmatprep.subr.mxu0 0.0
        %3645 = vmatpush1.msra.mxu0 0.0
        %3646 = vmatprep.subr.mxu0 0.0
        %3647 = vmatpush1.msra.mxu0 0.0
        %3648 = vmatprep.subr.mxu0 0.0
        %3649 = vmatpush1.msra.mxu0 0.0
        %3650 = vmatprep.subr.mxu0 0.0
        %3651 = vmatpush1.msra.mxu0 0.0
        %3652 = vmatprep.subr.mxu0 0.0
        %3653 = vmatpush1.msra.mxu0 0.0
        %3654 = vmatprep.subr.mxu0 0.0
        %3655 = vmatpush1.msra.mxu0 0.0
        %3656 = vmatprep.mubr.f32.mxu0 0.0
        %v3657 = vand.u32 %v241, 4294901760
        %3658 = vmatmul.mubr.f32.gmra.mrb[0].mxu0 %v3657
        %v3659 = vpop.f32.mrb[0].mxu0
        %v3660 = vadd.f32 %v3527, %v3659
        %v3661 = vpop.f32.mrb[0].mxu0
        %3662 = vmatprep.mubr.f32.mxu0 0.0
        %v3663 = vand.u32 %v244, 4294901760
        %3664 = vmatmul.mubr.f32.gmra.mrb[0].mxu0 %v3663
        %v3665 = vpop.f32.mrb[0].mxu0
        %v3666 = vadd.f32 %v3535, %v3665
        %v3667 = vpop.f32.mrb[0].mxu0
        %3668 = vmatprep.mubr.f32.mxu0 0.0
        %v3669 = vand.u32 %v247, 4294901760
        %3670 = vmatmul.mubr.f32.gmra.mrb[0].mxu0 %v3669
        %v3671 = vpop.f32.mrb[0].mxu0
        %v3672 = vadd.f32 %v3543, %v3671
        %v3673 = vpop.f32.mrb[0].mxu0
        %3674 = vmatprep.mubr.f32.mxu0 0.0
        %v3675 = vand.u32 %v250, 4294901760
        %3676 = vmatmul.mubr.f32.gmra.mrb[0].mxu0 %v3675
        %v3677 = vpop.f32.mrb[0].mxu0
        %v3678 = vadd.f32 %v3551, %v3677
        %v3679 = vpop.f32.mrb[0].mxu0
        %3680 = vmatprep.mubr.f32.mxu0 0.0
        %v3681 = vand.u32 %v253, 4294901760
        %3682 = vmatmul.mubr.f32.gmra.mrb[0].mxu0 %v3681
        %v3683 = vpop.f32.mrb[0].mxu0
        %v3684 = vadd.f32 %v3559, %v3683
        %v3685 = vpop.f32.mrb[0].mxu0
        %3686 = vmatprep.mubr.f32.mxu0 0.0
        %v3687 = vand.u32 %v256, 4294901760
        %3688 = vmatmul.mubr.f32.gmra.mrb[0].mxu0 %v3687
        %v3689 = vpop.f32.mrb[0].mxu0
        %v3690 = vadd.f32 %v3567, %v3689
        %v3691 = vpop.f32.mrb[0].mxu0
        %3692 = vmatprep.mubr.f32.mxu0 0.0
        %v3693 = vand.u32 %v259, 4294901760
        %3694 = vmatmul.mubr.f32.gmra.mrb[0].mxu0 %v3693
        %v3695 = vpop.f32.mrb[0].mxu0
        %v3696 = vadd.f32 %v3575, %v3695
        %v3697 = vpop.f32.mrb[0].mxu0
        %3698 = vmatprep.mubr.f32.mxu0 0.0
        %v3699 = vand.u32 %v262, 4294901760
        %3700 = vmatmul.mubr.f32.gmra.mrb[0].mxu0 %v3699
        %v3701 = vpop.f32.mrb[0].mxu0
        %v3702 = vadd.f32 %v3583, %v3701
        %v3703 = vpop.f32.mrb[0].mxu0
        %3704 = vdwg.mxu0
        %3705 = vmatprep.subr.mxu0 0.0
        %v3706 = vand.u32 %v3055, 4294901760
        %3707 = vmatpush1.msra.mxu0 %v3706
        %3708 = vmatprep.subr.mxu0 0.0
        %v3709 = vand.u32 %v3056, 4294901760
        %3710 = vmatpush1.msra.mxu0 %v3709
        %3711 = vmatprep.subr.mxu0 0.0
        %3712 = vmatpush1.msra.mxu0 0.0
        %3713 = vmatprep.subr.mxu0 0.0
        %3714 = vmatpush1.msra.mxu0 0.0
        %3715 = vmatprep.subr.mxu0 0.0
        %3716 = vmatpush1.msra.mxu0 0.0
        %3717 = vmatprep.subr.mxu0 0.0
        %3718 = vmatpush1.msra.mxu0 0.0
        %3719 = vmatprep.subr.mxu0 0.0
        %3720 = vmatpush1.msra.mxu0 0.0
        %3721 = vmatprep.subr.mxu0 0.0
        %3722 = vmatpush1.msra.mxu0 0.0
        %3723 = vmatprep.subr.mxu0 0.0
        %3724 = vmatpush1.msra.mxu0 0.0
        %3725 = vmatprep.subr.mxu0 0.0
        %3726 = vmatpush1.msra.mxu0 0.0
        %3727 = vmatprep.subr.mxu0 0.0
        %3728 = vmatpush1.msra.mxu0 0.0
        %3729 = vmatprep.subr.mxu0 0.0
        %3730 = vmatpush1.msra.mxu0 0.0
        %3731 = vmatprep.subr.mxu0 0.0
        %3732 = vmatpush1.msra.mxu0 0.0
        %3733 = vmatprep.subr.mxu0 0.0
        %3734 = vmatpush1.msra.mxu0 0.0
        %3735 = vmatprep.subr.mxu0 0.0
        %3736 = vmatpush1.msra.mxu0 0.0
        %3737 = vmatprep.subr.mxu0 0.0
        %3738 = vmatpush1.msra.mxu0 0.0
        %3739 = vmatprep.subr.mxu0 0.0
        %3740 = vmatpush1.msra.mxu0 0.0
        %3741 = vmatprep.subr.mxu0 0.0
        %3742 = vmatpush1.msra.mxu0 0.0
        %3743 = vmatprep.subr.mxu0 0.0
        %3744 = vmatpush1.msra.mxu0 0.0
        %3745 = vmatprep.subr.mxu0 0.0
        %3746 = vmatpush1.msra.mxu0 0.0
        %3747 = vmatprep.subr.mxu0 0.0
        %3748 = vmatpush1.msra.mxu0 0.0
        %3749 = vmatprep.subr.mxu0 0.0
        %3750 = vmatpush1.msra.mxu0 0.0
        %3751 = vmatprep.subr.mxu0 0.0
        %3752 = vmatpush1.msra.mxu0 0.0
        %3753 = vmatprep.subr.mxu0 0.0
        %3754 = vmatpush1.msra.mxu0 0.0
        %3755 = vmatprep.subr.mxu0 0.0
        %3756 = vmatpush1.msra.mxu0 0.0
        %3757 = vmatprep.subr.mxu0 0.0
        %3758 = vmatpush1.msra.mxu0 0.0
        %3759 = vmatprep.subr.mxu0 0.0
        %3760 = vmatpush1.msra.mxu0 0.0
        %3761 = vmatprep.subr.mxu0 0.0
        %3762 = vmatpush1.msra.mxu0 0.0
        %3763 = vmatprep.subr.mxu0 0.0
        %3764 = vmatpush1.msra.mxu0 0.0
        %3765 = vmatprep.subr.mxu0 0.0
        %3766 = vmatpush1.msra.mxu0 0.0
        %3767 = vmatprep.subr.mxu0 0.0
        %3768 = vmatpush1.msra.mxu0 0.0
        %3769 = vmatprep.subr.mxu0 0.0
        %3770 = vmatpush1.msra.mxu0 0.0
        %3771 = vmatprep.mubr.f32.mxu0 0.0
        %v3772 = vand.u32 %v241, 4294901760
        %3773 = vmatmul.mubr.f32.gmra.mrb[0].mxu0 %v3772
        %v3774 = vpop.f32.mrb[0].mxu0
        %v3775 = vadd.f32 %v3660, %v3774
        %v3776 = vpop.f32.mrb[0].mxu0
        %3777 = vmatprep.mubr.f32.mxu0 0.0
        %v3778 = vand.u32 %v244, 4294901760
        %3779 = vmatmul.mubr.f32.gmra.mrb[0].mxu0 %v3778
        %v3780 = vpop.f32.mrb[0].mxu0
        %v3781 = vadd.f32 %v3666, %v3780
        %v3782 = vpop.f32.mrb[0].mxu0
        %3783 = vmatprep.mubr.f32.mxu0 0.0
        %v3784 = vand.u32 %v247, 4294901760
        %3785 = vmatmul.mubr.f32.gmra.mrb[0].mxu0 %v3784
        %v3786 = vpop.f32.mrb[0].mxu0
        %v3787 = vadd.f32 %v3672, %v3786
        %v3788 = vpop.f32.mrb[0].mxu0
        %3789 = vmatprep.mubr.f32.mxu0 0.0
        %v3790 = vand.u32 %v250, 4294901760
        %3791 = vmatmul.mubr.f32.gmra.mrb[0].mxu0 %v3790
        %v3792 = vpop.f32.mrb[0].mxu0
        %v3793 = vadd.f32 %v3678, %v3792
        %v3794 = vpop.f32.mrb[0].mxu0
        %3795 = vmatprep.mubr.f32.mxu0 0.0
        %v3796 = vand.u32 %v253, 4294901760
        %3797 = vmatmul.mubr.f32.gmra.mrb[0].mxu0 %v3796
        %v3798 = vpop.f32.mrb[0].mxu0
        %v3799 = vadd.f32 %v3684, %v3798
        %v3800 = vpop.f32.mrb[0].mxu0
        %3801 = vmatprep.mubr.f32.mxu0 0.0
        %v3802 = vand.u32 %v256, 4294901760
        %3803 = vmatmul.mubr.f32.gmra.mrb[0].mxu0 %v3802
        %v3804 = vpop.f32.mrb[0].mxu0
        %v3805 = vadd.f32 %v3690, %v3804
        %v3806 = vpop.f32.mrb[0].mxu0
        %3807 = vmatprep.mubr.f32.mxu0 0.0
        %v3808 = vand.u32 %v259, 4294901760
        %3809 = vmatmul.mubr.f32.gmra.mrb[0].mxu0 %v3808
        %v3810 = vpop.f32.mrb[0].mxu0
        %v3811 = vadd.f32 %v3696, %v3810
        %v3812 = vpop.f32.mrb[0].mxu0
        %3813 = vmatprep.mubr.f32.mxu0 0.0
        %v3814 = vand.u32 %v262, 4294901760
        %3815 = vmatmul.mubr.f32.gmra.mrb[0].mxu0 %v3814
        %v3816 = vpop.f32.mrb[0].mxu0
        %v3817 = vadd.f32 %v3702, %v3816
        %v3818 = vpop.f32.mrb[0].mxu0
        %3819 = vdwg.mxu0
        %v3821 = vsel %vm227, %v3058, 0
        %v3824 = vsel %vm227, %v3059, 0
        %3826 = vmatprep.subr.mxu0 0.0
        %v3827 = vand.u32 %v3775, 4294901760
        %3828 = vmatpush1.msra.mxu0 %v3827
        %3829 = vmatprep.subr.mxu0 0.0
        %v3830 = vand.u32 %v3781, 4294901760
        %3831 = vmatpush1.msra.mxu0 %v3830
        %3832 = vmatprep.subr.mxu0 0.0
        %3833 = vmatpush1.msra.mxu0 0.0
        %3834 = vmatprep.subr.mxu0 0.0
        %3835 = vmatpush1.msra.mxu0 0.0
        %3836 = vmatprep.subr.mxu0 0.0
        %3837 = vmatpush1.msra.mxu0 0.0
        %3838 = vmatprep.subr.mxu0 0.0
        %3839 = vmatpush1.msra.mxu0 0.0
        %3840 = vmatprep.subr.mxu0 0.0
        %3841 = vmatpush1.msra.mxu0 0.0
        %3842 = vmatprep.subr.mxu0 0.0
        %3843 = vmatpush1.msra.mxu0 0.0
        %3844 = vmatprep.subr.mxu0 0.0
        %3845 = vmatpush1.msra.mxu0 0.0
        %3846 = vmatprep.subr.mxu0 0.0
        %3847 = vmatpush1.msra.mxu0 0.0
        %3848 = vmatprep.subr.mxu0 0.0
        %3849 = vmatpush1.msra.mxu0 0.0
        %3850 = vmatprep.subr.mxu0 0.0
        %3851 = vmatpush1.msra.mxu0 0.0
        %3852 = vmatprep.subr.mxu0 0.0
        %3853 = vmatpush1.msra.mxu0 0.0
        %3854 = vmatprep.subr.mxu0 0.0
        %3855 = vmatpush1.msra.mxu0 0.0
        %3856 = vmatprep.subr.mxu0 0.0
        %3857 = vmatpush1.msra.mxu0 0.0
        %3858 = vmatprep.subr.mxu0 0.0
        %3859 = vmatpush1.msra.mxu0 0.0
        %3860 = vmatprep.subr.mxu0 0.0
        %3861 = vmatpush1.msra.mxu0 0.0
        %3862 = vmatprep.subr.mxu0 0.0
        %3863 = vmatpush1.msra.mxu0 0.0
        %3864 = vmatprep.subr.mxu0 0.0
        %3865 = vmatpush1.msra.mxu0 0.0
        %3866 = vmatprep.subr.mxu0 0.0
        %3867 = vmatpush1.msra.mxu0 0.0
        %3868 = vmatprep.subr.mxu0 0.0
        %3869 = vmatpush1.msra.mxu0 0.0
        %3870 = vmatprep.subr.mxu0 0.0
        %3871 = vmatpush1.msra.mxu0 0.0
        %3872 = vmatprep.subr.mxu0 0.0
        %3873 = vmatpush1.msra.mxu0 0.0
        %3874 = vmatprep.subr.mxu0 0.0
        %3875 = vmatpush1.msra.mxu0 0.0
        %3876 = vmatprep.subr.mxu0 0.0
        %3877 = vmatpush1.msra.mxu0 0.0
        %3878 = vmatprep.subr.mxu0 0.0
        %3879 = vmatpush1.msra.mxu0 0.0
        %3880 = vmatprep.subr.mxu0 0.0
        %3881 = vmatpush1.msra.mxu0 0.0
        %3882 = vmatprep.subr.mxu0 0.0
        %3883 = vmatpush1.msra.mxu0 0.0
        %3884 = vmatprep.subr.mxu0 0.0
        %3885 = vmatpush1.msra.mxu0 0.0
        %3886 = vmatprep.subr.mxu0 0.0
        %3887 = vmatpush1.msra.mxu0 0.0
        %3888 = vmatprep.subr.mxu0 0.0
        %3889 = vmatpush1.msra.mxu0 0.0
        %3890 = vmatprep.subr.mxu0 0.0
        %3891 = vmatpush1.msra.mxu0 0.0
        %3892 = vmatprep.mubr.f32.mxu0 0.0
        %v3893 = vand.u32 %v3821, 4294901760
        %v3894 = vsub.f32 %v3821, %v3893
        %v3895 = vand.u32 %v3894, 4294901760
        %v3896 = vsub.f32 %v3894, %v3895
        %v3897 = vand.u32 %v3896, 4294901760
        %3898 = vmatmul.mubr.f32.gmra.mrb[0].mxu0 %v3897
        %v3899 = vpop.f32.mrb[0].mxu0
        %v3900 = vadd.f32 0.0, %v3899
        %v3901 = vpop.f32.mrb[0].mxu0
        %3902 = vmatprep.mubr.f32.mxu0 0.0
        %v3903 = vand.u32 %v3824, 4294901760
        %v3904 = vsub.f32 %v3824, %v3903
        %v3905 = vand.u32 %v3904, 4294901760
        %v3906 = vsub.f32 %v3904, %v3905
        %v3907 = vand.u32 %v3906, 4294901760
        %3908 = vmatmul.mubr.f32.gmra.mrb[0].mxu0 %v3907
        %v3909 = vpop.f32.mrb[0].mxu0
        %v3910 = vadd.f32 0.0, %v3909
        %v3911 = vpop.f32.mrb[0].mxu0
        %3912 = vdwg.mxu0
        %3913 = vmatprep.subr.mxu0 0.0
        %v3914 = vand.u32 %v3775, 4294901760
        %v3915 = vsub.f32 %v3775, %v3914
        %v3916 = vand.u32 %v3915, 4294901760
        %v3917 = vsub.f32 %v3915, %v3916
        %v3918 = vand.u32 %v3917, 4294901760
        %3919 = vmatpush1.msra.mxu0 %v3918
        %3920 = vmatprep.subr.mxu0 0.0
        %v3921 = vand.u32 %v3781, 4294901760
        %v3922 = vsub.f32 %v3781, %v3921
        %v3923 = vand.u32 %v3922, 4294901760
        %v3924 = vsub.f32 %v3922, %v3923
        %v3925 = vand.u32 %v3924, 4294901760
        %3926 = vmatpush1.msra.mxu0 %v3925
        %3927 = vmatprep.subr.mxu0 0.0
        %3928 = vmatpush1.msra.mxu0 0.0
        %3929 = vmatprep.subr.mxu0 0.0
        %3930 = vmatpush1.msra.mxu0 0.0
        %3931 = vmatprep.subr.mxu0 0.0
        %3932 = vmatpush1.msra.mxu0 0.0
        %3933 = vmatprep.subr.mxu0 0.0
        %3934 = vmatpush1.msra.mxu0 0.0
        %3935 = vmatprep.subr.mxu0 0.0
        %3936 = vmatpush1.msra.mxu0 0.0
        %3937 = vmatprep.subr.mxu0 0.0
        %3938 = vmatpush1.msra.mxu0 0.0
        %3939 = vmatprep.subr.mxu0 0.0
        %3940 = vmatpush1.msra.mxu0 0.0
        %3941 = vmatprep.subr.mxu0 0.0
        %3942 = vmatpush1.msra.mxu0 0.0
        %3943 = vmatprep.subr.mxu0 0.0
        %3944 = vmatpush1.msra.mxu0 0.0
        %3945 = vmatprep.subr.mxu0 0.0
        %3946 = vmatpush1.msra.mxu0 0.0
        %3947 = vmatprep.subr.mxu0 0.0
        %3948 = vmatpush1.msra.mxu0 0.0
        %3949 = vmatprep.subr.mxu0 0.0
        %3950 = vmatpush1.msra.mxu0 0.0
        %3951 = vmatprep.subr.mxu0 0.0
        %3952 = vmatpush1.msra.mxu0 0.0
        %3953 = vmatprep.subr.mxu0 0.0
        %3954 = vmatpush1.msra.mxu0 0.0
        %3955 = vmatprep.subr.mxu0 0.0
        %3956 = vmatpush1.msra.mxu0 0.0
        %3957 = vmatprep.subr.mxu0 0.0
        %3958 = vmatpush1.msra.mxu0 0.0
        %3959 = vmatprep.subr.mxu0 0.0
        %3960 = vmatpush1.msra.mxu0 0.0
        %3961 = vmatprep.subr.mxu0 0.0
        %3962 = vmatpush1.msra.mxu0 0.0
        %3963 = vmatprep.subr.mxu0 0.0
        %3964 = vmatpush1.msra.mxu0 0.0
        %3965 = vmatprep.subr.mxu0 0.0
        %3966 = vmatpush1.msra.mxu0 0.0
        %3967 = vmatprep.subr.mxu0 0.0
        %3968 = vmatpush1.msra.mxu0 0.0
        %3969 = vmatprep.subr.mxu0 0.0
        %3970 = vmatpush1.msra.mxu0 0.0
        %3971 = vmatprep.subr.mxu0 0.0
        %3972 = vmatpush1.msra.mxu0 0.0
        %3973 = vmatprep.subr.mxu0 0.0
        %3974 = vmatpush1.msra.mxu0 0.0
        %3975 = vmatprep.subr.mxu0 0.0
        %3976 = vmatpush1.msra.mxu0 0.0
        %3977 = vmatprep.subr.mxu0 0.0
        %3978 = vmatpush1.msra.mxu0 0.0
        %3979 = vmatprep.subr.mxu0 0.0
        %3980 = vmatpush1.msra.mxu0 0.0
        %3981 = vmatprep.subr.mxu0 0.0
        %3982 = vmatpush1.msra.mxu0 0.0
        %3983 = vmatprep.subr.mxu0 0.0
        %3984 = vmatpush1.msra.mxu0 0.0
        %3985 = vmatprep.subr.mxu0 0.0
        %3986 = vmatpush1.msra.mxu0 0.0
        %3987 = vmatprep.mubr.f32.mxu0 0.0
        %v3988 = vand.u32 %v3821, 4294901760
        %3989 = vmatmul.mubr.f32.gmra.mrb[0].mxu0 %v3988
        %v3990 = vpop.f32.mrb[0].mxu0
        %v3991 = vadd.f32 %v3900, %v3990
        %v3992 = vpop.f32.mrb[0].mxu0
        %3993 = vmatprep.mubr.f32.mxu0 0.0
        %v3994 = vand.u32 %v3824, 4294901760
        %3995 = vmatmul.mubr.f32.gmra.mrb[0].mxu0 %v3994
        %v3996 = vpop.f32.mrb[0].mxu0
        %v3997 = vadd.f32 %v3910, %v3996
        %v3998 = vpop.f32.mrb[0].mxu0
        %3999 = vdwg.mxu0
        %4000 = vmatprep.subr.mxu0 0.0
        %v4001 = vand.u32 %v3775, 4294901760
        %v4002 = vsub.f32 %v3775, %v4001
        %4003 = vmatpush1.msra.mxu0 %v4002
        %4004 = vmatprep.subr.mxu0 0.0
        %v4005 = vand.u32 %v3781, 4294901760
        %v4006 = vsub.f32 %v3781, %v4005
        %4007 = vmatpush1.msra.mxu0 %v4006
        %4008 = vmatprep.subr.mxu0 0.0
        %4009 = vmatpush1.msra.mxu0 0.0
        %4010 = vmatprep.subr.mxu0 0.0
        %4011 = vmatpush1.msra.mxu0 0.0
        %4012 = vmatprep.subr.mxu0 0.0
        %4013 = vmatpush1.msra.mxu0 0.0
        %4014 = vmatprep.subr.mxu0 0.0
        %4015 = vmatpush1.msra.mxu0 0.0
        %4016 = vmatprep.subr.mxu0 0.0
        %4017 = vmatpush1.msra.mxu0 0.0
        %4018 = vmatprep.subr.mxu0 0.0
        %4019 = vmatpush1.msra.mxu0 0.0
        %4020 = vmatprep.subr.mxu0 0.0
        %4021 = vmatpush1.msra.mxu0 0.0
        %4022 = vmatprep.subr.mxu0 0.0
        %4023 = vmatpush1.msra.mxu0 0.0
        %4024 = vmatprep.subr.mxu0 0.0
        %4025 = vmatpush1.msra.mxu0 0.0
        %4026 = vmatprep.subr.mxu0 0.0
        %4027 = vmatpush1.msra.mxu0 0.0
        %4028 = vmatprep.subr.mxu0 0.0
        %4029 = vmatpush1.msra.mxu0 0.0
        %4030 = vmatprep.subr.mxu0 0.0
        %4031 = vmatpush1.msra.mxu0 0.0
        %4032 = vmatprep.subr.mxu0 0.0
        %4033 = vmatpush1.msra.mxu0 0.0
        %4034 = vmatprep.subr.mxu0 0.0
        %4035 = vmatpush1.msra.mxu0 0.0
        %4036 = vmatprep.subr.mxu0 0.0
        %4037 = vmatpush1.msra.mxu0 0.0
        %4038 = vmatprep.subr.mxu0 0.0
        %4039 = vmatpush1.msra.mxu0 0.0
        %4040 = vmatprep.subr.mxu0 0.0
        %4041 = vmatpush1.msra.mxu0 0.0
        %4042 = vmatprep.subr.mxu0 0.0
        %4043 = vmatpush1.msra.mxu0 0.0
        %4044 = vmatprep.subr.mxu0 0.0
        %4045 = vmatpush1.msra.mxu0 0.0
        %4046 = vmatprep.subr.mxu0 0.0
        %4047 = vmatpush1.msra.mxu0 0.0
        %4048 = vmatprep.subr.mxu0 0.0
        %4049 = vmatpush1.msra.mxu0 0.0
        %4050 = vmatprep.subr.mxu0 0.0
        %4051 = vmatpush1.msra.mxu0 0.0
        %4052 = vmatprep.subr.mxu0 0.0
        %4053 = vmatpush1.msra.mxu0 0.0
        %4054 = vmatprep.subr.mxu0 0.0
        %4055 = vmatpush1.msra.mxu0 0.0
        %4056 = vmatprep.subr.mxu0 0.0
        %4057 = vmatpush1.msra.mxu0 0.0
        %4058 = vmatprep.subr.mxu0 0.0
        %4059 = vmatpush1.msra.mxu0 0.0
        %4060 = vmatprep.subr.mxu0 0.0
        %4061 = vmatpush1.msra.mxu0 0.0
        %4062 = vmatprep.subr.mxu0 0.0
        %4063 = vmatpush1.msra.mxu0 0.0
        %4064 = vmatprep.subr.mxu0 0.0
        %4065 = vmatpush1.msra.mxu0 0.0
        %4066 = vmatprep.subr.mxu0 0.0
        %4067 = vmatpush1.msra.mxu0 0.0
        %4068 = vmatprep.mubr.f32.mxu0 0.0
        %v4069 = vand.u32 %v3821, 4294901760
        %v4070 = vsub.f32 %v3821, %v4069
        %4071 = vmatmul.mubr.f32.gmra.mrb[0].mxu0 %v4070
        %v4072 = vpop.f32.mrb[0].mxu0
        %v4073 = vadd.f32 %v3991, %v4072
        %v4074 = vpop.f32.mrb[0].mxu0
        %4075 = vmatprep.mubr.f32.mxu0 0.0
        %v4076 = vand.u32 %v3824, 4294901760
        %v4077 = vsub.f32 %v3824, %v4076
        %4078 = vmatmul.mubr.f32.gmra.mrb[0].mxu0 %v4077
        %v4079 = vpop.f32.mrb[0].mxu0
        %v4080 = vadd.f32 %v3997, %v4079
        %v4081 = vpop.f32.mrb[0].mxu0
        %4082 = vdwg.mxu0
        %4083 = vmatprep.subr.mxu0 0.0
        %v4084 = vand.u32 %v3775, 4294901760
        %4085 = vmatpush1.msra.mxu0 %v4084
        %4086 = vmatprep.subr.mxu0 0.0
        %v4087 = vand.u32 %v3781, 4294901760
        %4088 = vmatpush1.msra.mxu0 %v4087
        %4089 = vmatprep.subr.mxu0 0.0
        %4090 = vmatpush1.msra.mxu0 0.0
        %4091 = vmatprep.subr.mxu0 0.0
        %4092 = vmatpush1.msra.mxu0 0.0
        %4093 = vmatprep.subr.mxu0 0.0
        %4094 = vmatpush1.msra.mxu0 0.0
        %4095 = vmatprep.subr.mxu0 0.0
        %4096 = vmatpush1.msra.mxu0 0.0
        %4097 = vmatprep.subr.mxu0 0.0
        %4098 = vmatpush1.msra.mxu0 0.0
        %4099 = vmatprep.subr.mxu0 0.0
        %4100 = vmatpush1.msra.mxu0 0.0
        %4101 = vmatprep.subr.mxu0 0.0
        %4102 = vmatpush1.msra.mxu0 0.0
        %4103 = vmatprep.subr.mxu0 0.0
        %4104 = vmatpush1.msra.mxu0 0.0
        %4105 = vmatprep.subr.mxu0 0.0
        %4106 = vmatpush1.msra.mxu0 0.0
        %4107 = vmatprep.subr.mxu0 0.0
        %4108 = vmatpush1.msra.mxu0 0.0
        %4109 = vmatprep.subr.mxu0 0.0
        %4110 = vmatpush1.msra.mxu0 0.0
        %4111 = vmatprep.subr.mxu0 0.0
        %4112 = vmatpush1.msra.mxu0 0.0
        %4113 = vmatprep.subr.mxu0 0.0
        %4114 = vmatpush1.msra.mxu0 0.0
        %4115 = vmatprep.subr.mxu0 0.0
        %4116 = vmatpush1.msra.mxu0 0.0
        %4117 = vmatprep.subr.mxu0 0.0
        %4118 = vmatpush1.msra.mxu0 0.0
        %4119 = vmatprep.subr.mxu0 0.0
        %4120 = vmatpush1.msra.mxu0 0.0
        %4121 = vmatprep.subr.mxu0 0.0
        %4122 = vmatpush1.msra.mxu0 0.0
        %4123 = vmatprep.subr.mxu0 0.0
        %4124 = vmatpush1.msra.mxu0 0.0
        %4125 = vmatprep.subr.mxu0 0.0
        %4126 = vmatpush1.msra.mxu0 0.0
        %4127 = vmatprep.subr.mxu0 0.0
        %4128 = vmatpush1.msra.mxu0 0.0
        %4129 = vmatprep.subr.mxu0 0.0
        %4130 = vmatpush1.msra.mxu0 0.0
        %4131 = vmatprep.subr.mxu0 0.0
        %4132 = vmatpush1.msra.mxu0 0.0
        %4133 = vmatprep.subr.mxu0 0.0
        %4134 = vmatpush1.msra.mxu0 0.0
        %4135 = vmatprep.subr.mxu0 0.0
        %4136 = vmatpush1.msra.mxu0 0.0
        %4137 = vmatprep.subr.mxu0 0.0
        %4138 = vmatpush1.msra.mxu0 0.0
        %4139 = vmatprep.subr.mxu0 0.0
        %4140 = vmatpush1.msra.mxu0 0.0
        %4141 = vmatprep.subr.mxu0 0.0
        %4142 = vmatpush1.msra.mxu0 0.0
        %4143 = vmatprep.subr.mxu0 0.0
        %4144 = vmatpush1.msra.mxu0 0.0
        %4145 = vmatprep.subr.mxu0 0.0
        %4146 = vmatpush1.msra.mxu0 0.0
        %4147 = vmatprep.subr.mxu0 0.0
        %4148 = vmatpush1.msra.mxu0 0.0
        %4149 = vmatprep.mubr.f32.mxu0 0.0
        %v4150 = vand.u32 %v3821, 4294901760
        %v4151 = vsub.f32 %v3821, %v4150
        %v4152 = vand.u32 %v4151, 4294901760
        %4153 = vmatmul.mubr.f32.gmra.mrb[0].mxu0 %v4152
        %v4154 = vpop.f32.mrb[0].mxu0
        %v4155 = vadd.f32 %v4073, %v4154
        %v4156 = vpop.f32.mrb[0].mxu0
        %4157 = vmatprep.mubr.f32.mxu0 0.0
        %v4158 = vand.u32 %v3824, 4294901760
        %v4159 = vsub.f32 %v3824, %v4158
        %v4160 = vand.u32 %v4159, 4294901760
        %4161 = vmatmul.mubr.f32.gmra.mrb[0].mxu0 %v4160
        %v4162 = vpop.f32.mrb[0].mxu0
        %v4163 = vadd.f32 %v4080, %v4162
        %v4164 = vpop.f32.mrb[0].mxu0
        %4165 = vdwg.mxu0
        %4166 = vmatprep.subr.mxu0 0.0
        %v4167 = vand.u32 %v3775, 4294901760
        %v4168 = vsub.f32 %v3775, %v4167
        %v4169 = vand.u32 %v4168, 4294901760
        %4170 = vmatpush1.msra.mxu0 %v4169
        %4171 = vmatprep.subr.mxu0 0.0
        %v4172 = vand.u32 %v3781, 4294901760
        %v4173 = vsub.f32 %v3781, %v4172
        %v4174 = vand.u32 %v4173, 4294901760
        %4175 = vmatpush1.msra.mxu0 %v4174
        %4176 = vmatprep.subr.mxu0 0.0
        %4177 = vmatpush1.msra.mxu0 0.0
        %4178 = vmatprep.subr.mxu0 0.0
        %4179 = vmatpush1.msra.mxu0 0.0
        %4180 = vmatprep.subr.mxu0 0.0
        %4181 = vmatpush1.msra.mxu0 0.0
        %4182 = vmatprep.subr.mxu0 0.0
        %4183 = vmatpush1.msra.mxu0 0.0
        %4184 = vmatprep.subr.mxu0 0.0
        %4185 = vmatpush1.msra.mxu0 0.0
        %4186 = vmatprep.subr.mxu0 0.0
        %4187 = vmatpush1.msra.mxu0 0.0
        %4188 = vmatprep.subr.mxu0 0.0
        %4189 = vmatpush1.msra.mxu0 0.0
        %4190 = vmatprep.subr.mxu0 0.0
        %4191 = vmatpush1.msra.mxu0 0.0
        %4192 = vmatprep.subr.mxu0 0.0
        %4193 = vmatpush1.msra.mxu0 0.0
        %4194 = vmatprep.subr.mxu0 0.0
        %4195 = vmatpush1.msra.mxu0 0.0
        %4196 = vmatprep.subr.mxu0 0.0
        %4197 = vmatpush1.msra.mxu0 0.0
        %4198 = vmatprep.subr.mxu0 0.0
        %4199 = vmatpush1.msra.mxu0 0.0
        %4200 = vmatprep.subr.mxu0 0.0
        %4201 = vmatpush1.msra.mxu0 0.0
        %4202 = vmatprep.subr.mxu0 0.0
        %4203 = vmatpush1.msra.mxu0 0.0
        %4204 = vmatprep.subr.mxu0 0.0
        %4205 = vmatpush1.msra.mxu0 0.0
        %4206 = vmatprep.subr.mxu0 0.0
        %4207 = vmatpush1.msra.mxu0 0.0
        %4208 = vmatprep.subr.mxu0 0.0
        %4209 = vmatpush1.msra.mxu0 0.0
        %4210 = vmatprep.subr.mxu0 0.0
        %4211 = vmatpush1.msra.mxu0 0.0
        %4212 = vmatprep.subr.mxu0 0.0
        %4213 = vmatpush1.msra.mxu0 0.0
        %4214 = vmatprep.subr.mxu0 0.0
        %4215 = vmatpush1.msra.mxu0 0.0
        %4216 = vmatprep.subr.mxu0 0.0
        %4217 = vmatpush1.msra.mxu0 0.0
        %4218 = vmatprep.subr.mxu0 0.0
        %4219 = vmatpush1.msra.mxu0 0.0
        %4220 = vmatprep.subr.mxu0 0.0
        %4221 = vmatpush1.msra.mxu0 0.0
        %4222 = vmatprep.subr.mxu0 0.0
        %4223 = vmatpush1.msra.mxu0 0.0
        %4224 = vmatprep.subr.mxu0 0.0
        %4225 = vmatpush1.msra.mxu0 0.0
        %4226 = vmatprep.subr.mxu0 0.0
        %4227 = vmatpush1.msra.mxu0 0.0
        %4228 = vmatprep.subr.mxu0 0.0
        %4229 = vmatpush1.msra.mxu0 0.0
        %4230 = vmatprep.subr.mxu0 0.0
        %4231 = vmatpush1.msra.mxu0 0.0
        %4232 = vmatprep.subr.mxu0 0.0
        %4233 = vmatpush1.msra.mxu0 0.0
        %4234 = vmatprep.subr.mxu0 0.0
        %4235 = vmatpush1.msra.mxu0 0.0
        %4236 = vmatprep.mubr.f32.mxu0 0.0
        %v4237 = vand.u32 %v3821, 4294901760
        %4238 = vmatmul.mubr.f32.gmra.mrb[0].mxu0 %v4237
        %v4239 = vpop.f32.mrb[0].mxu0
        %v4240 = vadd.f32 %v4155, %v4239
        %v4241 = vpop.f32.mrb[0].mxu0
        %4242 = vmatprep.mubr.f32.mxu0 0.0
        %v4243 = vand.u32 %v3824, 4294901760
        %4244 = vmatmul.mubr.f32.gmra.mrb[0].mxu0 %v4243
        %v4245 = vpop.f32.mrb[0].mxu0
        %v4246 = vadd.f32 %v4163, %v4245
        %v4247 = vpop.f32.mrb[0].mxu0
        %4248 = vdwg.mxu0
        %4249 = vmatprep.subr.mxu0 0.0
        %v4250 = vand.u32 %v3775, 4294901760
        %4251 = vmatpush1.msra.mxu0 %v4250
        %4252 = vmatprep.subr.mxu0 0.0
        %v4253 = vand.u32 %v3781, 4294901760
        %4254 = vmatpush1.msra.mxu0 %v4253
        %4255 = vmatprep.subr.mxu0 0.0
        %4256 = vmatpush1.msra.mxu0 0.0
        %4257 = vmatprep.subr.mxu0 0.0
        %4258 = vmatpush1.msra.mxu0 0.0
        %4259 = vmatprep.subr.mxu0 0.0
        %4260 = vmatpush1.msra.mxu0 0.0
        %4261 = vmatprep.subr.mxu0 0.0
        %4262 = vmatpush1.msra.mxu0 0.0
        %4263 = vmatprep.subr.mxu0 0.0
        %4264 = vmatpush1.msra.mxu0 0.0
        %4265 = vmatprep.subr.mxu0 0.0
        %4266 = vmatpush1.msra.mxu0 0.0
        %4267 = vmatprep.subr.mxu0 0.0
        %4268 = vmatpush1.msra.mxu0 0.0
        %4269 = vmatprep.subr.mxu0 0.0
        %4270 = vmatpush1.msra.mxu0 0.0
        %4271 = vmatprep.subr.mxu0 0.0
        %4272 = vmatpush1.msra.mxu0 0.0
        %4273 = vmatprep.subr.mxu0 0.0
        %4274 = vmatpush1.msra.mxu0 0.0
        %4275 = vmatprep.subr.mxu0 0.0
        %4276 = vmatpush1.msra.mxu0 0.0
        %4277 = vmatprep.subr.mxu0 0.0
        %4278 = vmatpush1.msra.mxu0 0.0
        %4279 = vmatprep.subr.mxu0 0.0
        %4280 = vmatpush1.msra.mxu0 0.0
        %4281 = vmatprep.subr.mxu0 0.0
        %4282 = vmatpush1.msra.mxu0 0.0
        %4283 = vmatprep.subr.mxu0 0.0
        %4284 = vmatpush1.msra.mxu0 0.0
        %4285 = vmatprep.subr.mxu0 0.0
        %4286 = vmatpush1.msra.mxu0 0.0
        %4287 = vmatprep.subr.mxu0 0.0
        %4288 = vmatpush1.msra.mxu0 0.0
        %4289 = vmatprep.subr.mxu0 0.0
        %4290 = vmatpush1.msra.mxu0 0.0
        %4291 = vmatprep.subr.mxu0 0.0
        %4292 = vmatpush1.msra.mxu0 0.0
        %4293 = vmatprep.subr.mxu0 0.0
        %4294 = vmatpush1.msra.mxu0 0.0
        %4295 = vmatprep.subr.mxu0 0.0
        %4296 = vmatpush1.msra.mxu0 0.0
        %4297 = vmatprep.subr.mxu0 0.0
        %4298 = vmatpush1.msra.mxu0 0.0
        %4299 = vmatprep.subr.mxu0 0.0
        %4300 = vmatpush1.msra.mxu0 0.0
        %4301 = vmatprep.subr.mxu0 0.0
        %4302 = vmatpush1.msra.mxu0 0.0
        %4303 = vmatprep.subr.mxu0 0.0
        %4304 = vmatpush1.msra.mxu0 0.0
        %4305 = vmatprep.subr.mxu0 0.0
        %4306 = vmatpush1.msra.mxu0 0.0
        %4307 = vmatprep.subr.mxu0 0.0
        %4308 = vmatpush1.msra.mxu0 0.0
        %4309 = vmatprep.subr.mxu0 0.0
        %4310 = vmatpush1.msra.mxu0 0.0
        %4311 = vmatprep.subr.mxu0 0.0
        %4312 = vmatpush1.msra.mxu0 0.0
        %4313 = vmatprep.subr.mxu0 0.0
        %4314 = vmatpush1.msra.mxu0 0.0
        %4315 = vmatprep.mubr.f32.mxu0 0.0
        %v4316 = vand.u32 %v3821, 4294901760
        %4317 = vmatmul.mubr.f32.gmra.mrb[0].mxu0 %v4316
        %v4318 = vpop.f32.mrb[0].mxu0
        %v4319 = vadd.f32 %v4240, %v4318
        %v4320 = vpop.f32.mrb[0].mxu0
        %4321 = vmatprep.mubr.f32.mxu0 0.0
        %v4322 = vand.u32 %v3824, 4294901760
        %4323 = vmatmul.mubr.f32.gmra.mrb[0].mxu0 %v4322
        %v4324 = vpop.f32.mrb[0].mxu0
        %v4325 = vadd.f32 %v4246, %v4324
        %v4326 = vpop.f32.mrb[0].mxu0
        %4327 = vdwg.mxu0
        %4328 = vmatprep.subr.mxu0 0.0
        %v4329 = vand.u32 %v3787, 4294901760
        %4330 = vmatpush1.msra.mxu0 %v4329
        %4331 = vmatprep.subr.mxu0 0.0
        %v4332 = vand.u32 %v3793, 4294901760
        %4333 = vmatpush1.msra.mxu0 %v4332
        %4334 = vmatprep.subr.mxu0 0.0
        %4335 = vmatpush1.msra.mxu0 0.0
        %4336 = vmatprep.subr.mxu0 0.0
        %4337 = vmatpush1.msra.mxu0 0.0
        %4338 = vmatprep.subr.mxu0 0.0
        %4339 = vmatpush1.msra.mxu0 0.0
        %4340 = vmatprep.subr.mxu0 0.0
        %4341 = vmatpush1.msra.mxu0 0.0
        %4342 = vmatprep.subr.mxu0 0.0
        %4343 = vmatpush1.msra.mxu0 0.0
        %4344 = vmatprep.subr.mxu0 0.0
        %4345 = vmatpush1.msra.mxu0 0.0
        %4346 = vmatprep.subr.mxu0 0.0
        %4347 = vmatpush1.msra.mxu0 0.0
        %4348 = vmatprep.subr.mxu0 0.0
        %4349 = vmatpush1.msra.mxu0 0.0
        %4350 = vmatprep.subr.mxu0 0.0
        %4351 = vmatpush1.msra.mxu0 0.0
        %4352 = vmatprep.subr.mxu0 0.0
        %4353 = vmatpush1.msra.mxu0 0.0
        %4354 = vmatprep.subr.mxu0 0.0
        %4355 = vmatpush1.msra.mxu0 0.0
        %4356 = vmatprep.subr.mxu0 0.0
        %4357 = vmatpush1.msra.mxu0 0.0
        %4358 = vmatprep.subr.mxu0 0.0
        %4359 = vmatpush1.msra.mxu0 0.0
        %4360 = vmatprep.subr.mxu0 0.0
        %4361 = vmatpush1.msra.mxu0 0.0
        %4362 = vmatprep.subr.mxu0 0.0
        %4363 = vmatpush1.msra.mxu0 0.0
        %4364 = vmatprep.subr.mxu0 0.0
        %4365 = vmatpush1.msra.mxu0 0.0
        %4366 = vmatprep.subr.mxu0 0.0
        %4367 = vmatpush1.msra.mxu0 0.0
        %4368 = vmatprep.subr.mxu0 0.0
        %4369 = vmatpush1.msra.mxu0 0.0
        %4370 = vmatprep.subr.mxu0 0.0
        %4371 = vmatpush1.msra.mxu0 0.0
        %4372 = vmatprep.subr.mxu0 0.0
        %4373 = vmatpush1.msra.mxu0 0.0
        %4374 = vmatprep.subr.mxu0 0.0
        %4375 = vmatpush1.msra.mxu0 0.0
        %4376 = vmatprep.subr.mxu0 0.0
        %4377 = vmatpush1.msra.mxu0 0.0
        %4378 = vmatprep.subr.mxu0 0.0
        %4379 = vmatpush1.msra.mxu0 0.0
        %4380 = vmatprep.subr.mxu0 0.0
        %4381 = vmatpush1.msra.mxu0 0.0
        %4382 = vmatprep.subr.mxu0 0.0
        %4383 = vmatpush1.msra.mxu0 0.0
        %4384 = vmatprep.subr.mxu0 0.0
        %4385 = vmatpush1.msra.mxu0 0.0
        %4386 = vmatprep.subr.mxu0 0.0
        %4387 = vmatpush1.msra.mxu0 0.0
        %4388 = vmatprep.subr.mxu0 0.0
        %4389 = vmatpush1.msra.mxu0 0.0
        %4390 = vmatprep.subr.mxu0 0.0
        %4391 = vmatpush1.msra.mxu0 0.0
        %4392 = vmatprep.subr.mxu0 0.0
        %4393 = vmatpush1.msra.mxu0 0.0
        %4394 = vmatprep.mubr.f32.mxu0 0.0
        %v4395 = vand.u32 %v3821, 4294901760
        %v4396 = vsub.f32 %v3821, %v4395
        %v4397 = vand.u32 %v4396, 4294901760
        %v4398 = vsub.f32 %v4396, %v4397
        %v4399 = vand.u32 %v4398, 4294901760
        %4400 = vmatmul.mubr.f32.gmra.mrb[0].mxu0 %v4399
        %v4401 = vpop.f32.mrb[0].mxu0
        %v4402 = vadd.f32 0.0, %v4401
        %v4403 = vpop.f32.mrb[0].mxu0
        %4404 = vmatprep.mubr.f32.mxu0 0.0
        %v4405 = vand.u32 %v3824, 4294901760
        %v4406 = vsub.f32 %v3824, %v4405
        %v4407 = vand.u32 %v4406, 4294901760
        %v4408 = vsub.f32 %v4406, %v4407
        %v4409 = vand.u32 %v4408, 4294901760
        %4410 = vmatmul.mubr.f32.gmra.mrb[0].mxu0 %v4409
        %v4411 = vpop.f32.mrb[0].mxu0
        %v4412 = vadd.f32 0.0, %v4411
        %v4413 = vpop.f32.mrb[0].mxu0
        %4414 = vdwg.mxu0
        %4415 = vmatprep.subr.mxu0 0.0
        %v4416 = vand.u32 %v3787, 4294901760
        %v4417 = vsub.f32 %v3787, %v4416
        %v4418 = vand.u32 %v4417, 4294901760
        %v4419 = vsub.f32 %v4417, %v4418
        %v4420 = vand.u32 %v4419, 4294901760
        %4421 = vmatpush1.msra.mxu0 %v4420
        %4422 = vmatprep.subr.mxu0 0.0
        %v4423 = vand.u32 %v3793, 4294901760
        %v4424 = vsub.f32 %v3793, %v4423
        %v4425 = vand.u32 %v4424, 4294901760
        %v4426 = vsub.f32 %v4424, %v4425
        %v4427 = vand.u32 %v4426, 4294901760
        %4428 = vmatpush1.msra.mxu0 %v4427
        %4429 = vmatprep.subr.mxu0 0.0
        %4430 = vmatpush1.msra.mxu0 0.0
        %4431 = vmatprep.subr.mxu0 0.0
        %4432 = vmatpush1.msra.mxu0 0.0
        %4433 = vmatprep.subr.mxu0 0.0
        %4434 = vmatpush1.msra.mxu0 0.0
        %4435 = vmatprep.subr.mxu0 0.0
        %4436 = vmatpush1.msra.mxu0 0.0
        %4437 = vmatprep.subr.mxu0 0.0
        %4438 = vmatpush1.msra.mxu0 0.0
        %4439 = vmatprep.subr.mxu0 0.0
        %4440 = vmatpush1.msra.mxu0 0.0
        %4441 = vmatprep.subr.mxu0 0.0
        %4442 = vmatpush1.msra.mxu0 0.0
        %4443 = vmatprep.subr.mxu0 0.0
        %4444 = vmatpush1.msra.mxu0 0.0
        %4445 = vmatprep.subr.mxu0 0.0
        %4446 = vmatpush1.msra.mxu0 0.0
        %4447 = vmatprep.subr.mxu0 0.0
        %4448 = vmatpush1.msra.mxu0 0.0
        %4449 = vmatprep.subr.mxu0 0.0
        %4450 = vmatpush1.msra.mxu0 0.0
        %4451 = vmatprep.subr.mxu0 0.0
        %4452 = vmatpush1.msra.mxu0 0.0
        %4453 = vmatprep.subr.mxu0 0.0
        %4454 = vmatpush1.msra.mxu0 0.0
        %4455 = vmatprep.subr.mxu0 0.0
        %4456 = vmatpush1.msra.mxu0 0.0
        %4457 = vmatprep.subr.mxu0 0.0
        %4458 = vmatpush1.msra.mxu0 0.0
        %4459 = vmatprep.subr.mxu0 0.0
        %4460 = vmatpush1.msra.mxu0 0.0
        %4461 = vmatprep.subr.mxu0 0.0
        %4462 = vmatpush1.msra.mxu0 0.0
        %4463 = vmatprep.subr.mxu0 0.0
        %4464 = vmatpush1.msra.mxu0 0.0
        %4465 = vmatprep.subr.mxu0 0.0
        %4466 = vmatpush1.msra.mxu0 0.0
        %4467 = vmatprep.subr.mxu0 0.0
        %4468 = vmatpush1.msra.mxu0 0.0
        %4469 = vmatprep.subr.mxu0 0.0
        %4470 = vmatpush1.msra.mxu0 0.0
        %4471 = vmatprep.subr.mxu0 0.0
        %4472 = vmatpush1.msra.mxu0 0.0
        %4473 = vmatprep.subr.mxu0 0.0
        %4474 = vmatpush1.msra.mxu0 0.0
        %4475 = vmatprep.subr.mxu0 0.0
        %4476 = vmatpush1.msra.mxu0 0.0
        %4477 = vmatprep.subr.mxu0 0.0
        %4478 = vmatpush1.msra.mxu0 0.0
        %4479 = vmatprep.subr.mxu0 0.0
        %4480 = vmatpush1.msra.mxu0 0.0
        %4481 = vmatprep.subr.mxu0 0.0
        %4482 = vmatpush1.msra.mxu0 0.0
        %4483 = vmatprep.subr.mxu0 0.0
        %4484 = vmatpush1.msra.mxu0 0.0
        %4485 = vmatprep.subr.mxu0 0.0
        %4486 = vmatpush1.msra.mxu0 0.0
        %4487 = vmatprep.subr.mxu0 0.0
        %4488 = vmatpush1.msra.mxu0 0.0
        %4489 = vmatprep.mubr.f32.mxu0 0.0
        %v4490 = vand.u32 %v3821, 4294901760
        %4491 = vmatmul.mubr.f32.gmra.mrb[0].mxu0 %v4490
        %v4492 = vpop.f32.mrb[0].mxu0
        %v4493 = vadd.f32 %v4402, %v4492
        %v4494 = vpop.f32.mrb[0].mxu0
        %4495 = vmatprep.mubr.f32.mxu0 0.0
        %v4496 = vand.u32 %v3824, 4294901760
        %4497 = vmatmul.mubr.f32.gmra.mrb[0].mxu0 %v4496
        %v4498 = vpop.f32.mrb[0].mxu0
        %v4499 = vadd.f32 %v4412, %v4498
        %v4500 = vpop.f32.mrb[0].mxu0
        %4501 = vdwg.mxu0
        %4502 = vmatprep.subr.mxu0 0.0
        %v4503 = vand.u32 %v3787, 4294901760
        %v4504 = vsub.f32 %v3787, %v4503
        %4505 = vmatpush1.msra.mxu0 %v4504
        %4506 = vmatprep.subr.mxu0 0.0
        %v4507 = vand.u32 %v3793, 4294901760
        %v4508 = vsub.f32 %v3793, %v4507
        %4509 = vmatpush1.msra.mxu0 %v4508
        %4510 = vmatprep.subr.mxu0 0.0
        %4511 = vmatpush1.msra.mxu0 0.0
        %4512 = vmatprep.subr.mxu0 0.0
        %4513 = vmatpush1.msra.mxu0 0.0
        %4514 = vmatprep.subr.mxu0 0.0
        %4515 = vmatpush1.msra.mxu0 0.0
        %4516 = vmatprep.subr.mxu0 0.0
        %4517 = vmatpush1.msra.mxu0 0.0
        %4518 = vmatprep.subr.mxu0 0.0
        %4519 = vmatpush1.msra.mxu0 0.0
        %4520 = vmatprep.subr.mxu0 0.0
        %4521 = vmatpush1.msra.mxu0 0.0
        %4522 = vmatprep.subr.mxu0 0.0
        %4523 = vmatpush1.msra.mxu0 0.0
        %4524 = vmatprep.subr.mxu0 0.0
        %4525 = vmatpush1.msra.mxu0 0.0
        %4526 = vmatprep.subr.mxu0 0.0
        %4527 = vmatpush1.msra.mxu0 0.0
        %4528 = vmatprep.subr.mxu0 0.0
        %4529 = vmatpush1.msra.mxu0 0.0
        %4530 = vmatprep.subr.mxu0 0.0
        %4531 = vmatpush1.msra.mxu0 0.0
        %4532 = vmatprep.subr.mxu0 0.0
        %4533 = vmatpush1.msra.mxu0 0.0
        %4534 = vmatprep.subr.mxu0 0.0
        %4535 = vmatpush1.msra.mxu0 0.0
        %4536 = vmatprep.subr.mxu0 0.0
        %4537 = vmatpush1.msra.mxu0 0.0
        %4538 = vmatprep.subr.mxu0 0.0
        %4539 = vmatpush1.msra.mxu0 0.0
        %4540 = vmatprep.subr.mxu0 0.0
        %4541 = vmatpush1.msra.mxu0 0.0
        %4542 = vmatprep.subr.mxu0 0.0
        %4543 = vmatpush1.msra.mxu0 0.0
        %4544 = vmatprep.subr.mxu0 0.0
        %4545 = vmatpush1.msra.mxu0 0.0
        %4546 = vmatprep.subr.mxu0 0.0
        %4547 = vmatpush1.msra.mxu0 0.0
        %4548 = vmatprep.subr.mxu0 0.0
        %4549 = vmatpush1.msra.mxu0 0.0
        %4550 = vmatprep.subr.mxu0 0.0
        %4551 = vmatpush1.msra.mxu0 0.0
        %4552 = vmatprep.subr.mxu0 0.0
        %4553 = vmatpush1.msra.mxu0 0.0
        %4554 = vmatprep.subr.mxu0 0.0
        %4555 = vmatpush1.msra.mxu0 0.0
        %4556 = vmatprep.subr.mxu0 0.0
        %4557 = vmatpush1.msra.mxu0 0.0
        %4558 = vmatprep.subr.mxu0 0.0
        %4559 = vmatpush1.msra.mxu0 0.0
        %4560 = vmatprep.subr.mxu0 0.0
        %4561 = vmatpush1.msra.mxu0 0.0
        %4562 = vmatprep.subr.mxu0 0.0
        %4563 = vmatpush1.msra.mxu0 0.0
        %4564 = vmatprep.subr.mxu0 0.0
        %4565 = vmatpush1.msra.mxu0 0.0
        %4566 = vmatprep.subr.mxu0 0.0
        %4567 = vmatpush1.msra.mxu0 0.0
        %4568 = vmatprep.subr.mxu0 0.0
        %4569 = vmatpush1.msra.mxu0 0.0
        %4570 = vmatprep.mubr.f32.mxu0 0.0
        %v4571 = vand.u32 %v3821, 4294901760
        %v4572 = vsub.f32 %v3821, %v4571
        %4573 = vmatmul.mubr.f32.gmra.mrb[0].mxu0 %v4572
        %v4574 = vpop.f32.mrb[0].mxu0
        %v4575 = vadd.f32 %v4493, %v4574
        %v4576 = vpop.f32.mrb[0].mxu0
        %4577 = vmatprep.mubr.f32.mxu0 0.0
        %v4578 = vand.u32 %v3824, 4294901760
        %v4579 = vsub.f32 %v3824, %v4578
        %4580 = vmatmul.mubr.f32.gmra.mrb[0].mxu0 %v4579
        %v4581 = vpop.f32.mrb[0].mxu0
        %v4582 = vadd.f32 %v4499, %v4581
        %v4583 = vpop.f32.mrb[0].mxu0
        %4584 = vdwg.mxu0
        %4585 = vmatprep.subr.mxu0 0.0
        %v4586 = vand.u32 %v3787, 4294901760
        %4587 = vmatpush1.msra.mxu0 %v4586
        %4588 = vmatprep.subr.mxu0 0.0
        %v4589 = vand.u32 %v3793, 4294901760
        %4590 = vmatpush1.msra.mxu0 %v4589
        %4591 = vmatprep.subr.mxu0 0.0
        %4592 = vmatpush1.msra.mxu0 0.0
        %4593 = vmatprep.subr.mxu0 0.0
        %4594 = vmatpush1.msra.mxu0 0.0
        %4595 = vmatprep.subr.mxu0 0.0
        %4596 = vmatpush1.msra.mxu0 0.0
        %4597 = vmatprep.subr.mxu0 0.0
        %4598 = vmatpush1.msra.mxu0 0.0
        %4599 = vmatprep.subr.mxu0 0.0
        %4600 = vmatpush1.msra.mxu0 0.0
        %4601 = vmatprep.subr.mxu0 0.0
        %4602 = vmatpush1.msra.mxu0 0.0
        %4603 = vmatprep.subr.mxu0 0.0
        %4604 = vmatpush1.msra.mxu0 0.0
        %4605 = vmatprep.subr.mxu0 0.0
        %4606 = vmatpush1.msra.mxu0 0.0
        %4607 = vmatprep.subr.mxu0 0.0
        %4608 = vmatpush1.msra.mxu0 0.0
        %4609 = vmatprep.subr.mxu0 0.0
        %4610 = vmatpush1.msra.mxu0 0.0
        %4611 = vmatprep.subr.mxu0 0.0
        %4612 = vmatpush1.msra.mxu0 0.0
        %4613 = vmatprep.subr.mxu0 0.0
        %4614 = vmatpush1.msra.mxu0 0.0
        %4615 = vmatprep.subr.mxu0 0.0
        %4616 = vmatpush1.msra.mxu0 0.0
        %4617 = vmatprep.subr.mxu0 0.0
        %4618 = vmatpush1.msra.mxu0 0.0
        %4619 = vmatprep.subr.mxu0 0.0
        %4620 = vmatpush1.msra.mxu0 0.0
        %4621 = vmatprep.subr.mxu0 0.0
        %4622 = vmatpush1.msra.mxu0 0.0
        %4623 = vmatprep.subr.mxu0 0.0
        %4624 = vmatpush1.msra.mxu0 0.0
        %4625 = vmatprep.subr.mxu0 0.0
        %4626 = vmatpush1.msra.mxu0 0.0
        %4627 = vmatprep.subr.mxu0 0.0
        %4628 = vmatpush1.msra.mxu0 0.0
        %4629 = vmatprep.subr.mxu0 0.0
        %4630 = vmatpush1.msra.mxu0 0.0
        %4631 = vmatprep.subr.mxu0 0.0
        %4632 = vmatpush1.msra.mxu0 0.0
        %4633 = vmatprep.subr.mxu0 0.0
        %4634 = vmatpush1.msra.mxu0 0.0
        %4635 = vmatprep.subr.mxu0 0.0
        %4636 = vmatpush1.msra.mxu0 0.0
        %4637 = vmatprep.subr.mxu0 0.0
        %4638 = vmatpush1.msra.mxu0 0.0
        %4639 = vmatprep.subr.mxu0 0.0
        %4640 = vmatpush1.msra.mxu0 0.0
        %4641 = vmatprep.subr.mxu0 0.0
        %4642 = vmatpush1.msra.mxu0 0.0
        %4643 = vmatprep.subr.mxu0 0.0
        %4644 = vmatpush1.msra.mxu0 0.0
        %4645 = vmatprep.subr.mxu0 0.0
        %4646 = vmatpush1.msra.mxu0 0.0
        %4647 = vmatprep.subr.mxu0 0.0
        %4648 = vmatpush1.msra.mxu0 0.0
        %4649 = vmatprep.subr.mxu0 0.0
        %4650 = vmatpush1.msra.mxu0 0.0
        %4651 = vmatprep.mubr.f32.mxu0 0.0
        %v4652 = vand.u32 %v3821, 4294901760
        %v4653 = vsub.f32 %v3821, %v4652
        %v4654 = vand.u32 %v4653, 4294901760
        %4655 = vmatmul.mubr.f32.gmra.mrb[0].mxu0 %v4654
        %v4656 = vpop.f32.mrb[0].mxu0
        %v4657 = vadd.f32 %v4575, %v4656
        %v4658 = vpop.f32.mrb[0].mxu0
        %4659 = vmatprep.mubr.f32.mxu0 0.0
        %v4660 = vand.u32 %v3824, 4294901760
        %v4661 = vsub.f32 %v3824, %v4660
        %v4662 = vand.u32 %v4661, 4294901760
        %4663 = vmatmul.mubr.f32.gmra.mrb[0].mxu0 %v4662
        %v4664 = vpop.f32.mrb[0].mxu0
        %v4665 = vadd.f32 %v4582, %v4664
        %v4666 = vpop.f32.mrb[0].mxu0
        %4667 = vdwg.mxu0
        %4668 = vmatprep.subr.mxu0 0.0
        %v4669 = vand.u32 %v3787, 4294901760
        %v4670 = vsub.f32 %v3787, %v4669
        %v4671 = vand.u32 %v4670, 4294901760
        %4672 = vmatpush1.msra.mxu0 %v4671
        %4673 = vmatprep.subr.mxu0 0.0
        %v4674 = vand.u32 %v3793, 4294901760
        %v4675 = vsub.f32 %v3793, %v4674
        %v4676 = vand.u32 %v4675, 4294901760
        %4677 = vmatpush1.msra.mxu0 %v4676
        %4678 = vmatprep.subr.mxu0 0.0
        %4679 = vmatpush1.msra.mxu0 0.0
        %4680 = vmatprep.subr.mxu0 0.0
        %4681 = vmatpush1.msra.mxu0 0.0
        %4682 = vmatprep.subr.mxu0 0.0
        %4683 = vmatpush1.msra.mxu0 0.0
        %4684 = vmatprep.subr.mxu0 0.0
        %4685 = vmatpush1.msra.mxu0 0.0
        %4686 = vmatprep.subr.mxu0 0.0
        %4687 = vmatpush1.msra.mxu0 0.0
        %4688 = vmatprep.subr.mxu0 0.0
        %4689 = vmatpush1.msra.mxu0 0.0
        %4690 = vmatprep.subr.mxu0 0.0
        %4691 = vmatpush1.msra.mxu0 0.0
        %4692 = vmatprep.subr.mxu0 0.0
        %4693 = vmatpush1.msra.mxu0 0.0
        %4694 = vmatprep.subr.mxu0 0.0
        %4695 = vmatpush1.msra.mxu0 0.0
        %4696 = vmatprep.subr.mxu0 0.0
        %4697 = vmatpush1.msra.mxu0 0.0
        %4698 = vmatprep.subr.mxu0 0.0
        %4699 = vmatpush1.msra.mxu0 0.0
        %4700 = vmatprep.subr.mxu0 0.0
        %4701 = vmatpush1.msra.mxu0 0.0
        %4702 = vmatprep.subr.mxu0 0.0
        %4703 = vmatpush1.msra.mxu0 0.0
        %4704 = vmatprep.subr.mxu0 0.0
        %4705 = vmatpush1.msra.mxu0 0.0
        %4706 = vmatprep.subr.mxu0 0.0
        %4707 = vmatpush1.msra.mxu0 0.0
        %4708 = vmatprep.subr.mxu0 0.0
        %4709 = vmatpush1.msra.mxu0 0.0
        %4710 = vmatprep.subr.mxu0 0.0
        %4711 = vmatpush1.msra.mxu0 0.0
        %4712 = vmatprep.subr.mxu0 0.0
        %4713 = vmatpush1.msra.mxu0 0.0
        %4714 = vmatprep.subr.mxu0 0.0
        %4715 = vmatpush1.msra.mxu0 0.0
        %4716 = vmatprep.subr.mxu0 0.0
        %4717 = vmatpush1.msra.mxu0 0.0
        %4718 = vmatprep.subr.mxu0 0.0
        %4719 = vmatpush1.msra.mxu0 0.0
        %4720 = vmatprep.subr.mxu0 0.0
        %4721 = vmatpush1.msra.mxu0 0.0
        %4722 = vmatprep.subr.mxu0 0.0
        %4723 = vmatpush1.msra.mxu0 0.0
        %4724 = vmatprep.subr.mxu0 0.0
        %4725 = vmatpush1.msra.mxu0 0.0
        %4726 = vmatprep.subr.mxu0 0.0
        %4727 = vmatpush1.msra.mxu0 0.0
        %4728 = vmatprep.subr.mxu0 0.0
        %4729 = vmatpush1.msra.mxu0 0.0
        %4730 = vmatprep.subr.mxu0 0.0
        %4731 = vmatpush1.msra.mxu0 0.0
        %4732 = vmatprep.subr.mxu0 0.0
        %4733 = vmatpush1.msra.mxu0 0.0
        %4734 = vmatprep.subr.mxu0 0.0
        %4735 = vmatpush1.msra.mxu0 0.0
        %4736 = vmatprep.subr.mxu0 0.0
        %4737 = vmatpush1.msra.mxu0 0.0
        %4738 = vmatprep.mubr.f32.mxu0 0.0
        %v4739 = vand.u32 %v3821, 4294901760
        %4740 = vmatmul.mubr.f32.gmra.mrb[0].mxu0 %v4739
        %v4741 = vpop.f32.mrb[0].mxu0
        %v4742 = vadd.f32 %v4657, %v4741
        %v4743 = vpop.f32.mrb[0].mxu0
        %4744 = vmatprep.mubr.f32.mxu0 0.0
        %v4745 = vand.u32 %v3824, 4294901760
        %4746 = vmatmul.mubr.f32.gmra.mrb[0].mxu0 %v4745
        %v4747 = vpop.f32.mrb[0].mxu0
        %v4748 = vadd.f32 %v4665, %v4747
        %v4749 = vpop.f32.mrb[0].mxu0
        %4750 = vdwg.mxu0
        %4751 = vmatprep.subr.mxu0 0.0
        %v4752 = vand.u32 %v3787, 4294901760
        %4753 = vmatpush1.msra.mxu0 %v4752
        %4754 = vmatprep.subr.mxu0 0.0
        %v4755 = vand.u32 %v3793, 4294901760
        %4756 = vmatpush1.msra.mxu0 %v4755
        %4757 = vmatprep.subr.mxu0 0.0
        %4758 = vmatpush1.msra.mxu0 0.0
        %4759 = vmatprep.subr.mxu0 0.0
        %4760 = vmatpush1.msra.mxu0 0.0
        %4761 = vmatprep.subr.mxu0 0.0
        %4762 = vmatpush1.msra.mxu0 0.0
        %4763 = vmatprep.subr.mxu0 0.0
        %4764 = vmatpush1.msra.mxu0 0.0
        %4765 = vmatprep.subr.mxu0 0.0
        %4766 = vmatpush1.msra.mxu0 0.0
        %4767 = vmatprep.subr.mxu0 0.0
        %4768 = vmatpush1.msra.mxu0 0.0
        %4769 = vmatprep.subr.mxu0 0.0
        %4770 = vmatpush1.msra.mxu0 0.0
        %4771 = vmatprep.subr.mxu0 0.0
        %4772 = vmatpush1.msra.mxu0 0.0
        %4773 = vmatprep.subr.mxu0 0.0
        %4774 = vmatpush1.msra.mxu0 0.0
        %4775 = vmatprep.subr.mxu0 0.0
        %4776 = vmatpush1.msra.mxu0 0.0
        %4777 = vmatprep.subr.mxu0 0.0
        %4778 = vmatpush1.msra.mxu0 0.0
        %4779 = vmatprep.subr.mxu0 0.0
        %4780 = vmatpush1.msra.mxu0 0.0
        %4781 = vmatprep.subr.mxu0 0.0
        %4782 = vmatpush1.msra.mxu0 0.0
        %4783 = vmatprep.subr.mxu0 0.0
        %4784 = vmatpush1.msra.mxu0 0.0
        %4785 = vmatprep.subr.mxu0 0.0
        %4786 = vmatpush1.msra.mxu0 0.0
        %4787 = vmatprep.subr.mxu0 0.0
        %4788 = vmatpush1.msra.mxu0 0.0
        %4789 = vmatprep.subr.mxu0 0.0
        %4790 = vmatpush1.msra.mxu0 0.0
        %4791 = vmatprep.subr.mxu0 0.0
        %4792 = vmatpush1.msra.mxu0 0.0
        %4793 = vmatprep.subr.mxu0 0.0
        %4794 = vmatpush1.msra.mxu0 0.0
        %4795 = vmatprep.subr.mxu0 0.0
        %4796 = vmatpush1.msra.mxu0 0.0
        %4797 = vmatprep.subr.mxu0 0.0
        %4798 = vmatpush1.msra.mxu0 0.0
        %4799 = vmatprep.subr.mxu0 0.0
        %4800 = vmatpush1.msra.mxu0 0.0
        %4801 = vmatprep.subr.mxu0 0.0
        %4802 = vmatpush1.msra.mxu0 0.0
        %4803 = vmatprep.subr.mxu0 0.0
        %4804 = vmatpush1.msra.mxu0 0.0
        %4805 = vmatprep.subr.mxu0 0.0
        %4806 = vmatpush1.msra.mxu0 0.0
        %4807 = vmatprep.subr.mxu0 0.0
        %4808 = vmatpush1.msra.mxu0 0.0
        %4809 = vmatprep.subr.mxu0 0.0
        %4810 = vmatpush1.msra.mxu0 0.0
        %4811 = vmatprep.subr.mxu0 0.0
        %4812 = vmatpush1.msra.mxu0 0.0
        %4813 = vmatprep.subr.mxu0 0.0
        %4814 = vmatpush1.msra.mxu0 0.0
        %4815 = vmatprep.subr.mxu0 0.0
        %4816 = vmatpush1.msra.mxu0 0.0
        %4817 = vmatprep.mubr.f32.mxu0 0.0
        %v4818 = vand.u32 %v3821, 4294901760
        %4819 = vmatmul.mubr.f32.gmra.mrb[0].mxu0 %v4818
        %v4820 = vpop.f32.mrb[0].mxu0
        %v4821 = vadd.f32 %v4742, %v4820
        %v4822 = vpop.f32.mrb[0].mxu0
        %4823 = vmatprep.mubr.f32.mxu0 0.0
        %v4824 = vand.u32 %v3824, 4294901760
        %4825 = vmatmul.mubr.f32.gmra.mrb[0].mxu0 %v4824
        %v4826 = vpop.f32.mrb[0].mxu0
        %v4827 = vadd.f32 %v4748, %v4826
        %v4828 = vpop.f32.mrb[0].mxu0
        %4829 = vdwg.mxu0
        %4830 = vmatprep.subr.mxu0 0.0
        %v4831 = vand.u32 %v3799, 4294901760
        %4832 = vmatpush1.msra.mxu0 %v4831
        %4833 = vmatprep.subr.mxu0 0.0
        %v4834 = vand.u32 %v3805, 4294901760
        %4835 = vmatpush1.msra.mxu0 %v4834
        %4836 = vmatprep.subr.mxu0 0.0
        %4837 = vmatpush1.msra.mxu0 0.0
        %4838 = vmatprep.subr.mxu0 0.0
        %4839 = vmatpush1.msra.mxu0 0.0
        %4840 = vmatprep.subr.mxu0 0.0
        %4841 = vmatpush1.msra.mxu0 0.0
        %4842 = vmatprep.subr.mxu0 0.0
        %4843 = vmatpush1.msra.mxu0 0.0
        %4844 = vmatprep.subr.mxu0 0.0
        %4845 = vmatpush1.msra.mxu0 0.0
        %4846 = vmatprep.subr.mxu0 0.0
        %4847 = vmatpush1.msra.mxu0 0.0
        %4848 = vmatprep.subr.mxu0 0.0
        %4849 = vmatpush1.msra.mxu0 0.0
        %4850 = vmatprep.subr.mxu0 0.0
        %4851 = vmatpush1.msra.mxu0 0.0
        %4852 = vmatprep.subr.mxu0 0.0
        %4853 = vmatpush1.msra.mxu0 0.0
        %4854 = vmatprep.subr.mxu0 0.0
        %4855 = vmatpush1.msra.mxu0 0.0
        %4856 = vmatprep.subr.mxu0 0.0
        %4857 = vmatpush1.msra.mxu0 0.0
        %4858 = vmatprep.subr.mxu0 0.0
        %4859 = vmatpush1.msra.mxu0 0.0
        %4860 = vmatprep.subr.mxu0 0.0
        %4861 = vmatpush1.msra.mxu0 0.0
        %4862 = vmatprep.subr.mxu0 0.0
        %4863 = vmatpush1.msra.mxu0 0.0
        %4864 = vmatprep.subr.mxu0 0.0
        %4865 = vmatpush1.msra.mxu0 0.0
        %4866 = vmatprep.subr.mxu0 0.0
        %4867 = vmatpush1.msra.mxu0 0.0
        %4868 = vmatprep.subr.mxu0 0.0
        %4869 = vmatpush1.msra.mxu0 0.0
        %4870 = vmatprep.subr.mxu0 0.0
        %4871 = vmatpush1.msra.mxu0 0.0
        %4872 = vmatprep.subr.mxu0 0.0
        %4873 = vmatpush1.msra.mxu0 0.0
        %4874 = vmatprep.subr.mxu0 0.0
        %4875 = vmatpush1.msra.mxu0 0.0
        %4876 = vmatprep.subr.mxu0 0.0
        %4877 = vmatpush1.msra.mxu0 0.0
        %4878 = vmatprep.subr.mxu0 0.0
        %4879 = vmatpush1.msra.mxu0 0.0
        %4880 = vmatprep.subr.mxu0 0.0
        %4881 = vmatpush1.msra.mxu0 0.0
        %4882 = vmatprep.subr.mxu0 0.0
        %4883 = vmatpush1.msra.mxu0 0.0
        %4884 = vmatprep.subr.mxu0 0.0
        %4885 = vmatpush1.msra.mxu0 0.0
        %4886 = vmatprep.subr.mxu0 0.0
        %4887 = vmatpush1.msra.mxu0 0.0
        %4888 = vmatprep.subr.mxu0 0.0
        %4889 = vmatpush1.msra.mxu0 0.0
        %4890 = vmatprep.subr.mxu0 0.0
        %4891 = vmatpush1.msra.mxu0 0.0
        %4892 = vmatprep.subr.mxu0 0.0
        %4893 = vmatpush1.msra.mxu0 0.0
        %4894 = vmatprep.subr.mxu0 0.0
        %4895 = vmatpush1.msra.mxu0 0.0
        %4896 = vmatprep.mubr.f32.mxu0 0.0
        %v4897 = vand.u32 %v3821, 4294901760
        %v4898 = vsub.f32 %v3821, %v4897
        %v4899 = vand.u32 %v4898, 4294901760
        %v4900 = vsub.f32 %v4898, %v4899
        %v4901 = vand.u32 %v4900, 4294901760
        %4902 = vmatmul.mubr.f32.gmra.mrb[0].mxu0 %v4901
        %v4903 = vpop.f32.mrb[0].mxu0
        %v4904 = vadd.f32 0.0, %v4903
        %v4905 = vpop.f32.mrb[0].mxu0
        %4906 = vmatprep.mubr.f32.mxu0 0.0
        %v4907 = vand.u32 %v3824, 4294901760
        %v4908 = vsub.f32 %v3824, %v4907
        %v4909 = vand.u32 %v4908, 4294901760
        %v4910 = vsub.f32 %v4908, %v4909
        %v4911 = vand.u32 %v4910, 4294901760
        %4912 = vmatmul.mubr.f32.gmra.mrb[0].mxu0 %v4911
        %v4913 = vpop.f32.mrb[0].mxu0
        %v4914 = vadd.f32 0.0, %v4913
        %v4915 = vpop.f32.mrb[0].mxu0
        %4916 = vdwg.mxu0
        %4917 = vmatprep.subr.mxu0 0.0
        %v4918 = vand.u32 %v3799, 4294901760
        %v4919 = vsub.f32 %v3799, %v4918
        %v4920 = vand.u32 %v4919, 4294901760
        %v4921 = vsub.f32 %v4919, %v4920
        %v4922 = vand.u32 %v4921, 4294901760
        %4923 = vmatpush1.msra.mxu0 %v4922
        %4924 = vmatprep.subr.mxu0 0.0
        %v4925 = vand.u32 %v3805, 4294901760
        %v4926 = vsub.f32 %v3805, %v4925
        %v4927 = vand.u32 %v4926, 4294901760
        %v4928 = vsub.f32 %v4926, %v4927
        %v4929 = vand.u32 %v4928, 4294901760
        %4930 = vmatpush1.msra.mxu0 %v4929
        %4931 = vmatprep.subr.mxu0 0.0
        %4932 = vmatpush1.msra.mxu0 0.0
        %4933 = vmatprep.subr.mxu0 0.0
        %4934 = vmatpush1.msra.mxu0 0.0
        %4935 = vmatprep.subr.mxu0 0.0
        %4936 = vmatpush1.msra.mxu0 0.0
        %4937 = vmatprep.subr.mxu0 0.0
        %4938 = vmatpush1.msra.mxu0 0.0
        %4939 = vmatprep.subr.mxu0 0.0
        %4940 = vmatpush1.msra.mxu0 0.0
        %4941 = vmatprep.subr.mxu0 0.0
        %4942 = vmatpush1.msra.mxu0 0.0
        %4943 = vmatprep.subr.mxu0 0.0
        %4944 = vmatpush1.msra.mxu0 0.0
        %4945 = vmatprep.subr.mxu0 0.0
        %4946 = vmatpush1.msra.mxu0 0.0
        %4947 = vmatprep.subr.mxu0 0.0
        %4948 = vmatpush1.msra.mxu0 0.0
        %4949 = vmatprep.subr.mxu0 0.0
        %4950 = vmatpush1.msra.mxu0 0.0
        %4951 = vmatprep.subr.mxu0 0.0
        %4952 = vmatpush1.msra.mxu0 0.0
        %4953 = vmatprep.subr.mxu0 0.0
        %4954 = vmatpush1.msra.mxu0 0.0
        %4955 = vmatprep.subr.mxu0 0.0
        %4956 = vmatpush1.msra.mxu0 0.0
        %4957 = vmatprep.subr.mxu0 0.0
        %4958 = vmatpush1.msra.mxu0 0.0
        %4959 = vmatprep.subr.mxu0 0.0
        %4960 = vmatpush1.msra.mxu0 0.0
        %4961 = vmatprep.subr.mxu0 0.0
        %4962 = vmatpush1.msra.mxu0 0.0
        %4963 = vmatprep.subr.mxu0 0.0
        %4964 = vmatpush1.msra.mxu0 0.0
        %4965 = vmatprep.subr.mxu0 0.0
        %4966 = vmatpush1.msra.mxu0 0.0
        %4967 = vmatprep.subr.mxu0 0.0
        %4968 = vmatpush1.msra.mxu0 0.0
        %4969 = vmatprep.subr.mxu0 0.0
        %4970 = vmatpush1.msra.mxu0 0.0
        %4971 = vmatprep.subr.mxu0 0.0
        %4972 = vmatpush1.msra.mxu0 0.0
        %4973 = vmatprep.subr.mxu0 0.0
        %4974 = vmatpush1.msra.mxu0 0.0
        %4975 = vmatprep.subr.mxu0 0.0
        %4976 = vmatpush1.msra.mxu0 0.0
        %4977 = vmatprep.subr.mxu0 0.0
        %4978 = vmatpush1.msra.mxu0 0.0
        %4979 = vmatprep.subr.mxu0 0.0
        %4980 = vmatpush1.msra.mxu0 0.0
        %4981 = vmatprep.subr.mxu0 0.0
        %4982 = vmatpush1.msra.mxu0 0.0
        %4983 = vmatprep.subr.mxu0 0.0
        %4984 = vmatpush1.msra.mxu0 0.0
        %4985 = vmatprep.subr.mxu0 0.0
        %4986 = vmatpush1.msra.mxu0 0.0
        %4987 = vmatprep.subr.mxu0 0.0
        %4988 = vmatpush1.msra.mxu0 0.0
        %4989 = vmatprep.subr.mxu0 0.0
        %4990 = vmatpush1.msra.mxu0 0.0
        %4991 = vmatprep.mubr.f32.mxu0 0.0
        %v4992 = vand.u32 %v3821, 4294901760
        %4993 = vmatmul.mubr.f32.gmra.mrb[0].mxu0 %v4992
        %v4994 = vpop.f32.mrb[0].mxu0
        %v4995 = vadd.f32 %v4904, %v4994
        %v4996 = vpop.f32.mrb[0].mxu0
        %4997 = vmatprep.mubr.f32.mxu0 0.0
        %v4998 = vand.u32 %v3824, 4294901760
        %4999 = vmatmul.mubr.f32.gmra.mrb[0].mxu0 %v4998
        %v5000 = vpop.f32.mrb[0].mxu0
        %v5001 = vadd.f32 %v4914, %v5000
        %v5002 = vpop.f32.mrb[0].mxu0
        %5003 = vdwg.mxu0
        %5004 = vmatprep.subr.mxu0 0.0
        %v5005 = vand.u32 %v3799, 4294901760
        %v5006 = vsub.f32 %v3799, %v5005
        %5007 = vmatpush1.msra.mxu0 %v5006
        %5008 = vmatprep.subr.mxu0 0.0
        %v5009 = vand.u32 %v3805, 4294901760
        %v5010 = vsub.f32 %v3805, %v5009
        %5011 = vmatpush1.msra.mxu0 %v5010
        %5012 = vmatprep.subr.mxu0 0.0
        %5013 = vmatpush1.msra.mxu0 0.0
        %5014 = vmatprep.subr.mxu0 0.0
        %5015 = vmatpush1.msra.mxu0 0.0
        %5016 = vmatprep.subr.mxu0 0.0
        %5017 = vmatpush1.msra.mxu0 0.0
        %5018 = vmatprep.subr.mxu0 0.0
        %5019 = vmatpush1.msra.mxu0 0.0
        %5020 = vmatprep.subr.mxu0 0.0
        %5021 = vmatpush1.msra.mxu0 0.0
        %5022 = vmatprep.subr.mxu0 0.0
        %5023 = vmatpush1.msra.mxu0 0.0
        %5024 = vmatprep.subr.mxu0 0.0
        %5025 = vmatpush1.msra.mxu0 0.0
        %5026 = vmatprep.subr.mxu0 0.0
        %5027 = vmatpush1.msra.mxu0 0.0
        %5028 = vmatprep.subr.mxu0 0.0
        %5029 = vmatpush1.msra.mxu0 0.0
        %5030 = vmatprep.subr.mxu0 0.0
        %5031 = vmatpush1.msra.mxu0 0.0
        %5032 = vmatprep.subr.mxu0 0.0
        %5033 = vmatpush1.msra.mxu0 0.0
        %5034 = vmatprep.subr.mxu0 0.0
        %5035 = vmatpush1.msra.mxu0 0.0
        %5036 = vmatprep.subr.mxu0 0.0
        %5037 = vmatpush1.msra.mxu0 0.0
        %5038 = vmatprep.subr.mxu0 0.0
        %5039 = vmatpush1.msra.mxu0 0.0
        %5040 = vmatprep.subr.mxu0 0.0
        %5041 = vmatpush1.msra.mxu0 0.0
        %5042 = vmatprep.subr.mxu0 0.0
        %5043 = vmatpush1.msra.mxu0 0.0
        %5044 = vmatprep.subr.mxu0 0.0
        %5045 = vmatpush1.msra.mxu0 0.0
        %5046 = vmatprep.subr.mxu0 0.0
        %5047 = vmatpush1.msra.mxu0 0.0
        %5048 = vmatprep.subr.mxu0 0.0
        %5049 = vmatpush1.msra.mxu0 0.0
        %5050 = vmatprep.subr.mxu0 0.0
        %5051 = vmatpush1.msra.mxu0 0.0
        %5052 = vmatprep.subr.mxu0 0.0
        %5053 = vmatpush1.msra.mxu0 0.0
        %5054 = vmatprep.subr.mxu0 0.0
        %5055 = vmatpush1.msra.mxu0 0.0
        %5056 = vmatprep.subr.mxu0 0.0
        %5057 = vmatpush1.msra.mxu0 0.0
        %5058 = vmatprep.subr.mxu0 0.0
        %5059 = vmatpush1.msra.mxu0 0.0
        %5060 = vmatprep.subr.mxu0 0.0
        %5061 = vmatpush1.msra.mxu0 0.0
        %5062 = vmatprep.subr.mxu0 0.0
        %5063 = vmatpush1.msra.mxu0 0.0
        %5064 = vmatprep.subr.mxu0 0.0
        %5065 = vmatpush1.msra.mxu0 0.0
        %5066 = vmatprep.subr.mxu0 0.0
        %5067 = vmatpush1.msra.mxu0 0.0
        %5068 = vmatprep.subr.mxu0 0.0
        %5069 = vmatpush1.msra.mxu0 0.0
        %5070 = vmatprep.subr.mxu0 0.0
        %5071 = vmatpush1.msra.mxu0 0.0
        %5072 = vmatprep.mubr.f32.mxu0 0.0
        %v5073 = vand.u32 %v3821, 4294901760
        %v5074 = vsub.f32 %v3821, %v5073
        %5075 = vmatmul.mubr.f32.gmra.mrb[0].mxu0 %v5074
        %v5076 = vpop.f32.mrb[0].mxu0
        %v5077 = vadd.f32 %v4995, %v5076
        %v5078 = vpop.f32.mrb[0].mxu0
        %5079 = vmatprep.mubr.f32.mxu0 0.0
        %v5080 = vand.u32 %v3824, 4294901760
        %v5081 = vsub.f32 %v3824, %v5080
        %5082 = vmatmul.mubr.f32.gmra.mrb[0].mxu0 %v5081
        %v5083 = vpop.f32.mrb[0].mxu0
        %v5084 = vadd.f32 %v5001, %v5083
        %v5085 = vpop.f32.mrb[0].mxu0
        %5086 = vdwg.mxu0
        %5087 = vmatprep.subr.mxu0 0.0
        %v5088 = vand.u32 %v3799, 4294901760
        %5089 = vmatpush1.msra.mxu0 %v5088
        %5090 = vmatprep.subr.mxu0 0.0
        %v5091 = vand.u32 %v3805, 4294901760
        %5092 = vmatpush1.msra.mxu0 %v5091
        %5093 = vmatprep.subr.mxu0 0.0
        %5094 = vmatpush1.msra.mxu0 0.0
        %5095 = vmatprep.subr.mxu0 0.0
        %5096 = vmatpush1.msra.mxu0 0.0
        %5097 = vmatprep.subr.mxu0 0.0
        %5098 = vmatpush1.msra.mxu0 0.0
        %5099 = vmatprep.subr.mxu0 0.0
        %5100 = vmatpush1.msra.mxu0 0.0
        %5101 = vmatprep.subr.mxu0 0.0
        %5102 = vmatpush1.msra.mxu0 0.0
        %5103 = vmatprep.subr.mxu0 0.0
        %5104 = vmatpush1.msra.mxu0 0.0
        %5105 = vmatprep.subr.mxu0 0.0
        %5106 = vmatpush1.msra.mxu0 0.0
        %5107 = vmatprep.subr.mxu0 0.0
        %5108 = vmatpush1.msra.mxu0 0.0
        %5109 = vmatprep.subr.mxu0 0.0
        %5110 = vmatpush1.msra.mxu0 0.0
        %5111 = vmatprep.subr.mxu0 0.0
        %5112 = vmatpush1.msra.mxu0 0.0
        %5113 = vmatprep.subr.mxu0 0.0
        %5114 = vmatpush1.msra.mxu0 0.0
        %5115 = vmatprep.subr.mxu0 0.0
        %5116 = vmatpush1.msra.mxu0 0.0
        %5117 = vmatprep.subr.mxu0 0.0
        %5118 = vmatpush1.msra.mxu0 0.0
        %5119 = vmatprep.subr.mxu0 0.0
        %5120 = vmatpush1.msra.mxu0 0.0
        %5121 = vmatprep.subr.mxu0 0.0
        %5122 = vmatpush1.msra.mxu0 0.0
        %5123 = vmatprep.subr.mxu0 0.0
        %5124 = vmatpush1.msra.mxu0 0.0
        %5125 = vmatprep.subr.mxu0 0.0
        %5126 = vmatpush1.msra.mxu0 0.0
        %5127 = vmatprep.subr.mxu0 0.0
        %5128 = vmatpush1.msra.mxu0 0.0
        %5129 = vmatprep.subr.mxu0 0.0
        %5130 = vmatpush1.msra.mxu0 0.0
        %5131 = vmatprep.subr.mxu0 0.0
        %5132 = vmatpush1.msra.mxu0 0.0
        %5133 = vmatprep.subr.mxu0 0.0
        %5134 = vmatpush1.msra.mxu0 0.0
        %5135 = vmatprep.subr.mxu0 0.0
        %5136 = vmatpush1.msra.mxu0 0.0
        %5137 = vmatprep.subr.mxu0 0.0
        %5138 = vmatpush1.msra.mxu0 0.0
        %5139 = vmatprep.subr.mxu0 0.0
        %5140 = vmatpush1.msra.mxu0 0.0
        %5141 = vmatprep.subr.mxu0 0.0
        %5142 = vmatpush1.msra.mxu0 0.0
        %5143 = vmatprep.subr.mxu0 0.0
        %5144 = vmatpush1.msra.mxu0 0.0
        %5145 = vmatprep.subr.mxu0 0.0
        %5146 = vmatpush1.msra.mxu0 0.0
        %5147 = vmatprep.subr.mxu0 0.0
        %5148 = vmatpush1.msra.mxu0 0.0
        %5149 = vmatprep.subr.mxu0 0.0
        %5150 = vmatpush1.msra.mxu0 0.0
        %5151 = vmatprep.subr.mxu0 0.0
        %5152 = vmatpush1.msra.mxu0 0.0
        %5153 = vmatprep.mubr.f32.mxu0 0.0
        %v5154 = vand.u32 %v3821, 4294901760
        %v5155 = vsub.f32 %v3821, %v5154
        %v5156 = vand.u32 %v5155, 4294901760
        %5157 = vmatmul.mubr.f32.gmra.mrb[0].mxu0 %v5156
        %v5158 = vpop.f32.mrb[0].mxu0
        %v5159 = vadd.f32 %v5077, %v5158
        %v5160 = vpop.f32.mrb[0].mxu0
        %5161 = vmatprep.mubr.f32.mxu0 0.0
        %v5162 = vand.u32 %v3824, 4294901760
        %v5163 = vsub.f32 %v3824, %v5162
        %v5164 = vand.u32 %v5163, 4294901760
        %5165 = vmatmul.mubr.f32.gmra.mrb[0].mxu0 %v5164
        %v5166 = vpop.f32.mrb[0].mxu0
        %v5167 = vadd.f32 %v5084, %v5166
        %v5168 = vpop.f32.mrb[0].mxu0
        %5169 = vdwg.mxu0
        %5170 = vmatprep.subr.mxu0 0.0
        %v5171 = vand.u32 %v3799, 4294901760
        %v5172 = vsub.f32 %v3799, %v5171
        %v5173 = vand.u32 %v5172, 4294901760
        %5174 = vmatpush1.msra.mxu0 %v5173
        %5175 = vmatprep.subr.mxu0 0.0
        %v5176 = vand.u32 %v3805, 4294901760
        %v5177 = vsub.f32 %v3805, %v5176
        %v5178 = vand.u32 %v5177, 4294901760
        %5179 = vmatpush1.msra.mxu0 %v5178
        %5180 = vmatprep.subr.mxu0 0.0
        %5181 = vmatpush1.msra.mxu0 0.0
        %5182 = vmatprep.subr.mxu0 0.0
        %5183 = vmatpush1.msra.mxu0 0.0
        %5184 = vmatprep.subr.mxu0 0.0
        %5185 = vmatpush1.msra.mxu0 0.0
        %5186 = vmatprep.subr.mxu0 0.0
        %5187 = vmatpush1.msra.mxu0 0.0
        %5188 = vmatprep.subr.mxu0 0.0
        %5189 = vmatpush1.msra.mxu0 0.0
        %5190 = vmatprep.subr.mxu0 0.0
        %5191 = vmatpush1.msra.mxu0 0.0
        %5192 = vmatprep.subr.mxu0 0.0
        %5193 = vmatpush1.msra.mxu0 0.0
        %5194 = vmatprep.subr.mxu0 0.0
        %5195 = vmatpush1.msra.mxu0 0.0
        %5196 = vmatprep.subr.mxu0 0.0
        %5197 = vmatpush1.msra.mxu0 0.0
        %5198 = vmatprep.subr.mxu0 0.0
        %5199 = vmatpush1.msra.mxu0 0.0
        %5200 = vmatprep.subr.mxu0 0.0
        %5201 = vmatpush1.msra.mxu0 0.0
        %5202 = vmatprep.subr.mxu0 0.0
        %5203 = vmatpush1.msra.mxu0 0.0
        %5204 = vmatprep.subr.mxu0 0.0
        %5205 = vmatpush1.msra.mxu0 0.0
        %5206 = vmatprep.subr.mxu0 0.0
        %5207 = vmatpush1.msra.mxu0 0.0
        %5208 = vmatprep.subr.mxu0 0.0
        %5209 = vmatpush1.msra.mxu0 0.0
        %5210 = vmatprep.subr.mxu0 0.0
        %5211 = vmatpush1.msra.mxu0 0.0
        %5212 = vmatprep.subr.mxu0 0.0
        %5213 = vmatpush1.msra.mxu0 0.0
        %5214 = vmatprep.subr.mxu0 0.0
        %5215 = vmatpush1.msra.mxu0 0.0
        %5216 = vmatprep.subr.mxu0 0.0
        %5217 = vmatpush1.msra.mxu0 0.0
        %5218 = vmatprep.subr.mxu0 0.0
        %5219 = vmatpush1.msra.mxu0 0.0
        %5220 = vmatprep.subr.mxu0 0.0
        %5221 = vmatpush1.msra.mxu0 0.0
        %5222 = vmatprep.subr.mxu0 0.0
        %5223 = vmatpush1.msra.mxu0 0.0
        %5224 = vmatprep.subr.mxu0 0.0
        %5225 = vmatpush1.msra.mxu0 0.0
        %5226 = vmatprep.subr.mxu0 0.0
        %5227 = vmatpush1.msra.mxu0 0.0
        %5228 = vmatprep.subr.mxu0 0.0
        %5229 = vmatpush1.msra.mxu0 0.0
        %5230 = vmatprep.subr.mxu0 0.0
        %5231 = vmatpush1.msra.mxu0 0.0
        %5232 = vmatprep.subr.mxu0 0.0
        %5233 = vmatpush1.msra.mxu0 0.0
        %5234 = vmatprep.subr.mxu0 0.0
        %5235 = vmatpush1.msra.mxu0 0.0
        %5236 = vmatprep.subr.mxu0 0.0
        %5237 = vmatpush1.msra.mxu0 0.0
        %5238 = vmatprep.subr.mxu0 0.0
        %5239 = vmatpush1.msra.mxu0 0.0
        %5240 = vmatprep.mubr.f32.mxu0 0.0
        %v5241 = vand.u32 %v3821, 4294901760
        %5242 = vmatmul.mubr.f32.gmra.mrb[0].mxu0 %v5241
        %v5243 = vpop.f32.mrb[0].mxu0
        %v5244 = vadd.f32 %v5159, %v5243
        %v5245 = vpop.f32.mrb[0].mxu0
        %5246 = vmatprep.mubr.f32.mxu0 0.0
        %v5247 = vand.u32 %v3824, 4294901760
        %5248 = vmatmul.mubr.f32.gmra.mrb[0].mxu0 %v5247
        %v5249 = vpop.f32.mrb[0].mxu0
        %v5250 = vadd.f32 %v5167, %v5249
        %v5251 = vpop.f32.mrb[0].mxu0
        %5252 = vdwg.mxu0
        %5253 = vmatprep.subr.mxu0 0.0
        %v5254 = vand.u32 %v3799, 4294901760
        %5255 = vmatpush1.msra.mxu0 %v5254
        %5256 = vmatprep.subr.mxu0 0.0
        %v5257 = vand.u32 %v3805, 4294901760
        %5258 = vmatpush1.msra.mxu0 %v5257
        %5259 = vmatprep.subr.mxu0 0.0
        %5260 = vmatpush1.msra.mxu0 0.0
        %5261 = vmatprep.subr.mxu0 0.0
        %5262 = vmatpush1.msra.mxu0 0.0
        %5263 = vmatprep.subr.mxu0 0.0
        %5264 = vmatpush1.msra.mxu0 0.0
        %5265 = vmatprep.subr.mxu0 0.0
        %5266 = vmatpush1.msra.mxu0 0.0
        %5267 = vmatprep.subr.mxu0 0.0
        %5268 = vmatpush1.msra.mxu0 0.0
        %5269 = vmatprep.subr.mxu0 0.0
        %5270 = vmatpush1.msra.mxu0 0.0
        %5271 = vmatprep.subr.mxu0 0.0
        %5272 = vmatpush1.msra.mxu0 0.0
        %5273 = vmatprep.subr.mxu0 0.0
        %5274 = vmatpush1.msra.mxu0 0.0
        %5275 = vmatprep.subr.mxu0 0.0
        %5276 = vmatpush1.msra.mxu0 0.0
        %5277 = vmatprep.subr.mxu0 0.0
        %5278 = vmatpush1.msra.mxu0 0.0
        %5279 = vmatprep.subr.mxu0 0.0
        %5280 = vmatpush1.msra.mxu0 0.0
        %5281 = vmatprep.subr.mxu0 0.0
        %5282 = vmatpush1.msra.mxu0 0.0
        %5283 = vmatprep.subr.mxu0 0.0
        %5284 = vmatpush1.msra.mxu0 0.0
        %5285 = vmatprep.subr.mxu0 0.0
        %5286 = vmatpush1.msra.mxu0 0.0
        %5287 = vmatprep.subr.mxu0 0.0
        %5288 = vmatpush1.msra.mxu0 0.0
        %5289 = vmatprep.subr.mxu0 0.0
        %5290 = vmatpush1.msra.mxu0 0.0
        %5291 = vmatprep.subr.mxu0 0.0
        %5292 = vmatpush1.msra.mxu0 0.0
        %5293 = vmatprep.subr.mxu0 0.0
        %5294 = vmatpush1.msra.mxu0 0.0
        %5295 = vmatprep.subr.mxu0 0.0
        %5296 = vmatpush1.msra.mxu0 0.0
        %5297 = vmatprep.subr.mxu0 0.0
        %5298 = vmatpush1.msra.mxu0 0.0
        %5299 = vmatprep.subr.mxu0 0.0
        %5300 = vmatpush1.msra.mxu0 0.0
        %5301 = vmatprep.subr.mxu0 0.0
        %5302 = vmatpush1.msra.mxu0 0.0
        %5303 = vmatprep.subr.mxu0 0.0
        %5304 = vmatpush1.msra.mxu0 0.0
        %5305 = vmatprep.subr.mxu0 0.0
        %5306 = vmatpush1.msra.mxu0 0.0
        %5307 = vmatprep.subr.mxu0 0.0
        %5308 = vmatpush1.msra.mxu0 0.0
        %5309 = vmatprep.subr.mxu0 0.0
        %5310 = vmatpush1.msra.mxu0 0.0
        %5311 = vmatprep.subr.mxu0 0.0
        %5312 = vmatpush1.msra.mxu0 0.0
        %5313 = vmatprep.subr.mxu0 0.0
        %5314 = vmatpush1.msra.mxu0 0.0
        %5315 = vmatprep.subr.mxu0 0.0
        %5316 = vmatpush1.msra.mxu0 0.0
        %5317 = vmatprep.subr.mxu0 0.0
        %5318 = vmatpush1.msra.mxu0 0.0
        %5319 = vmatprep.mubr.f32.mxu0 0.0
        %v5320 = vand.u32 %v3821, 4294901760
        %5321 = vmatmul.mubr.f32.gmra.mrb[0].mxu0 %v5320
        %v5322 = vpop.f32.mrb[0].mxu0
        %v5323 = vadd.f32 %v5244, %v5322
        %v5324 = vpop.f32.mrb[0].mxu0
        %5325 = vmatprep.mubr.f32.mxu0 0.0
        %v5326 = vand.u32 %v3824, 4294901760
        %5327 = vmatmul.mubr.f32.gmra.mrb[0].mxu0 %v5326
        %v5328 = vpop.f32.mrb[0].mxu0
        %v5329 = vadd.f32 %v5250, %v5328
        %v5330 = vpop.f32.mrb[0].mxu0
        %5331 = vdwg.mxu0
        %5332 = vmatprep.subr.mxu0 0.0
        %v5333 = vand.u32 %v3811, 4294901760
        %5334 = vmatpush1.msra.mxu0 %v5333
        %5335 = vmatprep.subr.mxu0 0.0
        %v5336 = vand.u32 %v3817, 4294901760
        %5337 = vmatpush1.msra.mxu0 %v5336
        %5338 = vmatprep.subr.mxu0 0.0
        %5339 = vmatpush1.msra.mxu0 0.0
        %5340 = vmatprep.subr.mxu0 0.0
        %5341 = vmatpush1.msra.mxu0 0.0
        %5342 = vmatprep.subr.mxu0 0.0
        %5343 = vmatpush1.msra.mxu0 0.0
        %5344 = vmatprep.subr.mxu0 0.0
        %5345 = vmatpush1.msra.mxu0 0.0
        %5346 = vmatprep.subr.mxu0 0.0
        %5347 = vmatpush1.msra.mxu0 0.0
        %5348 = vmatprep.subr.mxu0 0.0
        %5349 = vmatpush1.msra.mxu0 0.0
        %5350 = vmatprep.subr.mxu0 0.0
        %5351 = vmatpush1.msra.mxu0 0.0
        %5352 = vmatprep.subr.mxu0 0.0
        %5353 = vmatpush1.msra.mxu0 0.0
        %5354 = vmatprep.subr.mxu0 0.0
        %5355 = vmatpush1.msra.mxu0 0.0
        %5356 = vmatprep.subr.mxu0 0.0
        %5357 = vmatpush1.msra.mxu0 0.0
        %5358 = vmatprep.subr.mxu0 0.0
        %5359 = vmatpush1.msra.mxu0 0.0
        %5360 = vmatprep.subr.mxu0 0.0
        %5361 = vmatpush1.msra.mxu0 0.0
        %5362 = vmatprep.subr.mxu0 0.0
        %5363 = vmatpush1.msra.mxu0 0.0
        %5364 = vmatprep.subr.mxu0 0.0
        %5365 = vmatpush1.msra.mxu0 0.0
        %5366 = vmatprep.subr.mxu0 0.0
        %5367 = vmatpush1.msra.mxu0 0.0
        %5368 = vmatprep.subr.mxu0 0.0
        %5369 = vmatpush1.msra.mxu0 0.0
        %5370 = vmatprep.subr.mxu0 0.0
        %5371 = vmatpush1.msra.mxu0 0.0
        %5372 = vmatprep.subr.mxu0 0.0
        %5373 = vmatpush1.msra.mxu0 0.0
        %5374 = vmatprep.subr.mxu0 0.0
        %5375 = vmatpush1.msra.mxu0 0.0
        %5376 = vmatprep.subr.mxu0 0.0
        %5377 = vmatpush1.msra.mxu0 0.0
        %5378 = vmatprep.subr.mxu0 0.0
        %5379 = vmatpush1.msra.mxu0 0.0
        %5380 = vmatprep.subr.mxu0 0.0
        %5381 = vmatpush1.msra.mxu0 0.0
        %5382 = vmatprep.subr.mxu0 0.0
        %5383 = vmatpush1.msra.mxu0 0.0
        %5384 = vmatprep.subr.mxu0 0.0
        %5385 = vmatpush1.msra.mxu0 0.0
        %5386 = vmatprep.subr.mxu0 0.0
        %5387 = vmatpush1.msra.mxu0 0.0
        %5388 = vmatprep.subr.mxu0 0.0
        %5389 = vmatpush1.msra.mxu0 0.0
        %5390 = vmatprep.subr.mxu0 0.0
        %5391 = vmatpush1.msra.mxu0 0.0
        %5392 = vmatprep.subr.mxu0 0.0
        %5393 = vmatpush1.msra.mxu0 0.0
        %5394 = vmatprep.subr.mxu0 0.0
        %5395 = vmatpush1.msra.mxu0 0.0
        %5396 = vmatprep.subr.mxu0 0.0
        %5397 = vmatpush1.msra.mxu0 0.0
        %5398 = vmatprep.mubr.f32.mxu0 0.0
        %v5399 = vand.u32 %v3821, 4294901760
        %v5400 = vsub.f32 %v3821, %v5399
        %v5401 = vand.u32 %v5400, 4294901760
        %v5402 = vsub.f32 %v5400, %v5401
        %v5403 = vand.u32 %v5402, 4294901760
        %5404 = vmatmul.mubr.f32.gmra.mrb[0].mxu0 %v5403
        %v5405 = vpop.f32.mrb[0].mxu0
        %v5406 = vadd.f32 0.0, %v5405
        %v5407 = vpop.f32.mrb[0].mxu0
        %5408 = vmatprep.mubr.f32.mxu0 0.0
        %v5409 = vand.u32 %v3824, 4294901760
        %v5410 = vsub.f32 %v3824, %v5409
        %v5411 = vand.u32 %v5410, 4294901760
        %v5412 = vsub.f32 %v5410, %v5411
        %v5413 = vand.u32 %v5412, 4294901760
        %5414 = vmatmul.mubr.f32.gmra.mrb[0].mxu0 %v5413
        %v5415 = vpop.f32.mrb[0].mxu0
        %v5416 = vadd.f32 0.0, %v5415
        %v5417 = vpop.f32.mrb[0].mxu0
        %5418 = vdwg.mxu0
        %5419 = vmatprep.subr.mxu0 0.0
        %v5420 = vand.u32 %v3811, 4294901760
        %v5421 = vsub.f32 %v3811, %v5420
        %v5422 = vand.u32 %v5421, 4294901760
        %v5423 = vsub.f32 %v5421, %v5422
        %v5424 = vand.u32 %v5423, 4294901760
        %5425 = vmatpush1.msra.mxu0 %v5424
        %5426 = vmatprep.subr.mxu0 0.0
        %v5427 = vand.u32 %v3817, 4294901760
        %v5428 = vsub.f32 %v3817, %v5427
        %v5429 = vand.u32 %v5428, 4294901760
        %v5430 = vsub.f32 %v5428, %v5429
        %v5431 = vand.u32 %v5430, 4294901760
        %5432 = vmatpush1.msra.mxu0 %v5431
        %5433 = vmatprep.subr.mxu0 0.0
        %5434 = vmatpush1.msra.mxu0 0.0
        %5435 = vmatprep.subr.mxu0 0.0
        %5436 = vmatpush1.msra.mxu0 0.0
        %5437 = vmatprep.subr.mxu0 0.0
        %5438 = vmatpush1.msra.mxu0 0.0
        %5439 = vmatprep.subr.mxu0 0.0
        %5440 = vmatpush1.msra.mxu0 0.0
        %5441 = vmatprep.subr.mxu0 0.0
        %5442 = vmatpush1.msra.mxu0 0.0
        %5443 = vmatprep.subr.mxu0 0.0
        %5444 = vmatpush1.msra.mxu0 0.0
        %5445 = vmatprep.subr.mxu0 0.0
        %5446 = vmatpush1.msra.mxu0 0.0
        %5447 = vmatprep.subr.mxu0 0.0
        %5448 = vmatpush1.msra.mxu0 0.0
        %5449 = vmatprep.subr.mxu0 0.0
        %5450 = vmatpush1.msra.mxu0 0.0
        %5451 = vmatprep.subr.mxu0 0.0
        %5452 = vmatpush1.msra.mxu0 0.0
        %5453 = vmatprep.subr.mxu0 0.0
        %5454 = vmatpush1.msra.mxu0 0.0
        %5455 = vmatprep.subr.mxu0 0.0
        %5456 = vmatpush1.msra.mxu0 0.0
        %5457 = vmatprep.subr.mxu0 0.0
        %5458 = vmatpush1.msra.mxu0 0.0
        %5459 = vmatprep.subr.mxu0 0.0
        %5460 = vmatpush1.msra.mxu0 0.0
        %5461 = vmatprep.subr.mxu0 0.0
        %5462 = vmatpush1.msra.mxu0 0.0
        %5463 = vmatprep.subr.mxu0 0.0
        %5464 = vmatpush1.msra.mxu0 0.0
        %5465 = vmatprep.subr.mxu0 0.0
        %5466 = vmatpush1.msra.mxu0 0.0
        %5467 = vmatprep.subr.mxu0 0.0
        %5468 = vmatpush1.msra.mxu0 0.0
        %5469 = vmatprep.subr.mxu0 0.0
        %5470 = vmatpush1.msra.mxu0 0.0
        %5471 = vmatprep.subr.mxu0 0.0
        %5472 = vmatpush1.msra.mxu0 0.0
        %5473 = vmatprep.subr.mxu0 0.0
        %5474 = vmatpush1.msra.mxu0 0.0
        %5475 = vmatprep.subr.mxu0 0.0
        %5476 = vmatpush1.msra.mxu0 0.0
        %5477 = vmatprep.subr.mxu0 0.0
        %5478 = vmatpush1.msra.mxu0 0.0
        %5479 = vmatprep.subr.mxu0 0.0
        %5480 = vmatpush1.msra.mxu0 0.0
        %5481 = vmatprep.subr.mxu0 0.0
        %5482 = vmatpush1.msra.mxu0 0.0
        %5483 = vmatprep.subr.mxu0 0.0
        %5484 = vmatpush1.msra.mxu0 0.0
        %5485 = vmatprep.subr.mxu0 0.0
        %5486 = vmatpush1.msra.mxu0 0.0
        %5487 = vmatprep.subr.mxu0 0.0
        %5488 = vmatpush1.msra.mxu0 0.0
        %5489 = vmatprep.subr.mxu0 0.0
        %5490 = vmatpush1.msra.mxu0 0.0
        %5491 = vmatprep.subr.mxu0 0.0
        %5492 = vmatpush1.msra.mxu0 0.0
        %5493 = vmatprep.mubr.f32.mxu0 0.0
        %v5494 = vand.u32 %v3821, 4294901760
        %5495 = vmatmul.mubr.f32.gmra.mrb[0].mxu0 %v5494
        %v5496 = vpop.f32.mrb[0].mxu0
        %v5497 = vadd.f32 %v5406, %v5496
        %v5498 = vpop.f32.mrb[0].mxu0
        %5499 = vmatprep.mubr.f32.mxu0 0.0
        %v5500 = vand.u32 %v3824, 4294901760
        %5501 = vmatmul.mubr.f32.gmra.mrb[0].mxu0 %v5500
        %v5502 = vpop.f32.mrb[0].mxu0
        %v5503 = vadd.f32 %v5416, %v5502
        %v5504 = vpop.f32.mrb[0].mxu0
        %5505 = vdwg.mxu0
        %5506 = vmatprep.subr.mxu0 0.0
        %v5507 = vand.u32 %v3811, 4294901760
        %v5508 = vsub.f32 %v3811, %v5507
        %5509 = vmatpush1.msra.mxu0 %v5508
        %5510 = vmatprep.subr.mxu0 0.0
        %v5511 = vand.u32 %v3817, 4294901760
        %v5512 = vsub.f32 %v3817, %v5511
        %5513 = vmatpush1.msra.mxu0 %v5512
        %5514 = vmatprep.subr.mxu0 0.0
        %5515 = vmatpush1.msra.mxu0 0.0
        %5516 = vmatprep.subr.mxu0 0.0
        %5517 = vmatpush1.msra.mxu0 0.0
        %5518 = vmatprep.subr.mxu0 0.0
        %5519 = vmatpush1.msra.mxu0 0.0
        %5520 = vmatprep.subr.mxu0 0.0
        %5521 = vmatpush1.msra.mxu0 0.0
        %5522 = vmatprep.subr.mxu0 0.0
        %5523 = vmatpush1.msra.mxu0 0.0
        %5524 = vmatprep.subr.mxu0 0.0
        %5525 = vmatpush1.msra.mxu0 0.0
        %5526 = vmatprep.subr.mxu0 0.0
        %5527 = vmatpush1.msra.mxu0 0.0
        %5528 = vmatprep.subr.mxu0 0.0
        %5529 = vmatpush1.msra.mxu0 0.0
        %5530 = vmatprep.subr.mxu0 0.0
        %5531 = vmatpush1.msra.mxu0 0.0
        %5532 = vmatprep.subr.mxu0 0.0
        %5533 = vmatpush1.msra.mxu0 0.0
        %5534 = vmatprep.subr.mxu0 0.0
        %5535 = vmatpush1.msra.mxu0 0.0
        %5536 = vmatprep.subr.mxu0 0.0
        %5537 = vmatpush1.msra.mxu0 0.0
        %5538 = vmatprep.subr.mxu0 0.0
        %5539 = vmatpush1.msra.mxu0 0.0
        %5540 = vmatprep.subr.mxu0 0.0
        %5541 = vmatpush1.msra.mxu0 0.0
        %5542 = vmatprep.subr.mxu0 0.0
        %5543 = vmatpush1.msra.mxu0 0.0
        %5544 = vmatprep.subr.mxu0 0.0
        %5545 = vmatpush1.msra.mxu0 0.0
        %5546 = vmatprep.subr.mxu0 0.0
        %5547 = vmatpush1.msra.mxu0 0.0
        %5548 = vmatprep.subr.mxu0 0.0
        %5549 = vmatpush1.msra.mxu0 0.0
        %5550 = vmatprep.subr.mxu0 0.0
        %5551 = vmatpush1.msra.mxu0 0.0
        %5552 = vmatprep.subr.mxu0 0.0
        %5553 = vmatpush1.msra.mxu0 0.0
        %5554 = vmatprep.subr.mxu0 0.0
        %5555 = vmatpush1.msra.mxu0 0.0
        %5556 = vmatprep.subr.mxu0 0.0
        %5557 = vmatpush1.msra.mxu0 0.0
        %5558 = vmatprep.subr.mxu0 0.0
        %5559 = vmatpush1.msra.mxu0 0.0
        %5560 = vmatprep.subr.mxu0 0.0
        %5561 = vmatpush1.msra.mxu0 0.0
        %5562 = vmatprep.subr.mxu0 0.0
        %5563 = vmatpush1.msra.mxu0 0.0
        %5564 = vmatprep.subr.mxu0 0.0
        %5565 = vmatpush1.msra.mxu0 0.0
        %5566 = vmatprep.subr.mxu0 0.0
        %5567 = vmatpush1.msra.mxu0 0.0
        %5568 = vmatprep.subr.mxu0 0.0
        %5569 = vmatpush1.msra.mxu0 0.0
        %5570 = vmatprep.subr.mxu0 0.0
        %5571 = vmatpush1.msra.mxu0 0.0
        %5572 = vmatprep.subr.mxu0 0.0
        %5573 = vmatpush1.msra.mxu0 0.0
        %5574 = vmatprep.mubr.f32.mxu0 0.0
        %v5575 = vand.u32 %v3821, 4294901760
        %v5576 = vsub.f32 %v3821, %v5575
        %5577 = vmatmul.mubr.f32.gmra.mrb[0].mxu0 %v5576
        %v5578 = vpop.f32.mrb[0].mxu0
        %v5579 = vadd.f32 %v5497, %v5578
        %v5580 = vpop.f32.mrb[0].mxu0
        %5581 = vmatprep.mubr.f32.mxu0 0.0
        %v5582 = vand.u32 %v3824, 4294901760
        %v5583 = vsub.f32 %v3824, %v5582
        %5584 = vmatmul.mubr.f32.gmra.mrb[0].mxu0 %v5583
        %v5585 = vpop.f32.mrb[0].mxu0
        %v5586 = vadd.f32 %v5503, %v5585
        %v5587 = vpop.f32.mrb[0].mxu0
        %5588 = vdwg.mxu0
        %5589 = vmatprep.subr.mxu0 0.0
        %v5590 = vand.u32 %v3811, 4294901760
        %5591 = vmatpush1.msra.mxu0 %v5590
        %5592 = vmatprep.subr.mxu0 0.0
        %v5593 = vand.u32 %v3817, 4294901760
        %5594 = vmatpush1.msra.mxu0 %v5593
        %5595 = vmatprep.subr.mxu0 0.0
        %5596 = vmatpush1.msra.mxu0 0.0
        %5597 = vmatprep.subr.mxu0 0.0
        %5598 = vmatpush1.msra.mxu0 0.0
        %5599 = vmatprep.subr.mxu0 0.0
        %5600 = vmatpush1.msra.mxu0 0.0
        %5601 = vmatprep.subr.mxu0 0.0
        %5602 = vmatpush1.msra.mxu0 0.0
        %5603 = vmatprep.subr.mxu0 0.0
        %5604 = vmatpush1.msra.mxu0 0.0
        %5605 = vmatprep.subr.mxu0 0.0
        %5606 = vmatpush1.msra.mxu0 0.0
        %5607 = vmatprep.subr.mxu0 0.0
        %5608 = vmatpush1.msra.mxu0 0.0
        %5609 = vmatprep.subr.mxu0 0.0
        %5610 = vmatpush1.msra.mxu0 0.0
        %5611 = vmatprep.subr.mxu0 0.0
        %5612 = vmatpush1.msra.mxu0 0.0
        %5613 = vmatprep.subr.mxu0 0.0
        %5614 = vmatpush1.msra.mxu0 0.0
        %5615 = vmatprep.subr.mxu0 0.0
        %5616 = vmatpush1.msra.mxu0 0.0
        %5617 = vmatprep.subr.mxu0 0.0
        %5618 = vmatpush1.msra.mxu0 0.0
        %5619 = vmatprep.subr.mxu0 0.0
        %5620 = vmatpush1.msra.mxu0 0.0
        %5621 = vmatprep.subr.mxu0 0.0
        %5622 = vmatpush1.msra.mxu0 0.0
        %5623 = vmatprep.subr.mxu0 0.0
        %5624 = vmatpush1.msra.mxu0 0.0
        %5625 = vmatprep.subr.mxu0 0.0
        %5626 = vmatpush1.msra.mxu0 0.0
        %5627 = vmatprep.subr.mxu0 0.0
        %5628 = vmatpush1.msra.mxu0 0.0
        %5629 = vmatprep.subr.mxu0 0.0
        %5630 = vmatpush1.msra.mxu0 0.0
        %5631 = vmatprep.subr.mxu0 0.0
        %5632 = vmatpush1.msra.mxu0 0.0
        %5633 = vmatprep.subr.mxu0 0.0
        %5634 = vmatpush1.msra.mxu0 0.0
        %5635 = vmatprep.subr.mxu0 0.0
        %5636 = vmatpush1.msra.mxu0 0.0
        %5637 = vmatprep.subr.mxu0 0.0
        %5638 = vmatpush1.msra.mxu0 0.0
        %5639 = vmatprep.subr.mxu0 0.0
        %5640 = vmatpush1.msra.mxu0 0.0
        %5641 = vmatprep.subr.mxu0 0.0
        %5642 = vmatpush1.msra.mxu0 0.0
        %5643 = vmatprep.subr.mxu0 0.0
        %5644 = vmatpush1.msra.mxu0 0.0
        %5645 = vmatprep.subr.mxu0 0.0
        %5646 = vmatpush1.msra.mxu0 0.0
        %5647 = vmatprep.subr.mxu0 0.0
        %5648 = vmatpush1.msra.mxu0 0.0
        %5649 = vmatprep.subr.mxu0 0.0
        %5650 = vmatpush1.msra.mxu0 0.0
        %5651 = vmatprep.subr.mxu0 0.0
        %5652 = vmatpush1.msra.mxu0 0.0
        %5653 = vmatprep.subr.mxu0 0.0
        %5654 = vmatpush1.msra.mxu0 0.0
        %5655 = vmatprep.mubr.f32.mxu0 0.0
        %v5656 = vand.u32 %v3821, 4294901760
        %v5657 = vsub.f32 %v3821, %v5656
        %v5658 = vand.u32 %v5657, 4294901760
        %5659 = vmatmul.mubr.f32.gmra.mrb[0].mxu0 %v5658
        %v5660 = vpop.f32.mrb[0].mxu0
        %v5661 = vadd.f32 %v5579, %v5660
        %v5662 = vpop.f32.mrb[0].mxu0
        %5663 = vmatprep.mubr.f32.mxu0 0.0
        %v5664 = vand.u32 %v3824, 4294901760
        %v5665 = vsub.f32 %v3824, %v5664
        %v5666 = vand.u32 %v5665, 4294901760
        %5667 = vmatmul.mubr.f32.gmra.mrb[0].mxu0 %v5666
        %v5668 = vpop.f32.mrb[0].mxu0
        %v5669 = vadd.f32 %v5586, %v5668
        %v5670 = vpop.f32.mrb[0].mxu0
        %5671 = vdwg.mxu0
        %5672 = vmatprep.subr.mxu0 0.0
        %v5673 = vand.u32 %v3811, 4294901760
        %v5674 = vsub.f32 %v3811, %v5673
        %v5675 = vand.u32 %v5674, 4294901760
        %5676 = vmatpush1.msra.mxu0 %v5675
        %5677 = vmatprep.subr.mxu0 0.0
        %v5678 = vand.u32 %v3817, 4294901760
        %v5679 = vsub.f32 %v3817, %v5678
        %v5680 = vand.u32 %v5679, 4294901760
        %5681 = vmatpush1.msra.mxu0 %v5680
        %5682 = vmatprep.subr.mxu0 0.0
        %5683 = vmatpush1.msra.mxu0 0.0
        %5684 = vmatprep.subr.mxu0 0.0
        %5685 = vmatpush1.msra.mxu0 0.0
        %5686 = vmatprep.subr.mxu0 0.0
        %5687 = vmatpush1.msra.mxu0 0.0
        %5688 = vmatprep.subr.mxu0 0.0
        %5689 = vmatpush1.msra.mxu0 0.0
        %5690 = vmatprep.subr.mxu0 0.0
        %5691 = vmatpush1.msra.mxu0 0.0
        %5692 = vmatprep.subr.mxu0 0.0
        %5693 = vmatpush1.msra.mxu0 0.0
        %5694 = vmatprep.subr.mxu0 0.0
        %5695 = vmatpush1.msra.mxu0 0.0
        %5696 = vmatprep.subr.mxu0 0.0
        %5697 = vmatpush1.msra.mxu0 0.0
        %5698 = vmatprep.subr.mxu0 0.0
        %5699 = vmatpush1.msra.mxu0 0.0
        %5700 = vmatprep.subr.mxu0 0.0
        %5701 = vmatpush1.msra.mxu0 0.0
        %5702 = vmatprep.subr.mxu0 0.0
        %5703 = vmatpush1.msra.mxu0 0.0
        %5704 = vmatprep.subr.mxu0 0.0
        %5705 = vmatpush1.msra.mxu0 0.0
        %5706 = vmatprep.subr.mxu0 0.0
        %5707 = vmatpush1.msra.mxu0 0.0
        %5708 = vmatprep.subr.mxu0 0.0
        %5709 = vmatpush1.msra.mxu0 0.0
        %5710 = vmatprep.subr.mxu0 0.0
        %5711 = vmatpush1.msra.mxu0 0.0
        %5712 = vmatprep.subr.mxu0 0.0
        %5713 = vmatpush1.msra.mxu0 0.0
        %5714 = vmatprep.subr.mxu0 0.0
        %5715 = vmatpush1.msra.mxu0 0.0
        %5716 = vmatprep.subr.mxu0 0.0
        %5717 = vmatpush1.msra.mxu0 0.0
        %5718 = vmatprep.subr.mxu0 0.0
        %5719 = vmatpush1.msra.mxu0 0.0
        %5720 = vmatprep.subr.mxu0 0.0
        %5721 = vmatpush1.msra.mxu0 0.0
        %5722 = vmatprep.subr.mxu0 0.0
        %5723 = vmatpush1.msra.mxu0 0.0
        %5724 = vmatprep.subr.mxu0 0.0
        %5725 = vmatpush1.msra.mxu0 0.0
        %5726 = vmatprep.subr.mxu0 0.0
        %5727 = vmatpush1.msra.mxu0 0.0
        %5728 = vmatprep.subr.mxu0 0.0
        %5729 = vmatpush1.msra.mxu0 0.0
        %5730 = vmatprep.subr.mxu0 0.0
        %5731 = vmatpush1.msra.mxu0 0.0
        %5732 = vmatprep.subr.mxu0 0.0
        %5733 = vmatpush1.msra.mxu0 0.0
        %5734 = vmatprep.subr.mxu0 0.0
        %5735 = vmatpush1.msra.mxu0 0.0
        %5736 = vmatprep.subr.mxu0 0.0
        %5737 = vmatpush1.msra.mxu0 0.0
        %5738 = vmatprep.subr.mxu0 0.0
        %5739 = vmatpush1.msra.mxu0 0.0
        %5740 = vmatprep.subr.mxu0 0.0
        %5741 = vmatpush1.msra.mxu0 0.0
        %5742 = vmatprep.mubr.f32.mxu0 0.0
        %v5743 = vand.u32 %v3821, 4294901760
        %5744 = vmatmul.mubr.f32.gmra.mrb[0].mxu0 %v5743
        %v5745 = vpop.f32.mrb[0].mxu0
        %v5746 = vadd.f32 %v5661, %v5745
        %v5747 = vpop.f32.mrb[0].mxu0
        %5748 = vmatprep.mubr.f32.mxu0 0.0
        %v5749 = vand.u32 %v3824, 4294901760
        %5750 = vmatmul.mubr.f32.gmra.mrb[0].mxu0 %v5749
        %v5751 = vpop.f32.mrb[0].mxu0
        %v5752 = vadd.f32 %v5669, %v5751
        %v5753 = vpop.f32.mrb[0].mxu0
        %5754 = vdwg.mxu0
        %5755 = vmatprep.subr.mxu0 0.0
        %v5756 = vand.u32 %v3811, 4294901760
        %5757 = vmatpush1.msra.mxu0 %v5756
        %5758 = vmatprep.subr.mxu0 0.0
        %v5759 = vand.u32 %v3817, 4294901760
        %5760 = vmatpush1.msra.mxu0 %v5759
        %5761 = vmatprep.subr.mxu0 0.0
        %5762 = vmatpush1.msra.mxu0 0.0
        %5763 = vmatprep.subr.mxu0 0.0
        %5764 = vmatpush1.msra.mxu0 0.0
        %5765 = vmatprep.subr.mxu0 0.0
        %5766 = vmatpush1.msra.mxu0 0.0
        %5767 = vmatprep.subr.mxu0 0.0
        %5768 = vmatpush1.msra.mxu0 0.0
        %5769 = vmatprep.subr.mxu0 0.0
        %5770 = vmatpush1.msra.mxu0 0.0
        %5771 = vmatprep.subr.mxu0 0.0
        %5772 = vmatpush1.msra.mxu0 0.0
        %5773 = vmatprep.subr.mxu0 0.0
        %5774 = vmatpush1.msra.mxu0 0.0
        %5775 = vmatprep.subr.mxu0 0.0
        %5776 = vmatpush1.msra.mxu0 0.0
        %5777 = vmatprep.subr.mxu0 0.0
        %5778 = vmatpush1.msra.mxu0 0.0
        %5779 = vmatprep.subr.mxu0 0.0
        %5780 = vmatpush1.msra.mxu0 0.0
        %5781 = vmatprep.subr.mxu0 0.0
        %5782 = vmatpush1.msra.mxu0 0.0
        %5783 = vmatprep.subr.mxu0 0.0
        %5784 = vmatpush1.msra.mxu0 0.0
        %5785 = vmatprep.subr.mxu0 0.0
        %5786 = vmatpush1.msra.mxu0 0.0
        %5787 = vmatprep.subr.mxu0 0.0
        %5788 = vmatpush1.msra.mxu0 0.0
        %5789 = vmatprep.subr.mxu0 0.0
        %5790 = vmatpush1.msra.mxu0 0.0
        %5791 = vmatprep.subr.mxu0 0.0
        %5792 = vmatpush1.msra.mxu0 0.0
        %5793 = vmatprep.subr.mxu0 0.0
        %5794 = vmatpush1.msra.mxu0 0.0
        %5795 = vmatprep.subr.mxu0 0.0
        %5796 = vmatpush1.msra.mxu0 0.0
        %5797 = vmatprep.subr.mxu0 0.0
        %5798 = vmatpush1.msra.mxu0 0.0
        %5799 = vmatprep.subr.mxu0 0.0
        %5800 = vmatpush1.msra.mxu0 0.0
        %5801 = vmatprep.subr.mxu0 0.0
        %5802 = vmatpush1.msra.mxu0 0.0
        %5803 = vmatprep.subr.mxu0 0.0
        %5804 = vmatpush1.msra.mxu0 0.0
        %5805 = vmatprep.subr.mxu0 0.0
        %5806 = vmatpush1.msra.mxu0 0.0
        %5807 = vmatprep.subr.mxu0 0.0
        %5808 = vmatpush1.msra.mxu0 0.0
        %5809 = vmatprep.subr.mxu0 0.0
        %5810 = vmatpush1.msra.mxu0 0.0
        %5811 = vmatprep.subr.mxu0 0.0
        %5812 = vmatpush1.msra.mxu0 0.0
        %5813 = vmatprep.subr.mxu0 0.0
        %5814 = vmatpush1.msra.mxu0 0.0
        %5815 = vmatprep.subr.mxu0 0.0
        %5816 = vmatpush1.msra.mxu0 0.0
        %5817 = vmatprep.subr.mxu0 0.0
        %5818 = vmatpush1.msra.mxu0 0.0
        %5819 = vmatprep.subr.mxu0 0.0
        %5820 = vmatpush1.msra.mxu0 0.0
        %5821 = vmatprep.mubr.f32.mxu0 0.0
        %v5822 = vand.u32 %v3821, 4294901760
        %5823 = vmatmul.mubr.f32.gmra.mrb[0].mxu0 %v5822
        %v5824 = vpop.f32.mrb[0].mxu0
        %v5825 = vadd.f32 %v5746, %v5824
        %v5826 = vpop.f32.mrb[0].mxu0
        %5827 = vmatprep.mubr.f32.mxu0 0.0
        %v5828 = vand.u32 %v3824, 4294901760
        %5829 = vmatmul.mubr.f32.gmra.mrb[0].mxu0 %v5828
        %v5830 = vpop.f32.mrb[0].mxu0
        %v5831 = vadd.f32 %v5752, %v5830
        %v5832 = vpop.f32.mrb[0].mxu0
        %5833 = vdwg.mxu0
        %v5834 = vmul.f32 %v4319, 0.012345679
        %v5835 = vmul.f32 %v4325, 0.012345679
        %v5836 = vmul.f32 %v4821, 0.012345679
        %v5837 = vmul.f32 %v4827, 0.012345679
        %v5838 = vmul.f32 %v5323, 0.012345679
        %v5839 = vmul.f32 %v5329, 0.012345679
        %v5840 = vmul.f32 %v5825, 0.012345679
        %v5841 = vmul.f32 %v5831, 0.012345679
        %s5842 = scalar_lea.vmem %s217, 64 [#allocation8]
        %5843 = vst.msk [vmem:[%s5842] sm:$0xff] %vm227, %v5834
        %5844 = vst.msk [vmem:[%s5842 + $0x8] sm:$0xff] %vm227, %v5835
        %5845 = vst.msk [vmem:[%s5842 + $0x10] sm:$0xff] %vm227, %v5836
        %5846 = vst.msk [vmem:[%s5842 + $0x18] sm:$0xff] %vm227, %v5837
        %5847 = vst.msk [vmem:[%s5842 + $0x20] sm:$0xff] %vm227, %v5838
        %5848 = vst.msk [vmem:[%s5842 + $0x28] sm:$0xff] %vm227, %v5839
        %5849 = vst.msk [vmem:[%s5842 + $0x30] sm:$0xff] %vm227, %v5840
        %5850 = vst.msk [vmem:[%s5842 + $0x38] sm:$0xff] %vm227, %v5841
        %s5851 = scalar_lea.vmem [#allocation7], 32
        %v5852 = vld [vmem:[%s5851] sm:$0xff]
        %v5853 = vld [vmem:[%s5851 + $0x8] sm:$0xff]
        %s5854 = scalar_lea.vmem [#allocation5], 32
        %v5855 = vld [vmem:[%s5854] sm:$0xff]
        %v5856 = vld [vmem:[%s5854 + $0x8] sm:$0xff]
        %5857 = vmatprep.subr.mxu0 0.0
        %v5858 = vand.u32 %v5852, 4294901760
        %5859 = vmatpush1.msra.mxu0 %v5858
        %5860 = vmatprep.subr.mxu0 0.0
        %v5861 = vand.u32 %v5853, 4294901760
        %5862 = vmatpush1.msra.mxu0 %v5861
        %5863 = vmatprep.subr.mxu0 0.0
        %5864 = vmatpush1.msra.mxu0 0.0
        %5865 = vmatprep.subr.mxu0 0.0
        %5866 = vmatpush1.msra.mxu0 0.0
        %5867 = vmatprep.subr.mxu0 0.0
        %5868 = vmatpush1.msra.mxu0 0.0
        %5869 = vmatprep.subr.mxu0 0.0
        %5870 = vmatpush1.msra.mxu0 0.0
        %5871 = vmatprep.subr.mxu0 0.0
        %5872 = vmatpush1.msra.mxu0 0.0
        %5873 = vmatprep.subr.mxu0 0.0
        %5874 = vmatpush1.msra.mxu0 0.0
        %5875 = vmatprep.subr.mxu0 0.0
        %5876 = vmatpush1.msra.mxu0 0.0
        %5877 = vmatprep.subr.mxu0 0.0
        %5878 = vmatpush1.msra.mxu0 0.0
        %5879 = vmatprep.subr.mxu0 0.0
        %5880 = vmatpush1.msra.mxu0 0.0
        %5881 = vmatprep.subr.mxu0 0.0
        %5882 = vmatpush1.msra.mxu0 0.0
        %5883 = vmatprep.subr.mxu0 0.0
        %5884 = vmatpush1.msra.mxu0 0.0
        %5885 = vmatprep.subr.mxu0 0.0
        %5886 = vmatpush1.msra.mxu0 0.0
        %5887 = vmatprep.subr.mxu0 0.0
        %5888 = vmatpush1.msra.mxu0 0.0
        %5889 = vmatprep.subr.mxu0 0.0
        %5890 = vmatpush1.msra.mxu0 0.0
        %5891 = vmatprep.subr.mxu0 0.0
        %5892 = vmatpush1.msra.mxu0 0.0
        %5893 = vmatprep.subr.mxu0 0.0
        %5894 = vmatpush1.msra.mxu0 0.0
        %5895 = vmatprep.subr.mxu0 0.0
        %5896 = vmatpush1.msra.mxu0 0.0
        %5897 = vmatprep.subr.mxu0 0.0
        %5898 = vmatpush1.msra.mxu0 0.0
        %5899 = vmatprep.subr.mxu0 0.0
        %5900 = vmatpush1.msra.mxu0 0.0
        %5901 = vmatprep.subr.mxu0 0.0
        %5902 = vmatpush1.msra.mxu0 0.0
        %5903 = vmatprep.subr.mxu0 0.0
        %5904 = vmatpush1.msra.mxu0 0.0
        %5905 = vmatprep.subr.mxu0 0.0
        %5906 = vmatpush1.msra.mxu0 0.0
        %5907 = vmatprep.subr.mxu0 0.0
        %5908 = vmatpush1.msra.mxu0 0.0
        %5909 = vmatprep.subr.mxu0 0.0
        %5910 = vmatpush1.msra.mxu0 0.0
        %5911 = vmatprep.subr.mxu0 0.0
        %5912 = vmatpush1.msra.mxu0 0.0
        %5913 = vmatprep.subr.mxu0 0.0
        %5914 = vmatpush1.msra.mxu0 0.0
        %5915 = vmatprep.subr.mxu0 0.0
        %5916 = vmatpush1.msra.mxu0 0.0
        %5917 = vmatprep.subr.mxu0 0.0
        %5918 = vmatpush1.msra.mxu0 0.0
        %5919 = vmatprep.subr.mxu0 0.0
        %5920 = vmatpush1.msra.mxu0 0.0
        %5921 = vmatprep.subr.mxu0 0.0
        %5922 = vmatpush1.msra.mxu0 0.0
        %5923 = vmatprep.mubr.f32.mxu0 0.0
        %v5924 = vand.u32 %v241, 4294901760
        %v5925 = vsub.f32 %v241, %v5924
        %v5926 = vand.u32 %v5925, 4294901760
        %v5927 = vsub.f32 %v5925, %v5926
        %v5928 = vand.u32 %v5927, 4294901760
        %5929 = vmatmul.mubr.f32.gmra.mrb[0].mxu0 %v5928
        %v5930 = vpop.f32.mrb[0].mxu0
        %v5931 = vadd.f32 0.0, %v5930
        %v5932 = vpop.f32.mrb[0].mxu0
        %5933 = vmatprep.mubr.f32.mxu0 0.0
        %v5934 = vand.u32 %v244, 4294901760
        %v5935 = vsub.f32 %v244, %v5934
        %v5936 = vand.u32 %v5935, 4294901760
        %v5937 = vsub.f32 %v5935, %v5936
        %v5938 = vand.u32 %v5937, 4294901760
        %5939 = vmatmul.mubr.f32.gmra.mrb[0].mxu0 %v5938
        %v5940 = vpop.f32.mrb[0].mxu0
        %v5941 = vadd.f32 0.0, %v5940
        %v5942 = vpop.f32.mrb[0].mxu0
        %5943 = vmatprep.mubr.f32.mxu0 0.0
        %v5944 = vand.u32 %v247, 4294901760
        %v5945 = vsub.f32 %v247, %v5944
        %v5946 = vand.u32 %v5945, 4294901760
        %v5947 = vsub.f32 %v5945, %v5946
        %v5948 = vand.u32 %v5947, 4294901760
        %5949 = vmatmul.mubr.f32.gmra.mrb[0].mxu0 %v5948
        %v5950 = vpop.f32.mrb[0].mxu0
        %v5951 = vadd.f32 0.0, %v5950
        %v5952 = vpop.f32.mrb[0].mxu0
        %5953 = vmatprep.mubr.f32.mxu0 0.0
        %v5954 = vand.u32 %v250, 4294901760
        %v5955 = vsub.f32 %v250, %v5954
        %v5956 = vand.u32 %v5955, 4294901760
        %v5957 = vsub.f32 %v5955, %v5956
        %v5958 = vand.u32 %v5957, 4294901760
        %5959 = vmatmul.mubr.f32.gmra.mrb[0].mxu0 %v5958
        %v5960 = vpop.f32.mrb[0].mxu0
        %v5961 = vadd.f32 0.0, %v5960
        %v5962 = vpop.f32.mrb[0].mxu0
        %5963 = vmatprep.mubr.f32.mxu0 0.0
        %v5964 = vand.u32 %v253, 4294901760
        %v5965 = vsub.f32 %v253, %v5964
        %v5966 = vand.u32 %v5965, 4294901760
        %v5967 = vsub.f32 %v5965, %v5966
        %v5968 = vand.u32 %v5967, 4294901760
        %5969 = vmatmul.mubr.f32.gmra.mrb[0].mxu0 %v5968
        %v5970 = vpop.f32.mrb[0].mxu0
        %v5971 = vadd.f32 0.0, %v5970
        %v5972 = vpop.f32.mrb[0].mxu0
        %5973 = vmatprep.mubr.f32.mxu0 0.0
        %v5974 = vand.u32 %v256, 4294901760
        %v5975 = vsub.f32 %v256, %v5974
        %v5976 = vand.u32 %v5975, 4294901760
        %v5977 = vsub.f32 %v5975, %v5976
        %v5978 = vand.u32 %v5977, 4294901760
        %5979 = vmatmul.mubr.f32.gmra.mrb[0].mxu0 %v5978
        %v5980 = vpop.f32.mrb[0].mxu0
        %v5981 = vadd.f32 0.0, %v5980
        %v5982 = vpop.f32.mrb[0].mxu0
        %5983 = vmatprep.mubr.f32.mxu0 0.0
        %v5984 = vand.u32 %v259, 4294901760
        %v5985 = vsub.f32 %v259, %v5984
        %v5986 = vand.u32 %v5985, 4294901760
        %v5987 = vsub.f32 %v5985, %v5986
        %v5988 = vand.u32 %v5987, 4294901760
        %5989 = vmatmul.mubr.f32.gmra.mrb[0].mxu0 %v5988
        %v5990 = vpop.f32.mrb[0].mxu0
        %v5991 = vadd.f32 0.0, %v5990
        %v5992 = vpop.f32.mrb[0].mxu0
        %5993 = vmatprep.mubr.f32.mxu0 0.0
        %v5994 = vand.u32 %v262, 4294901760
        %v5995 = vsub.f32 %v262, %v5994
        %v5996 = vand.u32 %v5995, 4294901760
        %v5997 = vsub.f32 %v5995, %v5996
        %v5998 = vand.u32 %v5997, 4294901760
        %5999 = vmatmul.mubr.f32.gmra.mrb[0].mxu0 %v5998
        %v6000 = vpop.f32.mrb[0].mxu0
        %v6001 = vadd.f32 0.0, %v6000
        %v6002 = vpop.f32.mrb[0].mxu0
        %6003 = vdwg.mxu0
        %6004 = vmatprep.subr.mxu0 0.0
        %v6005 = vand.u32 %v5852, 4294901760
        %v6006 = vsub.f32 %v5852, %v6005
        %v6007 = vand.u32 %v6006, 4294901760
        %v6008 = vsub.f32 %v6006, %v6007
        %v6009 = vand.u32 %v6008, 4294901760
        %6010 = vmatpush1.msra.mxu0 %v6009
        %6011 = vmatprep.subr.mxu0 0.0
        %v6012 = vand.u32 %v5853, 4294901760
        %v6013 = vsub.f32 %v5853, %v6012
        %v6014 = vand.u32 %v6013, 4294901760
        %v6015 = vsub.f32 %v6013, %v6014
        %v6016 = vand.u32 %v6015, 4294901760
        %6017 = vmatpush1.msra.mxu0 %v6016
        %6018 = vmatprep.subr.mxu0 0.0
        %6019 = vmatpush1.msra.mxu0 0.0
        %6020 = vmatprep.subr.mxu0 0.0
        %6021 = vmatpush1.msra.mxu0 0.0
        %6022 = vmatprep.subr.mxu0 0.0
        %6023 = vmatpush1.msra.mxu0 0.0
        %6024 = vmatprep.subr.mxu0 0.0
        %6025 = vmatpush1.msra.mxu0 0.0
        %6026 = vmatprep.subr.mxu0 0.0
        %6027 = vmatpush1.msra.mxu0 0.0
        %6028 = vmatprep.subr.mxu0 0.0
        %6029 = vmatpush1.msra.mxu0 0.0
        %6030 = vmatprep.subr.mxu0 0.0
        %6031 = vmatpush1.msra.mxu0 0.0
        %6032 = vmatprep.subr.mxu0 0.0
        %6033 = vmatpush1.msra.mxu0 0.0
        %6034 = vmatprep.subr.mxu0 0.0
        %6035 = vmatpush1.msra.mxu0 0.0
        %6036 = vmatprep.subr.mxu0 0.0
        %6037 = vmatpush1.msra.mxu0 0.0
        %6038 = vmatprep.subr.mxu0 0.0
        %6039 = vmatpush1.msra.mxu0 0.0
        %6040 = vmatprep.subr.mxu0 0.0
        %6041 = vmatpush1.msra.mxu0 0.0
        %6042 = vmatprep.subr.mxu0 0.0
        %6043 = vmatpush1.msra.mxu0 0.0
        %6044 = vmatprep.subr.mxu0 0.0
        %6045 = vmatpush1.msra.mxu0 0.0
        %6046 = vmatprep.subr.mxu0 0.0
        %6047 = vmatpush1.msra.mxu0 0.0
        %6048 = vmatprep.subr.mxu0 0.0
        %6049 = vmatpush1.msra.mxu0 0.0
        %6050 = vmatprep.subr.mxu0 0.0
        %6051 = vmatpush1.msra.mxu0 0.0
        %6052 = vmatprep.subr.mxu0 0.0
        %6053 = vmatpush1.msra.mxu0 0.0
        %6054 = vmatprep.subr.mxu0 0.0
        %6055 = vmatpush1.msra.mxu0 0.0
        %6056 = vmatprep.subr.mxu0 0.0
        %6057 = vmatpush1.msra.mxu0 0.0
        %6058 = vmatprep.subr.mxu0 0.0
        %6059 = vmatpush1.msra.mxu0 0.0
        %6060 = vmatprep.subr.mxu0 0.0
        %6061 = vmatpush1.msra.mxu0 0.0
        %6062 = vmatprep.subr.mxu0 0.0
        %6063 = vmatpush1.msra.mxu0 0.0
        %6064 = vmatprep.subr.mxu0 0.0
        %6065 = vmatpush1.msra.mxu0 0.0
        %6066 = vmatprep.subr.mxu0 0.0
        %6067 = vmatpush1.msra.mxu0 0.0
        %6068 = vmatprep.subr.mxu0 0.0
        %6069 = vmatpush1.msra.mxu0 0.0
        %6070 = vmatprep.subr.mxu0 0.0
        %6071 = vmatpush1.msra.mxu0 0.0
        %6072 = vmatprep.subr.mxu0 0.0
        %6073 = vmatpush1.msra.mxu0 0.0
        %6074 = vmatprep.subr.mxu0 0.0
        %6075 = vmatpush1.msra.mxu0 0.0
        %6076 = vmatprep.subr.mxu0 0.0
        %6077 = vmatpush1.msra.mxu0 0.0
        %6078 = vmatprep.mubr.f32.mxu0 0.0
        %v6079 = vand.u32 %v241, 4294901760
        %6080 = vmatmul.mubr.f32.gmra.mrb[0].mxu0 %v6079
        %v6081 = vpop.f32.mrb[0].mxu0
        %v6082 = vadd.f32 %v5931, %v6081
        %v6083 = vpop.f32.mrb[0].mxu0
        %6084 = vmatprep.mubr.f32.mxu0 0.0
        %v6085 = vand.u32 %v244, 4294901760
        %6086 = vmatmul.mubr.f32.gmra.mrb[0].mxu0 %v6085
        %v6087 = vpop.f32.mrb[0].mxu0
        %v6088 = vadd.f32 %v5941, %v6087
        %v6089 = vpop.f32.mrb[0].mxu0
        %6090 = vmatprep.mubr.f32.mxu0 0.0
        %v6091 = vand.u32 %v247, 4294901760
        %6092 = vmatmul.mubr.f32.gmra.mrb[0].mxu0 %v6091
        %v6093 = vpop.f32.mrb[0].mxu0
        %v6094 = vadd.f32 %v5951, %v6093
        %v6095 = vpop.f32.mrb[0].mxu0
        %6096 = vmatprep.mubr.f32.mxu0 0.0
        %v6097 = vand.u32 %v250, 4294901760
        %6098 = vmatmul.mubr.f32.gmra.mrb[0].mxu0 %v6097
        %v6099 = vpop.f32.mrb[0].mxu0
        %v6100 = vadd.f32 %v5961, %v6099
        %v6101 = vpop.f32.mrb[0].mxu0
        %6102 = vmatprep.mubr.f32.mxu0 0.0
        %v6103 = vand.u32 %v253, 4294901760
        %6104 = vmatmul.mubr.f32.gmra.mrb[0].mxu0 %v6103
        %v6105 = vpop.f32.mrb[0].mxu0
        %v6106 = vadd.f32 %v5971, %v6105
        %v6107 = vpop.f32.mrb[0].mxu0
        %6108 = vmatprep.mubr.f32.mxu0 0.0
        %v6109 = vand.u32 %v256, 4294901760
        %6110 = vmatmul.mubr.f32.gmra.mrb[0].mxu0 %v6109
        %v6111 = vpop.f32.mrb[0].mxu0
        %v6112 = vadd.f32 %v5981, %v6111
        %v6113 = vpop.f32.mrb[0].mxu0
        %6114 = vmatprep.mubr.f32.mxu0 0.0
        %v6115 = vand.u32 %v259, 4294901760
        %6116 = vmatmul.mubr.f32.gmra.mrb[0].mxu0 %v6115
        %v6117 = vpop.f32.mrb[0].mxu0
        %v6118 = vadd.f32 %v5991, %v6117
        %v6119 = vpop.f32.mrb[0].mxu0
        %6120 = vmatprep.mubr.f32.mxu0 0.0
        %v6121 = vand.u32 %v262, 4294901760
        %6122 = vmatmul.mubr.f32.gmra.mrb[0].mxu0 %v6121
        %v6123 = vpop.f32.mrb[0].mxu0
        %v6124 = vadd.f32 %v6001, %v6123
        %v6125 = vpop.f32.mrb[0].mxu0
        %6126 = vdwg.mxu0
        %6127 = vmatprep.subr.mxu0 0.0
        %v6128 = vand.u32 %v5852, 4294901760
        %v6129 = vsub.f32 %v5852, %v6128
        %6130 = vmatpush1.msra.mxu0 %v6129
        %6131 = vmatprep.subr.mxu0 0.0
        %v6132 = vand.u32 %v5853, 4294901760
        %v6133 = vsub.f32 %v5853, %v6132
        %6134 = vmatpush1.msra.mxu0 %v6133
        %6135 = vmatprep.subr.mxu0 0.0
        %6136 = vmatpush1.msra.mxu0 0.0
        %6137 = vmatprep.subr.mxu0 0.0
        %6138 = vmatpush1.msra.mxu0 0.0
        %6139 = vmatprep.subr.mxu0 0.0
        %6140 = vmatpush1.msra.mxu0 0.0
        %6141 = vmatprep.subr.mxu0 0.0
        %6142 = vmatpush1.msra.mxu0 0.0
        %6143 = vmatprep.subr.mxu0 0.0
        %6144 = vmatpush1.msra.mxu0 0.0
        %6145 = vmatprep.subr.mxu0 0.0
        %6146 = vmatpush1.msra.mxu0 0.0
        %6147 = vmatprep.subr.mxu0 0.0
        %6148 = vmatpush1.msra.mxu0 0.0
        %6149 = vmatprep.subr.mxu0 0.0
        %6150 = vmatpush1.msra.mxu0 0.0
        %6151 = vmatprep.subr.mxu0 0.0
        %6152 = vmatpush1.msra.mxu0 0.0
        %6153 = vmatprep.subr.mxu0 0.0
        %6154 = vmatpush1.msra.mxu0 0.0
        %6155 = vmatprep.subr.mxu0 0.0
        %6156 = vmatpush1.msra.mxu0 0.0
        %6157 = vmatprep.subr.mxu0 0.0
        %6158 = vmatpush1.msra.mxu0 0.0
        %6159 = vmatprep.subr.mxu0 0.0
        %6160 = vmatpush1.msra.mxu0 0.0
        %6161 = vmatprep.subr.mxu0 0.0
        %6162 = vmatpush1.msra.mxu0 0.0
        %6163 = vmatprep.subr.mxu0 0.0
        %6164 = vmatpush1.msra.mxu0 0.0
        %6165 = vmatprep.subr.mxu0 0.0
        %6166 = vmatpush1.msra.mxu0 0.0
        %6167 = vmatprep.subr.mxu0 0.0
        %6168 = vmatpush1.msra.mxu0 0.0
        %6169 = vmatprep.subr.mxu0 0.0
        %6170 = vmatpush1.msra.mxu0 0.0
        %6171 = vmatprep.subr.mxu0 0.0
        %6172 = vmatpush1.msra.mxu0 0.0
        %6173 = vmatprep.subr.mxu0 0.0
        %6174 = vmatpush1.msra.mxu0 0.0
        %6175 = vmatprep.subr.mxu0 0.0
        %6176 = vmatpush1.msra.mxu0 0.0
        %6177 = vmatprep.subr.mxu0 0.0
        %6178 = vmatpush1.msra.mxu0 0.0
        %6179 = vmatprep.subr.mxu0 0.0
        %6180 = vmatpush1.msra.mxu0 0.0
        %6181 = vmatprep.subr.mxu0 0.0
        %6182 = vmatpush1.msra.mxu0 0.0
        %6183 = vmatprep.subr.mxu0 0.0
        %6184 = vmatpush1.msra.mxu0 0.0
        %6185 = vmatprep.subr.mxu0 0.0
        %6186 = vmatpush1.msra.mxu0 0.0
        %6187 = vmatprep.subr.mxu0 0.0
        %6188 = vmatpush1.msra.mxu0 0.0
        %6189 = vmatprep.subr.mxu0 0.0
        %6190 = vmatpush1.msra.mxu0 0.0
        %6191 = vmatprep.subr.mxu0 0.0
        %6192 = vmatpush1.msra.mxu0 0.0
        %6193 = vmatprep.subr.mxu0 0.0
        %6194 = vmatpush1.msra.mxu0 0.0
        %6195 = vmatprep.mubr.f32.mxu0 0.0
        %v6196 = vand.u32 %v241, 4294901760
        %v6197 = vsub.f32 %v241, %v6196
        %6198 = vmatmul.mubr.f32.gmra.mrb[0].mxu0 %v6197
        %v6199 = vpop.f32.mrb[0].mxu0
        %v6200 = vadd.f32 %v6082, %v6199
        %v6201 = vpop.f32.mrb[0].mxu0
        %6202 = vmatprep.mubr.f32.mxu0 0.0
        %v6203 = vand.u32 %v244, 4294901760
        %v6204 = vsub.f32 %v244, %v6203
        %6205 = vmatmul.mubr.f32.gmra.mrb[0].mxu0 %v6204
        %v6206 = vpop.f32.mrb[0].mxu0
        %v6207 = vadd.f32 %v6088, %v6206
        %v6208 = vpop.f32.mrb[0].mxu0
        %6209 = vmatprep.mubr.f32.mxu0 0.0
        %v6210 = vand.u32 %v247, 4294901760
        %v6211 = vsub.f32 %v247, %v6210
        %6212 = vmatmul.mubr.f32.gmra.mrb[0].mxu0 %v6211
        %v6213 = vpop.f32.mrb[0].mxu0
        %v6214 = vadd.f32 %v6094, %v6213
        %v6215 = vpop.f32.mrb[0].mxu0
        %6216 = vmatprep.mubr.f32.mxu0 0.0
        %v6217 = vand.u32 %v250, 4294901760
        %v6218 = vsub.f32 %v250, %v6217
        %6219 = vmatmul.mubr.f32.gmra.mrb[0].mxu0 %v6218
        %v6220 = vpop.f32.mrb[0].mxu0
        %v6221 = vadd.f32 %v6100, %v6220
        %v6222 = vpop.f32.mrb[0].mxu0
        %6223 = vmatprep.mubr.f32.mxu0 0.0
        %v6224 = vand.u32 %v253, 4294901760
        %v6225 = vsub.f32 %v253, %v6224
        %6226 = vmatmul.mubr.f32.gmra.mrb[0].mxu0 %v6225
        %v6227 = vpop.f32.mrb[0].mxu0
        %v6228 = vadd.f32 %v6106, %v6227
        %v6229 = vpop.f32.mrb[0].mxu0
        %6230 = vmatprep.mubr.f32.mxu0 0.0
        %v6231 = vand.u32 %v256, 4294901760
        %v6232 = vsub.f32 %v256, %v6231
        %6233 = vmatmul.mubr.f32.gmra.mrb[0].mxu0 %v6232
        %v6234 = vpop.f32.mrb[0].mxu0
        %v6235 = vadd.f32 %v6112, %v6234
        %v6236 = vpop.f32.mrb[0].mxu0
        %6237 = vmatprep.mubr.f32.mxu0 0.0
        %v6238 = vand.u32 %v259, 4294901760
        %v6239 = vsub.f32 %v259, %v6238
        %6240 = vmatmul.mubr.f32.gmra.mrb[0].mxu0 %v6239
        %v6241 = vpop.f32.mrb[0].mxu0
        %v6242 = vadd.f32 %v6118, %v6241
        %v6243 = vpop.f32.mrb[0].mxu0
        %6244 = vmatprep.mubr.f32.mxu0 0.0
        %v6245 = vand.u32 %v262, 4294901760
        %v6246 = vsub.f32 %v262, %v6245
        %6247 = vmatmul.mubr.f32.gmra.mrb[0].mxu0 %v6246
        %v6248 = vpop.f32.mrb[0].mxu0
        %v6249 = vadd.f32 %v6124, %v6248
        %v6250 = vpop.f32.mrb[0].mxu0
        %6251 = vdwg.mxu0
        %6252 = vmatprep.subr.mxu0 0.0
        %v6253 = vand.u32 %v5852, 4294901760
        %6254 = vmatpush1.msra.mxu0 %v6253
        %6255 = vmatprep.subr.mxu0 0.0
        %v6256 = vand.u32 %v5853, 4294901760
        %6257 = vmatpush1.msra.mxu0 %v6256
        %6258 = vmatprep.subr.mxu0 0.0
        %6259 = vmatpush1.msra.mxu0 0.0
        %6260 = vmatprep.subr.mxu0 0.0
        %6261 = vmatpush1.msra.mxu0 0.0
        %6262 = vmatprep.subr.mxu0 0.0
        %6263 = vmatpush1.msra.mxu0 0.0
        %6264 = vmatprep.subr.mxu0 0.0
        %6265 = vmatpush1.msra.mxu0 0.0
        %6266 = vmatprep.subr.mxu0 0.0
        %6267 = vmatpush1.msra.mxu0 0.0
        %6268 = vmatprep.subr.mxu0 0.0
        %6269 = vmatpush1.msra.mxu0 0.0
        %6270 = vmatprep.subr.mxu0 0.0
        %6271 = vmatpush1.msra.mxu0 0.0
        %6272 = vmatprep.subr.mxu0 0.0
        %6273 = vmatpush1.msra.mxu0 0.0
        %6274 = vmatprep.subr.mxu0 0.0
        %6275 = vmatpush1.msra.mxu0 0.0
        %6276 = vmatprep.subr.mxu0 0.0
        %6277 = vmatpush1.msra.mxu0 0.0
        %6278 = vmatprep.subr.mxu0 0.0
        %6279 = vmatpush1.msra.mxu0 0.0
        %6280 = vmatprep.subr.mxu0 0.0
        %6281 = vmatpush1.msra.mxu0 0.0
        %6282 = vmatprep.subr.mxu0 0.0
        %6283 = vmatpush1.msra.mxu0 0.0
        %6284 = vmatprep.subr.mxu0 0.0
        %6285 = vmatpush1.msra.mxu0 0.0
        %6286 = vmatprep.subr.mxu0 0.0
        %6287 = vmatpush1.msra.mxu0 0.0
        %6288 = vmatprep.subr.mxu0 0.0
        %6289 = vmatpush1.msra.mxu0 0.0
        %6290 = vmatprep.subr.mxu0 0.0
        %6291 = vmatpush1.msra.mxu0 0.0
        %6292 = vmatprep.subr.mxu0 0.0
        %6293 = vmatpush1.msra.mxu0 0.0
        %6294 = vmatprep.subr.mxu0 0.0
        %6295 = vmatpush1.msra.mxu0 0.0
        %6296 = vmatprep.subr.mxu0 0.0
        %6297 = vmatpush1.msra.mxu0 0.0
        %6298 = vmatprep.subr.mxu0 0.0
        %6299 = vmatpush1.msra.mxu0 0.0
        %6300 = vmatprep.subr.mxu0 0.0
        %6301 = vmatpush1.msra.mxu0 0.0
        %6302 = vmatprep.subr.mxu0 0.0
        %6303 = vmatpush1.msra.mxu0 0.0
        %6304 = vmatprep.subr.mxu0 0.0
        %6305 = vmatpush1.msra.mxu0 0.0
        %6306 = vmatprep.subr.mxu0 0.0
        %6307 = vmatpush1.msra.mxu0 0.0
        %6308 = vmatprep.subr.mxu0 0.0
        %6309 = vmatpush1.msra.mxu0 0.0
        %6310 = vmatprep.subr.mxu0 0.0
        %6311 = vmatpush1.msra.mxu0 0.0
        %6312 = vmatprep.subr.mxu0 0.0
        %6313 = vmatpush1.msra.mxu0 0.0
        %6314 = vmatprep.subr.mxu0 0.0
        %6315 = vmatpush1.msra.mxu0 0.0
        %6316 = vmatprep.subr.mxu0 0.0
        %6317 = vmatpush1.msra.mxu0 0.0
        %6318 = vmatprep.mubr.f32.mxu0 0.0
        %v6319 = vand.u32 %v241, 4294901760
        %v6320 = vsub.f32 %v241, %v6319
        %v6321 = vand.u32 %v6320, 4294901760
        %6322 = vmatmul.mubr.f32.gmra.mrb[0].mxu0 %v6321
        %v6323 = vpop.f32.mrb[0].mxu0
        %v6324 = vadd.f32 %v6200, %v6323
        %v6325 = vpop.f32.mrb[0].mxu0
        %6326 = vmatprep.mubr.f32.mxu0 0.0
        %v6327 = vand.u32 %v244, 4294901760
        %v6328 = vsub.f32 %v244, %v6327
        %v6329 = vand.u32 %v6328, 4294901760
        %6330 = vmatmul.mubr.f32.gmra.mrb[0].mxu0 %v6329
        %v6331 = vpop.f32.mrb[0].mxu0
        %v6332 = vadd.f32 %v6207, %v6331
        %v6333 = vpop.f32.mrb[0].mxu0
        %6334 = vmatprep.mubr.f32.mxu0 0.0
        %v6335 = vand.u32 %v247, 4294901760
        %v6336 = vsub.f32 %v247, %v6335
        %v6337 = vand.u32 %v6336, 4294901760
        %6338 = vmatmul.mubr.f32.gmra.mrb[0].mxu0 %v6337
        %v6339 = vpop.f32.mrb[0].mxu0
        %v6340 = vadd.f32 %v6214, %v6339
        %v6341 = vpop.f32.mrb[0].mxu0
        %6342 = vmatprep.mubr.f32.mxu0 0.0
        %v6343 = vand.u32 %v250, 4294901760
        %v6344 = vsub.f32 %v250, %v6343
        %v6345 = vand.u32 %v6344, 4294901760
        %6346 = vmatmul.mubr.f32.gmra.mrb[0].mxu0 %v6345
        %v6347 = vpop.f32.mrb[0].mxu0
        %v6348 = vadd.f32 %v6221, %v6347
        %v6349 = vpop.f32.mrb[0].mxu0
        %6350 = vmatprep.mubr.f32.mxu0 0.0
        %v6351 = vand.u32 %v253, 4294901760
        %v6352 = vsub.f32 %v253, %v6351
        %v6353 = vand.u32 %v6352, 4294901760
        %6354 = vmatmul.mubr.f32.gmra.mrb[0].mxu0 %v6353
        %v6355 = vpop.f32.mrb[0].mxu0
        %v6356 = vadd.f32 %v6228, %v6355
        %v6357 = vpop.f32.mrb[0].mxu0
        %6358 = vmatprep.mubr.f32.mxu0 0.0
        %v6359 = vand.u32 %v256, 4294901760
        %v6360 = vsub.f32 %v256, %v6359
        %v6361 = vand.u32 %v6360, 4294901760
        %6362 = vmatmul.mubr.f32.gmra.mrb[0].mxu0 %v6361
        %v6363 = vpop.f32.mrb[0].mxu0
        %v6364 = vadd.f32 %v6235, %v6363
        %v6365 = vpop.f32.mrb[0].mxu0
        %6366 = vmatprep.mubr.f32.mxu0 0.0
        %v6367 = vand.u32 %v259, 4294901760
        %v6368 = vsub.f32 %v259, %v6367
        %v6369 = vand.u32 %v6368, 4294901760
        %6370 = vmatmul.mubr.f32.gmra.mrb[0].mxu0 %v6369
        %v6371 = vpop.f32.mrb[0].mxu0
        %v6372 = vadd.f32 %v6242, %v6371
        %v6373 = vpop.f32.mrb[0].mxu0
        %6374 = vmatprep.mubr.f32.mxu0 0.0
        %v6375 = vand.u32 %v262, 4294901760
        %v6376 = vsub.f32 %v262, %v6375
        %v6377 = vand.u32 %v6376, 4294901760
        %6378 = vmatmul.mubr.f32.gmra.mrb[0].mxu0 %v6377
        %v6379 = vpop.f32.mrb[0].mxu0
        %v6380 = vadd.f32 %v6249, %v6379
        %v6381 = vpop.f32.mrb[0].mxu0
        %6382 = vdwg.mxu0
        %6383 = vmatprep.subr.mxu0 0.0
        %v6384 = vand.u32 %v5852, 4294901760
        %v6385 = vsub.f32 %v5852, %v6384
        %v6386 = vand.u32 %v6385, 4294901760
        %6387 = vmatpush1.msra.mxu0 %v6386
        %6388 = vmatprep.subr.mxu0 0.0
        %v6389 = vand.u32 %v5853, 4294901760
        %v6390 = vsub.f32 %v5853, %v6389
        %v6391 = vand.u32 %v6390, 4294901760
        %6392 = vmatpush1.msra.mxu0 %v6391
        %6393 = vmatprep.subr.mxu0 0.0
        %6394 = vmatpush1.msra.mxu0 0.0
        %6395 = vmatprep.subr.mxu0 0.0
        %6396 = vmatpush1.msra.mxu0 0.0
        %6397 = vmatprep.subr.mxu0 0.0
        %6398 = vmatpush1.msra.mxu0 0.0
        %6399 = vmatprep.subr.mxu0 0.0
        %6400 = vmatpush1.msra.mxu0 0.0
        %6401 = vmatprep.subr.mxu0 0.0
        %6402 = vmatpush1.msra.mxu0 0.0
        %6403 = vmatprep.subr.mxu0 0.0
        %6404 = vmatpush1.msra.mxu0 0.0
        %6405 = vmatprep.subr.mxu0 0.0
        %6406 = vmatpush1.msra.mxu0 0.0
        %6407 = vmatprep.subr.mxu0 0.0
        %6408 = vmatpush1.msra.mxu0 0.0
        %6409 = vmatprep.subr.mxu0 0.0
        %6410 = vmatpush1.msra.mxu0 0.0
        %6411 = vmatprep.subr.mxu0 0.0
        %6412 = vmatpush1.msra.mxu0 0.0
        %6413 = vmatprep.subr.mxu0 0.0
        %6414 = vmatpush1.msra.mxu0 0.0
        %6415 = vmatprep.subr.mxu0 0.0
        %6416 = vmatpush1.msra.mxu0 0.0
        %6417 = vmatprep.subr.mxu0 0.0
        %6418 = vmatpush1.msra.mxu0 0.0
        %6419 = vmatprep.subr.mxu0 0.0
        %6420 = vmatpush1.msra.mxu0 0.0
        %6421 = vmatprep.subr.mxu0 0.0
        %6422 = vmatpush1.msra.mxu0 0.0
        %6423 = vmatprep.subr.mxu0 0.0
        %6424 = vmatpush1.msra.mxu0 0.0
        %6425 = vmatprep.subr.mxu0 0.0
        %6426 = vmatpush1.msra.mxu0 0.0
        %6427 = vmatprep.subr.mxu0 0.0
        %6428 = vmatpush1.msra.mxu0 0.0
        %6429 = vmatprep.subr.mxu0 0.0
        %6430 = vmatpush1.msra.mxu0 0.0
        %6431 = vmatprep.subr.mxu0 0.0
        %6432 = vmatpush1.msra.mxu0 0.0
        %6433 = vmatprep.subr.mxu0 0.0
        %6434 = vmatpush1.msra.mxu0 0.0
        %6435 = vmatprep.subr.mxu0 0.0
        %6436 = vmatpush1.msra.mxu0 0.0
        %6437 = vmatprep.subr.mxu0 0.0
        %6438 = vmatpush1.msra.mxu0 0.0
        %6439 = vmatprep.subr.mxu0 0.0
        %6440 = vmatpush1.msra.mxu0 0.0
        %6441 = vmatprep.subr.mxu0 0.0
        %6442 = vmatpush1.msra.mxu0 0.0
        %6443 = vmatprep.subr.mxu0 0.0
        %6444 = vmatpush1.msra.mxu0 0.0
        %6445 = vmatprep.subr.mxu0 0.0
        %6446 = vmatpush1.msra.mxu0 0.0
        %6447 = vmatprep.subr.mxu0 0.0
        %6448 = vmatpush1.msra.mxu0 0.0
        %6449 = vmatprep.subr.mxu0 0.0
        %6450 = vmatpush1.msra.mxu0 0.0
        %6451 = vmatprep.subr.mxu0 0.0
        %6452 = vmatpush1.msra.mxu0 0.0
        %6453 = vmatprep.mubr.f32.mxu0 0.0
        %v6454 = vand.u32 %v241, 4294901760
        %6455 = vmatmul.mubr.f32.gmra.mrb[0].mxu0 %v6454
        %v6456 = vpop.f32.mrb[0].mxu0
        %v6457 = vadd.f32 %v6324, %v6456
        %v6458 = vpop.f32.mrb[0].mxu0
        %6459 = vmatprep.mubr.f32.mxu0 0.0
        %v6460 = vand.u32 %v244, 4294901760
        %6461 = vmatmul.mubr.f32.gmra.mrb[0].mxu0 %v6460
        %v6462 = vpop.f32.mrb[0].mxu0
        %v6463 = vadd.f32 %v6332, %v6462
        %v6464 = vpop.f32.mrb[0].mxu0
        %6465 = vmatprep.mubr.f32.mxu0 0.0
        %v6466 = vand.u32 %v247, 4294901760
        %6467 = vmatmul.mubr.f32.gmra.mrb[0].mxu0 %v6466
        %v6468 = vpop.f32.mrb[0].mxu0
        %v6469 = vadd.f32 %v6340, %v6468
        %v6470 = vpop.f32.mrb[0].mxu0
        %6471 = vmatprep.mubr.f32.mxu0 0.0
        %v6472 = vand.u32 %v250, 4294901760
        %6473 = vmatmul.mubr.f32.gmra.mrb[0].mxu0 %v6472
        %v6474 = vpop.f32.mrb[0].mxu0
        %v6475 = vadd.f32 %v6348, %v6474
        %v6476 = vpop.f32.mrb[0].mxu0
        %6477 = vmatprep.mubr.f32.mxu0 0.0
        %v6478 = vand.u32 %v253, 4294901760
        %6479 = vmatmul.mubr.f32.gmra.mrb[0].mxu0 %v6478
        %v6480 = vpop.f32.mrb[0].mxu0
        %v6481 = vadd.f32 %v6356, %v6480
        %v6482 = vpop.f32.mrb[0].mxu0
        %6483 = vmatprep.mubr.f32.mxu0 0.0
        %v6484 = vand.u32 %v256, 4294901760
        %6485 = vmatmul.mubr.f32.gmra.mrb[0].mxu0 %v6484
        %v6486 = vpop.f32.mrb[0].mxu0
        %v6487 = vadd.f32 %v6364, %v6486
        %v6488 = vpop.f32.mrb[0].mxu0
        %6489 = vmatprep.mubr.f32.mxu0 0.0
        %v6490 = vand.u32 %v259, 4294901760
        %6491 = vmatmul.mubr.f32.gmra.mrb[0].mxu0 %v6490
        %v6492 = vpop.f32.mrb[0].mxu0
        %v6493 = vadd.f32 %v6372, %v6492
        %v6494 = vpop.f32.mrb[0].mxu0
        %6495 = vmatprep.mubr.f32.mxu0 0.0
        %v6496 = vand.u32 %v262, 4294901760
        %6497 = vmatmul.mubr.f32.gmra.mrb[0].mxu0 %v6496
        %v6498 = vpop.f32.mrb[0].mxu0
        %v6499 = vadd.f32 %v6380, %v6498
        %v6500 = vpop.f32.mrb[0].mxu0
        %6501 = vdwg.mxu0
        %6502 = vmatprep.subr.mxu0 0.0
        %v6503 = vand.u32 %v5852, 4294901760
        %6504 = vmatpush1.msra.mxu0 %v6503
        %6505 = vmatprep.subr.mxu0 0.0
        %v6506 = vand.u32 %v5853, 4294901760
        %6507 = vmatpush1.msra.mxu0 %v6506
        %6508 = vmatprep.subr.mxu0 0.0
        %6509 = vmatpush1.msra.mxu0 0.0
        %6510 = vmatprep.subr.mxu0 0.0
        %6511 = vmatpush1.msra.mxu0 0.0
        %6512 = vmatprep.subr.mxu0 0.0
        %6513 = vmatpush1.msra.mxu0 0.0
        %6514 = vmatprep.subr.mxu0 0.0
        %6515 = vmatpush1.msra.mxu0 0.0
        %6516 = vmatprep.subr.mxu0 0.0
        %6517 = vmatpush1.msra.mxu0 0.0
        %6518 = vmatprep.subr.mxu0 0.0
        %6519 = vmatpush1.msra.mxu0 0.0
        %6520 = vmatprep.subr.mxu0 0.0
        %6521 = vmatpush1.msra.mxu0 0.0
        %6522 = vmatprep.subr.mxu0 0.0
        %6523 = vmatpush1.msra.mxu0 0.0
        %6524 = vmatprep.subr.mxu0 0.0
        %6525 = vmatpush1.msra.mxu0 0.0
        %6526 = vmatprep.subr.mxu0 0.0
        %6527 = vmatpush1.msra.mxu0 0.0
        %6528 = vmatprep.subr.mxu0 0.0
        %6529 = vmatpush1.msra.mxu0 0.0
        %6530 = vmatprep.subr.mxu0 0.0
        %6531 = vmatpush1.msra.mxu0 0.0
        %6532 = vmatprep.subr.mxu0 0.0
        %6533 = vmatpush1.msra.mxu0 0.0
        %6534 = vmatprep.subr.mxu0 0.0
        %6535 = vmatpush1.msra.mxu0 0.0
        %6536 = vmatprep.subr.mxu0 0.0
        %6537 = vmatpush1.msra.mxu0 0.0
        %6538 = vmatprep.subr.mxu0 0.0
        %6539 = vmatpush1.msra.mxu0 0.0
        %6540 = vmatprep.subr.mxu0 0.0
        %6541 = vmatpush1.msra.mxu0 0.0
        %6542 = vmatprep.subr.mxu0 0.0
        %6543 = vmatpush1.msra.mxu0 0.0
        %6544 = vmatprep.subr.mxu0 0.0
        %6545 = vmatpush1.msra.mxu0 0.0
        %6546 = vmatprep.subr.mxu0 0.0
        %6547 = vmatpush1.msra.mxu0 0.0
        %6548 = vmatprep.subr.mxu0 0.0
        %6549 = vmatpush1.msra.mxu0 0.0
        %6550 = vmatprep.subr.mxu0 0.0
        %6551 = vmatpush1.msra.mxu0 0.0
        %6552 = vmatprep.subr.mxu0 0.0
        %6553 = vmatpush1.msra.mxu0 0.0
        %6554 = vmatprep.subr.mxu0 0.0
        %6555 = vmatpush1.msra.mxu0 0.0
        %6556 = vmatprep.subr.mxu0 0.0
        %6557 = vmatpush1.msra.mxu0 0.0
        %6558 = vmatprep.subr.mxu0 0.0
        %6559 = vmatpush1.msra.mxu0 0.0
        %6560 = vmatprep.subr.mxu0 0.0
        %6561 = vmatpush1.msra.mxu0 0.0
        %6562 = vmatprep.subr.mxu0 0.0
        %6563 = vmatpush1.msra.mxu0 0.0
        %6564 = vmatprep.subr.mxu0 0.0
        %6565 = vmatpush1.msra.mxu0 0.0
        %6566 = vmatprep.subr.mxu0 0.0
        %6567 = vmatpush1.msra.mxu0 0.0
        %6568 = vmatprep.mubr.f32.mxu0 0.0
        %v6569 = vand.u32 %v241, 4294901760
        %6570 = vmatmul.mubr.f32.gmra.mrb[0].mxu0 %v6569
        %v6571 = vpop.f32.mrb[0].mxu0
        %v6572 = vadd.f32 %v6457, %v6571
        %v6573 = vpop.f32.mrb[0].mxu0
        %6574 = vmatprep.mubr.f32.mxu0 0.0
        %v6575 = vand.u32 %v244, 4294901760
        %6576 = vmatmul.mubr.f32.gmra.mrb[0].mxu0 %v6575
        %v6577 = vpop.f32.mrb[0].mxu0
        %v6578 = vadd.f32 %v6463, %v6577
        %v6579 = vpop.f32.mrb[0].mxu0
        %6580 = vmatprep.mubr.f32.mxu0 0.0
        %v6581 = vand.u32 %v247, 4294901760
        %6582 = vmatmul.mubr.f32.gmra.mrb[0].mxu0 %v6581
        %v6583 = vpop.f32.mrb[0].mxu0
        %v6584 = vadd.f32 %v6469, %v6583
        %v6585 = vpop.f32.mrb[0].mxu0
        %6586 = vmatprep.mubr.f32.mxu0 0.0
        %v6587 = vand.u32 %v250, 4294901760
        %6588 = vmatmul.mubr.f32.gmra.mrb[0].mxu0 %v6587
        %v6589 = vpop.f32.mrb[0].mxu0
        %v6590 = vadd.f32 %v6475, %v6589
        %v6591 = vpop.f32.mrb[0].mxu0
        %6592 = vmatprep.mubr.f32.mxu0 0.0
        %v6593 = vand.u32 %v253, 4294901760
        %6594 = vmatmul.mubr.f32.gmra.mrb[0].mxu0 %v6593
        %v6595 = vpop.f32.mrb[0].mxu0
        %v6596 = vadd.f32 %v6481, %v6595
        %v6597 = vpop.f32.mrb[0].mxu0
        %6598 = vmatprep.mubr.f32.mxu0 0.0
        %v6599 = vand.u32 %v256, 4294901760
        %6600 = vmatmul.mubr.f32.gmra.mrb[0].mxu0 %v6599
        %v6601 = vpop.f32.mrb[0].mxu0
        %v6602 = vadd.f32 %v6487, %v6601
        %v6603 = vpop.f32.mrb[0].mxu0
        %6604 = vmatprep.mubr.f32.mxu0 0.0
        %v6605 = vand.u32 %v259, 4294901760
        %6606 = vmatmul.mubr.f32.gmra.mrb[0].mxu0 %v6605
        %v6607 = vpop.f32.mrb[0].mxu0
        %v6608 = vadd.f32 %v6493, %v6607
        %v6609 = vpop.f32.mrb[0].mxu0
        %6610 = vmatprep.mubr.f32.mxu0 0.0
        %v6611 = vand.u32 %v262, 4294901760
        %6612 = vmatmul.mubr.f32.gmra.mrb[0].mxu0 %v6611
        %v6613 = vpop.f32.mrb[0].mxu0
        %v6614 = vadd.f32 %v6499, %v6613
        %v6615 = vpop.f32.mrb[0].mxu0
        %6616 = vdwg.mxu0
        %v6618 = vsel %vm227, %v5855, 0
        %v6621 = vsel %vm227, %v5856, 0
        %6623 = vmatprep.subr.mxu0 0.0
        %v6624 = vand.u32 %v6572, 4294901760
        %6625 = vmatpush1.msra.mxu0 %v6624
        %6626 = vmatprep.subr.mxu0 0.0
        %v6627 = vand.u32 %v6578, 4294901760
        %6628 = vmatpush1.msra.mxu0 %v6627
        %6629 = vmatprep.subr.mxu0 0.0
        %6630 = vmatpush1.msra.mxu0 0.0
        %6631 = vmatprep.subr.mxu0 0.0
        %6632 = vmatpush1.msra.mxu0 0.0
        %6633 = vmatprep.subr.mxu0 0.0
        %6634 = vmatpush1.msra.mxu0 0.0
        %6635 = vmatprep.subr.mxu0 0.0
        %6636 = vmatpush1.msra.mxu0 0.0
        %6637 = vmatprep.subr.mxu0 0.0
        %6638 = vmatpush1.msra.mxu0 0.0
        %6639 = vmatprep.subr.mxu0 0.0
        %6640 = vmatpush1.msra.mxu0 0.0
        %6641 = vmatprep.subr.mxu0 0.0
        %6642 = vmatpush1.msra.mxu0 0.0
        %6643 = vmatprep.subr.mxu0 0.0
        %6644 = vmatpush1.msra.mxu0 0.0
        %6645 = vmatprep.subr.mxu0 0.0
        %6646 = vmatpush1.msra.mxu0 0.0
        %6647 = vmatprep.subr.mxu0 0.0
        %6648 = vmatpush1.msra.mxu0 0.0
        %6649 = vmatprep.subr.mxu0 0.0
        %6650 = vmatpush1.msra.mxu0 0.0
        %6651 = vmatprep.subr.mxu0 0.0
        %6652 = vmatpush1.msra.mxu0 0.0
        %6653 = vmatprep.subr.mxu0 0.0
        %6654 = vmatpush1.msra.mxu0 0.0
        %6655 = vmatprep.subr.mxu0 0.0
        %6656 = vmatpush1.msra.mxu0 0.0
        %6657 = vmatprep.subr.mxu0 0.0
        %6658 = vmatpush1.msra.mxu0 0.0
        %6659 = vmatprep.subr.mxu0 0.0
        %6660 = vmatpush1.msra.mxu0 0.0
        %6661 = vmatprep.subr.mxu0 0.0
        %6662 = vmatpush1.msra.mxu0 0.0
        %6663 = vmatprep.subr.mxu0 0.0
        %6664 = vmatpush1.msra.mxu0 0.0
        %6665 = vmatprep.subr.mxu0 0.0
        %6666 = vmatpush1.msra.mxu0 0.0
        %6667 = vmatprep.subr.mxu0 0.0
        %6668 = vmatpush1.msra.mxu0 0.0
        %6669 = vmatprep.subr.mxu0 0.0
        %6670 = vmatpush1.msra.mxu0 0.0
        %6671 = vmatprep.subr.mxu0 0.0
        %6672 = vmatpush1.msra.mxu0 0.0
        %6673 = vmatprep.subr.mxu0 0.0
        %6674 = vmatpush1.msra.mxu0 0.0
        %6675 = vmatprep.subr.mxu0 0.0
        %6676 = vmatpush1.msra.mxu0 0.0
        %6677 = vmatprep.subr.mxu0 0.0
        %6678 = vmatpush1.msra.mxu0 0.0
        %6679 = vmatprep.subr.mxu0 0.0
        %6680 = vmatpush1.msra.mxu0 0.0
        %6681 = vmatprep.subr.mxu0 0.0
        %6682 = vmatpush1.msra.mxu0 0.0
        %6683 = vmatprep.subr.mxu0 0.0
        %6684 = vmatpush1.msra.mxu0 0.0
        %6685 = vmatprep.subr.mxu0 0.0
        %6686 = vmatpush1.msra.mxu0 0.0
        %6687 = vmatprep.subr.mxu0 0.0
        %6688 = vmatpush1.msra.mxu0 0.0
        %6689 = vmatprep.mubr.f32.mxu0 0.0
        %v6690 = vand.u32 %v6618, 4294901760
        %v6691 = vsub.f32 %v6618, %v6690
        %v6692 = vand.u32 %v6691, 4294901760
        %v6693 = vsub.f32 %v6691, %v6692
        %v6694 = vand.u32 %v6693, 4294901760
        %6695 = vmatmul.mubr.f32.gmra.mrb[0].mxu0 %v6694
        %v6696 = vpop.f32.mrb[0].mxu0
        %v6697 = vadd.f32 0.0, %v6696
        %v6698 = vpop.f32.mrb[0].mxu0
        %6699 = vmatprep.mubr.f32.mxu0 0.0
        %v6700 = vand.u32 %v6621, 4294901760
        %v6701 = vsub.f32 %v6621, %v6700
        %v6702 = vand.u32 %v6701, 4294901760
        %v6703 = vsub.f32 %v6701, %v6702
        %v6704 = vand.u32 %v6703, 4294901760
        %6705 = vmatmul.mubr.f32.gmra.mrb[0].mxu0 %v6704
        %v6706 = vpop.f32.mrb[0].mxu0
        %v6707 = vadd.f32 0.0, %v6706
        %v6708 = vpop.f32.mrb[0].mxu0
        %6709 = vdwg.mxu0
        %6710 = vmatprep.subr.mxu0 0.0
        %v6711 = vand.u32 %v6572, 4294901760
        %v6712 = vsub.f32 %v6572, %v6711
        %v6713 = vand.u32 %v6712, 4294901760
        %v6714 = vsub.f32 %v6712, %v6713
        %v6715 = vand.u32 %v6714, 4294901760
        %6716 = vmatpush1.msra.mxu0 %v6715
        %6717 = vmatprep.subr.mxu0 0.0
        %v6718 = vand.u32 %v6578, 4294901760
        %v6719 = vsub.f32 %v6578, %v6718
        %v6720 = vand.u32 %v6719, 4294901760
        %v6721 = vsub.f32 %v6719, %v6720
        %v6722 = vand.u32 %v6721, 4294901760
        %6723 = vmatpush1.msra.mxu0 %v6722
        %6724 = vmatprep.subr.mxu0 0.0
        %6725 = vmatpush1.msra.mxu0 0.0
        %6726 = vmatprep.subr.mxu0 0.0
        %6727 = vmatpush1.msra.mxu0 0.0
        %6728 = vmatprep.subr.mxu0 0.0
        %6729 = vmatpush1.msra.mxu0 0.0
        %6730 = vmatprep.subr.mxu0 0.0
        %6731 = vmatpush1.msra.mxu0 0.0
        %6732 = vmatprep.subr.mxu0 0.0
        %6733 = vmatpush1.msra.mxu0 0.0
        %6734 = vmatprep.subr.mxu0 0.0
        %6735 = vmatpush1.msra.mxu0 0.0
        %6736 = vmatprep.subr.mxu0 0.0
        %6737 = vmatpush1.msra.mxu0 0.0
        %6738 = vmatprep.subr.mxu0 0.0
        %6739 = vmatpush1.msra.mxu0 0.0
        %6740 = vmatprep.subr.mxu0 0.0
        %6741 = vmatpush1.msra.mxu0 0.0
        %6742 = vmatprep.subr.mxu0 0.0
        %6743 = vmatpush1.msra.mxu0 0.0
        %6744 = vmatprep.subr.mxu0 0.0
        %6745 = vmatpush1.msra.mxu0 0.0
        %6746 = vmatprep.subr.mxu0 0.0
        %6747 = vmatpush1.msra.mxu0 0.0
        %6748 = vmatprep.subr.mxu0 0.0
        %6749 = vmatpush1.msra.mxu0 0.0
        %6750 = vmatprep.subr.mxu0 0.0
        %6751 = vmatpush1.msra.mxu0 0.0
        %6752 = vmatprep.subr.mxu0 0.0
        %6753 = vmatpush1.msra.mxu0 0.0
        %6754 = vmatprep.subr.mxu0 0.0
        %6755 = vmatpush1.msra.mxu0 0.0
        %6756 = vmatprep.subr.mxu0 0.0
        %6757 = vmatpush1.msra.mxu0 0.0
        %6758 = vmatprep.subr.mxu0 0.0
        %6759 = vmatpush1.msra.mxu0 0.0
        %6760 = vmatprep.subr.mxu0 0.0
        %6761 = vmatpush1.msra.mxu0 0.0
        %6762 = vmatprep.subr.mxu0 0.0
        %6763 = vmatpush1.msra.mxu0 0.0
        %6764 = vmatprep.subr.mxu0 0.0
        %6765 = vmatpush1.msra.mxu0 0.0
        %6766 = vmatprep.subr.mxu0 0.0
        %6767 = vmatpush1.msra.mxu0 0.0
        %6768 = vmatprep.subr.mxu0 0.0
        %6769 = vmatpush1.msra.mxu0 0.0
        %6770 = vmatprep.subr.mxu0 0.0
        %6771 = vmatpush1.msra.mxu0 0.0
        %6772 = vmatprep.subr.mxu0 0.0
        %6773 = vmatpush1.msra.mxu0 0.0
        %6774 = vmatprep.subr.mxu0 0.0
        %6775 = vmatpush1.msra.mxu0 0.0
        %6776 = vmatprep.subr.mxu0 0.0
        %6777 = vmatpush1.msra.mxu0 0.0
        %6778 = vmatprep.subr.mxu0 0.0
        %6779 = vmatpush1.msra.mxu0 0.0
        %6780 = vmatprep.subr.mxu0 0.0
        %6781 = vmatpush1.msra.mxu0 0.0
        %6782 = vmatprep.subr.mxu0 0.0
        %6783 = vmatpush1.msra.mxu0 0.0
        %6784 = vmatprep.mubr.f32.mxu0 0.0
        %v6785 = vand.u32 %v6618, 4294901760
        %6786 = vmatmul.mubr.f32.gmra.mrb[0].mxu0 %v6785
        %v6787 = vpop.f32.mrb[0].mxu0
        %v6788 = vadd.f32 %v6697, %v6787
        %v6789 = vpop.f32.mrb[0].mxu0
        %6790 = vmatprep.mubr.f32.mxu0 0.0
        %v6791 = vand.u32 %v6621, 4294901760
        %6792 = vmatmul.mubr.f32.gmra.mrb[0].mxu0 %v6791
        %v6793 = vpop.f32.mrb[0].mxu0
        %v6794 = vadd.f32 %v6707, %v6793
        %v6795 = vpop.f32.mrb[0].mxu0
        %6796 = vdwg.mxu0
        %6797 = vmatprep.subr.mxu0 0.0
        %v6798 = vand.u32 %v6572, 4294901760
        %v6799 = vsub.f32 %v6572, %v6798
        %6800 = vmatpush1.msra.mxu0 %v6799
        %6801 = vmatprep.subr.mxu0 0.0
        %v6802 = vand.u32 %v6578, 4294901760
        %v6803 = vsub.f32 %v6578, %v6802
        %6804 = vmatpush1.msra.mxu0 %v6803
        %6805 = vmatprep.subr.mxu0 0.0
        %6806 = vmatpush1.msra.mxu0 0.0
        %6807 = vmatprep.subr.mxu0 0.0
        %6808 = vmatpush1.msra.mxu0 0.0
        %6809 = vmatprep.subr.mxu0 0.0
        %6810 = vmatpush1.msra.mxu0 0.0
        %6811 = vmatprep.subr.mxu0 0.0
        %6812 = vmatpush1.msra.mxu0 0.0
        %6813 = vmatprep.subr.mxu0 0.0
        %6814 = vmatpush1.msra.mxu0 0.0
        %6815 = vmatprep.subr.mxu0 0.0
        %6816 = vmatpush1.msra.mxu0 0.0
        %6817 = vmatprep.subr.mxu0 0.0
        %6818 = vmatpush1.msra.mxu0 0.0
        %6819 = vmatprep.subr.mxu0 0.0
        %6820 = vmatpush1.msra.mxu0 0.0
        %6821 = vmatprep.subr.mxu0 0.0
        %6822 = vmatpush1.msra.mxu0 0.0
        %6823 = vmatprep.subr.mxu0 0.0
        %6824 = vmatpush1.msra.mxu0 0.0
        %6825 = vmatprep.subr.mxu0 0.0
        %6826 = vmatpush1.msra.mxu0 0.0
        %6827 = vmatprep.subr.mxu0 0.0
        %6828 = vmatpush1.msra.mxu0 0.0
        %6829 = vmatprep.subr.mxu0 0.0
        %6830 = vmatpush1.msra.mxu0 0.0
        %6831 = vmatprep.subr.mxu0 0.0
        %6832 = vmatpush1.msra.mxu0 0.0
        %6833 = vmatprep.subr.mxu0 0.0
        %6834 = vmatpush1.msra.mxu0 0.0
        %6835 = vmatprep.subr.mxu0 0.0
        %6836 = vmatpush1.msra.mxu0 0.0
        %6837 = vmatprep.subr.mxu0 0.0
        %6838 = vmatpush1.msra.mxu0 0.0
        %6839 = vmatprep.subr.mxu0 0.0
        %6840 = vmatpush1.msra.mxu0 0.0
        %6841 = vmatprep.subr.mxu0 0.0
        %6842 = vmatpush1.msra.mxu0 0.0
        %6843 = vmatprep.subr.mxu0 0.0
        %6844 = vmatpush1.msra.mxu0 0.0
        %6845 = vmatprep.subr.mxu0 0.0
        %6846 = vmatpush1.msra.mxu0 0.0
        %6847 = vmatprep.subr.mxu0 0.0
        %6848 = vmatpush1.msra.mxu0 0.0
        %6849 = vmatprep.subr.mxu0 0.0
        %6850 = vmatpush1.msra.mxu0 0.0
        %6851 = vmatprep.subr.mxu0 0.0
        %6852 = vmatpush1.msra.mxu0 0.0
        %6853 = vmatprep.subr.mxu0 0.0
        %6854 = vmatpush1.msra.mxu0 0.0
        %6855 = vmatprep.subr.mxu0 0.0
        %6856 = vmatpush1.msra.mxu0 0.0
        %6857 = vmatprep.subr.mxu0 0.0
        %6858 = vmatpush1.msra.mxu0 0.0
        %6859 = vmatprep.subr.mxu0 0.0
        %6860 = vmatpush1.msra.mxu0 0.0
        %6861 = vmatprep.subr.mxu0 0.0
        %6862 = vmatpush1.msra.mxu0 0.0
        %6863 = vmatprep.subr.mxu0 0.0
        %6864 = vmatpush1.msra.mxu0 0.0
        %6865 = vmatprep.mubr.f32.mxu0 0.0
        %v6866 = vand.u32 %v6618, 4294901760
        %v6867 = vsub.f32 %v6618, %v6866
        %6868 = vmatmul.mubr.f32.gmra.mrb[0].mxu0 %v6867
        %v6869 = vpop.f32.mrb[0].mxu0
        %v6870 = vadd.f32 %v6788, %v6869
        %v6871 = vpop.f32.mrb[0].mxu0
        %6872 = vmatprep.mubr.f32.mxu0 0.0
        %v6873 = vand.u32 %v6621, 4294901760
        %v6874 = vsub.f32 %v6621, %v6873
        %6875 = vmatmul.mubr.f32.gmra.mrb[0].mxu0 %v6874
        %v6876 = vpop.f32.mrb[0].mxu0
        %v6877 = vadd.f32 %v6794, %v6876
        %v6878 = vpop.f32.mrb[0].mxu0
        %6879 = vdwg.mxu0
        %6880 = vmatprep.subr.mxu0 0.0
        %v6881 = vand.u32 %v6572, 4294901760
        %6882 = vmatpush1.msra.mxu0 %v6881
        %6883 = vmatprep.subr.mxu0 0.0
        %v6884 = vand.u32 %v6578, 4294901760
        %6885 = vmatpush1.msra.mxu0 %v6884
        %6886 = vmatprep.subr.mxu0 0.0
        %6887 = vmatpush1.msra.mxu0 0.0
        %6888 = vmatprep.subr.mxu0 0.0
        %6889 = vmatpush1.msra.mxu0 0.0
        %6890 = vmatprep.subr.mxu0 0.0
        %6891 = vmatpush1.msra.mxu0 0.0
        %6892 = vmatprep.subr.mxu0 0.0
        %6893 = vmatpush1.msra.mxu0 0.0
        %6894 = vmatprep.subr.mxu0 0.0
        %6895 = vmatpush1.msra.mxu0 0.0
        %6896 = vmatprep.subr.mxu0 0.0
        %6897 = vmatpush1.msra.mxu0 0.0
        %6898 = vmatprep.subr.mxu0 0.0
        %6899 = vmatpush1.msra.mxu0 0.0
        %6900 = vmatprep.subr.mxu0 0.0
        %6901 = vmatpush1.msra.mxu0 0.0
        %6902 = vmatprep.subr.mxu0 0.0
        %6903 = vmatpush1.msra.mxu0 0.0
        %6904 = vmatprep.subr.mxu0 0.0
        %6905 = vmatpush1.msra.mxu0 0.0
        %6906 = vmatprep.subr.mxu0 0.0
        %6907 = vmatpush1.msra.mxu0 0.0
        %6908 = vmatprep.subr.mxu0 0.0
        %6909 = vmatpush1.msra.mxu0 0.0
        %6910 = vmatprep.subr.mxu0 0.0
        %6911 = vmatpush1.msra.mxu0 0.0
        %6912 = vmatprep.subr.mxu0 0.0
        %6913 = vmatpush1.msra.mxu0 0.0
        %6914 = vmatprep.subr.mxu0 0.0
        %6915 = vmatpush1.msra.mxu0 0.0
        %6916 = vmatprep.subr.mxu0 0.0
        %6917 = vmatpush1.msra.mxu0 0.0
        %6918 = vmatprep.subr.mxu0 0.0
        %6919 = vmatpush1.msra.mxu0 0.0
        %6920 = vmatprep.subr.mxu0 0.0
        %6921 = vmatpush1.msra.mxu0 0.0
        %6922 = vmatprep.subr.mxu0 0.0
        %6923 = vmatpush1.msra.mxu0 0.0
        %6924 = vmatprep.subr.mxu0 0.0
        %6925 = vmatpush1.msra.mxu0 0.0
        %6926 = vmatprep.subr.mxu0 0.0
        %6927 = vmatpush1.msra.mxu0 0.0
        %6928 = vmatprep.subr.mxu0 0.0
        %6929 = vmatpush1.msra.mxu0 0.0
        %6930 = vmatprep.subr.mxu0 0.0
        %6931 = vmatpush1.msra.mxu0 0.0
        %6932 = vmatprep.subr.mxu0 0.0
        %6933 = vmatpush1.msra.mxu0 0.0
        %6934 = vmatprep.subr.mxu0 0.0
        %6935 = vmatpush1.msra.mxu0 0.0
        %6936 = vmatprep.subr.mxu0 0.0
        %6937 = vmatpush1.msra.mxu0 0.0
        %6938 = vmatprep.subr.mxu0 0.0
        %6939 = vmatpush1.msra.mxu0 0.0
        %6940 = vmatprep.subr.mxu0 0.0
        %6941 = vmatpush1.msra.mxu0 0.0
        %6942 = vmatprep.subr.mxu0 0.0
        %6943 = vmatpush1.msra.mxu0 0.0
        %6944 = vmatprep.subr.mxu0 0.0
        %6945 = vmatpush1.msra.mxu0 0.0
        %6946 = vmatprep.mubr.f32.mxu0 0.0
        %v6947 = vand.u32 %v6618, 4294901760
        %v6948 = vsub.f32 %v6618, %v6947
        %v6949 = vand.u32 %v6948, 4294901760
        %6950 = vmatmul.mubr.f32.gmra.mrb[0].mxu0 %v6949
        %v6951 = vpop.f32.mrb[0].mxu0
        %v6952 = vadd.f32 %v6870, %v6951
        %v6953 = vpop.f32.mrb[0].mxu0
        %6954 = vmatprep.mubr.f32.mxu0 0.0
        %v6955 = vand.u32 %v6621, 4294901760
        %v6956 = vsub.f32 %v6621, %v6955
        %v6957 = vand.u32 %v6956, 4294901760
        %6958 = vmatmul.mubr.f32.gmra.mrb[0].mxu0 %v6957
        %v6959 = vpop.f32.mrb[0].mxu0
        %v6960 = vadd.f32 %v6877, %v6959
        %v6961 = vpop.f32.mrb[0].mxu0
        %6962 = vdwg.mxu0
        %6963 = vmatprep.subr.mxu0 0.0
        %v6964 = vand.u32 %v6572, 4294901760
        %v6965 = vsub.f32 %v6572, %v6964
        %v6966 = vand.u32 %v6965, 4294901760
        %6967 = vmatpush1.msra.mxu0 %v6966
        %6968 = vmatprep.subr.mxu0 0.0
        %v6969 = vand.u32 %v6578, 4294901760
        %v6970 = vsub.f32 %v6578, %v6969
        %v6971 = vand.u32 %v6970, 4294901760
        %6972 = vmatpush1.msra.mxu0 %v6971
        %6973 = vmatprep.subr.mxu0 0.0
        %6974 = vmatpush1.msra.mxu0 0.0
        %6975 = vmatprep.subr.mxu0 0.0
        %6976 = vmatpush1.msra.mxu0 0.0
        %6977 = vmatprep.subr.mxu0 0.0
        %6978 = vmatpush1.msra.mxu0 0.0
        %6979 = vmatprep.subr.mxu0 0.0
        %6980 = vmatpush1.msra.mxu0 0.0
        %6981 = vmatprep.subr.mxu0 0.0
        %6982 = vmatpush1.msra.mxu0 0.0
        %6983 = vmatprep.subr.mxu0 0.0
        %6984 = vmatpush1.msra.mxu0 0.0
        %6985 = vmatprep.subr.mxu0 0.0
        %6986 = vmatpush1.msra.mxu0 0.0
        %6987 = vmatprep.subr.mxu0 0.0
        %6988 = vmatpush1.msra.mxu0 0.0
        %6989 = vmatprep.subr.mxu0 0.0
        %6990 = vmatpush1.msra.mxu0 0.0
        %6991 = vmatprep.subr.mxu0 0.0
        %6992 = vmatpush1.msra.mxu0 0.0
        %6993 = vmatprep.subr.mxu0 0.0
        %6994 = vmatpush1.msra.mxu0 0.0
        %6995 = vmatprep.subr.mxu0 0.0
        %6996 = vmatpush1.msra.mxu0 0.0
        %6997 = vmatprep.subr.mxu0 0.0
        %6998 = vmatpush1.msra.mxu0 0.0
        %6999 = vmatprep.subr.mxu0 0.0
        %7000 = vmatpush1.msra.mxu0 0.0
        %7001 = vmatprep.subr.mxu0 0.0
        %7002 = vmatpush1.msra.mxu0 0.0
        %7003 = vmatprep.subr.mxu0 0.0
        %7004 = vmatpush1.msra.mxu0 0.0
        %7005 = vmatprep.subr.mxu0 0.0
        %7006 = vmatpush1.msra.mxu0 0.0
        %7007 = vmatprep.subr.mxu0 0.0
        %7008 = vmatpush1.msra.mxu0 0.0
        %7009 = vmatprep.subr.mxu0 0.0
        %7010 = vmatpush1.msra.mxu0 0.0
        %7011 = vmatprep.subr.mxu0 0.0
        %7012 = vmatpush1.msra.mxu0 0.0
        %7013 = vmatprep.subr.mxu0 0.0
        %7014 = vmatpush1.msra.mxu0 0.0
        %7015 = vmatprep.subr.mxu0 0.0
        %7016 = vmatpush1.msra.mxu0 0.0
        %7017 = vmatprep.subr.mxu0 0.0
        %7018 = vmatpush1.msra.mxu0 0.0
        %7019 = vmatprep.subr.mxu0 0.0
        %7020 = vmatpush1.msra.mxu0 0.0
        %7021 = vmatprep.subr.mxu0 0.0
        %7022 = vmatpush1.msra.mxu0 0.0
        %7023 = vmatprep.subr.mxu0 0.0
        %7024 = vmatpush1.msra.mxu0 0.0
        %7025 = vmatprep.subr.mxu0 0.0
        %7026 = vmatpush1.msra.mxu0 0.0
        %7027 = vmatprep.subr.mxu0 0.0
        %7028 = vmatpush1.msra.mxu0 0.0
        %7029 = vmatprep.subr.mxu0 0.0
        %7030 = vmatpush1.msra.mxu0 0.0
        %7031 = vmatprep.subr.mxu0 0.0
        %7032 = vmatpush1.msra.mxu0 0.0
        %7033 = vmatprep.mubr.f32.mxu0 0.0
        %v7034 = vand.u32 %v6618, 4294901760
        %7035 = vmatmul.mubr.f32.gmra.mrb[0].mxu0 %v7034
        %v7036 = vpop.f32.mrb[0].mxu0
        %v7037 = vadd.f32 %v6952, %v7036
        %v7038 = vpop.f32.mrb[0].mxu0
        %7039 = vmatprep.mubr.f32.mxu0 0.0
        %v7040 = vand.u32 %v6621, 4294901760
        %7041 = vmatmul.mubr.f32.gmra.mrb[0].mxu0 %v7040
        %v7042 = vpop.f32.mrb[0].mxu0
        %v7043 = vadd.f32 %v6960, %v7042
        %v7044 = vpop.f32.mrb[0].mxu0
        %7045 = vdwg.mxu0
        %7046 = vmatprep.subr.mxu0 0.0
        %v7047 = vand.u32 %v6572, 4294901760
        %7048 = vmatpush1.msra.mxu0 %v7047
        %7049 = vmatprep.subr.mxu0 0.0
        %v7050 = vand.u32 %v6578, 4294901760
        %7051 = vmatpush1.msra.mxu0 %v7050
        %7052 = vmatprep.subr.mxu0 0.0
        %7053 = vmatpush1.msra.mxu0 0.0
        %7054 = vmatprep.subr.mxu0 0.0
        %7055 = vmatpush1.msra.mxu0 0.0
        %7056 = vmatprep.subr.mxu0 0.0
        %7057 = vmatpush1.msra.mxu0 0.0
        %7058 = vmatprep.subr.mxu0 0.0
        %7059 = vmatpush1.msra.mxu0 0.0
        %7060 = vmatprep.subr.mxu0 0.0
        %7061 = vmatpush1.msra.mxu0 0.0
        %7062 = vmatprep.subr.mxu0 0.0
        %7063 = vmatpush1.msra.mxu0 0.0
        %7064 = vmatprep.subr.mxu0 0.0
        %7065 = vmatpush1.msra.mxu0 0.0
        %7066 = vmatprep.subr.mxu0 0.0
        %7067 = vmatpush1.msra.mxu0 0.0
        %7068 = vmatprep.subr.mxu0 0.0
        %7069 = vmatpush1.msra.mxu0 0.0
        %7070 = vmatprep.subr.mxu0 0.0
        %7071 = vmatpush1.msra.mxu0 0.0
        %7072 = vmatprep.subr.mxu0 0.0
        %7073 = vmatpush1.msra.mxu0 0.0
        %7074 = vmatprep.subr.mxu0 0.0
        %7075 = vmatpush1.msra.mxu0 0.0
        %7076 = vmatprep.subr.mxu0 0.0
        %7077 = vmatpush1.msra.mxu0 0.0
        %7078 = vmatprep.subr.mxu0 0.0
        %7079 = vmatpush1.msra.mxu0 0.0
        %7080 = vmatprep.subr.mxu0 0.0
        %7081 = vmatpush1.msra.mxu0 0.0
        %7082 = vmatprep.subr.mxu0 0.0
        %7083 = vmatpush1.msra.mxu0 0.0
        %7084 = vmatprep.subr.mxu0 0.0
        %7085 = vmatpush1.msra.mxu0 0.0
        %7086 = vmatprep.subr.mxu0 0.0
        %7087 = vmatpush1.msra.mxu0 0.0
        %7088 = vmatprep.subr.mxu0 0.0
        %7089 = vmatpush1.msra.mxu0 0.0
        %7090 = vmatprep.subr.mxu0 0.0
        %7091 = vmatpush1.msra.mxu0 0.0
        %7092 = vmatprep.subr.mxu0 0.0
        %7093 = vmatpush1.msra.mxu0 0.0
        %7094 = vmatprep.subr.mxu0 0.0
        %7095 = vmatpush1.msra.mxu0 0.0
        %7096 = vmatprep.subr.mxu0 0.0
        %7097 = vmatpush1.msra.mxu0 0.0
        %7098 = vmatprep.subr.mxu0 0.0
        %7099 = vmatpush1.msra.mxu0 0.0
        %7100 = vmatprep.subr.mxu0 0.0
        %7101 = vmatpush1.msra.mxu0 0.0
        %7102 = vmatprep.subr.mxu0 0.0
        %7103 = vmatpush1.msra.mxu0 0.0
        %7104 = vmatprep.subr.mxu0 0.0
        %7105 = vmatpush1.msra.mxu0 0.0
        %7106 = vmatprep.subr.mxu0 0.0
        %7107 = vmatpush1.msra.mxu0 0.0
        %7108 = vmatprep.subr.mxu0 0.0
        %7109 = vmatpush1.msra.mxu0 0.0
        %7110 = vmatprep.subr.mxu0 0.0
        %7111 = vmatpush1.msra.mxu0 0.0
        %7112 = vmatprep.mubr.f32.mxu0 0.0
        %v7113 = vand.u32 %v6618, 4294901760
        %7114 = vmatmul.mubr.f32.gmra.mrb[0].mxu0 %v7113
        %v7115 = vpop.f32.mrb[0].mxu0
        %v7116 = vadd.f32 %v7037, %v7115
        %v7117 = vpop.f32.mrb[0].mxu0
        %7118 = vmatprep.mubr.f32.mxu0 0.0
        %v7119 = vand.u32 %v6621, 4294901760
        %7120 = vmatmul.mubr.f32.gmra.mrb[0].mxu0 %v7119
        %v7121 = vpop.f32.mrb[0].mxu0
        %v7122 = vadd.f32 %v7043, %v7121
        %v7123 = vpop.f32.mrb[0].mxu0
        %7124 = vdwg.mxu0
        %7125 = vmatprep.subr.mxu0 0.0
        %v7126 = vand.u32 %v6584, 4294901760
        %7127 = vmatpush1.msra.mxu0 %v7126
        %7128 = vmatprep.subr.mxu0 0.0
        %v7129 = vand.u32 %v6590, 4294901760
        %7130 = vmatpush1.msra.mxu0 %v7129
        %7131 = vmatprep.subr.mxu0 0.0
        %7132 = vmatpush1.msra.mxu0 0.0
        %7133 = vmatprep.subr.mxu0 0.0
        %7134 = vmatpush1.msra.mxu0 0.0
        %7135 = vmatprep.subr.mxu0 0.0
        %7136 = vmatpush1.msra.mxu0 0.0
        %7137 = vmatprep.subr.mxu0 0.0
        %7138 = vmatpush1.msra.mxu0 0.0
        %7139 = vmatprep.subr.mxu0 0.0
        %7140 = vmatpush1.msra.mxu0 0.0
        %7141 = vmatprep.subr.mxu0 0.0
        %7142 = vmatpush1.msra.mxu0 0.0
        %7143 = vmatprep.subr.mxu0 0.0
        %7144 = vmatpush1.msra.mxu0 0.0
        %7145 = vmatprep.subr.mxu0 0.0
        %7146 = vmatpush1.msra.mxu0 0.0
        %7147 = vmatprep.subr.mxu0 0.0
        %7148 = vmatpush1.msra.mxu0 0.0
        %7149 = vmatprep.subr.mxu0 0.0
        %7150 = vmatpush1.msra.mxu0 0.0
        %7151 = vmatprep.subr.mxu0 0.0
        %7152 = vmatpush1.msra.mxu0 0.0
        %7153 = vmatprep.subr.mxu0 0.0
        %7154 = vmatpush1.msra.mxu0 0.0
        %7155 = vmatprep.subr.mxu0 0.0
        %7156 = vmatpush1.msra.mxu0 0.0
        %7157 = vmatprep.subr.mxu0 0.0
        %7158 = vmatpush1.msra.mxu0 0.0
        %7159 = vmatprep.subr.mxu0 0.0
        %7160 = vmatpush1.msra.mxu0 0.0
        %7161 = vmatprep.subr.mxu0 0.0
        %7162 = vmatpush1.msra.mxu0 0.0
        %7163 = vmatprep.subr.mxu0 0.0
        %7164 = vmatpush1.msra.mxu0 0.0
        %7165 = vmatprep.subr.mxu0 0.0
        %7166 = vmatpush1.msra.mxu0 0.0
        %7167 = vmatprep.subr.mxu0 0.0
        %7168 = vmatpush1.msra.mxu0 0.0
        %7169 = vmatprep.subr.mxu0 0.0
        %7170 = vmatpush1.msra.mxu0 0.0
        %7171 = vmatprep.subr.mxu0 0.0
        %7172 = vmatpush1.msra.mxu0 0.0
        %7173 = vmatprep.subr.mxu0 0.0
        %7174 = vmatpush1.msra.mxu0 0.0
        %7175 = vmatprep.subr.mxu0 0.0
        %7176 = vmatpush1.msra.mxu0 0.0
        %7177 = vmatprep.subr.mxu0 0.0
        %7178 = vmatpush1.msra.mxu0 0.0
        %7179 = vmatprep.subr.mxu0 0.0
        %7180 = vmatpush1.msra.mxu0 0.0
        %7181 = vmatprep.subr.mxu0 0.0
        %7182 = vmatpush1.msra.mxu0 0.0
        %7183 = vmatprep.subr.mxu0 0.0
        %7184 = vmatpush1.msra.mxu0 0.0
        %7185 = vmatprep.subr.mxu0 0.0
        %7186 = vmatpush1.msra.mxu0 0.0
        %7187 = vmatprep.subr.mxu0 0.0
        %7188 = vmatpush1.msra.mxu0 0.0
        %7189 = vmatprep.subr.mxu0 0.0
        %7190 = vmatpush1.msra.mxu0 0.0
        %7191 = vmatprep.mubr.f32.mxu0 0.0
        %v7192 = vand.u32 %v6618, 4294901760
        %v7193 = vsub.f32 %v6618, %v7192
        %v7194 = vand.u32 %v7193, 4294901760
        %v7195 = vsub.f32 %v7193, %v7194
        %v7196 = vand.u32 %v7195, 4294901760
        %7197 = vmatmul.mubr.f32.gmra.mrb[0].mxu0 %v7196
        %v7198 = vpop.f32.mrb[0].mxu0
        %v7199 = vadd.f32 0.0, %v7198
        %v7200 = vpop.f32.mrb[0].mxu0
        %7201 = vmatprep.mubr.f32.mxu0 0.0
        %v7202 = vand.u32 %v6621, 4294901760
        %v7203 = vsub.f32 %v6621, %v7202
        %v7204 = vand.u32 %v7203, 4294901760
        %v7205 = vsub.f32 %v7203, %v7204
        %v7206 = vand.u32 %v7205, 4294901760
        %7207 = vmatmul.mubr.f32.gmra.mrb[0].mxu0 %v7206
        %v7208 = vpop.f32.mrb[0].mxu0
        %v7209 = vadd.f32 0.0, %v7208
        %v7210 = vpop.f32.mrb[0].mxu0
        %7211 = vdwg.mxu0
        %7212 = vmatprep.subr.mxu0 0.0
        %v7213 = vand.u32 %v6584, 4294901760
        %v7214 = vsub.f32 %v6584, %v7213
        %v7215 = vand.u32 %v7214, 4294901760
        %v7216 = vsub.f32 %v7214, %v7215
        %v7217 = vand.u32 %v7216, 4294901760
        %7218 = vmatpush1.msra.mxu0 %v7217
        %7219 = vmatprep.subr.mxu0 0.0
        %v7220 = vand.u32 %v6590, 4294901760
        %v7221 = vsub.f32 %v6590, %v7220
        %v7222 = vand.u32 %v7221, 4294901760
        %v7223 = vsub.f32 %v7221, %v7222
        %v7224 = vand.u32 %v7223, 4294901760
        %7225 = vmatpush1.msra.mxu0 %v7224
        %7226 = vmatprep.subr.mxu0 0.0
        %7227 = vmatpush1.msra.mxu0 0.0
        %7228 = vmatprep.subr.mxu0 0.0
        %7229 = vmatpush1.msra.mxu0 0.0
        %7230 = vmatprep.subr.mxu0 0.0
        %7231 = vmatpush1.msra.mxu0 0.0
        %7232 = vmatprep.subr.mxu0 0.0
        %7233 = vmatpush1.msra.mxu0 0.0
        %7234 = vmatprep.subr.mxu0 0.0
        %7235 = vmatpush1.msra.mxu0 0.0
        %7236 = vmatprep.subr.mxu0 0.0
        %7237 = vmatpush1.msra.mxu0 0.0
        %7238 = vmatprep.subr.mxu0 0.0
        %7239 = vmatpush1.msra.mxu0 0.0
        %7240 = vmatprep.subr.mxu0 0.0
        %7241 = vmatpush1.msra.mxu0 0.0
        %7242 = vmatprep.subr.mxu0 0.0
        %7243 = vmatpush1.msra.mxu0 0.0
        %7244 = vmatprep.subr.mxu0 0.0
        %7245 = vmatpush1.msra.mxu0 0.0
        %7246 = vmatprep.subr.mxu0 0.0
        %7247 = vmatpush1.msra.mxu0 0.0
        %7248 = vmatprep.subr.mxu0 0.0
        %7249 = vmatpush1.msra.mxu0 0.0
        %7250 = vmatprep.subr.mxu0 0.0
        %7251 = vmatpush1.msra.mxu0 0.0
        %7252 = vmatprep.subr.mxu0 0.0
        %7253 = vmatpush1.msra.mxu0 0.0
        %7254 = vmatprep.subr.mxu0 0.0
        %7255 = vmatpush1.msra.mxu0 0.0
        %7256 = vmatprep.subr.mxu0 0.0
        %7257 = vmatpush1.msra.mxu0 0.0
        %7258 = vmatprep.subr.mxu0 0.0
        %7259 = vmatpush1.msra.mxu0 0.0
        %7260 = vmatprep.subr.mxu0 0.0
        %7261 = vmatpush1.msra.mxu0 0.0
        %7262 = vmatprep.subr.mxu0 0.0
        %7263 = vmatpush1.msra.mxu0 0.0
        %7264 = vmatprep.subr.mxu0 0.0
        %7265 = vmatpush1.msra.mxu0 0.0
        %7266 = vmatprep.subr.mxu0 0.0
        %7267 = vmatpush1.msra.mxu0 0.0
        %7268 = vmatprep.subr.mxu0 0.0
        %7269 = vmatpush1.msra.mxu0 0.0
        %7270 = vmatprep.subr.mxu0 0.0
        %7271 = vmatpush1.msra.mxu0 0.0
        %7272 = vmatprep.subr.mxu0 0.0
        %7273 = vmatpush1.msra.mxu0 0.0
        %7274 = vmatprep.subr.mxu0 0.0
        %7275 = vmatpush1.msra.mxu0 0.0
        %7276 = vmatprep.subr.mxu0 0.0
        %7277 = vmatpush1.msra.mxu0 0.0
        %7278 = vmatprep.subr.mxu0 0.0
        %7279 = vmatpush1.msra.mxu0 0.0
        %7280 = vmatprep.subr.mxu0 0.0
        %7281 = vmatpush1.msra.mxu0 0.0
        %7282 = vmatprep.subr.mxu0 0.0
        %7283 = vmatpush1.msra.mxu0 0.0
        %7284 = vmatprep.subr.mxu0 0.0
        %7285 = vmatpush1.msra.mxu0 0.0
        %7286 = vmatprep.mubr.f32.mxu0 0.0
        %v7287 = vand.u32 %v6618, 4294901760
        %7288 = vmatmul.mubr.f32.gmra.mrb[0].mxu0 %v7287
        %v7289 = vpop.f32.mrb[0].mxu0
        %v7290 = vadd.f32 %v7199, %v7289
        %v7291 = vpop.f32.mrb[0].mxu0
        %7292 = vmatprep.mubr.f32.mxu0 0.0
        %v7293 = vand.u32 %v6621, 4294901760
        %7294 = vmatmul.mubr.f32.gmra.mrb[0].mxu0 %v7293
        %v7295 = vpop.f32.mrb[0].mxu0
        %v7296 = vadd.f32 %v7209, %v7295
        %v7297 = vpop.f32.mrb[0].mxu0
        %7298 = vdwg.mxu0
        %7299 = vmatprep.subr.mxu0 0.0
        %v7300 = vand.u32 %v6584, 4294901760
        %v7301 = vsub.f32 %v6584, %v7300
        %7302 = vmatpush1.msra.mxu0 %v7301
        %7303 = vmatprep.subr.mxu0 0.0
        %v7304 = vand.u32 %v6590, 4294901760
        %v7305 = vsub.f32 %v6590, %v7304
        %7306 = vmatpush1.msra.mxu0 %v7305
        %7307 = vmatprep.subr.mxu0 0.0
        %7308 = vmatpush1.msra.mxu0 0.0
        %7309 = vmatprep.subr.mxu0 0.0
        %7310 = vmatpush1.msra.mxu0 0.0
        %7311 = vmatprep.subr.mxu0 0.0
        %7312 = vmatpush1.msra.mxu0 0.0
        %7313 = vmatprep.subr.mxu0 0.0
        %7314 = vmatpush1.msra.mxu0 0.0
        %7315 = vmatprep.subr.mxu0 0.0
        %7316 = vmatpush1.msra.mxu0 0.0
        %7317 = vmatprep.subr.mxu0 0.0
        %7318 = vmatpush1.msra.mxu0 0.0
        %7319 = vmatprep.subr.mxu0 0.0
        %7320 = vmatpush1.msra.mxu0 0.0
        %7321 = vmatprep.subr.mxu0 0.0
        %7322 = vmatpush1.msra.mxu0 0.0
        %7323 = vmatprep.subr.mxu0 0.0
        %7324 = vmatpush1.msra.mxu0 0.0
        %7325 = vmatprep.subr.mxu0 0.0
        %7326 = vmatpush1.msra.mxu0 0.0
        %7327 = vmatprep.subr.mxu0 0.0
        %7328 = vmatpush1.msra.mxu0 0.0
        %7329 = vmatprep.subr.mxu0 0.0
        %7330 = vmatpush1.msra.mxu0 0.0
        %7331 = vmatprep.subr.mxu0 0.0
        %7332 = vmatpush1.msra.mxu0 0.0
        %7333 = vmatprep.subr.mxu0 0.0
        %7334 = vmatpush1.msra.mxu0 0.0
        %7335 = vmatprep.subr.mxu0 0.0
        %7336 = vmatpush1.msra.mxu0 0.0
        %7337 = vmatprep.subr.mxu0 0.0
        %7338 = vmatpush1.msra.mxu0 0.0
        %7339 = vmatprep.subr.mxu0 0.0
        %7340 = vmatpush1.msra.mxu0 0.0
        %7341 = vmatprep.subr.mxu0 0.0
        %7342 = vmatpush1.msra.mxu0 0.0
        %7343 = vmatprep.subr.mxu0 0.0
        %7344 = vmatpush1.msra.mxu0 0.0
        %7345 = vmatprep.subr.mxu0 0.0
        %7346 = vmatpush1.msra.mxu0 0.0
        %7347 = vmatprep.subr.mxu0 0.0
        %7348 = vmatpush1.msra.mxu0 0.0
        %7349 = vmatprep.subr.mxu0 0.0
        %7350 = vmatpush1.msra.mxu0 0.0
        %7351 = vmatprep.subr.mxu0 0.0
        %7352 = vmatpush1.msra.mxu0 0.0
        %7353 = vmatprep.subr.mxu0 0.0
        %7354 = vmatpush1.msra.mxu0 0.0
        %7355 = vmatprep.subr.mxu0 0.0
        %7356 = vmatpush1.msra.mxu0 0.0
        %7357 = vmatprep.subr.mxu0 0.0
        %7358 = vmatpush1.msra.mxu0 0.0
        %7359 = vmatprep.subr.mxu0 0.0
        %7360 = vmatpush1.msra.mxu0 0.0
        %7361 = vmatprep.subr.mxu0 0.0
        %7362 = vmatpush1.msra.mxu0 0.0
        %7363 = vmatprep.subr.mxu0 0.0
        %7364 = vmatpush1.msra.mxu0 0.0
        %7365 = vmatprep.subr.mxu0 0.0
        %7366 = vmatpush1.msra.mxu0 0.0
        %7367 = vmatprep.mubr.f32.mxu0 0.0
        %v7368 = vand.u32 %v6618, 4294901760
        %v7369 = vsub.f32 %v6618, %v7368
        %7370 = vmatmul.mubr.f32.gmra.mrb[0].mxu0 %v7369
        %v7371 = vpop.f32.mrb[0].mxu0
        %v7372 = vadd.f32 %v7290, %v7371
        %v7373 = vpop.f32.mrb[0].mxu0
        %7374 = vmatprep.mubr.f32.mxu0 0.0
        %v7375 = vand.u32 %v6621, 4294901760
        %v7376 = vsub.f32 %v6621, %v7375
        %7377 = vmatmul.mubr.f32.gmra.mrb[0].mxu0 %v7376
        %v7378 = vpop.f32.mrb[0].mxu0
        %v7379 = vadd.f32 %v7296, %v7378
        %v7380 = vpop.f32.mrb[0].mxu0
        %7381 = vdwg.mxu0
        %7382 = vmatprep.subr.mxu0 0.0
        %v7383 = vand.u32 %v6584, 4294901760
        %7384 = vmatpush1.msra.mxu0 %v7383
        %7385 = vmatprep.subr.mxu0 0.0
        %v7386 = vand.u32 %v6590, 4294901760
        %7387 = vmatpush1.msra.mxu0 %v7386
        %7388 = vmatprep.subr.mxu0 0.0
        %7389 = vmatpush1.msra.mxu0 0.0
        %7390 = vmatprep.subr.mxu0 0.0
        %7391 = vmatpush1.msra.mxu0 0.0
        %7392 = vmatprep.subr.mxu0 0.0
        %7393 = vmatpush1.msra.mxu0 0.0
        %7394 = vmatprep.subr.mxu0 0.0
        %7395 = vmatpush1.msra.mxu0 0.0
        %7396 = vmatprep.subr.mxu0 0.0
        %7397 = vmatpush1.msra.mxu0 0.0
        %7398 = vmatprep.subr.mxu0 0.0
        %7399 = vmatpush1.msra.mxu0 0.0
        %7400 = vmatprep.subr.mxu0 0.0
        %7401 = vmatpush1.msra.mxu0 0.0
        %7402 = vmatprep.subr.mxu0 0.0
        %7403 = vmatpush1.msra.mxu0 0.0
        %7404 = vmatprep.subr.mxu0 0.0
        %7405 = vmatpush1.msra.mxu0 0.0
        %7406 = vmatprep.subr.mxu0 0.0
        %7407 = vmatpush1.msra.mxu0 0.0
        %7408 = vmatprep.subr.mxu0 0.0
        %7409 = vmatpush1.msra.mxu0 0.0
        %7410 = vmatprep.subr.mxu0 0.0
        %7411 = vmatpush1.msra.mxu0 0.0
        %7412 = vmatprep.subr.mxu0 0.0
        %7413 = vmatpush1.msra.mxu0 0.0
        %7414 = vmatprep.subr.mxu0 0.0
        %7415 = vmatpush1.msra.mxu0 0.0
        %7416 = vmatprep.subr.mxu0 0.0
        %7417 = vmatpush1.msra.mxu0 0.0
        %7418 = vmatprep.subr.mxu0 0.0
        %7419 = vmatpush1.msra.mxu0 0.0
        %7420 = vmatprep.subr.mxu0 0.0
        %7421 = vmatpush1.msra.mxu0 0.0
        %7422 = vmatprep.subr.mxu0 0.0
        %7423 = vmatpush1.msra.mxu0 0.0
        %7424 = vmatprep.subr.mxu0 0.0
        %7425 = vmatpush1.msra.mxu0 0.0
        %7426 = vmatprep.subr.mxu0 0.0
        %7427 = vmatpush1.msra.mxu0 0.0
        %7428 = vmatprep.subr.mxu0 0.0
        %7429 = vmatpush1.msra.mxu0 0.0
        %7430 = vmatprep.subr.mxu0 0.0
        %7431 = vmatpush1.msra.mxu0 0.0
        %7432 = vmatprep.subr.mxu0 0.0
        %7433 = vmatpush1.msra.mxu0 0.0
        %7434 = vmatprep.subr.mxu0 0.0
        %7435 = vmatpush1.msra.mxu0 0.0
        %7436 = vmatprep.subr.mxu0 0.0
        %7437 = vmatpush1.msra.mxu0 0.0
        %7438 = vmatprep.subr.mxu0 0.0
        %7439 = vmatpush1.msra.mxu0 0.0
        %7440 = vmatprep.subr.mxu0 0.0
        %7441 = vmatpush1.msra.mxu0 0.0
        %7442 = vmatprep.subr.mxu0 0.0
        %7443 = vmatpush1.msra.mxu0 0.0
        %7444 = vmatprep.subr.mxu0 0.0
        %7445 = vmatpush1.msra.mxu0 0.0
        %7446 = vmatprep.subr.mxu0 0.0
        %7447 = vmatpush1.msra.mxu0 0.0
        %7448 = vmatprep.mubr.f32.mxu0 0.0
        %v7449 = vand.u32 %v6618, 4294901760
        %v7450 = vsub.f32 %v6618, %v7449
        %v7451 = vand.u32 %v7450, 4294901760
        %7452 = vmatmul.mubr.f32.gmra.mrb[0].mxu0 %v7451
        %v7453 = vpop.f32.mrb[0].mxu0
        %v7454 = vadd.f32 %v7372, %v7453
        %v7455 = vpop.f32.mrb[0].mxu0
        %7456 = vmatprep.mubr.f32.mxu0 0.0
        %v7457 = vand.u32 %v6621, 4294901760
        %v7458 = vsub.f32 %v6621, %v7457
        %v7459 = vand.u32 %v7458, 4294901760
        %7460 = vmatmul.mubr.f32.gmra.mrb[0].mxu0 %v7459
        %v7461 = vpop.f32.mrb[0].mxu0
        %v7462 = vadd.f32 %v7379, %v7461
        %v7463 = vpop.f32.mrb[0].mxu0
        %7464 = vdwg.mxu0
        %7465 = vmatprep.subr.mxu0 0.0
        %v7466 = vand.u32 %v6584, 4294901760
        %v7467 = vsub.f32 %v6584, %v7466
        %v7468 = vand.u32 %v7467, 4294901760
        %7469 = vmatpush1.msra.mxu0 %v7468
        %7470 = vmatprep.subr.mxu0 0.0
        %v7471 = vand.u32 %v6590, 4294901760
        %v7472 = vsub.f32 %v6590, %v7471
        %v7473 = vand.u32 %v7472, 4294901760
        %7474 = vmatpush1.msra.mxu0 %v7473
        %7475 = vmatprep.subr.mxu0 0.0
        %7476 = vmatpush1.msra.mxu0 0.0
        %7477 = vmatprep.subr.mxu0 0.0
        %7478 = vmatpush1.msra.mxu0 0.0
        %7479 = vmatprep.subr.mxu0 0.0
        %7480 = vmatpush1.msra.mxu0 0.0
        %7481 = vmatprep.subr.mxu0 0.0
        %7482 = vmatpush1.msra.mxu0 0.0
        %7483 = vmatprep.subr.mxu0 0.0
        %7484 = vmatpush1.msra.mxu0 0.0
        %7485 = vmatprep.subr.mxu0 0.0
        %7486 = vmatpush1.msra.mxu0 0.0
        %7487 = vmatprep.subr.mxu0 0.0
        %7488 = vmatpush1.msra.mxu0 0.0
        %7489 = vmatprep.subr.mxu0 0.0
        %7490 = vmatpush1.msra.mxu0 0.0
        %7491 = vmatprep.subr.mxu0 0.0
        %7492 = vmatpush1.msra.mxu0 0.0
        %7493 = vmatprep.subr.mxu0 0.0
        %7494 = vmatpush1.msra.mxu0 0.0
        %7495 = vmatprep.subr.mxu0 0.0
        %7496 = vmatpush1.msra.mxu0 0.0
        %7497 = vmatprep.subr.mxu0 0.0
        %7498 = vmatpush1.msra.mxu0 0.0
        %7499 = vmatprep.subr.mxu0 0.0
        %7500 = vmatpush1.msra.mxu0 0.0
        %7501 = vmatprep.subr.mxu0 0.0
        %7502 = vmatpush1.msra.mxu0 0.0
        %7503 = vmatprep.subr.mxu0 0.0
        %7504 = vmatpush1.msra.mxu0 0.0
        %7505 = vmatprep.subr.mxu0 0.0
        %7506 = vmatpush1.msra.mxu0 0.0
        %7507 = vmatprep.subr.mxu0 0.0
        %7508 = vmatpush1.msra.mxu0 0.0
        %7509 = vmatprep.subr.mxu0 0.0
        %7510 = vmatpush1.msra.mxu0 0.0
        %7511 = vmatprep.subr.mxu0 0.0
        %7512 = vmatpush1.msra.mxu0 0.0
        %7513 = vmatprep.subr.mxu0 0.0
        %7514 = vmatpush1.msra.mxu0 0.0
        %7515 = vmatprep.subr.mxu0 0.0
        %7516 = vmatpush1.msra.mxu0 0.0
        %7517 = vmatprep.subr.mxu0 0.0
        %7518 = vmatpush1.msra.mxu0 0.0
        %7519 = vmatprep.subr.mxu0 0.0
        %7520 = vmatpush1.msra.mxu0 0.0
        %7521 = vmatprep.subr.mxu0 0.0
        %7522 = vmatpush1.msra.mxu0 0.0
        %7523 = vmatprep.subr.mxu0 0.0
        %7524 = vmatpush1.msra.mxu0 0.0
        %7525 = vmatprep.subr.mxu0 0.0
        %7526 = vmatpush1.msra.mxu0 0.0
        %7527 = vmatprep.subr.mxu0 0.0
        %7528 = vmatpush1.msra.mxu0 0.0
        %7529 = vmatprep.subr.mxu0 0.0
        %7530 = vmatpush1.msra.mxu0 0.0
        %7531 = vmatprep.subr.mxu0 0.0
        %7532 = vmatpush1.msra.mxu0 0.0
        %7533 = vmatprep.subr.mxu0 0.0
        %7534 = vmatpush1.msra.mxu0 0.0
        %7535 = vmatprep.mubr.f32.mxu0 0.0
        %v7536 = vand.u32 %v6618, 4294901760
        %7537 = vmatmul.mubr.f32.gmra.mrb[0].mxu0 %v7536
        %v7538 = vpop.f32.mrb[0].mxu0
        %v7539 = vadd.f32 %v7454, %v7538
        %v7540 = vpop.f32.mrb[0].mxu0
        %7541 = vmatprep.mubr.f32.mxu0 0.0
        %v7542 = vand.u32 %v6621, 4294901760
        %7543 = vmatmul.mubr.f32.gmra.mrb[0].mxu0 %v7542
        %v7544 = vpop.f32.mrb[0].mxu0
        %v7545 = vadd.f32 %v7462, %v7544
        %v7546 = vpop.f32.mrb[0].mxu0
        %7547 = vdwg.mxu0
        %7548 = vmatprep.subr.mxu0 0.0
        %v7549 = vand.u32 %v6584, 4294901760
        %7550 = vmatpush1.msra.mxu0 %v7549
        %7551 = vmatprep.subr.mxu0 0.0
        %v7552 = vand.u32 %v6590, 4294901760
        %7553 = vmatpush1.msra.mxu0 %v7552
        %7554 = vmatprep.subr.mxu0 0.0
        %7555 = vmatpush1.msra.mxu0 0.0
        %7556 = vmatprep.subr.mxu0 0.0
        %7557 = vmatpush1.msra.mxu0 0.0
        %7558 = vmatprep.subr.mxu0 0.0
        %7559 = vmatpush1.msra.mxu0 0.0
        %7560 = vmatprep.subr.mxu0 0.0
        %7561 = vmatpush1.msra.mxu0 0.0
        %7562 = vmatprep.subr.mxu0 0.0
        %7563 = vmatpush1.msra.mxu0 0.0
        %7564 = vmatprep.subr.mxu0 0.0
        %7565 = vmatpush1.msra.mxu0 0.0
        %7566 = vmatprep.subr.mxu0 0.0
        %7567 = vmatpush1.msra.mxu0 0.0
        %7568 = vmatprep.subr.mxu0 0.0
        %7569 = vmatpush1.msra.mxu0 0.0
        %7570 = vmatprep.subr.mxu0 0.0
        %7571 = vmatpush1.msra.mxu0 0.0
        %7572 = vmatprep.subr.mxu0 0.0
        %7573 = vmatpush1.msra.mxu0 0.0
        %7574 = vmatprep.subr.mxu0 0.0
        %7575 = vmatpush1.msra.mxu0 0.0
        %7576 = vmatprep.subr.mxu0 0.0
        %7577 = vmatpush1.msra.mxu0 0.0
        %7578 = vmatprep.subr.mxu0 0.0
        %7579 = vmatpush1.msra.mxu0 0.0
        %7580 = vmatprep.subr.mxu0 0.0
        %7581 = vmatpush1.msra.mxu0 0.0
        %7582 = vmatprep.subr.mxu0 0.0
        %7583 = vmatpush1.msra.mxu0 0.0
        %7584 = vmatprep.subr.mxu0 0.0
        %7585 = vmatpush1.msra.mxu0 0.0
        %7586 = vmatprep.subr.mxu0 0.0
        %7587 = vmatpush1.msra.mxu0 0.0
        %7588 = vmatprep.subr.mxu0 0.0
        %7589 = vmatpush1.msra.mxu0 0.0
        %7590 = vmatprep.subr.mxu0 0.0
        %7591 = vmatpush1.msra.mxu0 0.0
        %7592 = vmatprep.subr.mxu0 0.0
        %7593 = vmatpush1.msra.mxu0 0.0
        %7594 = vmatprep.subr.mxu0 0.0
        %7595 = vmatpush1.msra.mxu0 0.0
        %7596 = vmatprep.subr.mxu0 0.0
        %7597 = vmatpush1.msra.mxu0 0.0
        %7598 = vmatprep.subr.mxu0 0.0
        %7599 = vmatpush1.msra.mxu0 0.0
        %7600 = vmatprep.subr.mxu0 0.0
        %7601 = vmatpush1.msra.mxu0 0.0
        %7602 = vmatprep.subr.mxu0 0.0
        %7603 = vmatpush1.msra.mxu0 0.0
        %7604 = vmatprep.subr.mxu0 0.0
        %7605 = vmatpush1.msra.mxu0 0.0
        %7606 = vmatprep.subr.mxu0 0.0
        %7607 = vmatpush1.msra.mxu0 0.0
        %7608 = vmatprep.subr.mxu0 0.0
        %7609 = vmatpush1.msra.mxu0 0.0
        %7610 = vmatprep.subr.mxu0 0.0
        %7611 = vmatpush1.msra.mxu0 0.0
        %7612 = vmatprep.subr.mxu0 0.0
        %7613 = vmatpush1.msra.mxu0 0.0
        %7614 = vmatprep.mubr.f32.mxu0 0.0
        %v7615 = vand.u32 %v6618, 4294901760
        %7616 = vmatmul.mubr.f32.gmra.mrb[0].mxu0 %v7615
        %v7617 = vpop.f32.mrb[0].mxu0
        %v7618 = vadd.f32 %v7539, %v7617
        %v7619 = vpop.f32.mrb[0].mxu0
        %7620 = vmatprep.mubr.f32.mxu0 0.0
        %v7621 = vand.u32 %v6621, 4294901760
        %7622 = vmatmul.mubr.f32.gmra.mrb[0].mxu0 %v7621
        %v7623 = vpop.f32.mrb[0].mxu0
        %v7624 = vadd.f32 %v7545, %v7623
        %v7625 = vpop.f32.mrb[0].mxu0
        %7626 = vdwg.mxu0
        %7627 = vmatprep.subr.mxu0 0.0
        %v7628 = vand.u32 %v6596, 4294901760
        %7629 = vmatpush1.msra.mxu0 %v7628
        %7630 = vmatprep.subr.mxu0 0.0
        %v7631 = vand.u32 %v6602, 4294901760
        %7632 = vmatpush1.msra.mxu0 %v7631
        %7633 = vmatprep.subr.mxu0 0.0
        %7634 = vmatpush1.msra.mxu0 0.0
        %7635 = vmatprep.subr.mxu0 0.0
        %7636 = vmatpush1.msra.mxu0 0.0
        %7637 = vmatprep.subr.mxu0 0.0
        %7638 = vmatpush1.msra.mxu0 0.0
        %7639 = vmatprep.subr.mxu0 0.0
        %7640 = vmatpush1.msra.mxu0 0.0
        %7641 = vmatprep.subr.mxu0 0.0
        %7642 = vmatpush1.msra.mxu0 0.0
        %7643 = vmatprep.subr.mxu0 0.0
        %7644 = vmatpush1.msra.mxu0 0.0
        %7645 = vmatprep.subr.mxu0 0.0
        %7646 = vmatpush1.msra.mxu0 0.0
        %7647 = vmatprep.subr.mxu0 0.0
        %7648 = vmatpush1.msra.mxu0 0.0
        %7649 = vmatprep.subr.mxu0 0.0
        %7650 = vmatpush1.msra.mxu0 0.0
        %7651 = vmatprep.subr.mxu0 0.0
        %7652 = vmatpush1.msra.mxu0 0.0
        %7653 = vmatprep.subr.mxu0 0.0
        %7654 = vmatpush1.msra.mxu0 0.0
        %7655 = vmatprep.subr.mxu0 0.0
        %7656 = vmatpush1.msra.mxu0 0.0
        %7657 = vmatprep.subr.mxu0 0.0
        %7658 = vmatpush1.msra.mxu0 0.0
        %7659 = vmatprep.subr.mxu0 0.0
        %7660 = vmatpush1.msra.mxu0 0.0
        %7661 = vmatprep.subr.mxu0 0.0
        %7662 = vmatpush1.msra.mxu0 0.0
        %7663 = vmatprep.subr.mxu0 0.0
        %7664 = vmatpush1.msra.mxu0 0.0
        %7665 = vmatprep.subr.mxu0 0.0
        %7666 = vmatpush1.msra.mxu0 0.0
        %7667 = vmatprep.subr.mxu0 0.0
        %7668 = vmatpush1.msra.mxu0 0.0
        %7669 = vmatprep.subr.mxu0 0.0
        %7670 = vmatpush1.msra.mxu0 0.0
        %7671 = vmatprep.subr.mxu0 0.0
        %7672 = vmatpush1.msra.mxu0 0.0
        %7673 = vmatprep.subr.mxu0 0.0
        %7674 = vmatpush1.msra.mxu0 0.0
        %7675 = vmatprep.subr.mxu0 0.0
        %7676 = vmatpush1.msra.mxu0 0.0
        %7677 = vmatprep.subr.mxu0 0.0
        %7678 = vmatpush1.msra.mxu0 0.0
        %7679 = vmatprep.subr.mxu0 0.0
        %7680 = vmatpush1.msra.mxu0 0.0
        %7681 = vmatprep.subr.mxu0 0.0
        %7682 = vmatpush1.msra.mxu0 0.0
        %7683 = vmatprep.subr.mxu0 0.0
        %7684 = vmatpush1.msra.mxu0 0.0
        %7685 = vmatprep.subr.mxu0 0.0
        %7686 = vmatpush1.msra.mxu0 0.0
        %7687 = vmatprep.subr.mxu0 0.0
        %7688 = vmatpush1.msra.mxu0 0.0
        %7689 = vmatprep.subr.mxu0 0.0
        %7690 = vmatpush1.msra.mxu0 0.0
        %7691 = vmatprep.subr.mxu0 0.0
        %7692 = vmatpush1.msra.mxu0 0.0
        %7693 = vmatprep.mubr.f32.mxu0 0.0
        %v7694 = vand.u32 %v6618, 4294901760
        %v7695 = vsub.f32 %v6618, %v7694
        %v7696 = vand.u32 %v7695, 4294901760
        %v7697 = vsub.f32 %v7695, %v7696
        %v7698 = vand.u32 %v7697, 4294901760
        %7699 = vmatmul.mubr.f32.gmra.mrb[0].mxu0 %v7698
        %v7700 = vpop.f32.mrb[0].mxu0
        %v7701 = vadd.f32 0.0, %v7700
        %v7702 = vpop.f32.mrb[0].mxu0
        %7703 = vmatprep.mubr.f32.mxu0 0.0
        %v7704 = vand.u32 %v6621, 4294901760
        %v7705 = vsub.f32 %v6621, %v7704
        %v7706 = vand.u32 %v7705, 4294901760
        %v7707 = vsub.f32 %v7705, %v7706
        %v7708 = vand.u32 %v7707, 4294901760
        %7709 = vmatmul.mubr.f32.gmra.mrb[0].mxu0 %v7708
        %v7710 = vpop.f32.mrb[0].mxu0
        %v7711 = vadd.f32 0.0, %v7710
        %v7712 = vpop.f32.mrb[0].mxu0
        %7713 = vdwg.mxu0
        %7714 = vmatprep.subr.mxu0 0.0
        %v7715 = vand.u32 %v6596, 4294901760
        %v7716 = vsub.f32 %v6596, %v7715
        %v7717 = vand.u32 %v7716, 4294901760
        %v7718 = vsub.f32 %v7716, %v7717
        %v7719 = vand.u32 %v7718, 4294901760
        %7720 = vmatpush1.msra.mxu0 %v7719
        %7721 = vmatprep.subr.mxu0 0.0
        %v7722 = vand.u32 %v6602, 4294901760
        %v7723 = vsub.f32 %v6602, %v7722
        %v7724 = vand.u32 %v7723, 4294901760
        %v7725 = vsub.f32 %v7723, %v7724
        %v7726 = vand.u32 %v7725, 4294901760
        %7727 = vmatpush1.msra.mxu0 %v7726
        %7728 = vmatprep.subr.mxu0 0.0
        %7729 = vmatpush1.msra.mxu0 0.0
        %7730 = vmatprep.subr.mxu0 0.0
        %7731 = vmatpush1.msra.mxu0 0.0
        %7732 = vmatprep.subr.mxu0 0.0
        %7733 = vmatpush1.msra.mxu0 0.0
        %7734 = vmatprep.subr.mxu0 0.0
        %7735 = vmatpush1.msra.mxu0 0.0
        %7736 = vmatprep.subr.mxu0 0.0
        %7737 = vmatpush1.msra.mxu0 0.0
        %7738 = vmatprep.subr.mxu0 0.0
        %7739 = vmatpush1.msra.mxu0 0.0
        %7740 = vmatprep.subr.mxu0 0.0
        %7741 = vmatpush1.msra.mxu0 0.0
        %7742 = vmatprep.subr.mxu0 0.0
        %7743 = vmatpush1.msra.mxu0 0.0
        %7744 = vmatprep.subr.mxu0 0.0
        %7745 = vmatpush1.msra.mxu0 0.0
        %7746 = vmatprep.subr.mxu0 0.0
        %7747 = vmatpush1.msra.mxu0 0.0
        %7748 = vmatprep.subr.mxu0 0.0
        %7749 = vmatpush1.msra.mxu0 0.0
        %7750 = vmatprep.subr.mxu0 0.0
        %7751 = vmatpush1.msra.mxu0 0.0
        %7752 = vmatprep.subr.mxu0 0.0
        %7753 = vmatpush1.msra.mxu0 0.0
        %7754 = vmatprep.subr.mxu0 0.0
        %7755 = vmatpush1.msra.mxu0 0.0
        %7756 = vmatprep.subr.mxu0 0.0
        %7757 = vmatpush1.msra.mxu0 0.0
        %7758 = vmatprep.subr.mxu0 0.0
        %7759 = vmatpush1.msra.mxu0 0.0
        %7760 = vmatprep.subr.mxu0 0.0
        %7761 = vmatpush1.msra.mxu0 0.0
        %7762 = vmatprep.subr.mxu0 0.0
        %7763 = vmatpush1.msra.mxu0 0.0
        %7764 = vmatprep.subr.mxu0 0.0
        %7765 = vmatpush1.msra.mxu0 0.0
        %7766 = vmatprep.subr.mxu0 0.0
        %7767 = vmatpush1.msra.mxu0 0.0
        %7768 = vmatprep.subr.mxu0 0.0
        %7769 = vmatpush1.msra.mxu0 0.0
        %7770 = vmatprep.subr.mxu0 0.0
        %7771 = vmatpush1.msra.mxu0 0.0
        %7772 = vmatprep.subr.mxu0 0.0
        %7773 = vmatpush1.msra.mxu0 0.0
        %7774 = vmatprep.subr.mxu0 0.0
        %7775 = vmatpush1.msra.mxu0 0.0
        %7776 = vmatprep.subr.mxu0 0.0
        %7777 = vmatpush1.msra.mxu0 0.0
        %7778 = vmatprep.subr.mxu0 0.0
        %7779 = vmatpush1.msra.mxu0 0.0
        %7780 = vmatprep.subr.mxu0 0.0
        %7781 = vmatpush1.msra.mxu0 0.0
        %7782 = vmatprep.subr.mxu0 0.0
        %7783 = vmatpush1.msra.mxu0 0.0
        %7784 = vmatprep.subr.mxu0 0.0
        %7785 = vmatpush1.msra.mxu0 0.0
        %7786 = vmatprep.subr.mxu0 0.0
        %7787 = vmatpush1.msra.mxu0 0.0
        %7788 = vmatprep.mubr.f32.mxu0 0.0
        %v7789 = vand.u32 %v6618, 4294901760
        %7790 = vmatmul.mubr.f32.gmra.mrb[0].mxu0 %v7789
        %v7791 = vpop.f32.mrb[0].mxu0
        %v7792 = vadd.f32 %v7701, %v7791
        %v7793 = vpop.f32.mrb[0].mxu0
        %7794 = vmatprep.mubr.f32.mxu0 0.0
        %v7795 = vand.u32 %v6621, 4294901760
        %7796 = vmatmul.mubr.f32.gmra.mrb[0].mxu0 %v7795
        %v7797 = vpop.f32.mrb[0].mxu0
        %v7798 = vadd.f32 %v7711, %v7797
        %v7799 = vpop.f32.mrb[0].mxu0
        %7800 = vdwg.mxu0
        %7801 = vmatprep.subr.mxu0 0.0
        %v7802 = vand.u32 %v6596, 4294901760
        %v7803 = vsub.f32 %v6596, %v7802
        %7804 = vmatpush1.msra.mxu0 %v7803
        %7805 = vmatprep.subr.mxu0 0.0
        %v7806 = vand.u32 %v6602, 4294901760
        %v7807 = vsub.f32 %v6602, %v7806
        %7808 = vmatpush1.msra.mxu0 %v7807
        %7809 = vmatprep.subr.mxu0 0.0
        %7810 = vmatpush1.msra.mxu0 0.0
        %7811 = vmatprep.subr.mxu0 0.0
        %7812 = vmatpush1.msra.mxu0 0.0
        %7813 = vmatprep.subr.mxu0 0.0
        %7814 = vmatpush1.msra.mxu0 0.0
        %7815 = vmatprep.subr.mxu0 0.0
        %7816 = vmatpush1.msra.mxu0 0.0
        %7817 = vmatprep.subr.mxu0 0.0
        %7818 = vmatpush1.msra.mxu0 0.0
        %7819 = vmatprep.subr.mxu0 0.0
        %7820 = vmatpush1.msra.mxu0 0.0
        %7821 = vmatprep.subr.mxu0 0.0
        %7822 = vmatpush1.msra.mxu0 0.0
        %7823 = vmatprep.subr.mxu0 0.0
        %7824 = vmatpush1.msra.mxu0 0.0
        %7825 = vmatprep.subr.mxu0 0.0
        %7826 = vmatpush1.msra.mxu0 0.0
        %7827 = vmatprep.subr.mxu0 0.0
        %7828 = vmatpush1.msra.mxu0 0.0
        %7829 = vmatprep.subr.mxu0 0.0
        %7830 = vmatpush1.msra.mxu0 0.0
        %7831 = vmatprep.subr.mxu0 0.0
        %7832 = vmatpush1.msra.mxu0 0.0
        %7833 = vmatprep.subr.mxu0 0.0
        %7834 = vmatpush1.msra.mxu0 0.0
        %7835 = vmatprep.subr.mxu0 0.0
        %7836 = vmatpush1.msra.mxu0 0.0
        %7837 = vmatprep.subr.mxu0 0.0
        %7838 = vmatpush1.msra.mxu0 0.0
        %7839 = vmatprep.subr.mxu0 0.0
        %7840 = vmatpush1.msra.mxu0 0.0
        %7841 = vmatprep.subr.mxu0 0.0
        %7842 = vmatpush1.msra.mxu0 0.0
        %7843 = vmatprep.subr.mxu0 0.0
        %7844 = vmatpush1.msra.mxu0 0.0
        %7845 = vmatprep.subr.mxu0 0.0
        %7846 = vmatpush1.msra.mxu0 0.0
        %7847 = vmatprep.subr.mxu0 0.0
        %7848 = vmatpush1.msra.mxu0 0.0
        %7849 = vmatprep.subr.mxu0 0.0
        %7850 = vmatpush1.msra.mxu0 0.0
        %7851 = vmatprep.subr.mxu0 0.0
        %7852 = vmatpush1.msra.mxu0 0.0
        %7853 = vmatprep.subr.mxu0 0.0
        %7854 = vmatpush1.msra.mxu0 0.0
        %7855 = vmatprep.subr.mxu0 0.0
        %7856 = vmatpush1.msra.mxu0 0.0
        %7857 = vmatprep.subr.mxu0 0.0
        %7858 = vmatpush1.msra.mxu0 0.0
        %7859 = vmatprep.subr.mxu0 0.0
        %7860 = vmatpush1.msra.mxu0 0.0
        %7861 = vmatprep.subr.mxu0 0.0
        %7862 = vmatpush1.msra.mxu0 0.0
        %7863 = vmatprep.subr.mxu0 0.0
        %7864 = vmatpush1.msra.mxu0 0.0
        %7865 = vmatprep.subr.mxu0 0.0
        %7866 = vmatpush1.msra.mxu0 0.0
        %7867 = vmatprep.subr.mxu0 0.0
        %7868 = vmatpush1.msra.mxu0 0.0
        %7869 = vmatprep.mubr.f32.mxu0 0.0
        %v7870 = vand.u32 %v6618, 4294901760
        %v7871 = vsub.f32 %v6618, %v7870
        %7872 = vmatmul.mubr.f32.gmra.mrb[0].mxu0 %v7871
        %v7873 = vpop.f32.mrb[0].mxu0
        %v7874 = vadd.f32 %v7792, %v7873
        %v7875 = vpop.f32.mrb[0].mxu0
        %7876 = vmatprep.mubr.f32.mxu0 0.0
        %v7877 = vand.u32 %v6621, 4294901760
        %v7878 = vsub.f32 %v6621, %v7877
        %7879 = vmatmul.mubr.f32.gmra.mrb[0].mxu0 %v7878
        %v7880 = vpop.f32.mrb[0].mxu0
        %v7881 = vadd.f32 %v7798, %v7880
        %v7882 = vpop.f32.mrb[0].mxu0
        %7883 = vdwg.mxu0
        %7884 = vmatprep.subr.mxu0 0.0
        %v7885 = vand.u32 %v6596, 4294901760
        %7886 = vmatpush1.msra.mxu0 %v7885
        %7887 = vmatprep.subr.mxu0 0.0
        %v7888 = vand.u32 %v6602, 4294901760
        %7889 = vmatpush1.msra.mxu0 %v7888
        %7890 = vmatprep.subr.mxu0 0.0
        %7891 = vmatpush1.msra.mxu0 0.0
        %7892 = vmatprep.subr.mxu0 0.0
        %7893 = vmatpush1.msra.mxu0 0.0
        %7894 = vmatprep.subr.mxu0 0.0
        %7895 = vmatpush1.msra.mxu0 0.0
        %7896 = vmatprep.subr.mxu0 0.0
        %7897 = vmatpush1.msra.mxu0 0.0
        %7898 = vmatprep.subr.mxu0 0.0
        %7899 = vmatpush1.msra.mxu0 0.0
        %7900 = vmatprep.subr.mxu0 0.0
        %7901 = vmatpush1.msra.mxu0 0.0
        %7902 = vmatprep.subr.mxu0 0.0
        %7903 = vmatpush1.msra.mxu0 0.0
        %7904 = vmatprep.subr.mxu0 0.0
        %7905 = vmatpush1.msra.mxu0 0.0
        %7906 = vmatprep.subr.mxu0 0.0
        %7907 = vmatpush1.msra.mxu0 0.0
        %7908 = vmatprep.subr.mxu0 0.0
        %7909 = vmatpush1.msra.mxu0 0.0
        %7910 = vmatprep.subr.mxu0 0.0
        %7911 = vmatpush1.msra.mxu0 0.0
        %7912 = vmatprep.subr.mxu0 0.0
        %7913 = vmatpush1.msra.mxu0 0.0
        %7914 = vmatprep.subr.mxu0 0.0
        %7915 = vmatpush1.msra.mxu0 0.0
        %7916 = vmatprep.subr.mxu0 0.0
        %7917 = vmatpush1.msra.mxu0 0.0
        %7918 = vmatprep.subr.mxu0 0.0
        %7919 = vmatpush1.msra.mxu0 0.0
        %7920 = vmatprep.subr.mxu0 0.0
        %7921 = vmatpush1.msra.mxu0 0.0
        %7922 = vmatprep.subr.mxu0 0.0
        %7923 = vmatpush1.msra.mxu0 0.0
        %7924 = vmatprep.subr.mxu0 0.0
        %7925 = vmatpush1.msra.mxu0 0.0
        %7926 = vmatprep.subr.mxu0 0.0
        %7927 = vmatpush1.msra.mxu0 0.0
        %7928 = vmatprep.subr.mxu0 0.0
        %7929 = vmatpush1.msra.mxu0 0.0
        %7930 = vmatprep.subr.mxu0 0.0
        %7931 = vmatpush1.msra.mxu0 0.0
        %7932 = vmatprep.subr.mxu0 0.0
        %7933 = vmatpush1.msra.mxu0 0.0
        %7934 = vmatprep.subr.mxu0 0.0
        %7935 = vmatpush1.msra.mxu0 0.0
        %7936 = vmatprep.subr.mxu0 0.0
        %7937 = vmatpush1.msra.mxu0 0.0
        %7938 = vmatprep.subr.mxu0 0.0
        %7939 = vmatpush1.msra.mxu0 0.0
        %7940 = vmatprep.subr.mxu0 0.0
        %7941 = vmatpush1.msra.mxu0 0.0
        %7942 = vmatprep.subr.mxu0 0.0
        %7943 = vmatpush1.msra.mxu0 0.0
        %7944 = vmatprep.subr.mxu0 0.0
        %7945 = vmatpush1.msra.mxu0 0.0
        %7946 = vmatprep.subr.mxu0 0.0
        %7947 = vmatpush1.msra.mxu0 0.0
        %7948 = vmatprep.subr.mxu0 0.0
        %7949 = vmatpush1.msra.mxu0 0.0
        %7950 = vmatprep.mubr.f32.mxu0 0.0
        %v7951 = vand.u32 %v6618, 4294901760
        %v7952 = vsub.f32 %v6618, %v7951
        %v7953 = vand.u32 %v7952, 4294901760
        %7954 = vmatmul.mubr.f32.gmra.mrb[0].mxu0 %v7953
        %v7955 = vpop.f32.mrb[0].mxu0
        %v7956 = vadd.f32 %v7874, %v7955
        %v7957 = vpop.f32.mrb[0].mxu0
        %7958 = vmatprep.mubr.f32.mxu0 0.0
        %v7959 = vand.u32 %v6621, 4294901760
        %v7960 = vsub.f32 %v6621, %v7959
        %v7961 = vand.u32 %v7960, 4294901760
        %7962 = vmatmul.mubr.f32.gmra.mrb[0].mxu0 %v7961
        %v7963 = vpop.f32.mrb[0].mxu0
        %v7964 = vadd.f32 %v7881, %v7963
        %v7965 = vpop.f32.mrb[0].mxu0
        %7966 = vdwg.mxu0
        %7967 = vmatprep.subr.mxu0 0.0
        %v7968 = vand.u32 %v6596, 4294901760
        %v7969 = vsub.f32 %v6596, %v7968
        %v7970 = vand.u32 %v7969, 4294901760
        %7971 = vmatpush1.msra.mxu0 %v7970
        %7972 = vmatprep.subr.mxu0 0.0
        %v7973 = vand.u32 %v6602, 4294901760
        %v7974 = vsub.f32 %v6602, %v7973
        %v7975 = vand.u32 %v7974, 4294901760
        %7976 = vmatpush1.msra.mxu0 %v7975
        %7977 = vmatprep.subr.mxu0 0.0
        %7978 = vmatpush1.msra.mxu0 0.0
        %7979 = vmatprep.subr.mxu0 0.0
        %7980 = vmatpush1.msra.mxu0 0.0
        %7981 = vmatprep.subr.mxu0 0.0
        %7982 = vmatpush1.msra.mxu0 0.0
        %7983 = vmatprep.subr.mxu0 0.0
        %7984 = vmatpush1.msra.mxu0 0.0
        %7985 = vmatprep.subr.mxu0 0.0
        %7986 = vmatpush1.msra.mxu0 0.0
        %7987 = vmatprep.subr.mxu0 0.0
        %7988 = vmatpush1.msra.mxu0 0.0
        %7989 = vmatprep.subr.mxu0 0.0
        %7990 = vmatpush1.msra.mxu0 0.0
        %7991 = vmatprep.subr.mxu0 0.0
        %7992 = vmatpush1.msra.mxu0 0.0
        %7993 = vmatprep.subr.mxu0 0.0
        %7994 = vmatpush1.msra.mxu0 0.0
        %7995 = vmatprep.subr.mxu0 0.0
        %7996 = vmatpush1.msra.mxu0 0.0
        %7997 = vmatprep.subr.mxu0 0.0
        %7998 = vmatpush1.msra.mxu0 0.0
        %7999 = vmatprep.subr.mxu0 0.0
        %8000 = vmatpush1.msra.mxu0 0.0
        %8001 = vmatprep.subr.mxu0 0.0
        %8002 = vmatpush1.msra.mxu0 0.0
        %8003 = vmatprep.subr.mxu0 0.0
        %8004 = vmatpush1.msra.mxu0 0.0
        %8005 = vmatprep.subr.mxu0 0.0
        %8006 = vmatpush1.msra.mxu0 0.0
        %8007 = vmatprep.subr.mxu0 0.0
        %8008 = vmatpush1.msra.mxu0 0.0
        %8009 = vmatprep.subr.mxu0 0.0
        %8010 = vmatpush1.msra.mxu0 0.0
        %8011 = vmatprep.subr.mxu0 0.0
        %8012 = vmatpush1.msra.mxu0 0.0
        %8013 = vmatprep.subr.mxu0 0.0
        %8014 = vmatpush1.msra.mxu0 0.0
        %8015 = vmatprep.subr.mxu0 0.0
        %8016 = vmatpush1.msra.mxu0 0.0
        %8017 = vmatprep.subr.mxu0 0.0
        %8018 = vmatpush1.msra.mxu0 0.0
        %8019 = vmatprep.subr.mxu0 0.0
        %8020 = vmatpush1.msra.mxu0 0.0
        %8021 = vmatprep.subr.mxu0 0.0
        %8022 = vmatpush1.msra.mxu0 0.0
        %8023 = vmatprep.subr.mxu0 0.0
        %8024 = vmatpush1.msra.mxu0 0.0
        %8025 = vmatprep.subr.mxu0 0.0
        %8026 = vmatpush1.msra.mxu0 0.0
        %8027 = vmatprep.subr.mxu0 0.0
        %8028 = vmatpush1.msra.mxu0 0.0
        %8029 = vmatprep.subr.mxu0 0.0
        %8030 = vmatpush1.msra.mxu0 0.0
        %8031 = vmatprep.subr.mxu0 0.0
        %8032 = vmatpush1.msra.mxu0 0.0
        %8033 = vmatprep.subr.mxu0 0.0
        %8034 = vmatpush1.msra.mxu0 0.0
        %8035 = vmatprep.subr.mxu0 0.0
        %8036 = vmatpush1.msra.mxu0 0.0
        %8037 = vmatprep.mubr.f32.mxu0 0.0
        %v8038 = vand.u32 %v6618, 4294901760
        %8039 = vmatmul.mubr.f32.gmra.mrb[0].mxu0 %v8038
        %v8040 = vpop.f32.mrb[0].mxu0
        %v8041 = vadd.f32 %v7956, %v8040
        %v8042 = vpop.f32.mrb[0].mxu0
        %8043 = vmatprep.mubr.f32.mxu0 0.0
        %v8044 = vand.u32 %v6621, 4294901760
        %8045 = vmatmul.mubr.f32.gmra.mrb[0].mxu0 %v8044
        %v8046 = vpop.f32.mrb[0].mxu0
        %v8047 = vadd.f32 %v7964, %v8046
        %v8048 = vpop.f32.mrb[0].mxu0
        %8049 = vdwg.mxu0
        %8050 = vmatprep.subr.mxu0 0.0
        %v8051 = vand.u32 %v6596, 4294901760
        %8052 = vmatpush1.msra.mxu0 %v8051
        %8053 = vmatprep.subr.mxu0 0.0
        %v8054 = vand.u32 %v6602, 4294901760
        %8055 = vmatpush1.msra.mxu0 %v8054
        %8056 = vmatprep.subr.mxu0 0.0
        %8057 = vmatpush1.msra.mxu0 0.0
        %8058 = vmatprep.subr.mxu0 0.0
        %8059 = vmatpush1.msra.mxu0 0.0
        %8060 = vmatprep.subr.mxu0 0.0
        %8061 = vmatpush1.msra.mxu0 0.0
        %8062 = vmatprep.subr.mxu0 0.0
        %8063 = vmatpush1.msra.mxu0 0.0
        %8064 = vmatprep.subr.mxu0 0.0
        %8065 = vmatpush1.msra.mxu0 0.0
        %8066 = vmatprep.subr.mxu0 0.0
        %8067 = vmatpush1.msra.mxu0 0.0
        %8068 = vmatprep.subr.mxu0 0.0
        %8069 = vmatpush1.msra.mxu0 0.0
        %8070 = vmatprep.subr.mxu0 0.0
        %8071 = vmatpush1.msra.mxu0 0.0
        %8072 = vmatprep.subr.mxu0 0.0
        %8073 = vmatpush1.msra.mxu0 0.0
        %8074 = vmatprep.subr.mxu0 0.0
        %8075 = vmatpush1.msra.mxu0 0.0
        %8076 = vmatprep.subr.mxu0 0.0
        %8077 = vmatpush1.msra.mxu0 0.0
        %8078 = vmatprep.subr.mxu0 0.0
        %8079 = vmatpush1.msra.mxu0 0.0
        %8080 = vmatprep.subr.mxu0 0.0
        %8081 = vmatpush1.msra.mxu0 0.0
        %8082 = vmatprep.subr.mxu0 0.0
        %8083 = vmatpush1.msra.mxu0 0.0
        %8084 = vmatprep.subr.mxu0 0.0
        %8085 = vmatpush1.msra.mxu0 0.0
        %8086 = vmatprep.subr.mxu0 0.0
        %8087 = vmatpush1.msra.mxu0 0.0
        %8088 = vmatprep.subr.mxu0 0.0
        %8089 = vmatpush1.msra.mxu0 0.0
        %8090 = vmatprep.subr.mxu0 0.0
        %8091 = vmatpush1.msra.mxu0 0.0
        %8092 = vmatprep.subr.mxu0 0.0
        %8093 = vmatpush1.msra.mxu0 0.0
        %8094 = vmatprep.subr.mxu0 0.0
        %8095 = vmatpush1.msra.mxu0 0.0
        %8096 = vmatprep.subr.mxu0 0.0
        %8097 = vmatpush1.msra.mxu0 0.0
        %8098 = vmatprep.subr.mxu0 0.0
        %8099 = vmatpush1.msra.mxu0 0.0
        %8100 = vmatprep.subr.mxu0 0.0
        %8101 = vmatpush1.msra.mxu0 0.0
        %8102 = vmatprep.subr.mxu0 0.0
        %8103 = vmatpush1.msra.mxu0 0.0
        %8104 = vmatprep.subr.mxu0 0.0
        %8105 = vmatpush1.msra.mxu0 0.0
        %8106 = vmatprep.subr.mxu0 0.0
        %8107 = vmatpush1.msra.mxu0 0.0
        %8108 = vmatprep.subr.mxu0 0.0
        %8109 = vmatpush1.msra.mxu0 0.0
        %8110 = vmatprep.subr.mxu0 0.0
        %8111 = vmatpush1.msra.mxu0 0.0
        %8112 = vmatprep.subr.mxu0 0.0
        %8113 = vmatpush1.msra.mxu0 0.0
        %8114 = vmatprep.subr.mxu0 0.0
        %8115 = vmatpush1.msra.mxu0 0.0
        %8116 = vmatprep.mubr.f32.mxu0 0.0
        %v8117 = vand.u32 %v6618, 4294901760
        %8118 = vmatmul.mubr.f32.gmra.mrb[0].mxu0 %v8117
        %v8119 = vpop.f32.mrb[0].mxu0
        %v8120 = vadd.f32 %v8041, %v8119
        %v8121 = vpop.f32.mrb[0].mxu0
        %8122 = vmatprep.mubr.f32.mxu0 0.0
        %v8123 = vand.u32 %v6621, 4294901760
        %8124 = vmatmul.mubr.f32.gmra.mrb[0].mxu0 %v8123
        %v8125 = vpop.f32.mrb[0].mxu0
        %v8126 = vadd.f32 %v8047, %v8125
        %v8127 = vpop.f32.mrb[0].mxu0
        %8128 = vdwg.mxu0
        %8129 = vmatprep.subr.mxu0 0.0
        %v8130 = vand.u32 %v6608, 4294901760
        %8131 = vmatpush1.msra.mxu0 %v8130
        %8132 = vmatprep.subr.mxu0 0.0
        %v8133 = vand.u32 %v6614, 4294901760
        %8134 = vmatpush1.msra.mxu0 %v8133
        %8135 = vmatprep.subr.mxu0 0.0
        %8136 = vmatpush1.msra.mxu0 0.0
        %8137 = vmatprep.subr.mxu0 0.0
        %8138 = vmatpush1.msra.mxu0 0.0
        %8139 = vmatprep.subr.mxu0 0.0
        %8140 = vmatpush1.msra.mxu0 0.0
        %8141 = vmatprep.subr.mxu0 0.0
        %8142 = vmatpush1.msra.mxu0 0.0
        %8143 = vmatprep.subr.mxu0 0.0
        %8144 = vmatpush1.msra.mxu0 0.0
        %8145 = vmatprep.subr.mxu0 0.0
        %8146 = vmatpush1.msra.mxu0 0.0
        %8147 = vmatprep.subr.mxu0 0.0
        %8148 = vmatpush1.msra.mxu0 0.0
        %8149 = vmatprep.subr.mxu0 0.0
        %8150 = vmatpush1.msra.mxu0 0.0
        %8151 = vmatprep.subr.mxu0 0.0
        %8152 = vmatpush1.msra.mxu0 0.0
        %8153 = vmatprep.subr.mxu0 0.0
        %8154 = vmatpush1.msra.mxu0 0.0
        %8155 = vmatprep.subr.mxu0 0.0
        %8156 = vmatpush1.msra.mxu0 0.0
        %8157 = vmatprep.subr.mxu0 0.0
        %8158 = vmatpush1.msra.mxu0 0.0
        %8159 = vmatprep.subr.mxu0 0.0
        %8160 = vmatpush1.msra.mxu0 0.0
        %8161 = vmatprep.subr.mxu0 0.0
        %8162 = vmatpush1.msra.mxu0 0.0
        %8163 = vmatprep.subr.mxu0 0.0
        %8164 = vmatpush1.msra.mxu0 0.0
        %8165 = vmatprep.subr.mxu0 0.0
        %8166 = vmatpush1.msra.mxu0 0.0
        %8167 = vmatprep.subr.mxu0 0.0
        %8168 = vmatpush1.msra.mxu0 0.0
        %8169 = vmatprep.subr.mxu0 0.0
        %8170 = vmatpush1.msra.mxu0 0.0
        %8171 = vmatprep.subr.mxu0 0.0
        %8172 = vmatpush1.msra.mxu0 0.0
        %8173 = vmatprep.subr.mxu0 0.0
        %8174 = vmatpush1.msra.mxu0 0.0
        %8175 = vmatprep.subr.mxu0 0.0
        %8176 = vmatpush1.msra.mxu0 0.0
        %8177 = vmatprep.subr.mxu0 0.0
        %8178 = vmatpush1.msra.mxu0 0.0
        %8179 = vmatprep.subr.mxu0 0.0
        %8180 = vmatpush1.msra.mxu0 0.0
        %8181 = vmatprep.subr.mxu0 0.0
        %8182 = vmatpush1.msra.mxu0 0.0
        %8183 = vmatprep.subr.mxu0 0.0
        %8184 = vmatpush1.msra.mxu0 0.0
        %8185 = vmatprep.subr.mxu0 0.0
        %8186 = vmatpush1.msra.mxu0 0.0
        %8187 = vmatprep.subr.mxu0 0.0
        %8188 = vmatpush1.msra.mxu0 0.0
        %8189 = vmatprep.subr.mxu0 0.0
        %8190 = vmatpush1.msra.mxu0 0.0
        %8191 = vmatprep.subr.mxu0 0.0
        %8192 = vmatpush1.msra.mxu0 0.0
        %8193 = vmatprep.subr.mxu0 0.0
        %8194 = vmatpush1.msra.mxu0 0.0
        %8195 = vmatprep.mubr.f32.mxu0 0.0
        %v8196 = vand.u32 %v6618, 4294901760
        %v8197 = vsub.f32 %v6618, %v8196
        %v8198 = vand.u32 %v8197, 4294901760
        %v8199 = vsub.f32 %v8197, %v8198
        %v8200 = vand.u32 %v8199, 4294901760
        %8201 = vmatmul.mubr.f32.gmra.mrb[0].mxu0 %v8200
        %v8202 = vpop.f32.mrb[0].mxu0
        %v8203 = vadd.f32 0.0, %v8202
        %v8204 = vpop.f32.mrb[0].mxu0
        %8205 = vmatprep.mubr.f32.mxu0 0.0
        %v8206 = vand.u32 %v6621, 4294901760
        %v8207 = vsub.f32 %v6621, %v8206
        %v8208 = vand.u32 %v8207, 4294901760
        %v8209 = vsub.f32 %v8207, %v8208
        %v8210 = vand.u32 %v8209, 4294901760
        %8211 = vmatmul.mubr.f32.gmra.mrb[0].mxu0 %v8210
        %v8212 = vpop.f32.mrb[0].mxu0
        %v8213 = vadd.f32 0.0, %v8212
        %v8214 = vpop.f32.mrb[0].mxu0
        %8215 = vdwg.mxu0
        %8216 = vmatprep.subr.mxu0 0.0
        %v8217 = vand.u32 %v6608, 4294901760
        %v8218 = vsub.f32 %v6608, %v8217
        %v8219 = vand.u32 %v8218, 4294901760
        %v8220 = vsub.f32 %v8218, %v8219
        %v8221 = vand.u32 %v8220, 4294901760
        %8222 = vmatpush1.msra.mxu0 %v8221
        %8223 = vmatprep.subr.mxu0 0.0
        %v8224 = vand.u32 %v6614, 4294901760
        %v8225 = vsub.f32 %v6614, %v8224
        %v8226 = vand.u32 %v8225, 4294901760
        %v8227 = vsub.f32 %v8225, %v8226
        %v8228 = vand.u32 %v8227, 4294901760
        %8229 = vmatpush1.msra.mxu0 %v8228
        %8230 = vmatprep.subr.mxu0 0.0
        %8231 = vmatpush1.msra.mxu0 0.0
        %8232 = vmatprep.subr.mxu0 0.0
        %8233 = vmatpush1.msra.mxu0 0.0
        %8234 = vmatprep.subr.mxu0 0.0
        %8235 = vmatpush1.msra.mxu0 0.0
        %8236 = vmatprep.subr.mxu0 0.0
        %8237 = vmatpush1.msra.mxu0 0.0
        %8238 = vmatprep.subr.mxu0 0.0
        %8239 = vmatpush1.msra.mxu0 0.0
        %8240 = vmatprep.subr.mxu0 0.0
        %8241 = vmatpush1.msra.mxu0 0.0
        %8242 = vmatprep.subr.mxu0 0.0
        %8243 = vmatpush1.msra.mxu0 0.0
        %8244 = vmatprep.subr.mxu0 0.0
        %8245 = vmatpush1.msra.mxu0 0.0
        %8246 = vmatprep.subr.mxu0 0.0
        %8247 = vmatpush1.msra.mxu0 0.0
        %8248 = vmatprep.subr.mxu0 0.0
        %8249 = vmatpush1.msra.mxu0 0.0
        %8250 = vmatprep.subr.mxu0 0.0
        %8251 = vmatpush1.msra.mxu0 0.0
        %8252 = vmatprep.subr.mxu0 0.0
        %8253 = vmatpush1.msra.mxu0 0.0
        %8254 = vmatprep.subr.mxu0 0.0
        %8255 = vmatpush1.msra.mxu0 0.0
        %8256 = vmatprep.subr.mxu0 0.0
        %8257 = vmatpush1.msra.mxu0 0.0
        %8258 = vmatprep.subr.mxu0 0.0
        %8259 = vmatpush1.msra.mxu0 0.0
        %8260 = vmatprep.subr.mxu0 0.0
        %8261 = vmatpush1.msra.mxu0 0.0
        %8262 = vmatprep.subr.mxu0 0.0
        %8263 = vmatpush1.msra.mxu0 0.0
        %8264 = vmatprep.subr.mxu0 0.0
        %8265 = vmatpush1.msra.mxu0 0.0
        %8266 = vmatprep.subr.mxu0 0.0
        %8267 = vmatpush1.msra.mxu0 0.0
        %8268 = vmatprep.subr.mxu0 0.0
        %8269 = vmatpush1.msra.mxu0 0.0
        %8270 = vmatprep.subr.mxu0 0.0
        %8271 = vmatpush1.msra.mxu0 0.0
        %8272 = vmatprep.subr.mxu0 0.0
        %8273 = vmatpush1.msra.mxu0 0.0
        %8274 = vmatprep.subr.mxu0 0.0
        %8275 = vmatpush1.msra.mxu0 0.0
        %8276 = vmatprep.subr.mxu0 0.0
        %8277 = vmatpush1.msra.mxu0 0.0
        %8278 = vmatprep.subr.mxu0 0.0
        %8279 = vmatpush1.msra.mxu0 0.0
        %8280 = vmatprep.subr.mxu0 0.0
        %8281 = vmatpush1.msra.mxu0 0.0
        %8282 = vmatprep.subr.mxu0 0.0
        %8283 = vmatpush1.msra.mxu0 0.0
        %8284 = vmatprep.subr.mxu0 0.0
        %8285 = vmatpush1.msra.mxu0 0.0
        %8286 = vmatprep.subr.mxu0 0.0
        %8287 = vmatpush1.msra.mxu0 0.0
        %8288 = vmatprep.subr.mxu0 0.0
        %8289 = vmatpush1.msra.mxu0 0.0
        %8290 = vmatprep.mubr.f32.mxu0 0.0
        %v8291 = vand.u32 %v6618, 4294901760
        %8292 = vmatmul.mubr.f32.gmra.mrb[0].mxu0 %v8291
        %v8293 = vpop.f32.mrb[0].mxu0
        %v8294 = vadd.f32 %v8203, %v8293
        %v8295 = vpop.f32.mrb[0].mxu0
        %8296 = vmatprep.mubr.f32.mxu0 0.0
        %v8297 = vand.u32 %v6621, 4294901760
        %8298 = vmatmul.mubr.f32.gmra.mrb[0].mxu0 %v8297
        %v8299 = vpop.f32.mrb[0].mxu0
        %v8300 = vadd.f32 %v8213, %v8299
        %v8301 = vpop.f32.mrb[0].mxu0
        %8302 = vdwg.mxu0
        %8303 = vmatprep.subr.mxu0 0.0
        %v8304 = vand.u32 %v6608, 4294901760
        %v8305 = vsub.f32 %v6608, %v8304
        %8306 = vmatpush1.msra.mxu0 %v8305
        %8307 = vmatprep.subr.mxu0 0.0
        %v8308 = vand.u32 %v6614, 4294901760
        %v8309 = vsub.f32 %v6614, %v8308
        %8310 = vmatpush1.msra.mxu0 %v8309
        %8311 = vmatprep.subr.mxu0 0.0
        %8312 = vmatpush1.msra.mxu0 0.0
        %8313 = vmatprep.subr.mxu0 0.0
        %8314 = vmatpush1.msra.mxu0 0.0
        %8315 = vmatprep.subr.mxu0 0.0
        %8316 = vmatpush1.msra.mxu0 0.0
        %8317 = vmatprep.subr.mxu0 0.0
        %8318 = vmatpush1.msra.mxu0 0.0
        %8319 = vmatprep.subr.mxu0 0.0
        %8320 = vmatpush1.msra.mxu0 0.0
        %8321 = vmatprep.subr.mxu0 0.0
        %8322 = vmatpush1.msra.mxu0 0.0
        %8323 = vmatprep.subr.mxu0 0.0
        %8324 = vmatpush1.msra.mxu0 0.0
        %8325 = vmatprep.subr.mxu0 0.0
        %8326 = vmatpush1.msra.mxu0 0.0
        %8327 = vmatprep.subr.mxu0 0.0
        %8328 = vmatpush1.msra.mxu0 0.0
        %8329 = vmatprep.subr.mxu0 0.0
        %8330 = vmatpush1.msra.mxu0 0.0
        %8331 = vmatprep.subr.mxu0 0.0
        %8332 = vmatpush1.msra.mxu0 0.0
        %8333 = vmatprep.subr.mxu0 0.0
        %8334 = vmatpush1.msra.mxu0 0.0
        %8335 = vmatprep.subr.mxu0 0.0
        %8336 = vmatpush1.msra.mxu0 0.0
        %8337 = vmatprep.subr.mxu0 0.0
        %8338 = vmatpush1.msra.mxu0 0.0
        %8339 = vmatprep.subr.mxu0 0.0
        %8340 = vmatpush1.msra.mxu0 0.0
        %8341 = vmatprep.subr.mxu0 0.0
        %8342 = vmatpush1.msra.mxu0 0.0
        %8343 = vmatprep.subr.mxu0 0.0
        %8344 = vmatpush1.msra.mxu0 0.0
        %8345 = vmatprep.subr.mxu0 0.0
        %8346 = vmatpush1.msra.mxu0 0.0
        %8347 = vmatprep.subr.mxu0 0.0
        %8348 = vmatpush1.msra.mxu0 0.0
        %8349 = vmatprep.subr.mxu0 0.0
        %8350 = vmatpush1.msra.mxu0 0.0
        %8351 = vmatprep.subr.mxu0 0.0
        %8352 = vmatpush1.msra.mxu0 0.0
        %8353 = vmatprep.subr.mxu0 0.0
        %8354 = vmatpush1.msra.mxu0 0.0
        %8355 = vmatprep.subr.mxu0 0.0
        %8356 = vmatpush1.msra.mxu0 0.0
        %8357 = vmatprep.subr.mxu0 0.0
        %8358 = vmatpush1.msra.mxu0 0.0
        %8359 = vmatprep.subr.mxu0 0.0
        %8360 = vmatpush1.msra.mxu0 0.0
        %8361 = vmatprep.subr.mxu0 0.0
        %8362 = vmatpush1.msra.mxu0 0.0
        %8363 = vmatprep.subr.mxu0 0.0
        %8364 = vmatpush1.msra.mxu0 0.0
        %8365 = vmatprep.subr.mxu0 0.0
        %8366 = vmatpush1.msra.mxu0 0.0
        %8367 = vmatprep.subr.mxu0 0.0
        %8368 = vmatpush1.msra.mxu0 0.0
        %8369 = vmatprep.subr.mxu0 0.0
        %8370 = vmatpush1.msra.mxu0 0.0
        %8371 = vmatprep.mubr.f32.mxu0 0.0
        %v8372 = vand.u32 %v6618, 4294901760
        %v8373 = vsub.f32 %v6618, %v8372
        %8374 = vmatmul.mubr.f32.gmra.mrb[0].mxu0 %v8373
        %v8375 = vpop.f32.mrb[0].mxu0
        %v8376 = vadd.f32 %v8294, %v8375
        %v8377 = vpop.f32.mrb[0].mxu0
        %8378 = vmatprep.mubr.f32.mxu0 0.0
        %v8379 = vand.u32 %v6621, 4294901760
        %v8380 = vsub.f32 %v6621, %v8379
        %8381 = vmatmul.mubr.f32.gmra.mrb[0].mxu0 %v8380
        %v8382 = vpop.f32.mrb[0].mxu0
        %v8383 = vadd.f32 %v8300, %v8382
        %v8384 = vpop.f32.mrb[0].mxu0
        %8385 = vdwg.mxu0
        %8386 = vmatprep.subr.mxu0 0.0
        %v8387 = vand.u32 %v6608, 4294901760
        %8388 = vmatpush1.msra.mxu0 %v8387
        %8389 = vmatprep.subr.mxu0 0.0
        %v8390 = vand.u32 %v6614, 4294901760
        %8391 = vmatpush1.msra.mxu0 %v8390
        %8392 = vmatprep.subr.mxu0 0.0
        %8393 = vmatpush1.msra.mxu0 0.0
        %8394 = vmatprep.subr.mxu0 0.0
        %8395 = vmatpush1.msra.mxu0 0.0
        %8396 = vmatprep.subr.mxu0 0.0
        %8397 = vmatpush1.msra.mxu0 0.0
        %8398 = vmatprep.subr.mxu0 0.0
        %8399 = vmatpush1.msra.mxu0 0.0
        %8400 = vmatprep.subr.mxu0 0.0
        %8401 = vmatpush1.msra.mxu0 0.0
        %8402 = vmatprep.subr.mxu0 0.0
        %8403 = vmatpush1.msra.mxu0 0.0
        %8404 = vmatprep.subr.mxu0 0.0
        %8405 = vmatpush1.msra.mxu0 0.0
        %8406 = vmatprep.subr.mxu0 0.0
        %8407 = vmatpush1.msra.mxu0 0.0
        %8408 = vmatprep.subr.mxu0 0.0
        %8409 = vmatpush1.msra.mxu0 0.0
        %8410 = vmatprep.subr.mxu0 0.0
        %8411 = vmatpush1.msra.mxu0 0.0
        %8412 = vmatprep.subr.mxu0 0.0
        %8413 = vmatpush1.msra.mxu0 0.0
        %8414 = vmatprep.subr.mxu0 0.0
        %8415 = vmatpush1.msra.mxu0 0.0
        %8416 = vmatprep.subr.mxu0 0.0
        %8417 = vmatpush1.msra.mxu0 0.0
        %8418 = vmatprep.subr.mxu0 0.0
        %8419 = vmatpush1.msra.mxu0 0.0
        %8420 = vmatprep.subr.mxu0 0.0
        %8421 = vmatpush1.msra.mxu0 0.0
        %8422 = vmatprep.subr.mxu0 0.0
        %8423 = vmatpush1.msra.mxu0 0.0
        %8424 = vmatprep.subr.mxu0 0.0
        %8425 = vmatpush1.msra.mxu0 0.0
        %8426 = vmatprep.subr.mxu0 0.0
        %8427 = vmatpush1.msra.mxu0 0.0
        %8428 = vmatprep.subr.mxu0 0.0
        %8429 = vmatpush1.msra.mxu0 0.0
        %8430 = vmatprep.subr.mxu0 0.0
        %8431 = vmatpush1.msra.mxu0 0.0
        %8432 = vmatprep.subr.mxu0 0.0
        %8433 = vmatpush1.msra.mxu0 0.0
        %8434 = vmatprep.subr.mxu0 0.0
        %8435 = vmatpush1.msra.mxu0 0.0
        %8436 = vmatprep.subr.mxu0 0.0
        %8437 = vmatpush1.msra.mxu0 0.0
        %8438 = vmatprep.subr.mxu0 0.0
        %8439 = vmatpush1.msra.mxu0 0.0
        %8440 = vmatprep.subr.mxu0 0.0
        %8441 = vmatpush1.msra.mxu0 0.0
        %8442 = vmatprep.subr.mxu0 0.0
        %8443 = vmatpush1.msra.mxu0 0.0
        %8444 = vmatprep.subr.mxu0 0.0
        %8445 = vmatpush1.msra.mxu0 0.0
        %8446 = vmatprep.subr.mxu0 0.0
        %8447 = vmatpush1.msra.mxu0 0.0
        %8448 = vmatprep.subr.mxu0 0.0
        %8449 = vmatpush1.msra.mxu0 0.0
        %8450 = vmatprep.subr.mxu0 0.0
        %8451 = vmatpush1.msra.mxu0 0.0
        %8452 = vmatprep.mubr.f32.mxu0 0.0
        %v8453 = vand.u32 %v6618, 4294901760
        %v8454 = vsub.f32 %v6618, %v8453
        %v8455 = vand.u32 %v8454, 4294901760
        %8456 = vmatmul.mubr.f32.gmra.mrb[0].mxu0 %v8455
        %v8457 = vpop.f32.mrb[0].mxu0
        %v8458 = vadd.f32 %v8376, %v8457
        %v8459 = vpop.f32.mrb[0].mxu0
        %8460 = vmatprep.mubr.f32.mxu0 0.0
        %v8461 = vand.u32 %v6621, 4294901760
        %v8462 = vsub.f32 %v6621, %v8461
        %v8463 = vand.u32 %v8462, 4294901760
        %8464 = vmatmul.mubr.f32.gmra.mrb[0].mxu0 %v8463
        %v8465 = vpop.f32.mrb[0].mxu0
        %v8466 = vadd.f32 %v8383, %v8465
        %v8467 = vpop.f32.mrb[0].mxu0
        %8468 = vdwg.mxu0
        %8469 = vmatprep.subr.mxu0 0.0
        %v8470 = vand.u32 %v6608, 4294901760
        %v8471 = vsub.f32 %v6608, %v8470
        %v8472 = vand.u32 %v8471, 4294901760
        %8473 = vmatpush1.msra.mxu0 %v8472
        %8474 = vmatprep.subr.mxu0 0.0
        %v8475 = vand.u32 %v6614, 4294901760
        %v8476 = vsub.f32 %v6614, %v8475
        %v8477 = vand.u32 %v8476, 4294901760
        %8478 = vmatpush1.msra.mxu0 %v8477
        %8479 = vmatprep.subr.mxu0 0.0
        %8480 = vmatpush1.msra.mxu0 0.0
        %8481 = vmatprep.subr.mxu0 0.0
        %8482 = vmatpush1.msra.mxu0 0.0
        %8483 = vmatprep.subr.mxu0 0.0
        %8484 = vmatpush1.msra.mxu0 0.0
        %8485 = vmatprep.subr.mxu0 0.0
        %8486 = vmatpush1.msra.mxu0 0.0
        %8487 = vmatprep.subr.mxu0 0.0
        %8488 = vmatpush1.msra.mxu0 0.0
        %8489 = vmatprep.subr.mxu0 0.0
        %8490 = vmatpush1.msra.mxu0 0.0
        %8491 = vmatprep.subr.mxu0 0.0
        %8492 = vmatpush1.msra.mxu0 0.0
        %8493 = vmatprep.subr.mxu0 0.0
        %8494 = vmatpush1.msra.mxu0 0.0
        %8495 = vmatprep.subr.mxu0 0.0
        %8496 = vmatpush1.msra.mxu0 0.0
        %8497 = vmatprep.subr.mxu0 0.0
        %8498 = vmatpush1.msra.mxu0 0.0
        %8499 = vmatprep.subr.mxu0 0.0
        %8500 = vmatpush1.msra.mxu0 0.0
        %8501 = vmatprep.subr.mxu0 0.0
        %8502 = vmatpush1.msra.mxu0 0.0
        %8503 = vmatprep.subr.mxu0 0.0
        %8504 = vmatpush1.msra.mxu0 0.0
        %8505 = vmatprep.subr.mxu0 0.0
        %8506 = vmatpush1.msra.mxu0 0.0
        %8507 = vmatprep.subr.mxu0 0.0
        %8508 = vmatpush1.msra.mxu0 0.0
        %8509 = vmatprep.subr.mxu0 0.0
        %8510 = vmatpush1.msra.mxu0 0.0
        %8511 = vmatprep.subr.mxu0 0.0
        %8512 = vmatpush1.msra.mxu0 0.0
        %8513 = vmatprep.subr.mxu0 0.0
        %8514 = vmatpush1.msra.mxu0 0.0
        %8515 = vmatprep.subr.mxu0 0.0
        %8516 = vmatpush1.msra.mxu0 0.0
        %8517 = vmatprep.subr.mxu0 0.0
        %8518 = vmatpush1.msra.mxu0 0.0
        %8519 = vmatprep.subr.mxu0 0.0
        %8520 = vmatpush1.msra.mxu0 0.0
        %8521 = vmatprep.subr.mxu0 0.0
        %8522 = vmatpush1.msra.mxu0 0.0
        %8523 = vmatprep.subr.mxu0 0.0
        %8524 = vmatpush1.msra.mxu0 0.0
        %8525 = vmatprep.subr.mxu0 0.0
        %8526 = vmatpush1.msra.mxu0 0.0
        %8527 = vmatprep.subr.mxu0 0.0
        %8528 = vmatpush1.msra.mxu0 0.0
        %8529 = vmatprep.subr.mxu0 0.0
        %8530 = vmatpush1.msra.mxu0 0.0
        %8531 = vmatprep.subr.mxu0 0.0
        %8532 = vmatpush1.msra.mxu0 0.0
        %8533 = vmatprep.subr.mxu0 0.0
        %8534 = vmatpush1.msra.mxu0 0.0
        %8535 = vmatprep.subr.mxu0 0.0
        %8536 = vmatpush1.msra.mxu0 0.0
        %8537 = vmatprep.subr.mxu0 0.0
        %8538 = vmatpush1.msra.mxu0 0.0
        %8539 = vmatprep.mubr.f32.mxu0 0.0
        %v8540 = vand.u32 %v6618, 4294901760
        %8541 = vmatmul.mubr.f32.gmra.mrb[0].mxu0 %v8540
        %v8542 = vpop.f32.mrb[0].mxu0
        %v8543 = vadd.f32 %v8458, %v8542
        %v8544 = vpop.f32.mrb[0].mxu0
        %8545 = vmatprep.mubr.f32.mxu0 0.0
        %v8546 = vand.u32 %v6621, 4294901760
        %8547 = vmatmul.mubr.f32.gmra.mrb[0].mxu0 %v8546
        %v8548 = vpop.f32.mrb[0].mxu0
        %v8549 = vadd.f32 %v8466, %v8548
        %v8550 = vpop.f32.mrb[0].mxu0
        %8551 = vdwg.mxu0
        %8552 = vmatprep.subr.mxu0 0.0
        %v8553 = vand.u32 %v6608, 4294901760
        %8554 = vmatpush1.msra.mxu0 %v8553
        %8555 = vmatprep.subr.mxu0 0.0
        %v8556 = vand.u32 %v6614, 4294901760
        %8557 = vmatpush1.msra.mxu0 %v8556
        %8558 = vmatprep.subr.mxu0 0.0
        %8559 = vmatpush1.msra.mxu0 0.0
        %8560 = vmatprep.subr.mxu0 0.0
        %8561 = vmatpush1.msra.mxu0 0.0
        %8562 = vmatprep.subr.mxu0 0.0
        %8563 = vmatpush1.msra.mxu0 0.0
        %8564 = vmatprep.subr.mxu0 0.0
        %8565 = vmatpush1.msra.mxu0 0.0
        %8566 = vmatprep.subr.mxu0 0.0
        %8567 = vmatpush1.msra.mxu0 0.0
        %8568 = vmatprep.subr.mxu0 0.0
        %8569 = vmatpush1.msra.mxu0 0.0
        %8570 = vmatprep.subr.mxu0 0.0
        %8571 = vmatpush1.msra.mxu0 0.0
        %8572 = vmatprep.subr.mxu0 0.0
        %8573 = vmatpush1.msra.mxu0 0.0
        %8574 = vmatprep.subr.mxu0 0.0
        %8575 = vmatpush1.msra.mxu0 0.0
        %8576 = vmatprep.subr.mxu0 0.0
        %8577 = vmatpush1.msra.mxu0 0.0
        %8578 = vmatprep.subr.mxu0 0.0
        %8579 = vmatpush1.msra.mxu0 0.0
        %8580 = vmatprep.subr.mxu0 0.0
        %8581 = vmatpush1.msra.mxu0 0.0
        %8582 = vmatprep.subr.mxu0 0.0
        %8583 = vmatpush1.msra.mxu0 0.0
        %8584 = vmatprep.subr.mxu0 0.0
        %8585 = vmatpush1.msra.mxu0 0.0
        %8586 = vmatprep.subr.mxu0 0.0
        %8587 = vmatpush1.msra.mxu0 0.0
        %8588 = vmatprep.subr.mxu0 0.0
        %8589 = vmatpush1.msra.mxu0 0.0
        %8590 = vmatprep.subr.mxu0 0.0
        %8591 = vmatpush1.msra.mxu0 0.0
        %8592 = vmatprep.subr.mxu0 0.0
        %8593 = vmatpush1.msra.mxu0 0.0
        %8594 = vmatprep.subr.mxu0 0.0
        %8595 = vmatpush1.msra.mxu0 0.0
        %8596 = vmatprep.subr.mxu0 0.0
        %8597 = vmatpush1.msra.mxu0 0.0
        %8598 = vmatprep.subr.mxu0 0.0
        %8599 = vmatpush1.msra.mxu0 0.0
        %8600 = vmatprep.subr.mxu0 0.0
        %8601 = vmatpush1.msra.mxu0 0.0
        %8602 = vmatprep.subr.mxu0 0.0
        %8603 = vmatpush1.msra.mxu0 0.0
        %8604 = vmatprep.subr.mxu0 0.0
        %8605 = vmatpush1.msra.mxu0 0.0
        %8606 = vmatprep.subr.mxu0 0.0
        %8607 = vmatpush1.msra.mxu0 0.0
        %8608 = vmatprep.subr.mxu0 0.0
        %8609 = vmatpush1.msra.mxu0 0.0
        %8610 = vmatprep.subr.mxu0 0.0
        %8611 = vmatpush1.msra.mxu0 0.0
        %8612 = vmatprep.subr.mxu0 0.0
        %8613 = vmatpush1.msra.mxu0 0.0
        %8614 = vmatprep.subr.mxu0 0.0
        %8615 = vmatpush1.msra.mxu0 0.0
        %8616 = vmatprep.subr.mxu0 0.0
        %8617 = vmatpush1.msra.mxu0 0.0
        %8618 = vmatprep.mubr.f32.mxu0 0.0
        %v8619 = vand.u32 %v6618, 4294901760
        %8620 = vmatmul.mubr.f32.gmra.mrb[0].mxu0 %v8619
        %v8621 = vpop.f32.mrb[0].mxu0
        %v8622 = vadd.f32 %v8543, %v8621
        %v8623 = vpop.f32.mrb[0].mxu0
        %8624 = vmatprep.mubr.f32.mxu0 0.0
        %v8625 = vand.u32 %v6621, 4294901760
        %8626 = vmatmul.mubr.f32.gmra.mrb[0].mxu0 %v8625
        %v8627 = vpop.f32.mrb[0].mxu0
        %v8628 = vadd.f32 %v8549, %v8627
        %v8629 = vpop.f32.mrb[0].mxu0
        %8630 = vdwg.mxu0
        %v8631 = vmul.f32 %v7116, 0.00591716
        %v8632 = vmul.f32 %v7122, 0.00591716
        %v8633 = vmul.f32 %v7618, 0.00591716
        %v8634 = vmul.f32 %v7624, 0.00591716
        %v8635 = vmul.f32 %v8120, 0.00591716
        %v8636 = vmul.f32 %v8126, 0.00591716
        %v8637 = vmul.f32 %v8622, 0.00591716
        %v8638 = vmul.f32 %v8628, 0.00591716
        %s8639 = scalar_lea.vmem %s217, 128 [#allocation8]
        %8640 = vst.msk [vmem:[%s8639] sm:$0xff] %vm227, %v8631
        %8641 = vst.msk [vmem:[%s8639 + $0x8] sm:$0xff] %vm227, %v8632
        %8642 = vst.msk [vmem:[%s8639 + $0x10] sm:$0xff] %vm227, %v8633
        %8643 = vst.msk [vmem:[%s8639 + $0x18] sm:$0xff] %vm227, %v8634
        %8644 = vst.msk [vmem:[%s8639 + $0x20] sm:$0xff] %vm227, %v8635
        %8645 = vst.msk [vmem:[%s8639 + $0x28] sm:$0xff] %vm227, %v8636
        %8646 = vst.msk [vmem:[%s8639 + $0x30] sm:$0xff] %vm227, %v8637
        %8647 = vst.msk [vmem:[%s8639 + $0x38] sm:$0xff] %vm227, %v8638
        %s8648 = sand.u32 %s97, 1
        %s8649 = scalar_lea.sflag [#allocation4], %s8648
        %s8650 = sand.u32 %s97, 1
        %s8651 = smul.addr %s8650, 256
        %s8652 = scalar_lea.vmem [#allocation8], %s8651
        // Predicated region
        $region45: #{tpu_custom_call.1} parent=31 // pred_check
          %p8653 = pneg %p107
        $region46: #{tpu_custom_call.1} parent=31 // pred_check_branch
          %8655 = sbr.rel (%p8653) target = $region48
        $region47: #{tpu_custom_call.1} parent=31 // pred_region
          %s8657 = ssub.s32 4096, 4096
          %8658 = vsyncadd %s8649, %s8657
          %s8659 = smul.addr %s21, 32
          %s8660 = smul.addr %s8659, 128
          %s8661 = scalar_lea.hbm %s3, %s8660
          %s8662 = sshll.u32 %s8652, 4
          %s8663 = int_to_ptr.vmem [resolvable:$true] %s8662
          %8668 = dma.vmem_to_hbm [thread:$0]  %s8663, 4096, %s8661, %s8649, 128, 128, 8
        $region48: #{tpu_custom_call.1} parent=31 // pred_fallthru
          _
      $region32: #{tpu_custom_call.1} parent=5 // pred_fallthru
        _
      %p8669 = scmp.le.s32.totalorder 2, %s16
      // Predicated region
      $region49: #{tpu_custom_call.1} parent=5 // pred_check
        %p8670 = pneg %p8669
      $region50: #{tpu_custom_call.1} parent=5 // pred_check_branch
        %8672 = sbr.rel (%p8670) target = $region52
      $region51: #{tpu_custom_call.1} parent=5 // pred_region
        %s8673 = ssub.s32 %s16, 2
        // Predicated region
        $region53: #{tpu_custom_call.1} parent=51 // pred_check
          %p8674 = pneg %p113
        $region54: #{tpu_custom_call.1} parent=51 // pred_check_branch
          %8676 = sbr.rel (%p8674) target = $region56
        $region55: #{tpu_custom_call.1} parent=51 // pred_region
          %s8677 = sand.u32 %s98, 1
          %s8678 = scalar_lea.sflag [#allocation4], %s8677
          %s8679 = sand.u32 %s98, 1
          %s8680 = smul.addr %s8679, 256
          %s8681 = scalar_lea.vmem [#allocation8], %s8680
          %8682 = dma.done %s8678, 4096
        $region56: #{tpu_custom_call.1} parent=51 // pred_fallthru
          _
      $region52: #{tpu_custom_call.1} parent=5 // pred_fallthru
        _
    $region6: #{tpu_custom_call.1} parent=1 // loop_footer
      %s20 = sadd.s32 1, %s16
    $region7: #{tpu_custom_call.1} parent=1 // loop_footer_branch
      %15 = sbr.rel target = $region3
    $region8: #{tpu_custom_call.1} parent=1 // loop_exit
      _
    %8683 = vsyncpa [#allocation3], 1
    %s8684 = scalar_lea.sflag [#allocation3], 1
    %8685 = vsyncpa %s8684, 1
    %8686 = vsyncpa [#allocation6], 1
    %8687 = vsyncpa [#allocation4], 1
    %s8688 = scalar_lea.sflag [#allocation4], 1
    %8689 = vsyncpa %s8688, 1

</llo_original>
